<compile_context>
chip_gen: v7x
topology: tpu7x:2x2x1
jax: 0.10.0
libtpu: 0.0.40
codegen_flags: <defaults>
</compile_context>

<pallas_src>
import functools

import jax
import jax.numpy as jnp
import numpy as np
from jax.experimental import pallas as pl
from jax.experimental.pallas import tpu as pltpu

LSTM_SIZE = 128
EMBED_DIM = 128
NUM_LAYERS = 3


def _sigmoid(x):
    # sigmoid(x) = 0.5 * tanh(x/2) + 0.5 : one EUP pass instead of exp+recip.
    return 0.5 * jnp.tanh(0.5 * x) + 0.5


# ----------------------------- fused forward kernel --------------------------
def _fused_forward_kernel(emb_ref, w_hbm, b_ref, h0_ref, c0_ref, fcw_hbm,
                          fcb_ref,
                          logits_ref, hT_ref, cT_ref,
                          w_sc, fcw_sc, sem,
                          *, seq_len, batch):
    """Fused Embedding-output -> 3x LSTM (wavefront) -> Linear forward.

    emb_ref: (T*B, E) embedded tokens (E == H == 128), VMEM
    w_hbm:   (L, 2H, 4H) concatenated [W_ih ; W_hh] per layer, HBM
    b_ref:   (L, 1, 4H) combined bias (b_ih + b_hh), VMEM
    h0_ref, c0_ref: (L, B, H) initial states, VMEM
    fcw_hbm: (H, V) FC weight, HBM;  fcb_ref: (1, V) FC bias, VMEM
    logits_ref: (T*B, V); hT_ref, cT_ref: (L, B, H)
    w_sc:  (L, 2H, 4H) VMEM scratch for LSTM weights
    fcw_sc: (H, V) VMEM scratch for FC weight
    sem:   (L+1,) DMA semaphores
    """
    H, L, T, B = LSTM_SIZE, NUM_LAYERS, seq_len, batch

    # ---- kick off weight DMAs; layer l awaited right before first use -------
    w_cp = [pltpu.make_async_copy(w_hbm.at[l], w_sc.at[l], sem.at[l])
            for l in range(L)]
    fc_cp = pltpu.make_async_copy(fcw_hbm, fcw_sc, sem.at[L])
    for cp in w_cp:
        cp.start()
    fc_cp.start()

    # Running hidden / cell states live in vregs (Python locals), not VMEM.
    h = [h0_ref[l] for l in range(L)]
    c = [c0_ref[l] for l in range(L)]
    carry_x = [None] * L        # carry_x[l] = input of layer l's next cell
    top = [None] * T            # top-layer outputs per timestep (for FC head)

    # ---- (layer, time) wavefront: cells with l + t == s are independent -----
    for s in range(T + L - 1):              # static unroll, T+L-1 = 10 steps
        if s < L:
            w_cp[s].wait()                  # layer s weights first needed now
        if s < T:
            carry_x[0] = emb_ref[s * B:(s + 1) * B, :]      # layer-0 input @ t=s
        produced = [None] * L
        for l in range(L):
            t = s - l
            if t < 0 or t >= T:
                continue
            # One fused matmul per cell: [x ; h] @ [W_ih ; W_hh] + b
            xh = jnp.concatenate([carry_x[l], h[l]], axis=1)        # (B, 2H)
            gates = (jnp.dot(xh, w_sc[l],
                             preferred_element_type=jnp.float32)
                     + b_ref[l])                                    # (B, 4H)

            # PyTorch gate ordering: input, forget, cell(g), output.
            i = _sigmoid(gates[:, 0 * H:1 * H])
            f = _sigmoid(gates[:, 1 * H:2 * H])
            g = jnp.tanh(gates[:, 2 * H:3 * H])
            o = _sigmoid(gates[:, 3 * H:4 * H])

            c_new = f * c[l] + i * g
            h_new = o * jnp.tanh(c_new)
            h[l] = h_new
            c[l] = c_new
            if l + 1 < L:
                produced[l + 1] = h_new     # next layer consumes it at s+1
            else:
                top[t] = h_new
        for l in range(1, L):
            if produced[l] is not None:
                carry_x[l] = produced[l]
        # TODO(synk): nn.LSTM applies dropout(p=0.2) between layers only in
        # training mode; inference semantics (identity) are implemented here.

    # Final states written once (not every step).
    for l in range(L):
        hT_ref[l] = h[l]
        cT_ref[l] = c[l]

    # ---- FC head over the whole sequence in one matmul ----------------------
    fc_cp.wait()
    seq = jnp.concatenate(top, axis=0)                              # (T*B, H)
    logits_ref[...] = (
        jnp.dot(seq, fcw_sc[...], preferred_element_type=jnp.float32)
        + fcb_ref[...])


def fused_forward(emb2d, w, b, h0, c0, fc_w, fc_b, *, seq_len, batch):
    """emb2d: (T*B, E); pre-stacked LSTM weights; returns (logits2d, h_n, c_n)."""
    V = fc_w.shape[-1]
    assert EMBED_DIM == LSTM_SIZE, "act reuse requires E == H"
    assert batch % 8 == 0, "batch must be sublane-aligned (multiple of 8)"
    assert emb2d.shape == (seq_len * batch, EMBED_DIM)

    vmem = pl.BlockSpec(memory_space=pltpu.MemorySpace.VMEM)
    hbm = pl.BlockSpec(memory_space=pl.ANY)
    return pl.pallas_call(
        functools.partial(_fused_forward_kernel, seq_len=seq_len, batch=batch),
        out_shape=(
            jax.ShapeDtypeStruct((seq_len * batch, V), jnp.float32),
            jax.ShapeDtypeStruct((NUM_LAYERS, batch, LSTM_SIZE), jnp.float32),
            jax.ShapeDtypeStruct((NUM_LAYERS, batch, LSTM_SIZE), jnp.float32),
        ),
        in_specs=[vmem, hbm, vmem, vmem, vmem, hbm, vmem],
        out_specs=(vmem, vmem, vmem),
        scratch_shapes=[
            pltpu.VMEM((NUM_LAYERS, 2 * LSTM_SIZE, 4 * LSTM_SIZE),
                       jnp.float32),                        # LSTM weights
            pltpu.VMEM((LSTM_SIZE, V), jnp.float32),        # FC weight
            pltpu.SemaphoreType.DMA((NUM_LAYERS + 1,)),     # per-copy sems
        ],
    )(emb2d, w, b, h0, c0, fc_w, fc_b)


# ------------------------------ Model wrapper --------------------------------
def init_params(key, n_vocab):
    keys = jax.random.split(key, 3 + 4 * NUM_LAYERS)
    k = iter(keys)
    scale = 1.0 / np.sqrt(LSTM_SIZE)

    # nn.Embedding default init: N(0, 1)
    embedding = jax.random.normal(next(k), (n_vocab, EMBED_DIM), jnp.float32)
    # nn.Linear weight stored pre-transposed as (H, V)
    fc_w = jax.random.uniform(next(k), (LSTM_SIZE, n_vocab), jnp.float32,
                              -scale, scale)
    fc_b = jax.random.uniform(next(k), (1, n_vocab), jnp.float32,
                              -scale, scale)

    # PyTorch stores (4H, in)/(4H, H); we pre-transpose for x @ W layout and
    # pre-stack once (no per-forward jnp.stack): w[l] = [W_ih ; W_hh] (2H, 4H).
    w_layers, b_layers = [], []
    for layer in range(NUM_LAYERS):
        in_dim = EMBED_DIM if layer == 0 else LSTM_SIZE
        w_ih = jax.random.uniform(next(k), (in_dim, 4 * LSTM_SIZE),
                                  jnp.float32, -scale, scale)
        w_hh = jax.random.uniform(next(k), (LSTM_SIZE, 4 * LSTM_SIZE),
                                  jnp.float32, -scale, scale)
        b_ih = jax.random.uniform(next(k), (1, 4 * LSTM_SIZE), jnp.float32,
                                  -scale, scale)
        b_hh = jax.random.uniform(next(k), (1, 4 * LSTM_SIZE), jnp.float32,
                                  -scale, scale)
        w_layers.append(jnp.concatenate([w_ih, w_hh], axis=0))
        b_layers.append(b_ih + b_hh)

    return {
        "embedding": embedding,
        "w": jnp.stack(w_layers),        # (L, 2H, 4H)
        "b": jnp.stack(b_layers),        # (L, 1, 4H)
        "fc_w": fc_w,                    # (H, V)
        "fc_b": fc_b,                    # (1, V)
    }


@jax.jit
def model_forward(params, x, prev_state):
    """Equivalent of Model.forward(x, prev_state) in inference mode."""
    h0, c0 = prev_state                          # each (num_layers, B, H)
    T, B = x.shape
    # TODO(synk): embedding gather stays in JAX glue (no blocked gather needed
    # at this size); the rest of the forward runs inside one Pallas kernel.
    emb = params["embedding"][x]                 # (T, B, E)
    emb2d = emb.reshape(T * B, EMBED_DIM)

    logits2d, h_n, c_n = fused_forward(
        emb2d, params["w"], params["b"], h0, c0, params["fc_w"],
        params["fc_b"], seq_len=T, batch=B)
    logits = logits2d.reshape(T, B, -1)
    return logits, (h_n, c_n)


# --------------------------- pure-JAX reference -------------------------------
def _reference_forward(params, x, prev_state):
    h0, c0 = prev_state
    out = params["embedding"][x]
    H = LSTM_SIZE
    hs, cs = [], []
    for layer in range(NUM_LAYERS):
        w_ih = params["w"][layer, :H]
        w_hh = params["w"][layer, H:]
        b = params["b"][layer, 0]

        def step(carry, x_t, w_ih=w_ih, w_hh=w_hh, b=b):
            h, c = carry
            gates = x_t @ w_ih + h @ w_hh + b
            i = jax.nn.sigmoid(gates[:, :H])
            f = jax.nn.sigmoid(gates[:, H:2 * H])
            g = jnp.tanh(gates[:, 2 * H:3 * H])
            o = jax.nn.sigmoid(gates[:, 3 * H:])
            c = f * c + i * g
            h = o * jnp.tanh(c)
            return (h, c), h

        (hT, cT), out = jax.lax.scan(step, (h0[layer], c0[layer]), out)
        hs.append(hT)
        cs.append(cT)
    logits = out @ params["fc_w"] + params["fc_b"][0]
    return logits, (jnp.stack(hs), jnp.stack(cs))


if __name__ == "__main__":
    n_vocab = 256
    T, B = 8, 8                               # sequence length, batch

    key = jax.random.PRNGKey(0)
    k_param, k_x = jax.random.split(key)
    params = init_params(k_param, n_vocab)

    x = jax.random.randint(k_x, (T, B), 0, n_vocab, dtype=jnp.int32)
    prev_state = (jnp.zeros((NUM_LAYERS, B, LSTM_SIZE), jnp.float32),
                  jnp.zeros((NUM_LAYERS, B, LSTM_SIZE), jnp.float32))

    logits, (h_n, c_n) = model_forward(params, x, prev_state)
    jax.block_until_ready((logits, h_n, c_n))

    ref_logits, (ref_h, ref_c) = _reference_forward(params, x, prev_state)
    assert logits.shape == (T, B, n_vocab)
    assert h_n.shape == (NUM_LAYERS, B, LSTM_SIZE)
    np.testing.assert_allclose(np.asarray(logits), np.asarray(ref_logits),
                               rtol=1e-4, atol=1e-4)
    np.testing.assert_allclose(np.asarray(h_n), np.asarray(ref_h),
                               rtol=1e-4, atol=1e-4)
    np.testing.assert_allclose(np.asarray(c_n), np.asarray(ref_c),
                               rtol=1e-4, atol=1e-4)

    print("KERNEL_OK")
</pallas_src>

<mosaic_0001>
module attributes {stable_mosaic.version = 11 : i64} {
  func.func @_fused_forward_kernel(%arg0: memref<64x128xf32, #tpu.memory_space<vmem>>, %arg1: memref<3x256x512xf32, #tpu.memory_space<any>>, %arg2: memref<3x1x512xf32, #tpu.memory_space<vmem>>, %arg3: memref<3x8x128xf32, #tpu.memory_space<vmem>>, %arg4: memref<3x8x128xf32, #tpu.memory_space<vmem>>, %arg5: memref<128x256xf32, #tpu.memory_space<any>>, %arg6: memref<1x256xf32, #tpu.memory_space<vmem>>, %arg7: memref<64x256xf32, #tpu.memory_space<vmem>>, %arg8: memref<3x8x128xf32, #tpu.memory_space<vmem>>, %arg9: memref<3x8x128xf32, #tpu.memory_space<vmem>>, %arg10: memref<3x256x512xf32, #tpu.memory_space<vmem>>, %arg11: memref<128x256xf32, #tpu.memory_space<vmem>>, %arg12: memref<4x!tpu.dma_semaphore, #tpu.memory_space<semaphore_mem>>) attributes {dimension_semantics = [], scalar_prefetch = 0 : i64, scratch_operands = 3 : i64, tpu.core_type = #tpu.core_type<tc>} {
    %c0_i32 = arith.constant 0 : i32
    %c0_i32_0 = arith.constant 0 : i32
    %c0_i32_1 = arith.constant 0 : i32
    %c0_i32_2 = arith.constant 0 : i32
    %c0_i32_3 = arith.constant 0 : i32
    %0 = tpu.memref_slice %arg1[%c0_i32, %c0_i32_2, %c0_i32_3] : memref<3x256x512xf32, #tpu.memory_space<any>> -> memref<1x256x512xf32, #tpu.memory_space<any>>
    %1 = tpu.memref_squeeze %0 : memref<1x256x512xf32, #tpu.memory_space<any>> -> memref<256x512xf32, #tpu.memory_space<any>>
    %c0_i32_4 = arith.constant 0 : i32
    %c0_i32_5 = arith.constant 0 : i32
    %2 = tpu.memref_slice %arg10[%c0_i32_0, %c0_i32_4, %c0_i32_5] : memref<3x256x512xf32, #tpu.memory_space<vmem>> -> memref<1x256x512xf32, #tpu.memory_space<vmem>>
    %3 = tpu.memref_squeeze %2 : memref<1x256x512xf32, #tpu.memory_space<vmem>> -> memref<256x512xf32, #tpu.memory_space<vmem>>
    %4 = tpu.memref_slice %arg12[%c0_i32_1] : memref<4x!tpu.dma_semaphore, #tpu.memory_space<semaphore_mem>> -> memref<1x!tpu.dma_semaphore, #tpu.memory_space<semaphore_mem>>
    %5 = tpu.memref_squeeze %4 : memref<1x!tpu.dma_semaphore, #tpu.memory_space<semaphore_mem>> -> memref<!tpu.dma_semaphore, #tpu.memory_space<semaphore_mem>>
    tpu.enqueue_dma source(%1 : memref<256x512xf32, #tpu.memory_space<any>>) target(%3 : memref<256x512xf32, #tpu.memory_space<vmem>>) target_semaphore(%5 : memref<!tpu.dma_semaphore, #tpu.memory_space<semaphore_mem>>)
    %c1_i32 = arith.constant 1 : i32
    %c1_i32_6 = arith.constant 1 : i32
    %c1_i32_7 = arith.constant 1 : i32
    %c0_i32_8 = arith.constant 0 : i32
    %c0_i32_9 = arith.constant 0 : i32
    %6 = tpu.memref_slice %arg1[%c1_i32, %c0_i32_8, %c0_i32_9] : memref<3x256x512xf32, #tpu.memory_space<any>> -> memref<1x256x512xf32, #tpu.memory_space<any>>
    %7 = tpu.memref_squeeze %6 : memref<1x256x512xf32, #tpu.memory_space<any>> -> memref<256x512xf32, #tpu.memory_space<any>>
    %c0_i32_10 = arith.constant 0 : i32
    %c0_i32_11 = arith.constant 0 : i32
    %8 = tpu.memref_slice %arg10[%c1_i32_6, %c0_i32_10, %c0_i32_11] : memref<3x256x512xf32, #tpu.memory_space<vmem>> -> memref<1x256x512xf32, #tpu.memory_space<vmem>>
    %9 = tpu.memref_squeeze %8 : memref<1x256x512xf32, #tpu.memory_space<vmem>> -> memref<256x512xf32, #tpu.memory_space<vmem>>
    %10 = tpu.memref_slice %arg12[%c1_i32_7] : memref<4x!tpu.dma_semaphore, #tpu.memory_space<semaphore_mem>> -> memref<1x!tpu.dma_semaphore, #tpu.memory_space<semaphore_mem>>
    %11 = tpu.memref_squeeze %10 : memref<1x!tpu.dma_semaphore, #tpu.memory_space<semaphore_mem>> -> memref<!tpu.dma_semaphore, #tpu.memory_space<semaphore_mem>>
    tpu.enqueue_dma source(%7 : memref<256x512xf32, #tpu.memory_space<any>>) target(%9 : memref<256x512xf32, #tpu.memory_space<vmem>>) target_semaphore(%11 : memref<!tpu.dma_semaphore, #tpu.memory_space<semaphore_mem>>)
    %c2_i32 = arith.constant 2 : i32
    %c2_i32_12 = arith.constant 2 : i32
    %c2_i32_13 = arith.constant 2 : i32
    %c0_i32_14 = arith.constant 0 : i32
    %c0_i32_15 = arith.constant 0 : i32
    %12 = tpu.memref_slice %arg1[%c2_i32, %c0_i32_14, %c0_i32_15] : memref<3x256x512xf32, #tpu.memory_space<any>> -> memref<1x256x512xf32, #tpu.memory_space<any>>
    %13 = tpu.memref_squeeze %12 : memref<1x256x512xf32, #tpu.memory_space<any>> -> memref<256x512xf32, #tpu.memory_space<any>>
    %c0_i32_16 = arith.constant 0 : i32
    %c0_i32_17 = arith.constant 0 : i32
    %14 = tpu.memref_slice %arg10[%c2_i32_12, %c0_i32_16, %c0_i32_17] : memref<3x256x512xf32, #tpu.memory_space<vmem>> -> memref<1x256x512xf32, #tpu.memory_space<vmem>>
    %15 = tpu.memref_squeeze %14 : memref<1x256x512xf32, #tpu.memory_space<vmem>> -> memref<256x512xf32, #tpu.memory_space<vmem>>
    %16 = tpu.memref_slice %arg12[%c2_i32_13] : memref<4x!tpu.dma_semaphore, #tpu.memory_space<semaphore_mem>> -> memref<1x!tpu.dma_semaphore, #tpu.memory_space<semaphore_mem>>
    %17 = tpu.memref_squeeze %16 : memref<1x!tpu.dma_semaphore, #tpu.memory_space<semaphore_mem>> -> memref<!tpu.dma_semaphore, #tpu.memory_space<semaphore_mem>>
    tpu.enqueue_dma source(%13 : memref<256x512xf32, #tpu.memory_space<any>>) target(%15 : memref<256x512xf32, #tpu.memory_space<vmem>>) target_semaphore(%17 : memref<!tpu.dma_semaphore, #tpu.memory_space<semaphore_mem>>)
    %c3_i32 = arith.constant 3 : i32
    %18 = tpu.memref_slice %arg12[%c3_i32] : memref<4x!tpu.dma_semaphore, #tpu.memory_space<semaphore_mem>> -> memref<1x!tpu.dma_semaphore, #tpu.memory_space<semaphore_mem>>
    %19 = tpu.memref_squeeze %18 : memref<1x!tpu.dma_semaphore, #tpu.memory_space<semaphore_mem>> -> memref<!tpu.dma_semaphore, #tpu.memory_space<semaphore_mem>>
    tpu.enqueue_dma source(%arg5 : memref<128x256xf32, #tpu.memory_space<any>>) target(%arg11 : memref<128x256xf32, #tpu.memory_space<vmem>>) target_semaphore(%19 : memref<!tpu.dma_semaphore, #tpu.memory_space<semaphore_mem>>)
    %c0 = arith.constant 0 : index
    %c0_18 = arith.constant 0 : index
    %c0_19 = arith.constant 0 : index
    %20 = vector.load %arg3[%c0, %c0_18, %c0_19] : memref<3x8x128xf32, #tpu.memory_space<vmem>>, vector<1x8x128xf32>
    %21 = vector.shape_cast %20 : vector<1x8x128xf32> to vector<8x128xf32>
    %c1 = arith.constant 1 : index
    %c0_20 = arith.constant 0 : index
    %c0_21 = arith.constant 0 : index
    %22 = vector.load %arg3[%c1, %c0_20, %c0_21] : memref<3x8x128xf32, #tpu.memory_space<vmem>>, vector<1x8x128xf32>
    %23 = vector.shape_cast %22 : vector<1x8x128xf32> to vector<8x128xf32>
    %c2 = arith.constant 2 : index
    %c0_22 = arith.constant 0 : index
    %c0_23 = arith.constant 0 : index
    %24 = vector.load %arg3[%c2, %c0_22, %c0_23] : memref<3x8x128xf32, #tpu.memory_space<vmem>>, vector<1x8x128xf32>
    %25 = vector.shape_cast %24 : vector<1x8x128xf32> to vector<8x128xf32>
    %c0_24 = arith.constant 0 : index
    %c0_25 = arith.constant 0 : index
    %c0_26 = arith.constant 0 : index
    %26 = vector.load %arg4[%c0_24, %c0_25, %c0_26] : memref<3x8x128xf32, #tpu.memory_space<vmem>>, vector<1x8x128xf32>
    %27 = vector.shape_cast %26 : vector<1x8x128xf32> to vector<8x128xf32>
    %c1_27 = arith.constant 1 : index
    %c0_28 = arith.constant 0 : index
    %c0_29 = arith.constant 0 : index
    %28 = vector.load %arg4[%c1_27, %c0_28, %c0_29] : memref<3x8x128xf32, #tpu.memory_space<vmem>>, vector<1x8x128xf32>
    %29 = vector.shape_cast %28 : vector<1x8x128xf32> to vector<8x128xf32>
    %c2_30 = arith.constant 2 : index
    %c0_31 = arith.constant 0 : index
    %c0_32 = arith.constant 0 : index
    %30 = vector.load %arg4[%c2_30, %c0_31, %c0_32] : memref<3x8x128xf32, #tpu.memory_space<vmem>>, vector<1x8x128xf32>
    %31 = vector.shape_cast %30 : vector<1x8x128xf32> to vector<8x128xf32>
    %c0_i32_33 = arith.constant 0 : i32
    %c0_i32_34 = arith.constant 0 : i32
    %c0_i32_35 = arith.constant 0 : i32
    %c0_i32_36 = arith.constant 0 : i32
    %c0_i32_37 = arith.constant 0 : i32
    %32 = tpu.memref_slice %arg1[%c0_i32_33, %c0_i32_36, %c0_i32_37] : memref<3x256x512xf32, #tpu.memory_space<any>> -> memref<1x256x512xf32, #tpu.memory_space<any>>
    %33 = tpu.memref_squeeze %32 : memref<1x256x512xf32, #tpu.memory_space<any>> -> memref<256x512xf32, #tpu.memory_space<any>>
    %c0_i32_38 = arith.constant 0 : i32
    %c0_i32_39 = arith.constant 0 : i32
    %34 = tpu.memref_slice %arg10[%c0_i32_34, %c0_i32_38, %c0_i32_39] : memref<3x256x512xf32, #tpu.memory_space<vmem>> -> memref<1x256x512xf32, #tpu.memory_space<vmem>>
    %35 = tpu.memref_squeeze %34 : memref<1x256x512xf32, #tpu.memory_space<vmem>> -> memref<256x512xf32, #tpu.memory_space<vmem>>
    %36 = tpu.memref_slice %arg12[%c0_i32_35] : memref<4x!tpu.dma_semaphore, #tpu.memory_space<semaphore_mem>> -> memref<1x!tpu.dma_semaphore, #tpu.memory_space<semaphore_mem>>
    %37 = tpu.memref_squeeze %36 : memref<1x!tpu.dma_semaphore, #tpu.memory_space<semaphore_mem>> -> memref<!tpu.dma_semaphore, #tpu.memory_space<semaphore_mem>>
    tpu.wait_dma2 semaphore(%37 : memref<!tpu.dma_semaphore, #tpu.memory_space<semaphore_mem>>) src(%33 : memref<256x512xf32, #tpu.memory_space<any>>) dst(%35 : memref<256x512xf32, #tpu.memory_space<vmem>>)
    %c0_40 = arith.constant 0 : index
    %c0_41 = arith.constant 0 : index
    %38 = vector.load %arg0[%c0_40, %c0_41] : memref<64x128xf32, #tpu.memory_space<vmem>>, vector<8x128xf32>
    %39 = tpu.concatenate %38, %21 in 1 : vector<8x128xf32>, vector<8x128xf32> -> vector<8x256xf32>
    %c0_42 = arith.constant 0 : index
    %c0_43 = arith.constant 0 : index
    %c0_44 = arith.constant 0 : index
    %40 = vector.load %arg10[%c0_42, %c0_43, %c0_44] : memref<3x256x512xf32, #tpu.memory_space<vmem>>, vector<1x256x512xf32>
    %41 = vector.shape_cast %40 : vector<1x256x512xf32> to vector<256x512xf32>
    %cst = arith.constant dense<0.000000e+00> : vector<8x512xf32>
    %42 = tpu.matmul %39, %41, %cst {dimension_numbers = #tpu.dot_dimension_numbers<[1], [0], [0], [1], [0, 0, 1, 1], [], []>} : vector<8x256xf32>, vector<256x512xf32>, vector<8x512xf32> -> vector<8x512xf32>
    %c0_45 = arith.constant 0 : index
    %c0_46 = arith.constant 0 : index
    %c0_47 = arith.constant 0 : index
    %43 = vector.load %arg2[%c0_45, %c0_46, %c0_47] : memref<3x1x512xf32, #tpu.memory_space<vmem>>, vector<1x1x512xf32>
    %44 = vector.shape_cast %43 : vector<1x1x512xf32> to vector<1x512xf32>
    %45 = vector.broadcast %44 : vector<1x512xf32> to vector<8x512xf32>
    %46 = arith.addf %42, %45 : vector<8x512xf32>
    %47 = vector.extract_strided_slice %46 {offsets = [0, 0], sizes = [8, 128], strides = [1, 1]} : vector<8x512xf32> to vector<8x128xf32>
    %cst_48 = arith.constant 5.000000e-01 : f32
    %48 = vector.broadcast %cst_48 : f32 to vector<8x128xf32>
    %49 = arith.mulf %48, %47 : vector<8x128xf32>
    %50 = math.tanh %49 : vector<8x128xf32>
    %cst_49 = arith.constant 5.000000e-01 : f32
    %51 = vector.broadcast %cst_49 : f32 to vector<8x128xf32>
    %52 = arith.mulf %51, %50 : vector<8x128xf32>
    %cst_50 = arith.constant 5.000000e-01 : f32
    %53 = vector.broadcast %cst_50 : f32 to vector<8x128xf32>
    %54 = arith.addf %52, %53 : vector<8x128xf32>
    %55 = vector.extract_strided_slice %46 {offsets = [0, 128], sizes = [8, 128], strides = [1, 1]} : vector<8x512xf32> to vector<8x128xf32>
    %cst_51 = arith.constant 5.000000e-01 : f32
    %56 = vector.broadcast %cst_51 : f32 to vector<8x128xf32>
    %57 = arith.mulf %56, %55 : vector<8x128xf32>
    %58 = math.tanh %57 : vector<8x128xf32>
    %cst_52 = arith.constant 5.000000e-01 : f32
    %59 = vector.broadcast %cst_52 : f32 to vector<8x128xf32>
    %60 = arith.mulf %59, %58 : vector<8x128xf32>
    %cst_53 = arith.constant 5.000000e-01 : f32
    %61 = vector.broadcast %cst_53 : f32 to vector<8x128xf32>
    %62 = arith.addf %60, %61 : vector<8x128xf32>
    %63 = vector.extract_strided_slice %46 {offsets = [0, 256], sizes = [8, 128], strides = [1, 1]} : vector<8x512xf32> to vector<8x128xf32>
    %64 = math.tanh %63 : vector<8x128xf32>
    %65 = vector.extract_strided_slice %46 {offsets = [0, 384], sizes = [8, 128], strides = [1, 1]} : vector<8x512xf32> to vector<8x128xf32>
    %cst_54 = arith.constant 5.000000e-01 : f32
    %66 = vector.broadcast %cst_54 : f32 to vector<8x128xf32>
    %67 = arith.mulf %66, %65 : vector<8x128xf32>
    %68 = math.tanh %67 : vector<8x128xf32>
    %cst_55 = arith.constant 5.000000e-01 : f32
    %69 = vector.broadcast %cst_55 : f32 to vector<8x128xf32>
    %70 = arith.mulf %69, %68 : vector<8x128xf32>
    %cst_56 = arith.constant 5.000000e-01 : f32
    %71 = vector.broadcast %cst_56 : f32 to vector<8x128xf32>
    %72 = arith.addf %70, %71 : vector<8x128xf32>
    %73 = arith.mulf %62, %27 : vector<8x128xf32>
    %74 = arith.mulf %54, %64 : vector<8x128xf32>
    %75 = arith.addf %73, %74 : vector<8x128xf32>
    %76 = math.tanh %75 : vector<8x128xf32>
    %77 = arith.mulf %72, %76 : vector<8x128xf32>
    %c1_i32_57 = arith.constant 1 : i32
    %c1_i32_58 = arith.constant 1 : i32
    %c1_i32_59 = arith.constant 1 : i32
    %c0_i32_60 = arith.constant 0 : i32
    %c0_i32_61 = arith.constant 0 : i32
    %78 = tpu.memref_slice %arg1[%c1_i32_57, %c0_i32_60, %c0_i32_61] : memref<3x256x512xf32, #tpu.memory_space<any>> -> memref<1x256x512xf32, #tpu.memory_space<any>>
    %79 = tpu.memref_squeeze %78 : memref<1x256x512xf32, #tpu.memory_space<any>> -> memref<256x512xf32, #tpu.memory_space<any>>
    %c0_i32_62 = arith.constant 0 : i32
    %c0_i32_63 = arith.constant 0 : i32
    %80 = tpu.memref_slice %arg10[%c1_i32_58, %c0_i32_62, %c0_i32_63] : memref<3x256x512xf32, #tpu.memory_space<vmem>> -> memref<1x256x512xf32, #tpu.memory_space<vmem>>
    %81 = tpu.memref_squeeze %80 : memref<1x256x512xf32, #tpu.memory_space<vmem>> -> memref<256x512xf32, #tpu.memory_space<vmem>>
    %82 = tpu.memref_slice %arg12[%c1_i32_59] : memref<4x!tpu.dma_semaphore, #tpu.memory_space<semaphore_mem>> -> memref<1x!tpu.dma_semaphore, #tpu.memory_space<semaphore_mem>>
    %83 = tpu.memref_squeeze %82 : memref<1x!tpu.dma_semaphore, #tpu.memory_space<semaphore_mem>> -> memref<!tpu.dma_semaphore, #tpu.memory_space<semaphore_mem>>
    tpu.wait_dma2 semaphore(%83 : memref<!tpu.dma_semaphore, #tpu.memory_space<semaphore_mem>>) src(%79 : memref<256x512xf32, #tpu.memory_space<any>>) dst(%81 : memref<256x512xf32, #tpu.memory_space<vmem>>)
    %c8 = arith.constant 8 : index
    %c0_64 = arith.constant 0 : index
    %84 = vector.load %arg0[%c8, %c0_64] : memref<64x128xf32, #tpu.memory_space<vmem>>, vector<8x128xf32>
    %85 = tpu.concatenate %84, %77 in 1 : vector<8x128xf32>, vector<8x128xf32> -> vector<8x256xf32>
    %c0_65 = arith.constant 0 : index
    %c0_66 = arith.constant 0 : index
    %c0_67 = arith.constant 0 : index
    %86 = vector.load %arg10[%c0_65, %c0_66, %c0_67] : memref<3x256x512xf32, #tpu.memory_space<vmem>>, vector<1x256x512xf32>
    %87 = vector.shape_cast %86 : vector<1x256x512xf32> to vector<256x512xf32>
    %cst_68 = arith.constant dense<0.000000e+00> : vector<8x512xf32>
    %88 = tpu.matmul %85, %87, %cst_68 {dimension_numbers = #tpu.dot_dimension_numbers<[1], [0], [0], [1], [0, 0, 1, 1], [], []>} : vector<8x256xf32>, vector<256x512xf32>, vector<8x512xf32> -> vector<8x512xf32>
    %c0_69 = arith.constant 0 : index
    %c0_70 = arith.constant 0 : index
    %c0_71 = arith.constant 0 : index
    %89 = vector.load %arg2[%c0_69, %c0_70, %c0_71] : memref<3x1x512xf32, #tpu.memory_space<vmem>>, vector<1x1x512xf32>
    %90 = vector.shape_cast %89 : vector<1x1x512xf32> to vector<1x512xf32>
    %91 = vector.broadcast %90 : vector<1x512xf32> to vector<8x512xf32>
    %92 = arith.addf %88, %91 : vector<8x512xf32>
    %93 = vector.extract_strided_slice %92 {offsets = [0, 0], sizes = [8, 128], strides = [1, 1]} : vector<8x512xf32> to vector<8x128xf32>
    %cst_72 = arith.constant 5.000000e-01 : f32
    %94 = vector.broadcast %cst_72 : f32 to vector<8x128xf32>
    %95 = arith.mulf %94, %93 : vector<8x128xf32>
    %96 = math.tanh %95 : vector<8x128xf32>
    %cst_73 = arith.constant 5.000000e-01 : f32
    %97 = vector.broadcast %cst_73 : f32 to vector<8x128xf32>
    %98 = arith.mulf %97, %96 : vector<8x128xf32>
    %cst_74 = arith.constant 5.000000e-01 : f32
    %99 = vector.broadcast %cst_74 : f32 to vector<8x128xf32>
    %100 = arith.addf %98, %99 : vector<8x128xf32>
    %101 = vector.extract_strided_slice %92 {offsets = [0, 128], sizes = [8, 128], strides = [1, 1]} : vector<8x512xf32> to vector<8x128xf32>
    %cst_75 = arith.constant 5.000000e-01 : f32
    %102 = vector.broadcast %cst_75 : f32 to vector<8x128xf32>
    %103 = arith.mulf %102, %101 : vector<8x128xf32>
    %104 = math.tanh %103 : vector<8x128xf32>
    %cst_76 = arith.constant 5.000000e-01 : f32
    %105 = vector.broadcast %cst_76 : f32 to vector<8x128xf32>
    %106 = arith.mulf %105, %104 : vector<8x128xf32>
    %cst_77 = arith.constant 5.000000e-01 : f32
    %107 = vector.broadcast %cst_77 : f32 to vector<8x128xf32>
    %108 = arith.addf %106, %107 : vector<8x128xf32>
    %109 = vector.extract_strided_slice %92 {offsets = [0, 256], sizes = [8, 128], strides = [1, 1]} : vector<8x512xf32> to vector<8x128xf32>
    %110 = math.tanh %109 : vector<8x128xf32>
    %111 = vector.extract_strided_slice %92 {offsets = [0, 384], sizes = [8, 128], strides = [1, 1]} : vector<8x512xf32> to vector<8x128xf32>
    %cst_78 = arith.constant 5.000000e-01 : f32
    %112 = vector.broadcast %cst_78 : f32 to vector<8x128xf32>
    %113 = arith.mulf %112, %111 : vector<8x128xf32>
    %114 = math.tanh %113 : vector<8x128xf32>
    %cst_79 = arith.constant 5.000000e-01 : f32
    %115 = vector.broadcast %cst_79 : f32 to vector<8x128xf32>
    %116 = arith.mulf %115, %114 : vector<8x128xf32>
    %cst_80 = arith.constant 5.000000e-01 : f32
    %117 = vector.broadcast %cst_80 : f32 to vector<8x128xf32>
    %118 = arith.addf %116, %117 : vector<8x128xf32>
    %119 = arith.mulf %108, %75 : vector<8x128xf32>
    %120 = arith.mulf %100, %110 : vector<8x128xf32>
    %121 = arith.addf %119, %120 : vector<8x128xf32>
    %122 = math.tanh %121 : vector<8x128xf32>
    %123 = arith.mulf %118, %122 : vector<8x128xf32>
    %124 = tpu.concatenate %77, %23 in 1 : vector<8x128xf32>, vector<8x128xf32> -> vector<8x256xf32>
    %c1_81 = arith.constant 1 : index
    %c0_82 = arith.constant 0 : index
    %c0_83 = arith.constant 0 : index
    %125 = vector.load %arg10[%c1_81, %c0_82, %c0_83] : memref<3x256x512xf32, #tpu.memory_space<vmem>>, vector<1x256x512xf32>
    %126 = vector.shape_cast %125 : vector<1x256x512xf32> to vector<256x512xf32>
    %cst_84 = arith.constant dense<0.000000e+00> : vector<8x512xf32>
    %127 = tpu.matmul %124, %126, %cst_84 {dimension_numbers = #tpu.dot_dimension_numbers<[1], [0], [0], [1], [0, 0, 1, 1], [], []>} : vector<8x256xf32>, vector<256x512xf32>, vector<8x512xf32> -> vector<8x512xf32>
    %c1_85 = arith.constant 1 : index
    %c0_86 = arith.constant 0 : index
    %c0_87 = arith.constant 0 : index
    %128 = vector.load %arg2[%c1_85, %c0_86, %c0_87] : memref<3x1x512xf32, #tpu.memory_space<vmem>>, vector<1x1x512xf32>
    %129 = vector.shape_cast %128 : vector<1x1x512xf32> to vector<1x512xf32>
    %130 = vector.broadcast %129 : vector<1x512xf32> to vector<8x512xf32>
    %131 = arith.addf %127, %130 : vector<8x512xf32>
    %132 = vector.extract_strided_slice %131 {offsets = [0, 0], sizes = [8, 128], strides = [1, 1]} : vector<8x512xf32> to vector<8x128xf32>
    %cst_88 = arith.constant 5.000000e-01 : f32
    %133 = vector.broadcast %cst_88 : f32 to vector<8x128xf32>
    %134 = arith.mulf %133, %132 : vector<8x128xf32>
    %135 = math.tanh %134 : vector<8x128xf32>
    %cst_89 = arith.constant 5.000000e-01 : f32
    %136 = vector.broadcast %cst_89 : f32 to vector<8x128xf32>
    %137 = arith.mulf %136, %135 : vector<8x128xf32>
    %cst_90 = arith.constant 5.000000e-01 : f32
    %138 = vector.broadcast %cst_90 : f32 to vector<8x128xf32>
    %139 = arith.addf %137, %138 : vector<8x128xf32>
    %140 = vector.extract_strided_slice %131 {offsets = [0, 128], sizes = [8, 128], strides = [1, 1]} : vector<8x512xf32> to vector<8x128xf32>
    %cst_91 = arith.constant 5.000000e-01 : f32
    %141 = vector.broadcast %cst_91 : f32 to vector<8x128xf32>
    %142 = arith.mulf %141, %140 : vector<8x128xf32>
    %143 = math.tanh %142 : vector<8x128xf32>
    %cst_92 = arith.constant 5.000000e-01 : f32
    %144 = vector.broadcast %cst_92 : f32 to vector<8x128xf32>
    %145 = arith.mulf %144, %143 : vector<8x128xf32>
    %cst_93 = arith.constant 5.000000e-01 : f32
    %146 = vector.broadcast %cst_93 : f32 to vector<8x128xf32>
    %147 = arith.addf %145, %146 : vector<8x128xf32>
    %148 = vector.extract_strided_slice %131 {offsets = [0, 256], sizes = [8, 128], strides = [1, 1]} : vector<8x512xf32> to vector<8x128xf32>
    %149 = math.tanh %148 : vector<8x128xf32>
    %150 = vector.extract_strided_slice %131 {offsets = [0, 384], sizes = [8, 128], strides = [1, 1]} : vector<8x512xf32> to vector<8x128xf32>
    %cst_94 = arith.constant 5.000000e-01 : f32
    %151 = vector.broadcast %cst_94 : f32 to vector<8x128xf32>
    %152 = arith.mulf %151, %150 : vector<8x128xf32>
    %153 = math.tanh %152 : vector<8x128xf32>
    %cst_95 = arith.constant 5.000000e-01 : f32
    %154 = vector.broadcast %cst_95 : f32 to vector<8x128xf32>
    %155 = arith.mulf %154, %153 : vector<8x128xf32>
    %cst_96 = arith.constant 5.000000e-01 : f32
    %156 = vector.broadcast %cst_96 : f32 to vector<8x128xf32>
    %157 = arith.addf %155, %156 : vector<8x128xf32>
    %158 = arith.mulf %147, %29 : vector<8x128xf32>
    %159 = arith.mulf %139, %149 : vector<8x128xf32>
    %160 = arith.addf %158, %159 : vector<8x128xf32>
    %161 = math.tanh %160 : vector<8x128xf32>
    %162 = arith.mulf %157, %161 : vector<8x128xf32>
    %c2_i32_97 = arith.constant 2 : i32
    %c2_i32_98 = arith.constant 2 : i32
    %c2_i32_99 = arith.constant 2 : i32
    %c0_i32_100 = arith.constant 0 : i32
    %c0_i32_101 = arith.constant 0 : i32
    %163 = tpu.memref_slice %arg1[%c2_i32_97, %c0_i32_100, %c0_i32_101] : memref<3x256x512xf32, #tpu.memory_space<any>> -> memref<1x256x512xf32, #tpu.memory_space<any>>
    %164 = tpu.memref_squeeze %163 : memref<1x256x512xf32, #tpu.memory_space<any>> -> memref<256x512xf32, #tpu.memory_space<any>>
    %c0_i32_102 = arith.constant 0 : i32
    %c0_i32_103 = arith.constant 0 : i32
    %165 = tpu.memref_slice %arg10[%c2_i32_98, %c0_i32_102, %c0_i32_103] : memref<3x256x512xf32, #tpu.memory_space<vmem>> -> memref<1x256x512xf32, #tpu.memory_space<vmem>>
    %166 = tpu.memref_squeeze %165 : memref<1x256x512xf32, #tpu.memory_space<vmem>> -> memref<256x512xf32, #tpu.memory_space<vmem>>
    %167 = tpu.memref_slice %arg12[%c2_i32_99] : memref<4x!tpu.dma_semaphore, #tpu.memory_space<semaphore_mem>> -> memref<1x!tpu.dma_semaphore, #tpu.memory_space<semaphore_mem>>
    %168 = tpu.memref_squeeze %167 : memref<1x!tpu.dma_semaphore, #tpu.memory_space<semaphore_mem>> -> memref<!tpu.dma_semaphore, #tpu.memory_space<semaphore_mem>>
    tpu.wait_dma2 semaphore(%168 : memref<!tpu.dma_semaphore, #tpu.memory_space<semaphore_mem>>) src(%164 : memref<256x512xf32, #tpu.memory_space<any>>) dst(%166 : memref<256x512xf32, #tpu.memory_space<vmem>>)
    %c16 = arith.constant 16 : index
    %c0_104 = arith.constant 0 : index
    %169 = vector.load %arg0[%c16, %c0_104] : memref<64x128xf32, #tpu.memory_space<vmem>>, vector<8x128xf32>
    %170 = tpu.concatenate %169, %123 in 1 : vector<8x128xf32>, vector<8x128xf32> -> vector<8x256xf32>
    %c0_105 = arith.constant 0 : index
    %c0_106 = arith.constant 0 : index
    %c0_107 = arith.constant 0 : index
    %171 = vector.load %arg10[%c0_105, %c0_106, %c0_107] : memref<3x256x512xf32, #tpu.memory_space<vmem>>, vector<1x256x512xf32>
    %172 = vector.shape_cast %171 : vector<1x256x512xf32> to vector<256x512xf32>
    %cst_108 = arith.constant dense<0.000000e+00> : vector<8x512xf32>
    %173 = tpu.matmul %170, %172, %cst_108 {dimension_numbers = #tpu.dot_dimension_numbers<[1], [0], [0], [1], [0, 0, 1, 1], [], []>} : vector<8x256xf32>, vector<256x512xf32>, vector<8x512xf32> -> vector<8x512xf32>
    %c0_109 = arith.constant 0 : index
    %c0_110 = arith.constant 0 : index
    %c0_111 = arith.constant 0 : index
    %174 = vector.load %arg2[%c0_109, %c0_110, %c0_111] : memref<3x1x512xf32, #tpu.memory_space<vmem>>, vector<1x1x512xf32>
    %175 = vector.shape_cast %174 : vector<1x1x512xf32> to vector<1x512xf32>
    %176 = vector.broadcast %175 : vector<1x512xf32> to vector<8x512xf32>
    %177 = arith.addf %173, %176 : vector<8x512xf32>
    %178 = vector.extract_strided_slice %177 {offsets = [0, 0], sizes = [8, 128], strides = [1, 1]} : vector<8x512xf32> to vector<8x128xf32>
    %cst_112 = arith.constant 5.000000e-01 : f32
    %179 = vector.broadcast %cst_112 : f32 to vector<8x128xf32>
    %180 = arith.mulf %179, %178 : vector<8x128xf32>
    %181 = math.tanh %180 : vector<8x128xf32>
    %cst_113 = arith.constant 5.000000e-01 : f32
    %182 = vector.broadcast %cst_113 : f32 to vector<8x128xf32>
    %183 = arith.mulf %182, %181 : vector<8x128xf32>
    %cst_114 = arith.constant 5.000000e-01 : f32
    %184 = vector.broadcast %cst_114 : f32 to vector<8x128xf32>
    %185 = arith.addf %183, %184 : vector<8x128xf32>
    %186 = vector.extract_strided_slice %177 {offsets = [0, 128], sizes = [8, 128], strides = [1, 1]} : vector<8x512xf32> to vector<8x128xf32>
    %cst_115 = arith.constant 5.000000e-01 : f32
    %187 = vector.broadcast %cst_115 : f32 to vector<8x128xf32>
    %188 = arith.mulf %187, %186 : vector<8x128xf32>
    %189 = math.tanh %188 : vector<8x128xf32>
    %cst_116 = arith.constant 5.000000e-01 : f32
    %190 = vector.broadcast %cst_116 : f32 to vector<8x128xf32>
    %191 = arith.mulf %190, %189 : vector<8x128xf32>
    %cst_117 = arith.constant 5.000000e-01 : f32
    %192 = vector.broadcast %cst_117 : f32 to vector<8x128xf32>
    %193 = arith.addf %191, %192 : vector<8x128xf32>
    %194 = vector.extract_strided_slice %177 {offsets = [0, 256], sizes = [8, 128], strides = [1, 1]} : vector<8x512xf32> to vector<8x128xf32>
    %195 = math.tanh %194 : vector<8x128xf32>
    %196 = vector.extract_strided_slice %177 {offsets = [0, 384], sizes = [8, 128], strides = [1, 1]} : vector<8x512xf32> to vector<8x128xf32>
    %cst_118 = arith.constant 5.000000e-01 : f32
    %197 = vector.broadcast %cst_118 : f32 to vector<8x128xf32>
    %198 = arith.mulf %197, %196 : vector<8x128xf32>
    %199 = math.tanh %198 : vector<8x128xf32>
    %cst_119 = arith.constant 5.000000e-01 : f32
    %200 = vector.broadcast %cst_119 : f32 to vector<8x128xf32>
    %201 = arith.mulf %200, %199 : vector<8x128xf32>
    %cst_120 = arith.constant 5.000000e-01 : f32
    %202 = vector.broadcast %cst_120 : f32 to vector<8x128xf32>
    %203 = arith.addf %201, %202 : vector<8x128xf32>
    %204 = arith.mulf %193, %121 : vector<8x128xf32>
    %205 = arith.mulf %185, %195 : vector<8x128xf32>
    %206 = arith.addf %204, %205 : vector<8x128xf32>
    %207 = math.tanh %206 : vector<8x128xf32>
    %208 = arith.mulf %203, %207 : vector<8x128xf32>
    %209 = tpu.concatenate %123, %162 in 1 : vector<8x128xf32>, vector<8x128xf32> -> vector<8x256xf32>
    %c1_121 = arith.constant 1 : index
    %c0_122 = arith.constant 0 : index
    %c0_123 = arith.constant 0 : index
    %210 = vector.load %arg10[%c1_121, %c0_122, %c0_123] : memref<3x256x512xf32, #tpu.memory_space<vmem>>, vector<1x256x512xf32>
    %211 = vector.shape_cast %210 : vector<1x256x512xf32> to vector<256x512xf32>
    %cst_124 = arith.constant dense<0.000000e+00> : vector<8x512xf32>
    %212 = tpu.matmul %209, %211, %cst_124 {dimension_numbers = #tpu.dot_dimension_numbers<[1], [0], [0], [1], [0, 0, 1, 1], [], []>} : vector<8x256xf32>, vector<256x512xf32>, vector<8x512xf32> -> vector<8x512xf32>
    %c1_125 = arith.constant 1 : index
    %c0_126 = arith.constant 0 : index
    %c0_127 = arith.constant 0 : index
    %213 = vector.load %arg2[%c1_125, %c0_126, %c0_127] : memref<3x1x512xf32, #tpu.memory_space<vmem>>, vector<1x1x512xf32>
    %214 = vector.shape_cast %213 : vector<1x1x512xf32> to vector<1x512xf32>
    %215 = vector.broadcast %214 : vector<1x512xf32> to vector<8x512xf32>
    %216 = arith.addf %212, %215 : vector<8x512xf32>
    %217 = vector.extract_strided_slice %216 {offsets = [0, 0], sizes = [8, 128], strides = [1, 1]} : vector<8x512xf32> to vector<8x128xf32>
    %cst_128 = arith.constant 5.000000e-01 : f32
    %218 = vector.broadcast %cst_128 : f32 to vector<8x128xf32>
    %219 = arith.mulf %218, %217 : vector<8x128xf32>
    %220 = math.tanh %219 : vector<8x128xf32>
    %cst_129 = arith.constant 5.000000e-01 : f32
    %221 = vector.broadcast %cst_129 : f32 to vector<8x128xf32>
    %222 = arith.mulf %221, %220 : vector<8x128xf32>
    %cst_130 = arith.constant 5.000000e-01 : f32
    %223 = vector.broadcast %cst_130 : f32 to vector<8x128xf32>
    %224 = arith.addf %222, %223 : vector<8x128xf32>
    %225 = vector.extract_strided_slice %216 {offsets = [0, 128], sizes = [8, 128], strides = [1, 1]} : vector<8x512xf32> to vector<8x128xf32>
    %cst_131 = arith.constant 5.000000e-01 : f32
    %226 = vector.broadcast %cst_131 : f32 to vector<8x128xf32>
    %227 = arith.mulf %226, %225 : vector<8x128xf32>
    %228 = math.tanh %227 : vector<8x128xf32>
    %cst_132 = arith.constant 5.000000e-01 : f32
    %229 = vector.broadcast %cst_132 : f32 to vector<8x128xf32>
    %230 = arith.mulf %229, %228 : vector<8x128xf32>
    %cst_133 = arith.constant 5.000000e-01 : f32
    %231 = vector.broadcast %cst_133 : f32 to vector<8x128xf32>
    %232 = arith.addf %230, %231 : vector<8x128xf32>
    %233 = vector.extract_strided_slice %216 {offsets = [0, 256], sizes = [8, 128], strides = [1, 1]} : vector<8x512xf32> to vector<8x128xf32>
    %234 = math.tanh %233 : vector<8x128xf32>
    %235 = vector.extract_strided_slice %216 {offsets = [0, 384], sizes = [8, 128], strides = [1, 1]} : vector<8x512xf32> to vector<8x128xf32>
    %cst_134 = arith.constant 5.000000e-01 : f32
    %236 = vector.broadcast %cst_134 : f32 to vector<8x128xf32>
    %237 = arith.mulf %236, %235 : vector<8x128xf32>
    %238 = math.tanh %237 : vector<8x128xf32>
    %cst_135 = arith.constant 5.000000e-01 : f32
    %239 = vector.broadcast %cst_135 : f32 to vector<8x128xf32>
    %240 = arith.mulf %239, %238 : vector<8x128xf32>
    %cst_136 = arith.constant 5.000000e-01 : f32
    %241 = vector.broadcast %cst_136 : f32 to vector<8x128xf32>
    %242 = arith.addf %240, %241 : vector<8x128xf32>
    %243 = arith.mulf %232, %160 : vector<8x128xf32>
    %244 = arith.mulf %224, %234 : vector<8x128xf32>
    %245 = arith.addf %243, %244 : vector<8x128xf32>
    %246 = math.tanh %245 : vector<8x128xf32>
    %247 = arith.mulf %242, %246 : vector<8x128xf32>
    %248 = tpu.concatenate %162, %25 in 1 : vector<8x128xf32>, vector<8x128xf32> -> vector<8x256xf32>
    %c2_137 = arith.constant 2 : index
    %c0_138 = arith.constant 0 : index
    %c0_139 = arith.constant 0 : index
    %249 = vector.load %arg10[%c2_137, %c0_138, %c0_139] : memref<3x256x512xf32, #tpu.memory_space<vmem>>, vector<1x256x512xf32>
    %250 = vector.shape_cast %249 : vector<1x256x512xf32> to vector<256x512xf32>
    %cst_140 = arith.constant dense<0.000000e+00> : vector<8x512xf32>
    %251 = tpu.matmul %248, %250, %cst_140 {dimension_numbers = #tpu.dot_dimension_numbers<[1], [0], [0], [1], [0, 0, 1, 1], [], []>} : vector<8x256xf32>, vector<256x512xf32>, vector<8x512xf32> -> vector<8x512xf32>
    %c2_141 = arith.constant 2 : index
    %c0_142 = arith.constant 0 : index
    %c0_143 = arith.constant 0 : index
    %252 = vector.load %arg2[%c2_141, %c0_142, %c0_143] : memref<3x1x512xf32, #tpu.memory_space<vmem>>, vector<1x1x512xf32>
    %253 = vector.shape_cast %252 : vector<1x1x512xf32> to vector<1x512xf32>
    %254 = vector.broadcast %253 : vector<1x512xf32> to vector<8x512xf32>
    %255 = arith.addf %251, %254 : vector<8x512xf32>
    %256 = vector.extract_strided_slice %255 {offsets = [0, 0], sizes = [8, 128], strides = [1, 1]} : vector<8x512xf32> to vector<8x128xf32>
    %cst_144 = arith.constant 5.000000e-01 : f32
    %257 = vector.broadcast %cst_144 : f32 to vector<8x128xf32>
    %258 = arith.mulf %257, %256 : vector<8x128xf32>
    %259 = math.tanh %258 : vector<8x128xf32>
    %cst_145 = arith.constant 5.000000e-01 : f32
    %260 = vector.broadcast %cst_145 : f32 to vector<8x128xf32>
    %261 = arith.mulf %260, %259 : vector<8x128xf32>
    %cst_146 = arith.constant 5.000000e-01 : f32
    %262 = vector.broadcast %cst_146 : f32 to vector<8x128xf32>
    %263 = arith.addf %261, %262 : vector<8x128xf32>
    %264 = vector.extract_strided_slice %255 {offsets = [0, 128], sizes = [8, 128], strides = [1, 1]} : vector<8x512xf32> to vector<8x128xf32>
    %cst_147 = arith.constant 5.000000e-01 : f32
    %265 = vector.broadcast %cst_147 : f32 to vector<8x128xf32>
    %266 = arith.mulf %265, %264 : vector<8x128xf32>
    %267 = math.tanh %266 : vector<8x128xf32>
    %cst_148 = arith.constant 5.000000e-01 : f32
    %268 = vector.broadcast %cst_148 : f32 to vector<8x128xf32>
    %269 = arith.mulf %268, %267 : vector<8x128xf32>
    %cst_149 = arith.constant 5.000000e-01 : f32
    %270 = vector.broadcast %cst_149 : f32 to vector<8x128xf32>
    %271 = arith.addf %269, %270 : vector<8x128xf32>
    %272 = vector.extract_strided_slice %255 {offsets = [0, 256], sizes = [8, 128], strides = [1, 1]} : vector<8x512xf32> to vector<8x128xf32>
    %273 = math.tanh %272 : vector<8x128xf32>
    %274 = vector.extract_strided_slice %255 {offsets = [0, 384], sizes = [8, 128], strides = [1, 1]} : vector<8x512xf32> to vector<8x128xf32>
    %cst_150 = arith.constant 5.000000e-01 : f32
    %275 = vector.broadcast %cst_150 : f32 to vector<8x128xf32>
    %276 = arith.mulf %275, %274 : vector<8x128xf32>
    %277 = math.tanh %276 : vector<8x128xf32>
    %cst_151 = arith.constant 5.000000e-01 : f32
    %278 = vector.broadcast %cst_151 : f32 to vector<8x128xf32>
    %279 = arith.mulf %278, %277 : vector<8x128xf32>
    %cst_152 = arith.constant 5.000000e-01 : f32
    %280 = vector.broadcast %cst_152 : f32 to vector<8x128xf32>
    %281 = arith.addf %279, %280 : vector<8x128xf32>
    %282 = arith.mulf %271, %31 : vector<8x128xf32>
    %283 = arith.mulf %263, %273 : vector<8x128xf32>
    %284 = arith.addf %282, %283 : vector<8x128xf32>
    %285 = math.tanh %284 : vector<8x128xf32>
    %286 = arith.mulf %281, %285 : vector<8x128xf32>
    %c24 = arith.constant 24 : index
    %c0_153 = arith.constant 0 : index
    %287 = vector.load %arg0[%c24, %c0_153] : memref<64x128xf32, #tpu.memory_space<vmem>>, vector<8x128xf32>
    %288 = tpu.concatenate %287, %208 in 1 : vector<8x128xf32>, vector<8x128xf32> -> vector<8x256xf32>
    %c0_154 = arith.constant 0 : index
    %c0_155 = arith.constant 0 : index
    %c0_156 = arith.constant 0 : index
    %289 = vector.load %arg10[%c0_154, %c0_155, %c0_156] : memref<3x256x512xf32, #tpu.memory_space<vmem>>, vector<1x256x512xf32>
    %290 = vector.shape_cast %289 : vector<1x256x512xf32> to vector<256x512xf32>
    %cst_157 = arith.constant dense<0.000000e+00> : vector<8x512xf32>
    %291 = tpu.matmul %288, %290, %cst_157 {dimension_numbers = #tpu.dot_dimension_numbers<[1], [0], [0], [1], [0, 0, 1, 1], [], []>} : vector<8x256xf32>, vector<256x512xf32>, vector<8x512xf32> -> vector<8x512xf32>
    %c0_158 = arith.constant 0 : index
    %c0_159 = arith.constant 0 : index
    %c0_160 = arith.constant 0 : index
    %292 = vector.load %arg2[%c0_158, %c0_159, %c0_160] : memref<3x1x512xf32, #tpu.memory_space<vmem>>, vector<1x1x512xf32>
    %293 = vector.shape_cast %292 : vector<1x1x512xf32> to vector<1x512xf32>
    %294 = vector.broadcast %293 : vector<1x512xf32> to vector<8x512xf32>
    %295 = arith.addf %291, %294 : vector<8x512xf32>
    %296 = vector.extract_strided_slice %295 {offsets = [0, 0], sizes = [8, 128], strides = [1, 1]} : vector<8x512xf32> to vector<8x128xf32>
    %cst_161 = arith.constant 5.000000e-01 : f32
    %297 = vector.broadcast %cst_161 : f32 to vector<8x128xf32>
    %298 = arith.mulf %297, %296 : vector<8x128xf32>
    %299 = math.tanh %298 : vector<8x128xf32>
    %cst_162 = arith.constant 5.000000e-01 : f32
    %300 = vector.broadcast %cst_162 : f32 to vector<8x128xf32>
    %301 = arith.mulf %300, %299 : vector<8x128xf32>
    %cst_163 = arith.constant 5.000000e-01 : f32
    %302 = vector.broadcast %cst_163 : f32 to vector<8x128xf32>
    %303 = arith.addf %301, %302 : vector<8x128xf32>
    %304 = vector.extract_strided_slice %295 {offsets = [0, 128], sizes = [8, 128], strides = [1, 1]} : vector<8x512xf32> to vector<8x128xf32>
    %cst_164 = arith.constant 5.000000e-01 : f32
    %305 = vector.broadcast %cst_164 : f32 to vector<8x128xf32>
    %306 = arith.mulf %305, %304 : vector<8x128xf32>
    %307 = math.tanh %306 : vector<8x128xf32>
    %cst_165 = arith.constant 5.000000e-01 : f32
    %308 = vector.broadcast %cst_165 : f32 to vector<8x128xf32>
    %309 = arith.mulf %308, %307 : vector<8x128xf32>
    %cst_166 = arith.constant 5.000000e-01 : f32
    %310 = vector.broadcast %cst_166 : f32 to vector<8x128xf32>
    %311 = arith.addf %309, %310 : vector<8x128xf32>
    %312 = vector.extract_strided_slice %295 {offsets = [0, 256], sizes = [8, 128], strides = [1, 1]} : vector<8x512xf32> to vector<8x128xf32>
    %313 = math.tanh %312 : vector<8x128xf32>
    %314 = vector.extract_strided_slice %295 {offsets = [0, 384], sizes = [8, 128], strides = [1, 1]} : vector<8x512xf32> to vector<8x128xf32>
    %cst_167 = arith.constant 5.000000e-01 : f32
    %315 = vector.broadcast %cst_167 : f32 to vector<8x128xf32>
    %316 = arith.mulf %315, %314 : vector<8x128xf32>
    %317 = math.tanh %316 : vector<8x128xf32>
    %cst_168 = arith.constant 5.000000e-01 : f32
    %318 = vector.broadcast %cst_168 : f32 to vector<8x128xf32>
    %319 = arith.mulf %318, %317 : vector<8x128xf32>
    %cst_169 = arith.constant 5.000000e-01 : f32
    %320 = vector.broadcast %cst_169 : f32 to vector<8x128xf32>
    %321 = arith.addf %319, %320 : vector<8x128xf32>
    %322 = arith.mulf %311, %206 : vector<8x128xf32>
    %323 = arith.mulf %303, %313 : vector<8x128xf32>
    %324 = arith.addf %322, %323 : vector<8x128xf32>
    %325 = math.tanh %324 : vector<8x128xf32>
    %326 = arith.mulf %321, %325 : vector<8x128xf32>
    %327 = tpu.concatenate %208, %247 in 1 : vector<8x128xf32>, vector<8x128xf32> -> vector<8x256xf32>
    %c1_170 = arith.constant 1 : index
    %c0_171 = arith.constant 0 : index
    %c0_172 = arith.constant 0 : index
    %328 = vector.load %arg10[%c1_170, %c0_171, %c0_172] : memref<3x256x512xf32, #tpu.memory_space<vmem>>, vector<1x256x512xf32>
    %329 = vector.shape_cast %328 : vector<1x256x512xf32> to vector<256x512xf32>
    %cst_173 = arith.constant dense<0.000000e+00> : vector<8x512xf32>
    %330 = tpu.matmul %327, %329, %cst_173 {dimension_numbers = #tpu.dot_dimension_numbers<[1], [0], [0], [1], [0, 0, 1, 1], [], []>} : vector<8x256xf32>, vector<256x512xf32>, vector<8x512xf32> -> vector<8x512xf32>
    %c1_174 = arith.constant 1 : index
    %c0_175 = arith.constant 0 : index
    %c0_176 = arith.constant 0 : index
    %331 = vector.load %arg2[%c1_174, %c0_175, %c0_176] : memref<3x1x512xf32, #tpu.memory_space<vmem>>, vector<1x1x512xf32>
    %332 = vector.shape_cast %331 : vector<1x1x512xf32> to vector<1x512xf32>
    %333 = vector.broadcast %332 : vector<1x512xf32> to vector<8x512xf32>
    %334 = arith.addf %330, %333 : vector<8x512xf32>
    %335 = vector.extract_strided_slice %334 {offsets = [0, 0], sizes = [8, 128], strides = [1, 1]} : vector<8x512xf32> to vector<8x128xf32>
    %cst_177 = arith.constant 5.000000e-01 : f32
    %336 = vector.broadcast %cst_177 : f32 to vector<8x128xf32>
    %337 = arith.mulf %336, %335 : vector<8x128xf32>
    %338 = math.tanh %337 : vector<8x128xf32>
    %cst_178 = arith.constant 5.000000e-01 : f32
    %339 = vector.broadcast %cst_178 : f32 to vector<8x128xf32>
    %340 = arith.mulf %339, %338 : vector<8x128xf32>
    %cst_179 = arith.constant 5.000000e-01 : f32
    %341 = vector.broadcast %cst_179 : f32 to vector<8x128xf32>
    %342 = arith.addf %340, %341 : vector<8x128xf32>
    %343 = vector.extract_strided_slice %334 {offsets = [0, 128], sizes = [8, 128], strides = [1, 1]} : vector<8x512xf32> to vector<8x128xf32>
    %cst_180 = arith.constant 5.000000e-01 : f32
    %344 = vector.broadcast %cst_180 : f32 to vector<8x128xf32>
    %345 = arith.mulf %344, %343 : vector<8x128xf32>
    %346 = math.tanh %345 : vector<8x128xf32>
    %cst_181 = arith.constant 5.000000e-01 : f32
    %347 = vector.broadcast %cst_181 : f32 to vector<8x128xf32>
    %348 = arith.mulf %347, %346 : vector<8x128xf32>
    %cst_182 = arith.constant 5.000000e-01 : f32
    %349 = vector.broadcast %cst_182 : f32 to vector<8x128xf32>
    %350 = arith.addf %348, %349 : vector<8x128xf32>
    %351 = vector.extract_strided_slice %334 {offsets = [0, 256], sizes = [8, 128], strides = [1, 1]} : vector<8x512xf32> to vector<8x128xf32>
    %352 = math.tanh %351 : vector<8x128xf32>
    %353 = vector.extract_strided_slice %334 {offsets = [0, 384], sizes = [8, 128], strides = [1, 1]} : vector<8x512xf32> to vector<8x128xf32>
    %cst_183 = arith.constant 5.000000e-01 : f32
    %354 = vector.broadcast %cst_183 : f32 to vector<8x128xf32>
    %355 = arith.mulf %354, %353 : vector<8x128xf32>
    %356 = math.tanh %355 : vector<8x128xf32>
    %cst_184 = arith.constant 5.000000e-01 : f32
    %357 = vector.broadcast %cst_184 : f32 to vector<8x128xf32>
    %358 = arith.mulf %357, %356 : vector<8x128xf32>
    %cst_185 = arith.constant 5.000000e-01 : f32
    %359 = vector.broadcast %cst_185 : f32 to vector<8x128xf32>
    %360 = arith.addf %358, %359 : vector<8x128xf32>
    %361 = arith.mulf %350, %245 : vector<8x128xf32>
    %362 = arith.mulf %342, %352 : vector<8x128xf32>
    %363 = arith.addf %361, %362 : vector<8x128xf32>
    %364 = math.tanh %363 : vector<8x128xf32>
    %365 = arith.mulf %360, %364 : vector<8x128xf32>
    %366 = tpu.concatenate %247, %286 in 1 : vector<8x128xf32>, vector<8x128xf32> -> vector<8x256xf32>
    %c2_186 = arith.constant 2 : index
    %c0_187 = arith.constant 0 : index
    %c0_188 = arith.constant 0 : index
    %367 = vector.load %arg10[%c2_186, %c0_187, %c0_188] : memref<3x256x512xf32, #tpu.memory_space<vmem>>, vector<1x256x512xf32>
    %368 = vector.shape_cast %367 : vector<1x256x512xf32> to vector<256x512xf32>
    %cst_189 = arith.constant dense<0.000000e+00> : vector<8x512xf32>
    %369 = tpu.matmul %366, %368, %cst_189 {dimension_numbers = #tpu.dot_dimension_numbers<[1], [0], [0], [1], [0, 0, 1, 1], [], []>} : vector<8x256xf32>, vector<256x512xf32>, vector<8x512xf32> -> vector<8x512xf32>
    %c2_190 = arith.constant 2 : index
    %c0_191 = arith.constant 0 : index
    %c0_192 = arith.constant 0 : index
    %370 = vector.load %arg2[%c2_190, %c0_191, %c0_192] : memref<3x1x512xf32, #tpu.memory_space<vmem>>, vector<1x1x512xf32>
    %371 = vector.shape_cast %370 : vector<1x1x512xf32> to vector<1x512xf32>
    %372 = vector.broadcast %371 : vector<1x512xf32> to vector<8x512xf32>
    %373 = arith.addf %369, %372 : vector<8x512xf32>
    %374 = vector.extract_strided_slice %373 {offsets = [0, 0], sizes = [8, 128], strides = [1, 1]} : vector<8x512xf32> to vector<8x128xf32>
    %cst_193 = arith.constant 5.000000e-01 : f32
    %375 = vector.broadcast %cst_193 : f32 to vector<8x128xf32>
    %376 = arith.mulf %375, %374 : vector<8x128xf32>
    %377 = math.tanh %376 : vector<8x128xf32>
    %cst_194 = arith.constant 5.000000e-01 : f32
    %378 = vector.broadcast %cst_194 : f32 to vector<8x128xf32>
    %379 = arith.mulf %378, %377 : vector<8x128xf32>
    %cst_195 = arith.constant 5.000000e-01 : f32
    %380 = vector.broadcast %cst_195 : f32 to vector<8x128xf32>
    %381 = arith.addf %379, %380 : vector<8x128xf32>
    %382 = vector.extract_strided_slice %373 {offsets = [0, 128], sizes = [8, 128], strides = [1, 1]} : vector<8x512xf32> to vector<8x128xf32>
    %cst_196 = arith.constant 5.000000e-01 : f32
    %383 = vector.broadcast %cst_196 : f32 to vector<8x128xf32>
    %384 = arith.mulf %383, %382 : vector<8x128xf32>
    %385 = math.tanh %384 : vector<8x128xf32>
    %cst_197 = arith.constant 5.000000e-01 : f32
    %386 = vector.broadcast %cst_197 : f32 to vector<8x128xf32>
    %387 = arith.mulf %386, %385 : vector<8x128xf32>
    %cst_198 = arith.constant 5.000000e-01 : f32
    %388 = vector.broadcast %cst_198 : f32 to vector<8x128xf32>
    %389 = arith.addf %387, %388 : vector<8x128xf32>
    %390 = vector.extract_strided_slice %373 {offsets = [0, 256], sizes = [8, 128], strides = [1, 1]} : vector<8x512xf32> to vector<8x128xf32>
    %391 = math.tanh %390 : vector<8x128xf32>
    %392 = vector.extract_strided_slice %373 {offsets = [0, 384], sizes = [8, 128], strides = [1, 1]} : vector<8x512xf32> to vector<8x128xf32>
    %cst_199 = arith.constant 5.000000e-01 : f32
    %393 = vector.broadcast %cst_199 : f32 to vector<8x128xf32>
    %394 = arith.mulf %393, %392 : vector<8x128xf32>
    %395 = math.tanh %394 : vector<8x128xf32>
    %cst_200 = arith.constant 5.000000e-01 : f32
    %396 = vector.broadcast %cst_200 : f32 to vector<8x128xf32>
    %397 = arith.mulf %396, %395 : vector<8x128xf32>
    %cst_201 = arith.constant 5.000000e-01 : f32
    %398 = vector.broadcast %cst_201 : f32 to vector<8x128xf32>
    %399 = arith.addf %397, %398 : vector<8x128xf32>
    %400 = arith.mulf %389, %284 : vector<8x128xf32>
    %401 = arith.mulf %381, %391 : vector<8x128xf32>
    %402 = arith.addf %400, %401 : vector<8x128xf32>
    %403 = math.tanh %402 : vector<8x128xf32>
    %404 = arith.mulf %399, %403 : vector<8x128xf32>
    %c32 = arith.constant 32 : index
    %c0_202 = arith.constant 0 : index
    %405 = vector.load %arg0[%c32, %c0_202] : memref<64x128xf32, #tpu.memory_space<vmem>>, vector<8x128xf32>
    %406 = tpu.concatenate %405, %326 in 1 : vector<8x128xf32>, vector<8x128xf32> -> vector<8x256xf32>
    %c0_203 = arith.constant 0 : index
    %c0_204 = arith.constant 0 : index
    %c0_205 = arith.constant 0 : index
    %407 = vector.load %arg10[%c0_203, %c0_204, %c0_205] : memref<3x256x512xf32, #tpu.memory_space<vmem>>, vector<1x256x512xf32>
    %408 = vector.shape_cast %407 : vector<1x256x512xf32> to vector<256x512xf32>
    %cst_206 = arith.constant dense<0.000000e+00> : vector<8x512xf32>
    %409 = tpu.matmul %406, %408, %cst_206 {dimension_numbers = #tpu.dot_dimension_numbers<[1], [0], [0], [1], [0, 0, 1, 1], [], []>} : vector<8x256xf32>, vector<256x512xf32>, vector<8x512xf32> -> vector<8x512xf32>
    %c0_207 = arith.constant 0 : index
    %c0_208 = arith.constant 0 : index
    %c0_209 = arith.constant 0 : index
    %410 = vector.load %arg2[%c0_207, %c0_208, %c0_209] : memref<3x1x512xf32, #tpu.memory_space<vmem>>, vector<1x1x512xf32>
    %411 = vector.shape_cast %410 : vector<1x1x512xf32> to vector<1x512xf32>
    %412 = vector.broadcast %411 : vector<1x512xf32> to vector<8x512xf32>
    %413 = arith.addf %409, %412 : vector<8x512xf32>
    %414 = vector.extract_strided_slice %413 {offsets = [0, 0], sizes = [8, 128], strides = [1, 1]} : vector<8x512xf32> to vector<8x128xf32>
    %cst_210 = arith.constant 5.000000e-01 : f32
    %415 = vector.broadcast %cst_210 : f32 to vector<8x128xf32>
    %416 = arith.mulf %415, %414 : vector<8x128xf32>
    %417 = math.tanh %416 : vector<8x128xf32>
    %cst_211 = arith.constant 5.000000e-01 : f32
    %418 = vector.broadcast %cst_211 : f32 to vector<8x128xf32>
    %419 = arith.mulf %418, %417 : vector<8x128xf32>
    %cst_212 = arith.constant 5.000000e-01 : f32
    %420 = vector.broadcast %cst_212 : f32 to vector<8x128xf32>
    %421 = arith.addf %419, %420 : vector<8x128xf32>
    %422 = vector.extract_strided_slice %413 {offsets = [0, 128], sizes = [8, 128], strides = [1, 1]} : vector<8x512xf32> to vector<8x128xf32>
    %cst_213 = arith.constant 5.000000e-01 : f32
    %423 = vector.broadcast %cst_213 : f32 to vector<8x128xf32>
    %424 = arith.mulf %423, %422 : vector<8x128xf32>
    %425 = math.tanh %424 : vector<8x128xf32>
    %cst_214 = arith.constant 5.000000e-01 : f32
    %426 = vector.broadcast %cst_214 : f32 to vector<8x128xf32>
    %427 = arith.mulf %426, %425 : vector<8x128xf32>
    %cst_215 = arith.constant 5.000000e-01 : f32
    %428 = vector.broadcast %cst_215 : f32 to vector<8x128xf32>
    %429 = arith.addf %427, %428 : vector<8x128xf32>
    %430 = vector.extract_strided_slice %413 {offsets = [0, 256], sizes = [8, 128], strides = [1, 1]} : vector<8x512xf32> to vector<8x128xf32>
    %431 = math.tanh %430 : vector<8x128xf32>
    %432 = vector.extract_strided_slice %413 {offsets = [0, 384], sizes = [8, 128], strides = [1, 1]} : vector<8x512xf32> to vector<8x128xf32>
    %cst_216 = arith.constant 5.000000e-01 : f32
    %433 = vector.broadcast %cst_216 : f32 to vector<8x128xf32>
    %434 = arith.mulf %433, %432 : vector<8x128xf32>
    %435 = math.tanh %434 : vector<8x128xf32>
    %cst_217 = arith.constant 5.000000e-01 : f32
    %436 = vector.broadcast %cst_217 : f32 to vector<8x128xf32>
    %437 = arith.mulf %436, %435 : vector<8x128xf32>
    %cst_218 = arith.constant 5.000000e-01 : f32
    %438 = vector.broadcast %cst_218 : f32 to vector<8x128xf32>
    %439 = arith.addf %437, %438 : vector<8x128xf32>
    %440 = arith.mulf %429, %324 : vector<8x128xf32>
    %441 = arith.mulf %421, %431 : vector<8x128xf32>
    %442 = arith.addf %440, %441 : vector<8x128xf32>
    %443 = math.tanh %442 : vector<8x128xf32>
    %444 = arith.mulf %439, %443 : vector<8x128xf32>
    %445 = tpu.concatenate %326, %365 in 1 : vector<8x128xf32>, vector<8x128xf32> -> vector<8x256xf32>
    %c1_219 = arith.constant 1 : index
    %c0_220 = arith.constant 0 : index
    %c0_221 = arith.constant 0 : index
    %446 = vector.load %arg10[%c1_219, %c0_220, %c0_221] : memref<3x256x512xf32, #tpu.memory_space<vmem>>, vector<1x256x512xf32>
    %447 = vector.shape_cast %446 : vector<1x256x512xf32> to vector<256x512xf32>
    %cst_222 = arith.constant dense<0.000000e+00> : vector<8x512xf32>
    %448 = tpu.matmul %445, %447, %cst_222 {dimension_numbers = #tpu.dot_dimension_numbers<[1], [0], [0], [1], [0, 0, 1, 1], [], []>} : vector<8x256xf32>, vector<256x512xf32>, vector<8x512xf32> -> vector<8x512xf32>
    %c1_223 = arith.constant 1 : index
    %c0_224 = arith.constant 0 : index
    %c0_225 = arith.constant 0 : index
    %449 = vector.load %arg2[%c1_223, %c0_224, %c0_225] : memref<3x1x512xf32, #tpu.memory_space<vmem>>, vector<1x1x512xf32>
    %450 = vector.shape_cast %449 : vector<1x1x512xf32> to vector<1x512xf32>
    %451 = vector.broadcast %450 : vector<1x512xf32> to vector<8x512xf32>
    %452 = arith.addf %448, %451 : vector<8x512xf32>
    %453 = vector.extract_strided_slice %452 {offsets = [0, 0], sizes = [8, 128], strides = [1, 1]} : vector<8x512xf32> to vector<8x128xf32>
    %cst_226 = arith.constant 5.000000e-01 : f32
    %454 = vector.broadcast %cst_226 : f32 to vector<8x128xf32>
    %455 = arith.mulf %454, %453 : vector<8x128xf32>
    %456 = math.tanh %455 : vector<8x128xf32>
    %cst_227 = arith.constant 5.000000e-01 : f32
    %457 = vector.broadcast %cst_227 : f32 to vector<8x128xf32>
    %458 = arith.mulf %457, %456 : vector<8x128xf32>
    %cst_228 = arith.constant 5.000000e-01 : f32
    %459 = vector.broadcast %cst_228 : f32 to vector<8x128xf32>
    %460 = arith.addf %458, %459 : vector<8x128xf32>
    %461 = vector.extract_strided_slice %452 {offsets = [0, 128], sizes = [8, 128], strides = [1, 1]} : vector<8x512xf32> to vector<8x128xf32>
    %cst_229 = arith.constant 5.000000e-01 : f32
    %462 = vector.broadcast %cst_229 : f32 to vector<8x128xf32>
    %463 = arith.mulf %462, %461 : vector<8x128xf32>
    %464 = math.tanh %463 : vector<8x128xf32>
    %cst_230 = arith.constant 5.000000e-01 : f32
    %465 = vector.broadcast %cst_230 : f32 to vector<8x128xf32>
    %466 = arith.mulf %465, %464 : vector<8x128xf32>
    %cst_231 = arith.constant 5.000000e-01 : f32
    %467 = vector.broadcast %cst_231 : f32 to vector<8x128xf32>
    %468 = arith.addf %466, %467 : vector<8x128xf32>
    %469 = vector.extract_strided_slice %452 {offsets = [0, 256], sizes = [8, 128], strides = [1, 1]} : vector<8x512xf32> to vector<8x128xf32>
    %470 = math.tanh %469 : vector<8x128xf32>
    %471 = vector.extract_strided_slice %452 {offsets = [0, 384], sizes = [8, 128], strides = [1, 1]} : vector<8x512xf32> to vector<8x128xf32>
    %cst_232 = arith.constant 5.000000e-01 : f32
    %472 = vector.broadcast %cst_232 : f32 to vector<8x128xf32>
    %473 = arith.mulf %472, %471 : vector<8x128xf32>
    %474 = math.tanh %473 : vector<8x128xf32>
    %cst_233 = arith.constant 5.000000e-01 : f32
    %475 = vector.broadcast %cst_233 : f32 to vector<8x128xf32>
    %476 = arith.mulf %475, %474 : vector<8x128xf32>
    %cst_234 = arith.constant 5.000000e-01 : f32
    %477 = vector.broadcast %cst_234 : f32 to vector<8x128xf32>
    %478 = arith.addf %476, %477 : vector<8x128xf32>
    %479 = arith.mulf %468, %363 : vector<8x128xf32>
    %480 = arith.mulf %460, %470 : vector<8x128xf32>
    %481 = arith.addf %479, %480 : vector<8x128xf32>
    %482 = math.tanh %481 : vector<8x128xf32>
    %483 = arith.mulf %478, %482 : vector<8x128xf32>
    %484 = tpu.concatenate %365, %404 in 1 : vector<8x128xf32>, vector<8x128xf32> -> vector<8x256xf32>
    %c2_235 = arith.constant 2 : index
    %c0_236 = arith.constant 0 : index
    %c0_237 = arith.constant 0 : index
    %485 = vector.load %arg10[%c2_235, %c0_236, %c0_237] : memref<3x256x512xf32, #tpu.memory_space<vmem>>, vector<1x256x512xf32>
    %486 = vector.shape_cast %485 : vector<1x256x512xf32> to vector<256x512xf32>
    %cst_238 = arith.constant dense<0.000000e+00> : vector<8x512xf32>
    %487 = tpu.matmul %484, %486, %cst_238 {dimension_numbers = #tpu.dot_dimension_numbers<[1], [0], [0], [1], [0, 0, 1, 1], [], []>} : vector<8x256xf32>, vector<256x512xf32>, vector<8x512xf32> -> vector<8x512xf32>
    %c2_239 = arith.constant 2 : index
    %c0_240 = arith.constant 0 : index
    %c0_241 = arith.constant 0 : index
    %488 = vector.load %arg2[%c2_239, %c0_240, %c0_241] : memref<3x1x512xf32, #tpu.memory_space<vmem>>, vector<1x1x512xf32>
    %489 = vector.shape_cast %488 : vector<1x1x512xf32> to vector<1x512xf32>
    %490 = vector.broadcast %489 : vector<1x512xf32> to vector<8x512xf32>
    %491 = arith.addf %487, %490 : vector<8x512xf32>
    %492 = vector.extract_strided_slice %491 {offsets = [0, 0], sizes = [8, 128], strides = [1, 1]} : vector<8x512xf32> to vector<8x128xf32>
    %cst_242 = arith.constant 5.000000e-01 : f32
    %493 = vector.broadcast %cst_242 : f32 to vector<8x128xf32>
    %494 = arith.mulf %493, %492 : vector<8x128xf32>
    %495 = math.tanh %494 : vector<8x128xf32>
    %cst_243 = arith.constant 5.000000e-01 : f32
    %496 = vector.broadcast %cst_243 : f32 to vector<8x128xf32>
    %497 = arith.mulf %496, %495 : vector<8x128xf32>
    %cst_244 = arith.constant 5.000000e-01 : f32
    %498 = vector.broadcast %cst_244 : f32 to vector<8x128xf32>
    %499 = arith.addf %497, %498 : vector<8x128xf32>
    %500 = vector.extract_strided_slice %491 {offsets = [0, 128], sizes = [8, 128], strides = [1, 1]} : vector<8x512xf32> to vector<8x128xf32>
    %cst_245 = arith.constant 5.000000e-01 : f32
    %501 = vector.broadcast %cst_245 : f32 to vector<8x128xf32>
    %502 = arith.mulf %501, %500 : vector<8x128xf32>
    %503 = math.tanh %502 : vector<8x128xf32>
    %cst_246 = arith.constant 5.000000e-01 : f32
    %504 = vector.broadcast %cst_246 : f32 to vector<8x128xf32>
    %505 = arith.mulf %504, %503 : vector<8x128xf32>
    %cst_247 = arith.constant 5.000000e-01 : f32
    %506 = vector.broadcast %cst_247 : f32 to vector<8x128xf32>
    %507 = arith.addf %505, %506 : vector<8x128xf32>
    %508 = vector.extract_strided_slice %491 {offsets = [0, 256], sizes = [8, 128], strides = [1, 1]} : vector<8x512xf32> to vector<8x128xf32>
    %509 = math.tanh %508 : vector<8x128xf32>
    %510 = vector.extract_strided_slice %491 {offsets = [0, 384], sizes = [8, 128], strides = [1, 1]} : vector<8x512xf32> to vector<8x128xf32>
    %cst_248 = arith.constant 5.000000e-01 : f32
    %511 = vector.broadcast %cst_248 : f32 to vector<8x128xf32>
    %512 = arith.mulf %511, %510 : vector<8x128xf32>
    %513 = math.tanh %512 : vector<8x128xf32>
    %cst_249 = arith.constant 5.000000e-01 : f32
    %514 = vector.broadcast %cst_249 : f32 to vector<8x128xf32>
    %515 = arith.mulf %514, %513 : vector<8x128xf32>
    %cst_250 = arith.constant 5.000000e-01 : f32
    %516 = vector.broadcast %cst_250 : f32 to vector<8x128xf32>
    %517 = arith.addf %515, %516 : vector<8x128xf32>
    %518 = arith.mulf %507, %402 : vector<8x128xf32>
    %519 = arith.mulf %499, %509 : vector<8x128xf32>
    %520 = arith.addf %518, %519 : vector<8x128xf32>
    %521 = math.tanh %520 : vector<8x128xf32>
    %522 = arith.mulf %517, %521 : vector<8x128xf32>
    %c40 = arith.constant 40 : index
    %c0_251 = arith.constant 0 : index
    %523 = vector.load %arg0[%c40, %c0_251] : memref<64x128xf32, #tpu.memory_space<vmem>>, vector<8x128xf32>
    %524 = tpu.concatenate %523, %444 in 1 : vector<8x128xf32>, vector<8x128xf32> -> vector<8x256xf32>
    %c0_252 = arith.constant 0 : index
    %c0_253 = arith.constant 0 : index
    %c0_254 = arith.constant 0 : index
    %525 = vector.load %arg10[%c0_252, %c0_253, %c0_254] : memref<3x256x512xf32, #tpu.memory_space<vmem>>, vector<1x256x512xf32>
    %526 = vector.shape_cast %525 : vector<1x256x512xf32> to vector<256x512xf32>
    %cst_255 = arith.constant dense<0.000000e+00> : vector<8x512xf32>
    %527 = tpu.matmul %524, %526, %cst_255 {dimension_numbers = #tpu.dot_dimension_numbers<[1], [0], [0], [1], [0, 0, 1, 1], [], []>} : vector<8x256xf32>, vector<256x512xf32>, vector<8x512xf32> -> vector<8x512xf32>
    %c0_256 = arith.constant 0 : index
    %c0_257 = arith.constant 0 : index
    %c0_258 = arith.constant 0 : index
    %528 = vector.load %arg2[%c0_256, %c0_257, %c0_258] : memref<3x1x512xf32, #tpu.memory_space<vmem>>, vector<1x1x512xf32>
    %529 = vector.shape_cast %528 : vector<1x1x512xf32> to vector<1x512xf32>
    %530 = vector.broadcast %529 : vector<1x512xf32> to vector<8x512xf32>
    %531 = arith.addf %527, %530 : vector<8x512xf32>
    %532 = vector.extract_strided_slice %531 {offsets = [0, 0], sizes = [8, 128], strides = [1, 1]} : vector<8x512xf32> to vector<8x128xf32>
    %cst_259 = arith.constant 5.000000e-01 : f32
    %533 = vector.broadcast %cst_259 : f32 to vector<8x128xf32>
    %534 = arith.mulf %533, %532 : vector<8x128xf32>
    %535 = math.tanh %534 : vector<8x128xf32>
    %cst_260 = arith.constant 5.000000e-01 : f32
    %536 = vector.broadcast %cst_260 : f32 to vector<8x128xf32>
    %537 = arith.mulf %536, %535 : vector<8x128xf32>
    %cst_261 = arith.constant 5.000000e-01 : f32
    %538 = vector.broadcast %cst_261 : f32 to vector<8x128xf32>
    %539 = arith.addf %537, %538 : vector<8x128xf32>
    %540 = vector.extract_strided_slice %531 {offsets = [0, 128], sizes = [8, 128], strides = [1, 1]} : vector<8x512xf32> to vector<8x128xf32>
    %cst_262 = arith.constant 5.000000e-01 : f32
    %541 = vector.broadcast %cst_262 : f32 to vector<8x128xf32>
    %542 = arith.mulf %541, %540 : vector<8x128xf32>
    %543 = math.tanh %542 : vector<8x128xf32>
    %cst_263 = arith.constant 5.000000e-01 : f32
    %544 = vector.broadcast %cst_263 : f32 to vector<8x128xf32>
    %545 = arith.mulf %544, %543 : vector<8x128xf32>
    %cst_264 = arith.constant 5.000000e-01 : f32
    %546 = vector.broadcast %cst_264 : f32 to vector<8x128xf32>
    %547 = arith.addf %545, %546 : vector<8x128xf32>
    %548 = vector.extract_strided_slice %531 {offsets = [0, 256], sizes = [8, 128], strides = [1, 1]} : vector<8x512xf32> to vector<8x128xf32>
    %549 = math.tanh %548 : vector<8x128xf32>
    %550 = vector.extract_strided_slice %531 {offsets = [0, 384], sizes = [8, 128], strides = [1, 1]} : vector<8x512xf32> to vector<8x128xf32>
    %cst_265 = arith.constant 5.000000e-01 : f32
    %551 = vector.broadcast %cst_265 : f32 to vector<8x128xf32>
    %552 = arith.mulf %551, %550 : vector<8x128xf32>
    %553 = math.tanh %552 : vector<8x128xf32>
    %cst_266 = arith.constant 5.000000e-01 : f32
    %554 = vector.broadcast %cst_266 : f32 to vector<8x128xf32>
    %555 = arith.mulf %554, %553 : vector<8x128xf32>
    %cst_267 = arith.constant 5.000000e-01 : f32
    %556 = vector.broadcast %cst_267 : f32 to vector<8x128xf32>
    %557 = arith.addf %555, %556 : vector<8x128xf32>
    %558 = arith.mulf %547, %442 : vector<8x128xf32>
    %559 = arith.mulf %539, %549 : vector<8x128xf32>
    %560 = arith.addf %558, %559 : vector<8x128xf32>
    %561 = math.tanh %560 : vector<8x128xf32>
    %562 = arith.mulf %557, %561 : vector<8x128xf32>
    %563 = tpu.concatenate %444, %483 in 1 : vector<8x128xf32>, vector<8x128xf32> -> vector<8x256xf32>
    %c1_268 = arith.constant 1 : index
    %c0_269 = arith.constant 0 : index
    %c0_270 = arith.constant 0 : index
    %564 = vector.load %arg10[%c1_268, %c0_269, %c0_270] : memref<3x256x512xf32, #tpu.memory_space<vmem>>, vector<1x256x512xf32>
    %565 = vector.shape_cast %564 : vector<1x256x512xf32> to vector<256x512xf32>
    %cst_271 = arith.constant dense<0.000000e+00> : vector<8x512xf32>
    %566 = tpu.matmul %563, %565, %cst_271 {dimension_numbers = #tpu.dot_dimension_numbers<[1], [0], [0], [1], [0, 0, 1, 1], [], []>} : vector<8x256xf32>, vector<256x512xf32>, vector<8x512xf32> -> vector<8x512xf32>
    %c1_272 = arith.constant 1 : index
    %c0_273 = arith.constant 0 : index
    %c0_274 = arith.constant 0 : index
    %567 = vector.load %arg2[%c1_272, %c0_273, %c0_274] : memref<3x1x512xf32, #tpu.memory_space<vmem>>, vector<1x1x512xf32>
    %568 = vector.shape_cast %567 : vector<1x1x512xf32> to vector<1x512xf32>
    %569 = vector.broadcast %568 : vector<1x512xf32> to vector<8x512xf32>
    %570 = arith.addf %566, %569 : vector<8x512xf32>
    %571 = vector.extract_strided_slice %570 {offsets = [0, 0], sizes = [8, 128], strides = [1, 1]} : vector<8x512xf32> to vector<8x128xf32>
    %cst_275 = arith.constant 5.000000e-01 : f32
    %572 = vector.broadcast %cst_275 : f32 to vector<8x128xf32>
    %573 = arith.mulf %572, %571 : vector<8x128xf32>
    %574 = math.tanh %573 : vector<8x128xf32>
    %cst_276 = arith.constant 5.000000e-01 : f32
    %575 = vector.broadcast %cst_276 : f32 to vector<8x128xf32>
    %576 = arith.mulf %575, %574 : vector<8x128xf32>
    %cst_277 = arith.constant 5.000000e-01 : f32
    %577 = vector.broadcast %cst_277 : f32 to vector<8x128xf32>
    %578 = arith.addf %576, %577 : vector<8x128xf32>
    %579 = vector.extract_strided_slice %570 {offsets = [0, 128], sizes = [8, 128], strides = [1, 1]} : vector<8x512xf32> to vector<8x128xf32>
    %cst_278 = arith.constant 5.000000e-01 : f32
    %580 = vector.broadcast %cst_278 : f32 to vector<8x128xf32>
    %581 = arith.mulf %580, %579 : vector<8x128xf32>
    %582 = math.tanh %581 : vector<8x128xf32>
    %cst_279 = arith.constant 5.000000e-01 : f32
    %583 = vector.broadcast %cst_279 : f32 to vector<8x128xf32>
    %584 = arith.mulf %583, %582 : vector<8x128xf32>
    %cst_280 = arith.constant 5.000000e-01 : f32
    %585 = vector.broadcast %cst_280 : f32 to vector<8x128xf32>
    %586 = arith.addf %584, %585 : vector<8x128xf32>
    %587 = vector.extract_strided_slice %570 {offsets = [0, 256], sizes = [8, 128], strides = [1, 1]} : vector<8x512xf32> to vector<8x128xf32>
    %588 = math.tanh %587 : vector<8x128xf32>
    %589 = vector.extract_strided_slice %570 {offsets = [0, 384], sizes = [8, 128], strides = [1, 1]} : vector<8x512xf32> to vector<8x128xf32>
    %cst_281 = arith.constant 5.000000e-01 : f32
    %590 = vector.broadcast %cst_281 : f32 to vector<8x128xf32>
    %591 = arith.mulf %590, %589 : vector<8x128xf32>
    %592 = math.tanh %591 : vector<8x128xf32>
    %cst_282 = arith.constant 5.000000e-01 : f32
    %593 = vector.broadcast %cst_282 : f32 to vector<8x128xf32>
    %594 = arith.mulf %593, %592 : vector<8x128xf32>
    %cst_283 = arith.constant 5.000000e-01 : f32
    %595 = vector.broadcast %cst_283 : f32 to vector<8x128xf32>
    %596 = arith.addf %594, %595 : vector<8x128xf32>
    %597 = arith.mulf %586, %481 : vector<8x128xf32>
    %598 = arith.mulf %578, %588 : vector<8x128xf32>
    %599 = arith.addf %597, %598 : vector<8x128xf32>
    %600 = math.tanh %599 : vector<8x128xf32>
    %601 = arith.mulf %596, %600 : vector<8x128xf32>
    %602 = tpu.concatenate %483, %522 in 1 : vector<8x128xf32>, vector<8x128xf32> -> vector<8x256xf32>
    %c2_284 = arith.constant 2 : index
    %c0_285 = arith.constant 0 : index
    %c0_286 = arith.constant 0 : index
    %603 = vector.load %arg10[%c2_284, %c0_285, %c0_286] : memref<3x256x512xf32, #tpu.memory_space<vmem>>, vector<1x256x512xf32>
    %604 = vector.shape_cast %603 : vector<1x256x512xf32> to vector<256x512xf32>
    %cst_287 = arith.constant dense<0.000000e+00> : vector<8x512xf32>
    %605 = tpu.matmul %602, %604, %cst_287 {dimension_numbers = #tpu.dot_dimension_numbers<[1], [0], [0], [1], [0, 0, 1, 1], [], []>} : vector<8x256xf32>, vector<256x512xf32>, vector<8x512xf32> -> vector<8x512xf32>
    %c2_288 = arith.constant 2 : index
    %c0_289 = arith.constant 0 : index
    %c0_290 = arith.constant 0 : index
    %606 = vector.load %arg2[%c2_288, %c0_289, %c0_290] : memref<3x1x512xf32, #tpu.memory_space<vmem>>, vector<1x1x512xf32>
    %607 = vector.shape_cast %606 : vector<1x1x512xf32> to vector<1x512xf32>
    %608 = vector.broadcast %607 : vector<1x512xf32> to vector<8x512xf32>
    %609 = arith.addf %605, %608 : vector<8x512xf32>
    %610 = vector.extract_strided_slice %609 {offsets = [0, 0], sizes = [8, 128], strides = [1, 1]} : vector<8x512xf32> to vector<8x128xf32>
    %cst_291 = arith.constant 5.000000e-01 : f32
    %611 = vector.broadcast %cst_291 : f32 to vector<8x128xf32>
    %612 = arith.mulf %611, %610 : vector<8x128xf32>
    %613 = math.tanh %612 : vector<8x128xf32>
    %cst_292 = arith.constant 5.000000e-01 : f32
    %614 = vector.broadcast %cst_292 : f32 to vector<8x128xf32>
    %615 = arith.mulf %614, %613 : vector<8x128xf32>
    %cst_293 = arith.constant 5.000000e-01 : f32
    %616 = vector.broadcast %cst_293 : f32 to vector<8x128xf32>
    %617 = arith.addf %615, %616 : vector<8x128xf32>
    %618 = vector.extract_strided_slice %609 {offsets = [0, 128], sizes = [8, 128], strides = [1, 1]} : vector<8x512xf32> to vector<8x128xf32>
    %cst_294 = arith.constant 5.000000e-01 : f32
    %619 = vector.broadcast %cst_294 : f32 to vector<8x128xf32>
    %620 = arith.mulf %619, %618 : vector<8x128xf32>
    %621 = math.tanh %620 : vector<8x128xf32>
    %cst_295 = arith.constant 5.000000e-01 : f32
    %622 = vector.broadcast %cst_295 : f32 to vector<8x128xf32>
    %623 = arith.mulf %622, %621 : vector<8x128xf32>
    %cst_296 = arith.constant 5.000000e-01 : f32
    %624 = vector.broadcast %cst_296 : f32 to vector<8x128xf32>
    %625 = arith.addf %623, %624 : vector<8x128xf32>
    %626 = vector.extract_strided_slice %609 {offsets = [0, 256], sizes = [8, 128], strides = [1, 1]} : vector<8x512xf32> to vector<8x128xf32>
    %627 = math.tanh %626 : vector<8x128xf32>
    %628 = vector.extract_strided_slice %609 {offsets = [0, 384], sizes = [8, 128], strides = [1, 1]} : vector<8x512xf32> to vector<8x128xf32>
    %cst_297 = arith.constant 5.000000e-01 : f32
    %629 = vector.broadcast %cst_297 : f32 to vector<8x128xf32>
    %630 = arith.mulf %629, %628 : vector<8x128xf32>
    %631 = math.tanh %630 : vector<8x128xf32>
    %cst_298 = arith.constant 5.000000e-01 : f32
    %632 = vector.broadcast %cst_298 : f32 to vector<8x128xf32>
    %633 = arith.mulf %632, %631 : vector<8x128xf32>
    %cst_299 = arith.constant 5.000000e-01 : f32
    %634 = vector.broadcast %cst_299 : f32 to vector<8x128xf32>
    %635 = arith.addf %633, %634 : vector<8x128xf32>
    %636 = arith.mulf %625, %520 : vector<8x128xf32>
    %637 = arith.mulf %617, %627 : vector<8x128xf32>
    %638 = arith.addf %636, %637 : vector<8x128xf32>
    %639 = math.tanh %638 : vector<8x128xf32>
    %640 = arith.mulf %635, %639 : vector<8x128xf32>
    %c48 = arith.constant 48 : index
    %c0_300 = arith.constant 0 : index
    %641 = vector.load %arg0[%c48, %c0_300] : memref<64x128xf32, #tpu.memory_space<vmem>>, vector<8x128xf32>
    %642 = tpu.concatenate %641, %562 in 1 : vector<8x128xf32>, vector<8x128xf32> -> vector<8x256xf32>
    %c0_301 = arith.constant 0 : index
    %c0_302 = arith.constant 0 : index
    %c0_303 = arith.constant 0 : index
    %643 = vector.load %arg10[%c0_301, %c0_302, %c0_303] : memref<3x256x512xf32, #tpu.memory_space<vmem>>, vector<1x256x512xf32>
    %644 = vector.shape_cast %643 : vector<1x256x512xf32> to vector<256x512xf32>
    %cst_304 = arith.constant dense<0.000000e+00> : vector<8x512xf32>
    %645 = tpu.matmul %642, %644, %cst_304 {dimension_numbers = #tpu.dot_dimension_numbers<[1], [0], [0], [1], [0, 0, 1, 1], [], []>} : vector<8x256xf32>, vector<256x512xf32>, vector<8x512xf32> -> vector<8x512xf32>
    %c0_305 = arith.constant 0 : index
    %c0_306 = arith.constant 0 : index
    %c0_307 = arith.constant 0 : index
    %646 = vector.load %arg2[%c0_305, %c0_306, %c0_307] : memref<3x1x512xf32, #tpu.memory_space<vmem>>, vector<1x1x512xf32>
    %647 = vector.shape_cast %646 : vector<1x1x512xf32> to vector<1x512xf32>
    %648 = vector.broadcast %647 : vector<1x512xf32> to vector<8x512xf32>
    %649 = arith.addf %645, %648 : vector<8x512xf32>
    %650 = vector.extract_strided_slice %649 {offsets = [0, 0], sizes = [8, 128], strides = [1, 1]} : vector<8x512xf32> to vector<8x128xf32>
    %cst_308 = arith.constant 5.000000e-01 : f32
    %651 = vector.broadcast %cst_308 : f32 to vector<8x128xf32>
    %652 = arith.mulf %651, %650 : vector<8x128xf32>
    %653 = math.tanh %652 : vector<8x128xf32>
    %cst_309 = arith.constant 5.000000e-01 : f32
    %654 = vector.broadcast %cst_309 : f32 to vector<8x128xf32>
    %655 = arith.mulf %654, %653 : vector<8x128xf32>
    %cst_310 = arith.constant 5.000000e-01 : f32
    %656 = vector.broadcast %cst_310 : f32 to vector<8x128xf32>
    %657 = arith.addf %655, %656 : vector<8x128xf32>
    %658 = vector.extract_strided_slice %649 {offsets = [0, 128], sizes = [8, 128], strides = [1, 1]} : vector<8x512xf32> to vector<8x128xf32>
    %cst_311 = arith.constant 5.000000e-01 : f32
    %659 = vector.broadcast %cst_311 : f32 to vector<8x128xf32>
    %660 = arith.mulf %659, %658 : vector<8x128xf32>
    %661 = math.tanh %660 : vector<8x128xf32>
    %cst_312 = arith.constant 5.000000e-01 : f32
    %662 = vector.broadcast %cst_312 : f32 to vector<8x128xf32>
    %663 = arith.mulf %662, %661 : vector<8x128xf32>
    %cst_313 = arith.constant 5.000000e-01 : f32
    %664 = vector.broadcast %cst_313 : f32 to vector<8x128xf32>
    %665 = arith.addf %663, %664 : vector<8x128xf32>
    %666 = vector.extract_strided_slice %649 {offsets = [0, 256], sizes = [8, 128], strides = [1, 1]} : vector<8x512xf32> to vector<8x128xf32>
    %667 = math.tanh %666 : vector<8x128xf32>
    %668 = vector.extract_strided_slice %649 {offsets = [0, 384], sizes = [8, 128], strides = [1, 1]} : vector<8x512xf32> to vector<8x128xf32>
    %cst_314 = arith.constant 5.000000e-01 : f32
    %669 = vector.broadcast %cst_314 : f32 to vector<8x128xf32>
    %670 = arith.mulf %669, %668 : vector<8x128xf32>
    %671 = math.tanh %670 : vector<8x128xf32>
    %cst_315 = arith.constant 5.000000e-01 : f32
    %672 = vector.broadcast %cst_315 : f32 to vector<8x128xf32>
    %673 = arith.mulf %672, %671 : vector<8x128xf32>
    %cst_316 = arith.constant 5.000000e-01 : f32
    %674 = vector.broadcast %cst_316 : f32 to vector<8x128xf32>
    %675 = arith.addf %673, %674 : vector<8x128xf32>
    %676 = arith.mulf %665, %560 : vector<8x128xf32>
    %677 = arith.mulf %657, %667 : vector<8x128xf32>
    %678 = arith.addf %676, %677 : vector<8x128xf32>
    %679 = math.tanh %678 : vector<8x128xf32>
    %680 = arith.mulf %675, %679 : vector<8x128xf32>
    %681 = tpu.concatenate %562, %601 in 1 : vector<8x128xf32>, vector<8x128xf32> -> vector<8x256xf32>
    %c1_317 = arith.constant 1 : index
    %c0_318 = arith.constant 0 : index
    %c0_319 = arith.constant 0 : index
    %682 = vector.load %arg10[%c1_317, %c0_318, %c0_319] : memref<3x256x512xf32, #tpu.memory_space<vmem>>, vector<1x256x512xf32>
    %683 = vector.shape_cast %682 : vector<1x256x512xf32> to vector<256x512xf32>
    %cst_320 = arith.constant dense<0.000000e+00> : vector<8x512xf32>
    %684 = tpu.matmul %681, %683, %cst_320 {dimension_numbers = #tpu.dot_dimension_numbers<[1], [0], [0], [1], [0, 0, 1, 1], [], []>} : vector<8x256xf32>, vector<256x512xf32>, vector<8x512xf32> -> vector<8x512xf32>
    %c1_321 = arith.constant 1 : index
    %c0_322 = arith.constant 0 : index
    %c0_323 = arith.constant 0 : index
    %685 = vector.load %arg2[%c1_321, %c0_322, %c0_323] : memref<3x1x512xf32, #tpu.memory_space<vmem>>, vector<1x1x512xf32>
    %686 = vector.shape_cast %685 : vector<1x1x512xf32> to vector<1x512xf32>
    %687 = vector.broadcast %686 : vector<1x512xf32> to vector<8x512xf32>
    %688 = arith.addf %684, %687 : vector<8x512xf32>
    %689 = vector.extract_strided_slice %688 {offsets = [0, 0], sizes = [8, 128], strides = [1, 1]} : vector<8x512xf32> to vector<8x128xf32>
    %cst_324 = arith.constant 5.000000e-01 : f32
    %690 = vector.broadcast %cst_324 : f32 to vector<8x128xf32>
    %691 = arith.mulf %690, %689 : vector<8x128xf32>
    %692 = math.tanh %691 : vector<8x128xf32>
    %cst_325 = arith.constant 5.000000e-01 : f32
    %693 = vector.broadcast %cst_325 : f32 to vector<8x128xf32>
    %694 = arith.mulf %693, %692 : vector<8x128xf32>
    %cst_326 = arith.constant 5.000000e-01 : f32
    %695 = vector.broadcast %cst_326 : f32 to vector<8x128xf32>
    %696 = arith.addf %694, %695 : vector<8x128xf32>
    %697 = vector.extract_strided_slice %688 {offsets = [0, 128], sizes = [8, 128], strides = [1, 1]} : vector<8x512xf32> to vector<8x128xf32>
    %cst_327 = arith.constant 5.000000e-01 : f32
    %698 = vector.broadcast %cst_327 : f32 to vector<8x128xf32>
    %699 = arith.mulf %698, %697 : vector<8x128xf32>
    %700 = math.tanh %699 : vector<8x128xf32>
    %cst_328 = arith.constant 5.000000e-01 : f32
    %701 = vector.broadcast %cst_328 : f32 to vector<8x128xf32>
    %702 = arith.mulf %701, %700 : vector<8x128xf32>
    %cst_329 = arith.constant 5.000000e-01 : f32
    %703 = vector.broadcast %cst_329 : f32 to vector<8x128xf32>
    %704 = arith.addf %702, %703 : vector<8x128xf32>
    %705 = vector.extract_strided_slice %688 {offsets = [0, 256], sizes = [8, 128], strides = [1, 1]} : vector<8x512xf32> to vector<8x128xf32>
    %706 = math.tanh %705 : vector<8x128xf32>
    %707 = vector.extract_strided_slice %688 {offsets = [0, 384], sizes = [8, 128], strides = [1, 1]} : vector<8x512xf32> to vector<8x128xf32>
    %cst_330 = arith.constant 5.000000e-01 : f32
    %708 = vector.broadcast %cst_330 : f32 to vector<8x128xf32>
    %709 = arith.mulf %708, %707 : vector<8x128xf32>
    %710 = math.tanh %709 : vector<8x128xf32>
    %cst_331 = arith.constant 5.000000e-01 : f32
    %711 = vector.broadcast %cst_331 : f32 to vector<8x128xf32>
    %712 = arith.mulf %711, %710 : vector<8x128xf32>
    %cst_332 = arith.constant 5.000000e-01 : f32
    %713 = vector.broadcast %cst_332 : f32 to vector<8x128xf32>
    %714 = arith.addf %712, %713 : vector<8x128xf32>
    %715 = arith.mulf %704, %599 : vector<8x128xf32>
    %716 = arith.mulf %696, %706 : vector<8x128xf32>
    %717 = arith.addf %715, %716 : vector<8x128xf32>
    %718 = math.tanh %717 : vector<8x128xf32>
    %719 = arith.mulf %714, %718 : vector<8x128xf32>
    %720 = tpu.concatenate %601, %640 in 1 : vector<8x128xf32>, vector<8x128xf32> -> vector<8x256xf32>
    %c2_333 = arith.constant 2 : index
    %c0_334 = arith.constant 0 : index
    %c0_335 = arith.constant 0 : index
    %721 = vector.load %arg10[%c2_333, %c0_334, %c0_335] : memref<3x256x512xf32, #tpu.memory_space<vmem>>, vector<1x256x512xf32>
    %722 = vector.shape_cast %721 : vector<1x256x512xf32> to vector<256x512xf32>
    %cst_336 = arith.constant dense<0.000000e+00> : vector<8x512xf32>
    %723 = tpu.matmul %720, %722, %cst_336 {dimension_numbers = #tpu.dot_dimension_numbers<[1], [0], [0], [1], [0, 0, 1, 1], [], []>} : vector<8x256xf32>, vector<256x512xf32>, vector<8x512xf32> -> vector<8x512xf32>
    %c2_337 = arith.constant 2 : index
    %c0_338 = arith.constant 0 : index
    %c0_339 = arith.constant 0 : index
    %724 = vector.load %arg2[%c2_337, %c0_338, %c0_339] : memref<3x1x512xf32, #tpu.memory_space<vmem>>, vector<1x1x512xf32>
    %725 = vector.shape_cast %724 : vector<1x1x512xf32> to vector<1x512xf32>
    %726 = vector.broadcast %725 : vector<1x512xf32> to vector<8x512xf32>
    %727 = arith.addf %723, %726 : vector<8x512xf32>
    %728 = vector.extract_strided_slice %727 {offsets = [0, 0], sizes = [8, 128], strides = [1, 1]} : vector<8x512xf32> to vector<8x128xf32>
    %cst_340 = arith.constant 5.000000e-01 : f32
    %729 = vector.broadcast %cst_340 : f32 to vector<8x128xf32>
    %730 = arith.mulf %729, %728 : vector<8x128xf32>
    %731 = math.tanh %730 : vector<8x128xf32>
    %cst_341 = arith.constant 5.000000e-01 : f32
    %732 = vector.broadcast %cst_341 : f32 to vector<8x128xf32>
    %733 = arith.mulf %732, %731 : vector<8x128xf32>
    %cst_342 = arith.constant 5.000000e-01 : f32
    %734 = vector.broadcast %cst_342 : f32 to vector<8x128xf32>
    %735 = arith.addf %733, %734 : vector<8x128xf32>
    %736 = vector.extract_strided_slice %727 {offsets = [0, 128], sizes = [8, 128], strides = [1, 1]} : vector<8x512xf32> to vector<8x128xf32>
    %cst_343 = arith.constant 5.000000e-01 : f32
    %737 = vector.broadcast %cst_343 : f32 to vector<8x128xf32>
    %738 = arith.mulf %737, %736 : vector<8x128xf32>
    %739 = math.tanh %738 : vector<8x128xf32>
    %cst_344 = arith.constant 5.000000e-01 : f32
    %740 = vector.broadcast %cst_344 : f32 to vector<8x128xf32>
    %741 = arith.mulf %740, %739 : vector<8x128xf32>
    %cst_345 = arith.constant 5.000000e-01 : f32
    %742 = vector.broadcast %cst_345 : f32 to vector<8x128xf32>
    %743 = arith.addf %741, %742 : vector<8x128xf32>
    %744 = vector.extract_strided_slice %727 {offsets = [0, 256], sizes = [8, 128], strides = [1, 1]} : vector<8x512xf32> to vector<8x128xf32>
    %745 = math.tanh %744 : vector<8x128xf32>
    %746 = vector.extract_strided_slice %727 {offsets = [0, 384], sizes = [8, 128], strides = [1, 1]} : vector<8x512xf32> to vector<8x128xf32>
    %cst_346 = arith.constant 5.000000e-01 : f32
    %747 = vector.broadcast %cst_346 : f32 to vector<8x128xf32>
    %748 = arith.mulf %747, %746 : vector<8x128xf32>
    %749 = math.tanh %748 : vector<8x128xf32>
    %cst_347 = arith.constant 5.000000e-01 : f32
    %750 = vector.broadcast %cst_347 : f32 to vector<8x128xf32>
    %751 = arith.mulf %750, %749 : vector<8x128xf32>
    %cst_348 = arith.constant 5.000000e-01 : f32
    %752 = vector.broadcast %cst_348 : f32 to vector<8x128xf32>
    %753 = arith.addf %751, %752 : vector<8x128xf32>
    %754 = arith.mulf %743, %638 : vector<8x128xf32>
    %755 = arith.mulf %735, %745 : vector<8x128xf32>
    %756 = arith.addf %754, %755 : vector<8x128xf32>
    %757 = math.tanh %756 : vector<8x128xf32>
    %758 = arith.mulf %753, %757 : vector<8x128xf32>
    %c56 = arith.constant 56 : index
    %c0_349 = arith.constant 0 : index
    %759 = vector.load %arg0[%c56, %c0_349] : memref<64x128xf32, #tpu.memory_space<vmem>>, vector<8x128xf32>
    %760 = tpu.concatenate %759, %680 in 1 : vector<8x128xf32>, vector<8x128xf32> -> vector<8x256xf32>
    %c0_350 = arith.constant 0 : index
    %c0_351 = arith.constant 0 : index
    %c0_352 = arith.constant 0 : index
    %761 = vector.load %arg10[%c0_350, %c0_351, %c0_352] : memref<3x256x512xf32, #tpu.memory_space<vmem>>, vector<1x256x512xf32>
    %762 = vector.shape_cast %761 : vector<1x256x512xf32> to vector<256x512xf32>
    %cst_353 = arith.constant dense<0.000000e+00> : vector<8x512xf32>
    %763 = tpu.matmul %760, %762, %cst_353 {dimension_numbers = #tpu.dot_dimension_numbers<[1], [0], [0], [1], [0, 0, 1, 1], [], []>} : vector<8x256xf32>, vector<256x512xf32>, vector<8x512xf32> -> vector<8x512xf32>
    %c0_354 = arith.constant 0 : index
    %c0_355 = arith.constant 0 : index
    %c0_356 = arith.constant 0 : index
    %764 = vector.load %arg2[%c0_354, %c0_355, %c0_356] : memref<3x1x512xf32, #tpu.memory_space<vmem>>, vector<1x1x512xf32>
    %765 = vector.shape_cast %764 : vector<1x1x512xf32> to vector<1x512xf32>
    %766 = vector.broadcast %765 : vector<1x512xf32> to vector<8x512xf32>
    %767 = arith.addf %763, %766 : vector<8x512xf32>
    %768 = vector.extract_strided_slice %767 {offsets = [0, 0], sizes = [8, 128], strides = [1, 1]} : vector<8x512xf32> to vector<8x128xf32>
    %cst_357 = arith.constant 5.000000e-01 : f32
    %769 = vector.broadcast %cst_357 : f32 to vector<8x128xf32>
    %770 = arith.mulf %769, %768 : vector<8x128xf32>
    %771 = math.tanh %770 : vector<8x128xf32>
    %cst_358 = arith.constant 5.000000e-01 : f32
    %772 = vector.broadcast %cst_358 : f32 to vector<8x128xf32>
    %773 = arith.mulf %772, %771 : vector<8x128xf32>
    %cst_359 = arith.constant 5.000000e-01 : f32
    %774 = vector.broadcast %cst_359 : f32 to vector<8x128xf32>
    %775 = arith.addf %773, %774 : vector<8x128xf32>
    %776 = vector.extract_strided_slice %767 {offsets = [0, 128], sizes = [8, 128], strides = [1, 1]} : vector<8x512xf32> to vector<8x128xf32>
    %cst_360 = arith.constant 5.000000e-01 : f32
    %777 = vector.broadcast %cst_360 : f32 to vector<8x128xf32>
    %778 = arith.mulf %777, %776 : vector<8x128xf32>
    %779 = math.tanh %778 : vector<8x128xf32>
    %cst_361 = arith.constant 5.000000e-01 : f32
    %780 = vector.broadcast %cst_361 : f32 to vector<8x128xf32>
    %781 = arith.mulf %780, %779 : vector<8x128xf32>
    %cst_362 = arith.constant 5.000000e-01 : f32
    %782 = vector.broadcast %cst_362 : f32 to vector<8x128xf32>
    %783 = arith.addf %781, %782 : vector<8x128xf32>
    %784 = vector.extract_strided_slice %767 {offsets = [0, 256], sizes = [8, 128], strides = [1, 1]} : vector<8x512xf32> to vector<8x128xf32>
    %785 = math.tanh %784 : vector<8x128xf32>
    %786 = vector.extract_strided_slice %767 {offsets = [0, 384], sizes = [8, 128], strides = [1, 1]} : vector<8x512xf32> to vector<8x128xf32>
    %cst_363 = arith.constant 5.000000e-01 : f32
    %787 = vector.broadcast %cst_363 : f32 to vector<8x128xf32>
    %788 = arith.mulf %787, %786 : vector<8x128xf32>
    %789 = math.tanh %788 : vector<8x128xf32>
    %cst_364 = arith.constant 5.000000e-01 : f32
    %790 = vector.broadcast %cst_364 : f32 to vector<8x128xf32>
    %791 = arith.mulf %790, %789 : vector<8x128xf32>
    %cst_365 = arith.constant 5.000000e-01 : f32
    %792 = vector.broadcast %cst_365 : f32 to vector<8x128xf32>
    %793 = arith.addf %791, %792 : vector<8x128xf32>
    %794 = arith.mulf %783, %678 : vector<8x128xf32>
    %795 = arith.mulf %775, %785 : vector<8x128xf32>
    %796 = arith.addf %794, %795 : vector<8x128xf32>
    %797 = math.tanh %796 : vector<8x128xf32>
    %798 = arith.mulf %793, %797 : vector<8x128xf32>
    %799 = tpu.concatenate %680, %719 in 1 : vector<8x128xf32>, vector<8x128xf32> -> vector<8x256xf32>
    %c1_366 = arith.constant 1 : index
    %c0_367 = arith.constant 0 : index
    %c0_368 = arith.constant 0 : index
    %800 = vector.load %arg10[%c1_366, %c0_367, %c0_368] : memref<3x256x512xf32, #tpu.memory_space<vmem>>, vector<1x256x512xf32>
    %801 = vector.shape_cast %800 : vector<1x256x512xf32> to vector<256x512xf32>
    %cst_369 = arith.constant dense<0.000000e+00> : vector<8x512xf32>
    %802 = tpu.matmul %799, %801, %cst_369 {dimension_numbers = #tpu.dot_dimension_numbers<[1], [0], [0], [1], [0, 0, 1, 1], [], []>} : vector<8x256xf32>, vector<256x512xf32>, vector<8x512xf32> -> vector<8x512xf32>
    %c1_370 = arith.constant 1 : index
    %c0_371 = arith.constant 0 : index
    %c0_372 = arith.constant 0 : index
    %803 = vector.load %arg2[%c1_370, %c0_371, %c0_372] : memref<3x1x512xf32, #tpu.memory_space<vmem>>, vector<1x1x512xf32>
    %804 = vector.shape_cast %803 : vector<1x1x512xf32> to vector<1x512xf32>
    %805 = vector.broadcast %804 : vector<1x512xf32> to vector<8x512xf32>
    %806 = arith.addf %802, %805 : vector<8x512xf32>
    %807 = vector.extract_strided_slice %806 {offsets = [0, 0], sizes = [8, 128], strides = [1, 1]} : vector<8x512xf32> to vector<8x128xf32>
    %cst_373 = arith.constant 5.000000e-01 : f32
    %808 = vector.broadcast %cst_373 : f32 to vector<8x128xf32>
    %809 = arith.mulf %808, %807 : vector<8x128xf32>
    %810 = math.tanh %809 : vector<8x128xf32>
    %cst_374 = arith.constant 5.000000e-01 : f32
    %811 = vector.broadcast %cst_374 : f32 to vector<8x128xf32>
    %812 = arith.mulf %811, %810 : vector<8x128xf32>
    %cst_375 = arith.constant 5.000000e-01 : f32
    %813 = vector.broadcast %cst_375 : f32 to vector<8x128xf32>
    %814 = arith.addf %812, %813 : vector<8x128xf32>
    %815 = vector.extract_strided_slice %806 {offsets = [0, 128], sizes = [8, 128], strides = [1, 1]} : vector<8x512xf32> to vector<8x128xf32>
    %cst_376 = arith.constant 5.000000e-01 : f32
    %816 = vector.broadcast %cst_376 : f32 to vector<8x128xf32>
    %817 = arith.mulf %816, %815 : vector<8x128xf32>
    %818 = math.tanh %817 : vector<8x128xf32>
    %cst_377 = arith.constant 5.000000e-01 : f32
    %819 = vector.broadcast %cst_377 : f32 to vector<8x128xf32>
    %820 = arith.mulf %819, %818 : vector<8x128xf32>
    %cst_378 = arith.constant 5.000000e-01 : f32
    %821 = vector.broadcast %cst_378 : f32 to vector<8x128xf32>
    %822 = arith.addf %820, %821 : vector<8x128xf32>
    %823 = vector.extract_strided_slice %806 {offsets = [0, 256], sizes = [8, 128], strides = [1, 1]} : vector<8x512xf32> to vector<8x128xf32>
    %824 = math.tanh %823 : vector<8x128xf32>
    %825 = vector.extract_strided_slice %806 {offsets = [0, 384], sizes = [8, 128], strides = [1, 1]} : vector<8x512xf32> to vector<8x128xf32>
    %cst_379 = arith.constant 5.000000e-01 : f32
    %826 = vector.broadcast %cst_379 : f32 to vector<8x128xf32>
    %827 = arith.mulf %826, %825 : vector<8x128xf32>
    %828 = math.tanh %827 : vector<8x128xf32>
    %cst_380 = arith.constant 5.000000e-01 : f32
    %829 = vector.broadcast %cst_380 : f32 to vector<8x128xf32>
    %830 = arith.mulf %829, %828 : vector<8x128xf32>
    %cst_381 = arith.constant 5.000000e-01 : f32
    %831 = vector.broadcast %cst_381 : f32 to vector<8x128xf32>
    %832 = arith.addf %830, %831 : vector<8x128xf32>
    %833 = arith.mulf %822, %717 : vector<8x128xf32>
    %834 = arith.mulf %814, %824 : vector<8x128xf32>
    %835 = arith.addf %833, %834 : vector<8x128xf32>
    %836 = math.tanh %835 : vector<8x128xf32>
    %837 = arith.mulf %832, %836 : vector<8x128xf32>
    %838 = tpu.concatenate %719, %758 in 1 : vector<8x128xf32>, vector<8x128xf32> -> vector<8x256xf32>
    %c2_382 = arith.constant 2 : index
    %c0_383 = arith.constant 0 : index
    %c0_384 = arith.constant 0 : index
    %839 = vector.load %arg10[%c2_382, %c0_383, %c0_384] : memref<3x256x512xf32, #tpu.memory_space<vmem>>, vector<1x256x512xf32>
    %840 = vector.shape_cast %839 : vector<1x256x512xf32> to vector<256x512xf32>
    %cst_385 = arith.constant dense<0.000000e+00> : vector<8x512xf32>
    %841 = tpu.matmul %838, %840, %cst_385 {dimension_numbers = #tpu.dot_dimension_numbers<[1], [0], [0], [1], [0, 0, 1, 1], [], []>} : vector<8x256xf32>, vector<256x512xf32>, vector<8x512xf32> -> vector<8x512xf32>
    %c2_386 = arith.constant 2 : index
    %c0_387 = arith.constant 0 : index
    %c0_388 = arith.constant 0 : index
    %842 = vector.load %arg2[%c2_386, %c0_387, %c0_388] : memref<3x1x512xf32, #tpu.memory_space<vmem>>, vector<1x1x512xf32>
    %843 = vector.shape_cast %842 : vector<1x1x512xf32> to vector<1x512xf32>
    %844 = vector.broadcast %843 : vector<1x512xf32> to vector<8x512xf32>
    %845 = arith.addf %841, %844 : vector<8x512xf32>
    %846 = vector.extract_strided_slice %845 {offsets = [0, 0], sizes = [8, 128], strides = [1, 1]} : vector<8x512xf32> to vector<8x128xf32>
    %cst_389 = arith.constant 5.000000e-01 : f32
    %847 = vector.broadcast %cst_389 : f32 to vector<8x128xf32>
    %848 = arith.mulf %847, %846 : vector<8x128xf32>
    %849 = math.tanh %848 : vector<8x128xf32>
    %cst_390 = arith.constant 5.000000e-01 : f32
    %850 = vector.broadcast %cst_390 : f32 to vector<8x128xf32>
    %851 = arith.mulf %850, %849 : vector<8x128xf32>
    %cst_391 = arith.constant 5.000000e-01 : f32
    %852 = vector.broadcast %cst_391 : f32 to vector<8x128xf32>
    %853 = arith.addf %851, %852 : vector<8x128xf32>
    %854 = vector.extract_strided_slice %845 {offsets = [0, 128], sizes = [8, 128], strides = [1, 1]} : vector<8x512xf32> to vector<8x128xf32>
    %cst_392 = arith.constant 5.000000e-01 : f32
    %855 = vector.broadcast %cst_392 : f32 to vector<8x128xf32>
    %856 = arith.mulf %855, %854 : vector<8x128xf32>
    %857 = math.tanh %856 : vector<8x128xf32>
    %cst_393 = arith.constant 5.000000e-01 : f32
    %858 = vector.broadcast %cst_393 : f32 to vector<8x128xf32>
    %859 = arith.mulf %858, %857 : vector<8x128xf32>
    %cst_394 = arith.constant 5.000000e-01 : f32
    %860 = vector.broadcast %cst_394 : f32 to vector<8x128xf32>
    %861 = arith.addf %859, %860 : vector<8x128xf32>
    %862 = vector.extract_strided_slice %845 {offsets = [0, 256], sizes = [8, 128], strides = [1, 1]} : vector<8x512xf32> to vector<8x128xf32>
    %863 = math.tanh %862 : vector<8x128xf32>
    %864 = vector.extract_strided_slice %845 {offsets = [0, 384], sizes = [8, 128], strides = [1, 1]} : vector<8x512xf32> to vector<8x128xf32>
    %cst_395 = arith.constant 5.000000e-01 : f32
    %865 = vector.broadcast %cst_395 : f32 to vector<8x128xf32>
    %866 = arith.mulf %865, %864 : vector<8x128xf32>
    %867 = math.tanh %866 : vector<8x128xf32>
    %cst_396 = arith.constant 5.000000e-01 : f32
    %868 = vector.broadcast %cst_396 : f32 to vector<8x128xf32>
    %869 = arith.mulf %868, %867 : vector<8x128xf32>
    %cst_397 = arith.constant 5.000000e-01 : f32
    %870 = vector.broadcast %cst_397 : f32 to vector<8x128xf32>
    %871 = arith.addf %869, %870 : vector<8x128xf32>
    %872 = arith.mulf %861, %756 : vector<8x128xf32>
    %873 = arith.mulf %853, %863 : vector<8x128xf32>
    %874 = arith.addf %872, %873 : vector<8x128xf32>
    %875 = math.tanh %874 : vector<8x128xf32>
    %876 = arith.mulf %871, %875 : vector<8x128xf32>
    %877 = tpu.concatenate %798, %837 in 1 : vector<8x128xf32>, vector<8x128xf32> -> vector<8x256xf32>
    %c1_398 = arith.constant 1 : index
    %c0_399 = arith.constant 0 : index
    %c0_400 = arith.constant 0 : index
    %878 = vector.load %arg10[%c1_398, %c0_399, %c0_400] : memref<3x256x512xf32, #tpu.memory_space<vmem>>, vector<1x256x512xf32>
    %879 = vector.shape_cast %878 : vector<1x256x512xf32> to vector<256x512xf32>
    %cst_401 = arith.constant dense<0.000000e+00> : vector<8x512xf32>
    %880 = tpu.matmul %877, %879, %cst_401 {dimension_numbers = #tpu.dot_dimension_numbers<[1], [0], [0], [1], [0, 0, 1, 1], [], []>} : vector<8x256xf32>, vector<256x512xf32>, vector<8x512xf32> -> vector<8x512xf32>
    %c1_402 = arith.constant 1 : index
    %c0_403 = arith.constant 0 : index
    %c0_404 = arith.constant 0 : index
    %881 = vector.load %arg2[%c1_402, %c0_403, %c0_404] : memref<3x1x512xf32, #tpu.memory_space<vmem>>, vector<1x1x512xf32>
    %882 = vector.shape_cast %881 : vector<1x1x512xf32> to vector<1x512xf32>
    %883 = vector.broadcast %882 : vector<1x512xf32> to vector<8x512xf32>
    %884 = arith.addf %880, %883 : vector<8x512xf32>
    %885 = vector.extract_strided_slice %884 {offsets = [0, 0], sizes = [8, 128], strides = [1, 1]} : vector<8x512xf32> to vector<8x128xf32>
    %cst_405 = arith.constant 5.000000e-01 : f32
    %886 = vector.broadcast %cst_405 : f32 to vector<8x128xf32>
    %887 = arith.mulf %886, %885 : vector<8x128xf32>
    %888 = math.tanh %887 : vector<8x128xf32>
    %cst_406 = arith.constant 5.000000e-01 : f32
    %889 = vector.broadcast %cst_406 : f32 to vector<8x128xf32>
    %890 = arith.mulf %889, %888 : vector<8x128xf32>
    %cst_407 = arith.constant 5.000000e-01 : f32
    %891 = vector.broadcast %cst_407 : f32 to vector<8x128xf32>
    %892 = arith.addf %890, %891 : vector<8x128xf32>
    %893 = vector.extract_strided_slice %884 {offsets = [0, 128], sizes = [8, 128], strides = [1, 1]} : vector<8x512xf32> to vector<8x128xf32>
    %cst_408 = arith.constant 5.000000e-01 : f32
    %894 = vector.broadcast %cst_408 : f32 to vector<8x128xf32>
    %895 = arith.mulf %894, %893 : vector<8x128xf32>
    %896 = math.tanh %895 : vector<8x128xf32>
    %cst_409 = arith.constant 5.000000e-01 : f32
    %897 = vector.broadcast %cst_409 : f32 to vector<8x128xf32>
    %898 = arith.mulf %897, %896 : vector<8x128xf32>
    %cst_410 = arith.constant 5.000000e-01 : f32
    %899 = vector.broadcast %cst_410 : f32 to vector<8x128xf32>
    %900 = arith.addf %898, %899 : vector<8x128xf32>
    %901 = vector.extract_strided_slice %884 {offsets = [0, 256], sizes = [8, 128], strides = [1, 1]} : vector<8x512xf32> to vector<8x128xf32>
    %902 = math.tanh %901 : vector<8x128xf32>
    %903 = vector.extract_strided_slice %884 {offsets = [0, 384], sizes = [8, 128], strides = [1, 1]} : vector<8x512xf32> to vector<8x128xf32>
    %cst_411 = arith.constant 5.000000e-01 : f32
    %904 = vector.broadcast %cst_411 : f32 to vector<8x128xf32>
    %905 = arith.mulf %904, %903 : vector<8x128xf32>
    %906 = math.tanh %905 : vector<8x128xf32>
    %cst_412 = arith.constant 5.000000e-01 : f32
    %907 = vector.broadcast %cst_412 : f32 to vector<8x128xf32>
    %908 = arith.mulf %907, %906 : vector<8x128xf32>
    %cst_413 = arith.constant 5.000000e-01 : f32
    %909 = vector.broadcast %cst_413 : f32 to vector<8x128xf32>
    %910 = arith.addf %908, %909 : vector<8x128xf32>
    %911 = arith.mulf %900, %835 : vector<8x128xf32>
    %912 = arith.mulf %892, %902 : vector<8x128xf32>
    %913 = arith.addf %911, %912 : vector<8x128xf32>
    %914 = math.tanh %913 : vector<8x128xf32>
    %915 = arith.mulf %910, %914 : vector<8x128xf32>
    %916 = tpu.concatenate %837, %876 in 1 : vector<8x128xf32>, vector<8x128xf32> -> vector<8x256xf32>
    %c2_414 = arith.constant 2 : index
    %c0_415 = arith.constant 0 : index
    %c0_416 = arith.constant 0 : index
    %917 = vector.load %arg10[%c2_414, %c0_415, %c0_416] : memref<3x256x512xf32, #tpu.memory_space<vmem>>, vector<1x256x512xf32>
    %918 = vector.shape_cast %917 : vector<1x256x512xf32> to vector<256x512xf32>
    %cst_417 = arith.constant dense<0.000000e+00> : vector<8x512xf32>
    %919 = tpu.matmul %916, %918, %cst_417 {dimension_numbers = #tpu.dot_dimension_numbers<[1], [0], [0], [1], [0, 0, 1, 1], [], []>} : vector<8x256xf32>, vector<256x512xf32>, vector<8x512xf32> -> vector<8x512xf32>
    %c2_418 = arith.constant 2 : index
    %c0_419 = arith.constant 0 : index
    %c0_420 = arith.constant 0 : index
    %920 = vector.load %arg2[%c2_418, %c0_419, %c0_420] : memref<3x1x512xf32, #tpu.memory_space<vmem>>, vector<1x1x512xf32>
    %921 = vector.shape_cast %920 : vector<1x1x512xf32> to vector<1x512xf32>
    %922 = vector.broadcast %921 : vector<1x512xf32> to vector<8x512xf32>
    %923 = arith.addf %919, %922 : vector<8x512xf32>
    %924 = vector.extract_strided_slice %923 {offsets = [0, 0], sizes = [8, 128], strides = [1, 1]} : vector<8x512xf32> to vector<8x128xf32>
    %cst_421 = arith.constant 5.000000e-01 : f32
    %925 = vector.broadcast %cst_421 : f32 to vector<8x128xf32>
    %926 = arith.mulf %925, %924 : vector<8x128xf32>
    %927 = math.tanh %926 : vector<8x128xf32>
    %cst_422 = arith.constant 5.000000e-01 : f32
    %928 = vector.broadcast %cst_422 : f32 to vector<8x128xf32>
    %929 = arith.mulf %928, %927 : vector<8x128xf32>
    %cst_423 = arith.constant 5.000000e-01 : f32
    %930 = vector.broadcast %cst_423 : f32 to vector<8x128xf32>
    %931 = arith.addf %929, %930 : vector<8x128xf32>
    %932 = vector.extract_strided_slice %923 {offsets = [0, 128], sizes = [8, 128], strides = [1, 1]} : vector<8x512xf32> to vector<8x128xf32>
    %cst_424 = arith.constant 5.000000e-01 : f32
    %933 = vector.broadcast %cst_424 : f32 to vector<8x128xf32>
    %934 = arith.mulf %933, %932 : vector<8x128xf32>
    %935 = math.tanh %934 : vector<8x128xf32>
    %cst_425 = arith.constant 5.000000e-01 : f32
    %936 = vector.broadcast %cst_425 : f32 to vector<8x128xf32>
    %937 = arith.mulf %936, %935 : vector<8x128xf32>
    %cst_426 = arith.constant 5.000000e-01 : f32
    %938 = vector.broadcast %cst_426 : f32 to vector<8x128xf32>
    %939 = arith.addf %937, %938 : vector<8x128xf32>
    %940 = vector.extract_strided_slice %923 {offsets = [0, 256], sizes = [8, 128], strides = [1, 1]} : vector<8x512xf32> to vector<8x128xf32>
    %941 = math.tanh %940 : vector<8x128xf32>
    %942 = vector.extract_strided_slice %923 {offsets = [0, 384], sizes = [8, 128], strides = [1, 1]} : vector<8x512xf32> to vector<8x128xf32>
    %cst_427 = arith.constant 5.000000e-01 : f32
    %943 = vector.broadcast %cst_427 : f32 to vector<8x128xf32>
    %944 = arith.mulf %943, %942 : vector<8x128xf32>
    %945 = math.tanh %944 : vector<8x128xf32>
    %cst_428 = arith.constant 5.000000e-01 : f32
    %946 = vector.broadcast %cst_428 : f32 to vector<8x128xf32>
    %947 = arith.mulf %946, %945 : vector<8x128xf32>
    %cst_429 = arith.constant 5.000000e-01 : f32
    %948 = vector.broadcast %cst_429 : f32 to vector<8x128xf32>
    %949 = arith.addf %947, %948 : vector<8x128xf32>
    %950 = arith.mulf %939, %874 : vector<8x128xf32>
    %951 = arith.mulf %931, %941 : vector<8x128xf32>
    %952 = arith.addf %950, %951 : vector<8x128xf32>
    %953 = math.tanh %952 : vector<8x128xf32>
    %954 = arith.mulf %949, %953 : vector<8x128xf32>
    %955 = tpu.concatenate %915, %954 in 1 : vector<8x128xf32>, vector<8x128xf32> -> vector<8x256xf32>
    %c2_430 = arith.constant 2 : index
    %c0_431 = arith.constant 0 : index
    %c0_432 = arith.constant 0 : index
    %956 = vector.load %arg10[%c2_430, %c0_431, %c0_432] : memref<3x256x512xf32, #tpu.memory_space<vmem>>, vector<1x256x512xf32>
    %957 = vector.shape_cast %956 : vector<1x256x512xf32> to vector<256x512xf32>
    %cst_433 = arith.constant dense<0.000000e+00> : vector<8x512xf32>
    %958 = tpu.matmul %955, %957, %cst_433 {dimension_numbers = #tpu.dot_dimension_numbers<[1], [0], [0], [1], [0, 0, 1, 1], [], []>} : vector<8x256xf32>, vector<256x512xf32>, vector<8x512xf32> -> vector<8x512xf32>
    %c2_434 = arith.constant 2 : index
    %c0_435 = arith.constant 0 : index
    %c0_436 = arith.constant 0 : index
    %959 = vector.load %arg2[%c2_434, %c0_435, %c0_436] : memref<3x1x512xf32, #tpu.memory_space<vmem>>, vector<1x1x512xf32>
    %960 = vector.shape_cast %959 : vector<1x1x512xf32> to vector<1x512xf32>
    %961 = vector.broadcast %960 : vector<1x512xf32> to vector<8x512xf32>
    %962 = arith.addf %958, %961 : vector<8x512xf32>
    %963 = vector.extract_strided_slice %962 {offsets = [0, 0], sizes = [8, 128], strides = [1, 1]} : vector<8x512xf32> to vector<8x128xf32>
    %cst_437 = arith.constant 5.000000e-01 : f32
    %964 = vector.broadcast %cst_437 : f32 to vector<8x128xf32>
    %965 = arith.mulf %964, %963 : vector<8x128xf32>
    %966 = math.tanh %965 : vector<8x128xf32>
    %cst_438 = arith.constant 5.000000e-01 : f32
    %967 = vector.broadcast %cst_438 : f32 to vector<8x128xf32>
    %968 = arith.mulf %967, %966 : vector<8x128xf32>
    %cst_439 = arith.constant 5.000000e-01 : f32
    %969 = vector.broadcast %cst_439 : f32 to vector<8x128xf32>
    %970 = arith.addf %968, %969 : vector<8x128xf32>
    %971 = vector.extract_strided_slice %962 {offsets = [0, 128], sizes = [8, 128], strides = [1, 1]} : vector<8x512xf32> to vector<8x128xf32>
    %cst_440 = arith.constant 5.000000e-01 : f32
    %972 = vector.broadcast %cst_440 : f32 to vector<8x128xf32>
    %973 = arith.mulf %972, %971 : vector<8x128xf32>
    %974 = math.tanh %973 : vector<8x128xf32>
    %cst_441 = arith.constant 5.000000e-01 : f32
    %975 = vector.broadcast %cst_441 : f32 to vector<8x128xf32>
    %976 = arith.mulf %975, %974 : vector<8x128xf32>
    %cst_442 = arith.constant 5.000000e-01 : f32
    %977 = vector.broadcast %cst_442 : f32 to vector<8x128xf32>
    %978 = arith.addf %976, %977 : vector<8x128xf32>
    %979 = vector.extract_strided_slice %962 {offsets = [0, 256], sizes = [8, 128], strides = [1, 1]} : vector<8x512xf32> to vector<8x128xf32>
    %980 = math.tanh %979 : vector<8x128xf32>
    %981 = vector.extract_strided_slice %962 {offsets = [0, 384], sizes = [8, 128], strides = [1, 1]} : vector<8x512xf32> to vector<8x128xf32>
    %cst_443 = arith.constant 5.000000e-01 : f32
    %982 = vector.broadcast %cst_443 : f32 to vector<8x128xf32>
    %983 = arith.mulf %982, %981 : vector<8x128xf32>
    %984 = math.tanh %983 : vector<8x128xf32>
    %cst_444 = arith.constant 5.000000e-01 : f32
    %985 = vector.broadcast %cst_444 : f32 to vector<8x128xf32>
    %986 = arith.mulf %985, %984 : vector<8x128xf32>
    %cst_445 = arith.constant 5.000000e-01 : f32
    %987 = vector.broadcast %cst_445 : f32 to vector<8x128xf32>
    %988 = arith.addf %986, %987 : vector<8x128xf32>
    %989 = arith.mulf %978, %952 : vector<8x128xf32>
    %990 = arith.mulf %970, %980 : vector<8x128xf32>
    %991 = arith.addf %989, %990 : vector<8x128xf32>
    %992 = math.tanh %991 : vector<8x128xf32>
    %993 = arith.mulf %988, %992 : vector<8x128xf32>
    %c0_446 = arith.constant 0 : index
    %c0_447 = arith.constant 0 : index
    %c0_448 = arith.constant 0 : index
    %994 = vector.load %arg8[%c0_446, %c0_447, %c0_448] : memref<3x8x128xf32, #tpu.memory_space<vmem>>, vector<1x8x128xf32>
    %995 = vector.shape_cast %994 : vector<1x8x128xf32> to vector<8x128xf32>
    %996 = vector.shape_cast %798 : vector<8x128xf32> to vector<1x8x128xf32>
    tpu.vector_store %arg8[%c0_446, %c0_447, %c0_448], %996 {strides = array<i32>} : memref<3x8x128xf32, #tpu.memory_space<vmem>>, vector<1x8x128xf32>,
    %c0_449 = arith.constant 0 : index
    %c0_450 = arith.constant 0 : index
    %c0_451 = arith.constant 0 : index
    %997 = vector.load %arg9[%c0_449, %c0_450, %c0_451] : memref<3x8x128xf32, #tpu.memory_space<vmem>>, vector<1x8x128xf32>
    %998 = vector.shape_cast %997 : vector<1x8x128xf32> to vector<8x128xf32>
    %999 = vector.shape_cast %796 : vector<8x128xf32> to vector<1x8x128xf32>
    tpu.vector_store %arg9[%c0_449, %c0_450, %c0_451], %999 {strides = array<i32>} : memref<3x8x128xf32, #tpu.memory_space<vmem>>, vector<1x8x128xf32>,
    %c1_452 = arith.constant 1 : index
    %c0_453 = arith.constant 0 : index
    %c0_454 = arith.constant 0 : index
    %1000 = vector.load %arg8[%c1_452, %c0_453, %c0_454] : memref<3x8x128xf32, #tpu.memory_space<vmem>>, vector<1x8x128xf32>
    %1001 = vector.shape_cast %1000 : vector<1x8x128xf32> to vector<8x128xf32>
    %1002 = vector.shape_cast %915 : vector<8x128xf32> to vector<1x8x128xf32>
    tpu.vector_store %arg8[%c1_452, %c0_453, %c0_454], %1002 {strides = array<i32>} : memref<3x8x128xf32, #tpu.memory_space<vmem>>, vector<1x8x128xf32>,
    %c1_455 = arith.constant 1 : index
    %c0_456 = arith.constant 0 : index
    %c0_457 = arith.constant 0 : index
    %1003 = vector.load %arg9[%c1_455, %c0_456, %c0_457] : memref<3x8x128xf32, #tpu.memory_space<vmem>>, vector<1x8x128xf32>
    %1004 = vector.shape_cast %1003 : vector<1x8x128xf32> to vector<8x128xf32>
    %1005 = vector.shape_cast %913 : vector<8x128xf32> to vector<1x8x128xf32>
    tpu.vector_store %arg9[%c1_455, %c0_456, %c0_457], %1005 {strides = array<i32>} : memref<3x8x128xf32, #tpu.memory_space<vmem>>, vector<1x8x128xf32>,
    %c2_458 = arith.constant 2 : index
    %c0_459 = arith.constant 0 : index
    %c0_460 = arith.constant 0 : index
    %1006 = vector.load %arg8[%c2_458, %c0_459, %c0_460] : memref<3x8x128xf32, #tpu.memory_space<vmem>>, vector<1x8x128xf32>
    %1007 = vector.shape_cast %1006 : vector<1x8x128xf32> to vector<8x128xf32>
    %1008 = vector.shape_cast %993 : vector<8x128xf32> to vector<1x8x128xf32>
    tpu.vector_store %arg8[%c2_458, %c0_459, %c0_460], %1008 {strides = array<i32>} : memref<3x8x128xf32, #tpu.memory_space<vmem>>, vector<1x8x128xf32>,
    %c2_461 = arith.constant 2 : index
    %c0_462 = arith.constant 0 : index
    %c0_463 = arith.constant 0 : index
    %1009 = vector.load %arg9[%c2_461, %c0_462, %c0_463] : memref<3x8x128xf32, #tpu.memory_space<vmem>>, vector<1x8x128xf32>
    %1010 = vector.shape_cast %1009 : vector<1x8x128xf32> to vector<8x128xf32>
    %1011 = vector.shape_cast %991 : vector<8x128xf32> to vector<1x8x128xf32>
    tpu.vector_store %arg9[%c2_461, %c0_462, %c0_463], %1011 {strides = array<i32>} : memref<3x8x128xf32, #tpu.memory_space<vmem>>, vector<1x8x128xf32>,
    %c3_i32_464 = arith.constant 3 : i32
    %1012 = tpu.memref_slice %arg12[%c3_i32_464] : memref<4x!tpu.dma_semaphore, #tpu.memory_space<semaphore_mem>> -> memref<1x!tpu.dma_semaphore, #tpu.memory_space<semaphore_mem>>
    %1013 = tpu.memref_squeeze %1012 : memref<1x!tpu.dma_semaphore, #tpu.memory_space<semaphore_mem>> -> memref<!tpu.dma_semaphore, #tpu.memory_space<semaphore_mem>>
    tpu.wait_dma2 semaphore(%1013 : memref<!tpu.dma_semaphore, #tpu.memory_space<semaphore_mem>>) src(%arg5 : memref<128x256xf32, #tpu.memory_space<any>>) dst(%arg11 : memref<128x256xf32, #tpu.memory_space<vmem>>)
    %1014 = tpu.concatenate %286, %404, %522, %640, %758, %876, %954, %993 in 0 : vector<8x128xf32>, vector<8x128xf32>, vector<8x128xf32>, vector<8x128xf32>, vector<8x128xf32>, vector<8x128xf32>, vector<8x128xf32>, vector<8x128xf32> -> vector<64x128xf32>
    %c0_465 = arith.constant 0 : index
    %c0_466 = arith.constant 0 : index
    %1015 = vector.load %arg11[%c0_465, %c0_466] : memref<128x256xf32, #tpu.memory_space<vmem>>, vector<128x256xf32>
    %cst_467 = arith.constant dense<0.000000e+00> : vector<64x256xf32>
    %1016 = tpu.matmul %1014, %1015, %cst_467 {dimension_numbers = #tpu.dot_dimension_numbers<[1], [0], [0], [1], [0, 0, 1, 1], [], []>} : vector<64x128xf32>, vector<128x256xf32>, vector<64x256xf32> -> vector<64x256xf32>
    %c0_468 = arith.constant 0 : index
    %c0_469 = arith.constant 0 : index
    %1017 = vector.load %arg6[%c0_468, %c0_469] : memref<1x256xf32, #tpu.memory_space<vmem>>, vector<1x256xf32>
    %1018 = vector.broadcast %1017 : vector<1x256xf32> to vector<64x256xf32>
    %1019 = arith.addf %1016, %1018 : vector<64x256xf32>
    %c0_470 = arith.constant 0 : index
    %c0_471 = arith.constant 0 : index
    %1020 = vector.load %arg7[%c0_470, %c0_471] : memref<64x256xf32, #tpu.memory_space<vmem>>, vector<64x256xf32>
    tpu.vector_store %arg7[%c0_470, %c0_471], %1019 {strides = array<i32>} : memref<64x256xf32, #tpu.memory_space<vmem>>, vector<64x256xf32>,
    return
  }
}

</mosaic_0001>

<llo_original>
// kernel: model_forward.1
$region0: #{model_forward.1}
  #allocation0 [shape = 'u32[]', space=smem, size = 0x4, offset = 0x4, fixed_abs, tag = 'smem constant byte address 0x4 - core index']
  #allocation1 [shape = 'u32[144,128]{1,0:T(1,128)}', space=vmem, size = 0x12000, scoped, tag = 'internal scratch']
  #allocation2 [shape = 'f32[3,256,512]{2,1,0:T(8,128)}', space=vmem, size = 0x180000, scoped, tag = 'scratch operand']
  #allocation3 [shape = 'f32[128,256]{1,0:T(8,128)}', space=vmem, size = 0x20000, scoped, tag = 'scratch operand']
  #allocation4 [shape = 's32[4]{0}', space=sflag, size = 0x10, scoped, tag = 'scratch operand']
  #allocation17 [shape = 's32[]', space=sflag, size = 0x4, offset = 0, fixed_abs, tag = 'sflag constant byte address 0x0 - dummy sync flag']
  #allocation18 [shape = 's32[]', space=sflag, size = 0x4, offset = 0, fixed_abs, tag = 'sflag constant byte address 0x0 - dummy sync flag']
  #allocation19 [shape = 'u32[]', space=smem, size = 0x4, offset = 0x44, fixed_abs, tag = 'smem constant byte address 0x44 - assertion arg 0']
  #allocation20 [shape = 'u32[]', space=smem, size = 0x4, offset = 0x48, fixed_abs, tag = 'smem constant byte address 0x48 - assertion arg 1']
  #allocation21 [shape = 's32[]', space=sflag, size = 0x4, offset = 0, fixed_abs, tag = 'sflag constant byte address 0x0 - dummy sync flag']
  #allocation22 [shape = 's32[]', space=sflag, size = 0x4, offset = 0, fixed_abs, tag = 'sflag constant byte address 0x0 - dummy sync flag']
  #allocation23 [shape = 's32[]', space=sflag, size = 0x4, offset = 0, fixed_abs, tag = 'sflag constant byte address 0x0 - dummy sync flag']
  #allocation24 [shape = 's32[]', space=sflag, size = 0x4, offset = 0, fixed_abs, tag = 'sflag constant byte address 0x0 - dummy sync flag']
  #allocation25 [shape = 's32[]', space=sflag, size = 0x4, offset = 0, fixed_abs, tag = 'sflag constant byte address 0x0 - dummy sync flag']
  #allocation26 [shape = 's32[]', space=sflag, size = 0x4, offset = 0, fixed_abs, tag = 'sflag constant byte address 0x0 - dummy sync flag']
  %s0 = inlined_call_operand.vmem [shape: f32[64,128], index: 0, kind: input, shape index: {}]
  %s1 = inlined_call_operand.hbm [shape: f32[3,256,512], index: 1, kind: input, shape index: {}]
  %s2 = inlined_call_operand.hbm [shape: f32[3,1,512], index: 2, kind: input, shape index: {}]
  %s3 = inlined_call_operand.hbm [shape: f32[3,8,128], index: 3, kind: input, shape index: {}]
  %s4 = inlined_call_operand.hbm [shape: f32[3,8,128], index: 4, kind: input, shape index: {}]
  %s5 = inlined_call_operand.hbm [shape: f32[128,256], index: 5, kind: input, shape index: {}]
  %s6 = inlined_call_operand.hbm [shape: f32[1,256], index: 6, kind: input, shape index: {}]
  %s7 = inlined_call_operand.hbm [shape: f32[64,256], index: 7, kind: output, shape index: {0}]
  %s8 = inlined_call_operand.hbm [shape: f32[3,8,128], index: 8, kind: output, shape index: {1}]
  %s9 = inlined_call_operand.hbm [shape: f32[3,8,128], index: 9, kind: output, shape index: {2}]
  %10 = xla_tuple %s7, %s8, %s9
  %s11 = sld [smem:[#allocation0]]
  $region78: #{model_forward.1} parent=0
    _
  %s13 = ssub.s32 1, %s11
  %s14 = scalar_select 0, %s13, %s11
  $region1: #{model_forward.1} parent=0
    #allocation5 [shape = 'u8[6144]{0}', space=vmem, size = 0x1800, scoped, tag = 'input window, operand 2, single buffered']
    #allocation6 [shape = 's32[1]{0}', space=sflag, size = 0x4, scoped, tag = 'scoped memory for model_forward.1']
    #allocation7 [shape = 's32[1]{0}', space=sflag, size = 0x4, scoped, tag = 'scoped memory for model_forward.1']
    #allocation8 [shape = 'u8[12288]{0}', space=vmem, size = 0x3000, scoped, tag = 'input window, operand 3, single buffered']
    #allocation9 [shape = 's32[1]{0}', space=sflag, size = 0x4, scoped, tag = 'scoped memory for model_forward.1']
    #allocation10 [shape = 'u8[12288]{0}', space=vmem, size = 0x3000, scoped, tag = 'input window, operand 4, single buffered']
    #allocation11 [shape = 'u8[1024]{0}', space=vmem, size = 0x400, scoped, tag = 'input window, operand 6, single buffered']
    #allocation12 [shape = 's32[1]{0}', space=sflag, size = 0x4, scoped, tag = 'scoped memory for model_forward.1']
    #allocation13 [shape = 'u8[65536]{0}', space=vmem, size = 0x10000, scoped, tag = 'output window, operand 0, single buffered']
    #allocation14 [shape = 'u8[12288]{0}', space=vmem, size = 0x3000, scoped, tag = 'output window, operand 1, single buffered']
    #allocation15 [shape = 's32[1]{0}', space=sflag, size = 0x4, scoped, tag = 'scoped memory for model_forward.1']
    #allocation16 [shape = 'u8[12288]{0}', space=vmem, size = 0x3000, scoped, tag = 'output window, operand 2, single buffered']
    %15 = vsyncpa [#allocation6], 0
    %16 = vsyncpa [#allocation9], 0
    %17 = vsyncpa [#allocation12], 0
    %18 = vsyncpa [#allocation7], 0
    %19 = vsyncpa [#allocation15], 0
    // Predicated region
    $region2: #{model_forward.1} parent=1 // pred_check
      _
    $region3: #{model_forward.1} parent=1 // pred_check_branch
      %21 = sbr.rel (0) target = $region5
    $region4: #{model_forward.1} parent=1 // pred_region
      _
    $region5: #{model_forward.1} parent=1 // pred_fallthru
      _
    // Predicated region
    $region6: #{model_forward.1} parent=1 // pred_check
      _
    $region7: #{model_forward.1} parent=1 // pred_check_branch
      %23 = sbr.rel (0) target = $region9
    $region8: #{model_forward.1} parent=1 // pred_region
      %s25 = ssub.s32 192, 192
      %26 = vsyncadd [#allocation6], %s25
      %s27 = sshll.u32 [#allocation5], 4
      %s28 = int_to_ptr.vmem [resolvable:$true] %s27
      %33 = dma.hbm_to_vmem [thread:$0]  %s2, 192, %s28, [#allocation6], 64, 64, 4
    $region9: #{model_forward.1} parent=1 // pred_fallthru
      _
    // Predicated region
    $region10: #{model_forward.1} parent=1 // pred_check
      _
    $region11: #{model_forward.1} parent=1 // pred_check_branch
      %35 = sbr.rel (0) target = $region13
    $region12: #{model_forward.1} parent=1 // pred_region
      %s37 = ssub.s32 384, 384
      %38 = vsyncadd [#allocation9], %s37
      %s39 = sshll.u32 [#allocation8], 4
      %s40 = int_to_ptr.vmem [resolvable:$true] %s39
      %45 = dma.hbm_to_vmem [thread:$0]  %s3, 384, %s40, [#allocation9], 128, 128, 8
    $region13: #{model_forward.1} parent=1 // pred_fallthru
      _
    // Predicated region
    $region14: #{model_forward.1} parent=1 // pred_check
      _
    $region15: #{model_forward.1} parent=1 // pred_check_branch
      %47 = sbr.rel (0) target = $region17
    $region16: #{model_forward.1} parent=1 // pred_region
      %s49 = ssub.s32 384, 384
      %50 = vsyncadd [#allocation9], %s49
      %s51 = sshll.u32 [#allocation10], 4
      %s52 = int_to_ptr.vmem [resolvable:$true] %s51
      %57 = dma.hbm_to_vmem [thread:$0]  %s4, 384, %s52, [#allocation9], 128, 128, 8
    $region17: #{model_forward.1} parent=1 // pred_fallthru
      _
    // Predicated region
    $region18: #{model_forward.1} parent=1 // pred_check
      _
    $region19: #{model_forward.1} parent=1 // pred_check_branch
      %59 = sbr.rel (0) target = $region21
    $region20: #{model_forward.1} parent=1 // pred_region
      %s61 = ssub.s32 32, 32
      %62 = vsyncadd [#allocation12], %s61
      %s64 = sshll.u32 [#allocation11], 4
      %s65 = int_to_ptr.vmem [resolvable:$true] %s64
      %67 = dma.hbm_to_vmem [thread:$0]  %s6, 32, %s65, [#allocation12]
    $region21: #{model_forward.1} parent=1 // pred_fallthru
      _
    // Predicated region
    $region22: #{model_forward.1} parent=1 // pred_check
      _
    $region23: #{model_forward.1} parent=1 // pred_check_branch
      %69 = sbr.rel (0) target = $region25
    $region24: #{model_forward.1} parent=1 // pred_region
      %70 = dma.done [#allocation6], 192
    $region25: #{model_forward.1} parent=1 // pred_fallthru
      _
    // Predicated region
    $region26: #{model_forward.1} parent=1 // pred_check
      _
    $region27: #{model_forward.1} parent=1 // pred_check_branch
      %72 = sbr.rel (0) target = $region29
    $region28: #{model_forward.1} parent=1 // pred_region
      %73 = dma.done [#allocation9], 384
    $region29: #{model_forward.1} parent=1 // pred_fallthru
      _
    // Predicated region
    $region30: #{model_forward.1} parent=1 // pred_check
      _
    $region31: #{model_forward.1} parent=1 // pred_check_branch
      %75 = sbr.rel (0) target = $region33
    $region32: #{model_forward.1} parent=1 // pred_region
      %76 = dma.done [#allocation9], 384
    $region33: #{model_forward.1} parent=1 // pred_fallthru
      _
    // Predicated region
    $region34: #{model_forward.1} parent=1 // pred_check
      _
    $region35: #{model_forward.1} parent=1 // pred_check_branch
      %78 = sbr.rel (0) target = $region37
    $region36: #{model_forward.1} parent=1 // pred_region
      %79 = dma.done [#allocation12], 32
    $region37: #{model_forward.1} parent=1 // pred_fallthru
      _
    // Predicated region
    $region38: #{model_forward.1} parent=1 // pred_check
      _
    $region39: #{model_forward.1} parent=1 // pred_check_branch
      %81 = sbr.rel target = $region41
    $region40: #{model_forward.1} parent=1 // pred_region
      %82 = sst [smem:[#allocation19]] [#allocation18]
      %83 = sst [smem:[#allocation20]] [#allocation17]
    $region41: #{model_forward.1} parent=1 // pred_fallthru
      _
    %85 = shalt.err (0)
    %s87 = sshll.u32 [#allocation2], 4
    %s88 = int_to_ptr.vmem [resolvable:$true] %s87
    %90 = dma.hbm_to_vmem [thread:$0]  %s1, 16384, %s88, [#allocation4]
    %s91 = scalar_lea.hbm %s1, 16384
    %s92 = scalar_lea.vmem [#allocation2], 1024
    %s93 = scalar_lea.sflag [#allocation4], 1
    // Predicated region
    $region42: #{model_forward.1} parent=1 // pred_check
      _
    $region43: #{model_forward.1} parent=1 // pred_check_branch
      %95 = sbr.rel target = $region45
    $region44: #{model_forward.1} parent=1 // pred_region
      %96 = sst [smem:[#allocation19]] [#allocation22]
      %97 = sst [smem:[#allocation20]] [#allocation21]
    $region45: #{model_forward.1} parent=1 // pred_fallthru
      _
    %99 = shalt.err (0)
    %s101 = sshll.u32 %s92, 4
    %s102 = int_to_ptr.vmem [resolvable:$true] %s101
    %104 = dma.hbm_to_vmem [thread:$0]  %s91, 16384, %s102, %s93
    %s105 = scalar_lea.hbm %s1, 32768
    %s106 = scalar_lea.vmem [#allocation2], 2048
    %s107 = scalar_lea.sflag [#allocation4], 2
    // Predicated region
    $region46: #{model_forward.1} parent=1 // pred_check
      _
    $region47: #{model_forward.1} parent=1 // pred_check_branch
      %109 = sbr.rel target = $region49
    $region48: #{model_forward.1} parent=1 // pred_region
      %110 = sst [smem:[#allocation19]] [#allocation24]
      %111 = sst [smem:[#allocation20]] [#allocation23]
    $region49: #{model_forward.1} parent=1 // pred_fallthru
      _
    %113 = shalt.err (0)
    %s115 = sshll.u32 %s106, 4
    %s116 = int_to_ptr.vmem [resolvable:$true] %s115
    %118 = dma.hbm_to_vmem [thread:$0]  %s105, 16384, %s116, %s107
    %s119 = scalar_lea.sflag [#allocation4], 3
    // Predicated region
    $region50: #{model_forward.1} parent=1 // pred_check
      _
    $region51: #{model_forward.1} parent=1 // pred_check_branch
      %121 = sbr.rel target = $region53
    $region52: #{model_forward.1} parent=1 // pred_region
      %122 = sst [smem:[#allocation19]] [#allocation26]
      %123 = sst [smem:[#allocation20]] [#allocation25]
    $region53: #{model_forward.1} parent=1 // pred_fallthru
      _
    %125 = shalt.err (0)
    %s127 = sshll.u32 [#allocation3], 4
    %s128 = int_to_ptr.vmem [resolvable:$true] %s127
    %130 = dma.hbm_to_vmem [thread:$0]  %s5, 4096, %s128, %s119
    %v131 = vld [vmem:[#allocation8] sm:$0xff]
    %s132 = scalar_lea.vmem [#allocation8], 8
    %v133 = vld [vmem:[%s132] sm:$0xff]
    %s134 = scalar_lea.vmem [#allocation8], 16
    %v135 = vld [vmem:[%s134] sm:$0xff]
    %v136 = vld [vmem:[#allocation10] sm:$0xff]
    %s137 = scalar_lea.vmem [#allocation10], 8
    %v138 = vld [vmem:[%s137] sm:$0xff]
    %s139 = scalar_lea.vmem [#allocation10], 16
    %v140 = vld [vmem:[%s139] sm:$0xff]
    %s141 = smul.u32 8, 32
    %s142 = smul.u32 %s141, 4
    %s143 = sshll.u32 %s142, 4
    %144 = dma.done [#allocation4], %s143
    %v145 = vld [vmem:[%s0] sm:$0xff]
    %v146 = vld [vmem:[#allocation2] sm:$0xff]
    %v147 = vld [vmem:[#allocation2 + $0x8] sm:$0xff]
    %v148 = vld [vmem:[#allocation2 + $0x10] sm:$0xff]
    %v149 = vld [vmem:[#allocation2 + $0x18] sm:$0xff]
    %v150 = vld [vmem:[#allocation2 + $0x20] sm:$0xff]
    %v151 = vld [vmem:[#allocation2 + $0x28] sm:$0xff]
    %v152 = vld [vmem:[#allocation2 + $0x30] sm:$0xff]
    %v153 = vld [vmem:[#allocation2 + $0x38] sm:$0xff]
    %v154 = vld [vmem:[#allocation2 + $0x40] sm:$0xff]
    %v155 = vld [vmem:[#allocation2 + $0x48] sm:$0xff]
    %v156 = vld [vmem:[#allocation2 + $0x50] sm:$0xff]
    %v157 = vld [vmem:[#allocation2 + $0x58] sm:$0xff]
    %v158 = vld [vmem:[#allocation2 + $0x60] sm:$0xff]
    %v159 = vld [vmem:[#allocation2 + $0x68] sm:$0xff]
    %v160 = vld [vmem:[#allocation2 + $0x70] sm:$0xff]
    %v161 = vld [vmem:[#allocation2 + $0x78] sm:$0xff]
    %v162 = vld [vmem:[#allocation2 + $0x80] sm:$0xff]
    %v163 = vld [vmem:[#allocation2 + $0x88] sm:$0xff]
    %v164 = vld [vmem:[#allocation2 + $0x90] sm:$0xff]
    %v165 = vld [vmem:[#allocation2 + $0x98] sm:$0xff]
    %v166 = vld [vmem:[#allocation2 + $0xa0] sm:$0xff]
    %v167 = vld [vmem:[#allocation2 + $0xa8] sm:$0xff]
    %v168 = vld [vmem:[#allocation2 + $0xb0] sm:$0xff]
    %v169 = vld [vmem:[#allocation2 + $0xb8] sm:$0xff]
    %v170 = vld [vmem:[#allocation2 + $0xc0] sm:$0xff]
    %v171 = vld [vmem:[#allocation2 + $0xc8] sm:$0xff]
    %v172 = vld [vmem:[#allocation2 + $0xd0] sm:$0xff]
    %v173 = vld [vmem:[#allocation2 + $0xd8] sm:$0xff]
    %v174 = vld [vmem:[#allocation2 + $0xe0] sm:$0xff]
    %v175 = vld [vmem:[#allocation2 + $0xe8] sm:$0xff]
    %v176 = vld [vmem:[#allocation2 + $0xf0] sm:$0xff]
    %v177 = vld [vmem:[#allocation2 + $0xf8] sm:$0xff]
    %v178 = vld [vmem:[#allocation2 + $0x100] sm:$0xff]
    %v179 = vld [vmem:[#allocation2 + $0x108] sm:$0xff]
    %v180 = vld [vmem:[#allocation2 + $0x110] sm:$0xff]
    %v181 = vld [vmem:[#allocation2 + $0x118] sm:$0xff]
    %v182 = vld [vmem:[#allocation2 + $0x120] sm:$0xff]
    %v183 = vld [vmem:[#allocation2 + $0x128] sm:$0xff]
    %v184 = vld [vmem:[#allocation2 + $0x130] sm:$0xff]
    %v185 = vld [vmem:[#allocation2 + $0x138] sm:$0xff]
    %v186 = vld [vmem:[#allocation2 + $0x140] sm:$0xff]
    %v187 = vld [vmem:[#allocation2 + $0x148] sm:$0xff]
    %v188 = vld [vmem:[#allocation2 + $0x150] sm:$0xff]
    %v189 = vld [vmem:[#allocation2 + $0x158] sm:$0xff]
    %v190 = vld [vmem:[#allocation2 + $0x160] sm:$0xff]
    %v191 = vld [vmem:[#allocation2 + $0x168] sm:$0xff]
    %v192 = vld [vmem:[#allocation2 + $0x170] sm:$0xff]
    %v193 = vld [vmem:[#allocation2 + $0x178] sm:$0xff]
    %v194 = vld [vmem:[#allocation2 + $0x180] sm:$0xff]
    %v195 = vld [vmem:[#allocation2 + $0x188] sm:$0xff]
    %v196 = vld [vmem:[#allocation2 + $0x190] sm:$0xff]
    %v197 = vld [vmem:[#allocation2 + $0x198] sm:$0xff]
    %v198 = vld [vmem:[#allocation2 + $0x1a0] sm:$0xff]
    %v199 = vld [vmem:[#allocation2 + $0x1a8] sm:$0xff]
    %v200 = vld [vmem:[#allocation2 + $0x1b0] sm:$0xff]
    %v201 = vld [vmem:[#allocation2 + $0x1b8] sm:$0xff]
    %v202 = vld [vmem:[#allocation2 + $0x1c0] sm:$0xff]
    %v203 = vld [vmem:[#allocation2 + $0x1c8] sm:$0xff]
    %v204 = vld [vmem:[#allocation2 + $0x1d0] sm:$0xff]
    %v205 = vld [vmem:[#allocation2 + $0x1d8] sm:$0xff]
    %v206 = vld [vmem:[#allocation2 + $0x1e0] sm:$0xff]
    %v207 = vld [vmem:[#allocation2 + $0x1e8] sm:$0xff]
    %v208 = vld [vmem:[#allocation2 + $0x1f0] sm:$0xff]
    %v209 = vld [vmem:[#allocation2 + $0x1f8] sm:$0xff]
    %v210 = vld [vmem:[#allocation2 + $0x200] sm:$0xff]
    %v211 = vld [vmem:[#allocation2 + $0x208] sm:$0xff]
    %v212 = vld [vmem:[#allocation2 + $0x210] sm:$0xff]
    %v213 = vld [vmem:[#allocation2 + $0x218] sm:$0xff]
    %v214 = vld [vmem:[#allocation2 + $0x220] sm:$0xff]
    %v215 = vld [vmem:[#allocation2 + $0x228] sm:$0xff]
    %v216 = vld [vmem:[#allocation2 + $0x230] sm:$0xff]
    %v217 = vld [vmem:[#allocation2 + $0x238] sm:$0xff]
    %v218 = vld [vmem:[#allocation2 + $0x240] sm:$0xff]
    %v219 = vld [vmem:[#allocation2 + $0x248] sm:$0xff]
    %v220 = vld [vmem:[#allocation2 + $0x250] sm:$0xff]
    %v221 = vld [vmem:[#allocation2 + $0x258] sm:$0xff]
    %v222 = vld [vmem:[#allocation2 + $0x260] sm:$0xff]
    %v223 = vld [vmem:[#allocation2 + $0x268] sm:$0xff]
    %v224 = vld [vmem:[#allocation2 + $0x270] sm:$0xff]
    %v225 = vld [vmem:[#allocation2 + $0x278] sm:$0xff]
    %v226 = vld [vmem:[#allocation2 + $0x280] sm:$0xff]
    %v227 = vld [vmem:[#allocation2 + $0x288] sm:$0xff]
    %v228 = vld [vmem:[#allocation2 + $0x290] sm:$0xff]
    %v229 = vld [vmem:[#allocation2 + $0x298] sm:$0xff]
    %v230 = vld [vmem:[#allocation2 + $0x2a0] sm:$0xff]
    %v231 = vld [vmem:[#allocation2 + $0x2a8] sm:$0xff]
    %v232 = vld [vmem:[#allocation2 + $0x2b0] sm:$0xff]
    %v233 = vld [vmem:[#allocation2 + $0x2b8] sm:$0xff]
    %v234 = vld [vmem:[#allocation2 + $0x2c0] sm:$0xff]
    %v235 = vld [vmem:[#allocation2 + $0x2c8] sm:$0xff]
    %v236 = vld [vmem:[#allocation2 + $0x2d0] sm:$0xff]
    %v237 = vld [vmem:[#allocation2 + $0x2d8] sm:$0xff]
    %v238 = vld [vmem:[#allocation2 + $0x2e0] sm:$0xff]
    %v239 = vld [vmem:[#allocation2 + $0x2e8] sm:$0xff]
    %v240 = vld [vmem:[#allocation2 + $0x2f0] sm:$0xff]
    %v241 = vld [vmem:[#allocation2 + $0x2f8] sm:$0xff]
    %v242 = vld [vmem:[#allocation2 + $0x300] sm:$0xff]
    %v243 = vld [vmem:[#allocation2 + $0x308] sm:$0xff]
    %v244 = vld [vmem:[#allocation2 + $0x310] sm:$0xff]
    %v245 = vld [vmem:[#allocation2 + $0x318] sm:$0xff]
    %v246 = vld [vmem:[#allocation2 + $0x320] sm:$0xff]
    %v247 = vld [vmem:[#allocation2 + $0x328] sm:$0xff]
    %v248 = vld [vmem:[#allocation2 + $0x330] sm:$0xff]
    %v249 = vld [vmem:[#allocation2 + $0x338] sm:$0xff]
    %v250 = vld [vmem:[#allocation2 + $0x340] sm:$0xff]
    %v251 = vld [vmem:[#allocation2 + $0x348] sm:$0xff]
    %v252 = vld [vmem:[#allocation2 + $0x350] sm:$0xff]
    %v253 = vld [vmem:[#allocation2 + $0x358] sm:$0xff]
    %v254 = vld [vmem:[#allocation2 + $0x360] sm:$0xff]
    %v255 = vld [vmem:[#allocation2 + $0x368] sm:$0xff]
    %v256 = vld [vmem:[#allocation2 + $0x370] sm:$0xff]
    %v257 = vld [vmem:[#allocation2 + $0x378] sm:$0xff]
    %v258 = vld [vmem:[#allocation2 + $0x380] sm:$0xff]
    %v259 = vld [vmem:[#allocation2 + $0x388] sm:$0xff]
    %v260 = vld [vmem:[#allocation2 + $0x390] sm:$0xff]
    %v261 = vld [vmem:[#allocation2 + $0x398] sm:$0xff]
    %v262 = vld [vmem:[#allocation2 + $0x3a0] sm:$0xff]
    %v263 = vld [vmem:[#allocation2 + $0x3a8] sm:$0xff]
    %v264 = vld [vmem:[#allocation2 + $0x3b0] sm:$0xff]
    %v265 = vld [vmem:[#allocation2 + $0x3b8] sm:$0xff]
    %v266 = vld [vmem:[#allocation2 + $0x3c0] sm:$0xff]
    %v267 = vld [vmem:[#allocation2 + $0x3c8] sm:$0xff]
    %v268 = vld [vmem:[#allocation2 + $0x3d0] sm:$0xff]
    %v269 = vld [vmem:[#allocation2 + $0x3d8] sm:$0xff]
    %v270 = vld [vmem:[#allocation2 + $0x3e0] sm:$0xff]
    %v271 = vld [vmem:[#allocation2 + $0x3e8] sm:$0xff]
    %v272 = vld [vmem:[#allocation2 + $0x3f0] sm:$0xff]
    %v273 = vld [vmem:[#allocation2 + $0x3f8] sm:$0xff]
    %v274 = vld [vmem:[#allocation5] sm:$0xf]
    %v276 = vlaneseq
    %v277 = vshrl.u32 %v276, 7
    %v278 = vsub.s32 0, %v277
    %v279 = vrot.slane %v274, %v278
    %v280 = vlaneseq
    %v281 = vshrl.u32 %v280, 7
    %v282 = vsub.s32 1, %v281
    %v283 = vrot.slane %v274, %v282
    %v284 = vlaneseq
    %v285 = vshrl.u32 %v284, 7
    %v286 = vsub.s32 2, %v285
    %v287 = vrot.slane %v274, %v286
    %v288 = vlaneseq
    %v289 = vshrl.u32 %v288, 7
    %v290 = vsub.s32 3, %v289
    %v291 = vrot.slane %v274, %v290
    %296 = vmatprep.subr.mxu0 %v147
    %297 = vmatpush1.msra.mxu0 %v146
    %298 = vmatprep.subr.mxu0 %v151
    %299 = vmatpush1.msra.mxu0 %v150
    %300 = vmatprep.subr.mxu0 %v155
    %301 = vmatpush1.msra.mxu0 %v154
    %302 = vmatprep.subr.mxu0 %v159
    %303 = vmatpush1.msra.mxu0 %v158
    %304 = vmatprep.subr.mxu0 %v163
    %305 = vmatpush1.msra.mxu0 %v162
    %306 = vmatprep.subr.mxu0 %v167
    %307 = vmatpush1.msra.mxu0 %v166
    %308 = vmatprep.subr.mxu0 %v171
    %309 = vmatpush1.msra.mxu0 %v170
    %310 = vmatprep.subr.mxu0 %v175
    %311 = vmatpush1.msra.mxu0 %v174
    %312 = vmatprep.subr.mxu0 %v179
    %313 = vmatpush1.msra.mxu0 %v178
    %314 = vmatprep.subr.mxu0 %v183
    %315 = vmatpush1.msra.mxu0 %v182
    %316 = vmatprep.subr.mxu0 %v187
    %317 = vmatpush1.msra.mxu0 %v186
    %318 = vmatprep.subr.mxu0 %v191
    %319 = vmatpush1.msra.mxu0 %v190
    %320 = vmatprep.subr.mxu0 %v195
    %321 = vmatpush1.msra.mxu0 %v194
    %322 = vmatprep.subr.mxu0 %v199
    %323 = vmatpush1.msra.mxu0 %v198
    %324 = vmatprep.subr.mxu0 %v203
    %325 = vmatpush1.msra.mxu0 %v202
    %326 = vmatprep.subr.mxu0 %v207
    %327 = vmatpush1.msra.mxu0 %v206
    %328 = vmatprep.subr.mxu0 %v211
    %329 = vmatpush1.msra.mxu0 %v210
    %330 = vmatprep.subr.mxu0 %v215
    %331 = vmatpush1.msra.mxu0 %v214
    %332 = vmatprep.subr.mxu0 %v219
    %333 = vmatpush1.msra.mxu0 %v218
    %334 = vmatprep.subr.mxu0 %v223
    %335 = vmatpush1.msra.mxu0 %v222
    %336 = vmatprep.subr.mxu0 %v227
    %337 = vmatpush1.msra.mxu0 %v226
    %338 = vmatprep.subr.mxu0 %v231
    %339 = vmatpush1.msra.mxu0 %v230
    %340 = vmatprep.subr.mxu0 %v235
    %341 = vmatpush1.msra.mxu0 %v234
    %342 = vmatprep.subr.mxu0 %v239
    %343 = vmatpush1.msra.mxu0 %v238
    %344 = vmatprep.subr.mxu0 %v243
    %345 = vmatpush1.msra.mxu0 %v242
    %346 = vmatprep.subr.mxu0 %v247
    %347 = vmatpush1.msra.mxu0 %v246
    %348 = vmatprep.subr.mxu0 %v251
    %349 = vmatpush1.msra.mxu0 %v250
    %350 = vmatprep.subr.mxu0 %v255
    %351 = vmatpush1.msra.mxu0 %v254
    %352 = vmatprep.subr.mxu0 %v259
    %353 = vmatpush1.msra.mxu0 %v258
    %354 = vmatprep.subr.mxu0 %v263
    %355 = vmatpush1.msra.mxu0 %v262
    %356 = vmatprep.subr.mxu0 %v267
    %357 = vmatpush1.msra.mxu0 %v266
    %358 = vmatprep.subr.mxu0 %v271
    %359 = vmatpush1.msra.mxu0 %v270
    %360 = vmatprep.mubr.f32.mxu0 %v131
    %361 = vmatmul.mubr.f32.gmra.mrb[0].mxu0 %v145
    %v362 = vpop.f32.mrb[0].mxu0
    %v363 = vadd.f32 %v279, %v362
    %v364 = vpop.f32.mrb[0].mxu0
    %v365 = vadd.f32 %v283, %v364
    %366 = vdwg.mxu0
    %367 = vmatprep.subr.mxu0 %v149
    %368 = vmatpush1.msra.mxu0 %v148
    %369 = vmatprep.subr.mxu0 %v153
    %370 = vmatpush1.msra.mxu0 %v152
    %371 = vmatprep.subr.mxu0 %v157
    %372 = vmatpush1.msra.mxu0 %v156
    %373 = vmatprep.subr.mxu0 %v161
    %374 = vmatpush1.msra.mxu0 %v160
    %375 = vmatprep.subr.mxu0 %v165
    %376 = vmatpush1.msra.mxu0 %v164
    %377 = vmatprep.subr.mxu0 %v169
    %378 = vmatpush1.msra.mxu0 %v168
    %379 = vmatprep.subr.mxu0 %v173
    %380 = vmatpush1.msra.mxu0 %v172
    %381 = vmatprep.subr.mxu0 %v177
    %382 = vmatpush1.msra.mxu0 %v176
    %383 = vmatprep.subr.mxu0 %v181
    %384 = vmatpush1.msra.mxu0 %v180
    %385 = vmatprep.subr.mxu0 %v185
    %386 = vmatpush1.msra.mxu0 %v184
    %387 = vmatprep.subr.mxu0 %v189
    %388 = vmatpush1.msra.mxu0 %v188
    %389 = vmatprep.subr.mxu0 %v193
    %390 = vmatpush1.msra.mxu0 %v192
    %391 = vmatprep.subr.mxu0 %v197
    %392 = vmatpush1.msra.mxu0 %v196
    %393 = vmatprep.subr.mxu0 %v201
    %394 = vmatpush1.msra.mxu0 %v200
    %395 = vmatprep.subr.mxu0 %v205
    %396 = vmatpush1.msra.mxu0 %v204
    %397 = vmatprep.subr.mxu0 %v209
    %398 = vmatpush1.msra.mxu0 %v208
    %399 = vmatprep.subr.mxu0 %v213
    %400 = vmatpush1.msra.mxu0 %v212
    %401 = vmatprep.subr.mxu0 %v217
    %402 = vmatpush1.msra.mxu0 %v216
    %403 = vmatprep.subr.mxu0 %v221
    %404 = vmatpush1.msra.mxu0 %v220
    %405 = vmatprep.subr.mxu0 %v225
    %406 = vmatpush1.msra.mxu0 %v224
    %407 = vmatprep.subr.mxu0 %v229
    %408 = vmatpush1.msra.mxu0 %v228
    %409 = vmatprep.subr.mxu0 %v233
    %410 = vmatpush1.msra.mxu0 %v232
    %411 = vmatprep.subr.mxu0 %v237
    %412 = vmatpush1.msra.mxu0 %v236
    %413 = vmatprep.subr.mxu0 %v241
    %414 = vmatpush1.msra.mxu0 %v240
    %415 = vmatprep.subr.mxu0 %v245
    %416 = vmatpush1.msra.mxu0 %v244
    %417 = vmatprep.subr.mxu0 %v249
    %418 = vmatpush1.msra.mxu0 %v248
    %419 = vmatprep.subr.mxu0 %v253
    %420 = vmatpush1.msra.mxu0 %v252
    %421 = vmatprep.subr.mxu0 %v257
    %422 = vmatpush1.msra.mxu0 %v256
    %423 = vmatprep.subr.mxu0 %v261
    %424 = vmatpush1.msra.mxu0 %v260
    %425 = vmatprep.subr.mxu0 %v265
    %426 = vmatpush1.msra.mxu0 %v264
    %427 = vmatprep.subr.mxu0 %v269
    %428 = vmatpush1.msra.mxu0 %v268
    %429 = vmatprep.subr.mxu0 %v273
    %430 = vmatpush1.msra.mxu0 %v272
    %431 = vmatprep.mubr.f32.mxu0 %v131
    %432 = vmatmul.mubr.f32.gmra.mrb[0].mxu0 %v145
    %v433 = vpop.f32.mrb[0].mxu0
    %v434 = vadd.f32 %v287, %v433
    %v435 = vpop.f32.mrb[0].mxu0
    %v436 = vadd.f32 %v291, %v435
    %437 = vdwg.mxu0
    %v438 = vmul.f32 %v363, 0.5
    %v439 = vtanh.pop %v438
    %v440 = vmul.f32 %v439, 0.5
    %v441 = vadd.f32 %v440, 0.5
    %v442 = vmul.f32 %v365, 0.5
    %v443 = vtanh.pop %v442
    %v444 = vmul.f32 %v443, 0.5
    %v445 = vadd.f32 %v444, 0.5
    %v446 = vtanh.pop %v434
    %v447 = vmul.f32 %v436, 0.5
    %v448 = vtanh.pop %v447
    %v449 = vmul.f32 %v448, 0.5
    %v450 = vadd.f32 %v449, 0.5
    %v451 = vmul.f32 %v445, %v136
    %v452 = vmul.f32 %v441, %v446
    %v453 = vadd.f32 %v451, %v452
    %v454 = vtanh.pop %v453
    %v455 = vmul.f32 %v450, %v454
    %s456 = sshll.u32 %s142, 4
    %457 = dma.done %s93, %s456
    %v458 = vld [vmem:[%s0 + $0x8] sm:$0xff]
    %v459 = vld [vmem:[#allocation2] sm:$0xff]
    %v460 = vld [vmem:[#allocation2 + $0x8] sm:$0xff]
    %v461 = vld [vmem:[#allocation2 + $0x10] sm:$0xff]
    %v462 = vld [vmem:[#allocation2 + $0x18] sm:$0xff]
    %v463 = vld [vmem:[#allocation2 + $0x20] sm:$0xff]
    %v464 = vld [vmem:[#allocation2 + $0x28] sm:$0xff]
    %v465 = vld [vmem:[#allocation2 + $0x30] sm:$0xff]
    %v466 = vld [vmem:[#allocation2 + $0x38] sm:$0xff]
    %v467 = vld [vmem:[#allocation2 + $0x40] sm:$0xff]
    %v468 = vld [vmem:[#allocation2 + $0x48] sm:$0xff]
    %v469 = vld [vmem:[#allocation2 + $0x50] sm:$0xff]
    %v470 = vld [vmem:[#allocation2 + $0x58] sm:$0xff]
    %v471 = vld [vmem:[#allocation2 + $0x60] sm:$0xff]
    %v472 = vld [vmem:[#allocation2 + $0x68] sm:$0xff]
    %v473 = vld [vmem:[#allocation2 + $0x70] sm:$0xff]
    %v474 = vld [vmem:[#allocation2 + $0x78] sm:$0xff]
    %v475 = vld [vmem:[#allocation2 + $0x80] sm:$0xff]
    %v476 = vld [vmem:[#allocation2 + $0x88] sm:$0xff]
    %v477 = vld [vmem:[#allocation2 + $0x90] sm:$0xff]
    %v478 = vld [vmem:[#allocation2 + $0x98] sm:$0xff]
    %v479 = vld [vmem:[#allocation2 + $0xa0] sm:$0xff]
    %v480 = vld [vmem:[#allocation2 + $0xa8] sm:$0xff]
    %v481 = vld [vmem:[#allocation2 + $0xb0] sm:$0xff]
    %v482 = vld [vmem:[#allocation2 + $0xb8] sm:$0xff]
    %v483 = vld [vmem:[#allocation2 + $0xc0] sm:$0xff]
    %v484 = vld [vmem:[#allocation2 + $0xc8] sm:$0xff]
    %v485 = vld [vmem:[#allocation2 + $0xd0] sm:$0xff]
    %v486 = vld [vmem:[#allocation2 + $0xd8] sm:$0xff]
    %v487 = vld [vmem:[#allocation2 + $0xe0] sm:$0xff]
    %v488 = vld [vmem:[#allocation2 + $0xe8] sm:$0xff]
    %v489 = vld [vmem:[#allocation2 + $0xf0] sm:$0xff]
    %v490 = vld [vmem:[#allocation2 + $0xf8] sm:$0xff]
    %v491 = vld [vmem:[#allocation2 + $0x100] sm:$0xff]
    %v492 = vld [vmem:[#allocation2 + $0x108] sm:$0xff]
    %v493 = vld [vmem:[#allocation2 + $0x110] sm:$0xff]
    %v494 = vld [vmem:[#allocation2 + $0x118] sm:$0xff]
    %v495 = vld [vmem:[#allocation2 + $0x120] sm:$0xff]
    %v496 = vld [vmem:[#allocation2 + $0x128] sm:$0xff]
    %v497 = vld [vmem:[#allocation2 + $0x130] sm:$0xff]
    %v498 = vld [vmem:[#allocation2 + $0x138] sm:$0xff]
    %v499 = vld [vmem:[#allocation2 + $0x140] sm:$0xff]
    %v500 = vld [vmem:[#allocation2 + $0x148] sm:$0xff]
    %v501 = vld [vmem:[#allocation2 + $0x150] sm:$0xff]
    %v502 = vld [vmem:[#allocation2 + $0x158] sm:$0xff]
    %v503 = vld [vmem:[#allocation2 + $0x160] sm:$0xff]
    %v504 = vld [vmem:[#allocation2 + $0x168] sm:$0xff]
    %v505 = vld [vmem:[#allocation2 + $0x170] sm:$0xff]
    %v506 = vld [vmem:[#allocation2 + $0x178] sm:$0xff]
    %v507 = vld [vmem:[#allocation2 + $0x180] sm:$0xff]
    %v508 = vld [vmem:[#allocation2 + $0x188] sm:$0xff]
    %v509 = vld [vmem:[#allocation2 + $0x190] sm:$0xff]
    %v510 = vld [vmem:[#allocation2 + $0x198] sm:$0xff]
    %v511 = vld [vmem:[#allocation2 + $0x1a0] sm:$0xff]
    %v512 = vld [vmem:[#allocation2 + $0x1a8] sm:$0xff]
    %v513 = vld [vmem:[#allocation2 + $0x1b0] sm:$0xff]
    %v514 = vld [vmem:[#allocation2 + $0x1b8] sm:$0xff]
    %v515 = vld [vmem:[#allocation2 + $0x1c0] sm:$0xff]
    %v516 = vld [vmem:[#allocation2 + $0x1c8] sm:$0xff]
    %v517 = vld [vmem:[#allocation2 + $0x1d0] sm:$0xff]
    %v518 = vld [vmem:[#allocation2 + $0x1d8] sm:$0xff]
    %v519 = vld [vmem:[#allocation2 + $0x1e0] sm:$0xff]
    %v520 = vld [vmem:[#allocation2 + $0x1e8] sm:$0xff]
    %v521 = vld [vmem:[#allocation2 + $0x1f0] sm:$0xff]
    %v522 = vld [vmem:[#allocation2 + $0x1f8] sm:$0xff]
    %v523 = vld [vmem:[#allocation2 + $0x200] sm:$0xff]
    %v524 = vld [vmem:[#allocation2 + $0x208] sm:$0xff]
    %v525 = vld [vmem:[#allocation2 + $0x210] sm:$0xff]
    %v526 = vld [vmem:[#allocation2 + $0x218] sm:$0xff]
    %v527 = vld [vmem:[#allocation2 + $0x220] sm:$0xff]
    %v528 = vld [vmem:[#allocation2 + $0x228] sm:$0xff]
    %v529 = vld [vmem:[#allocation2 + $0x230] sm:$0xff]
    %v530 = vld [vmem:[#allocation2 + $0x238] sm:$0xff]
    %v531 = vld [vmem:[#allocation2 + $0x240] sm:$0xff]
    %v532 = vld [vmem:[#allocation2 + $0x248] sm:$0xff]
    %v533 = vld [vmem:[#allocation2 + $0x250] sm:$0xff]
    %v534 = vld [vmem:[#allocation2 + $0x258] sm:$0xff]
    %v535 = vld [vmem:[#allocation2 + $0x260] sm:$0xff]
    %v536 = vld [vmem:[#allocation2 + $0x268] sm:$0xff]
    %v537 = vld [vmem:[#allocation2 + $0x270] sm:$0xff]
    %v538 = vld [vmem:[#allocation2 + $0x278] sm:$0xff]
    %v539 = vld [vmem:[#allocation2 + $0x280] sm:$0xff]
    %v540 = vld [vmem:[#allocation2 + $0x288] sm:$0xff]
    %v541 = vld [vmem:[#allocation2 + $0x290] sm:$0xff]
    %v542 = vld [vmem:[#allocation2 + $0x298] sm:$0xff]
    %v543 = vld [vmem:[#allocation2 + $0x2a0] sm:$0xff]
    %v544 = vld [vmem:[#allocation2 + $0x2a8] sm:$0xff]
    %v545 = vld [vmem:[#allocation2 + $0x2b0] sm:$0xff]
    %v546 = vld [vmem:[#allocation2 + $0x2b8] sm:$0xff]
    %v547 = vld [vmem:[#allocation2 + $0x2c0] sm:$0xff]
    %v548 = vld [vmem:[#allocation2 + $0x2c8] sm:$0xff]
    %v549 = vld [vmem:[#allocation2 + $0x2d0] sm:$0xff]
    %v550 = vld [vmem:[#allocation2 + $0x2d8] sm:$0xff]
    %v551 = vld [vmem:[#allocation2 + $0x2e0] sm:$0xff]
    %v552 = vld [vmem:[#allocation2 + $0x2e8] sm:$0xff]
    %v553 = vld [vmem:[#allocation2 + $0x2f0] sm:$0xff]
    %v554 = vld [vmem:[#allocation2 + $0x2f8] sm:$0xff]
    %v555 = vld [vmem:[#allocation2 + $0x300] sm:$0xff]
    %v556 = vld [vmem:[#allocation2 + $0x308] sm:$0xff]
    %v557 = vld [vmem:[#allocation2 + $0x310] sm:$0xff]
    %v558 = vld [vmem:[#allocation2 + $0x318] sm:$0xff]
    %v559 = vld [vmem:[#allocation2 + $0x320] sm:$0xff]
    %v560 = vld [vmem:[#allocation2 + $0x328] sm:$0xff]
    %v561 = vld [vmem:[#allocation2 + $0x330] sm:$0xff]
    %v562 = vld [vmem:[#allocation2 + $0x338] sm:$0xff]
    %v563 = vld [vmem:[#allocation2 + $0x340] sm:$0xff]
    %v564 = vld [vmem:[#allocation2 + $0x348] sm:$0xff]
    %v565 = vld [vmem:[#allocation2 + $0x350] sm:$0xff]
    %v566 = vld [vmem:[#allocation2 + $0x358] sm:$0xff]
    %v567 = vld [vmem:[#allocation2 + $0x360] sm:$0xff]
    %v568 = vld [vmem:[#allocation2 + $0x368] sm:$0xff]
    %v569 = vld [vmem:[#allocation2 + $0x370] sm:$0xff]
    %v570 = vld [vmem:[#allocation2 + $0x378] sm:$0xff]
    %v571 = vld [vmem:[#allocation2 + $0x380] sm:$0xff]
    %v572 = vld [vmem:[#allocation2 + $0x388] sm:$0xff]
    %v573 = vld [vmem:[#allocation2 + $0x390] sm:$0xff]
    %v574 = vld [vmem:[#allocation2 + $0x398] sm:$0xff]
    %v575 = vld [vmem:[#allocation2 + $0x3a0] sm:$0xff]
    %v576 = vld [vmem:[#allocation2 + $0x3a8] sm:$0xff]
    %v577 = vld [vmem:[#allocation2 + $0x3b0] sm:$0xff]
    %v578 = vld [vmem:[#allocation2 + $0x3b8] sm:$0xff]
    %v579 = vld [vmem:[#allocation2 + $0x3c0] sm:$0xff]
    %v580 = vld [vmem:[#allocation2 + $0x3c8] sm:$0xff]
    %v581 = vld [vmem:[#allocation2 + $0x3d0] sm:$0xff]
    %v582 = vld [vmem:[#allocation2 + $0x3d8] sm:$0xff]
    %v583 = vld [vmem:[#allocation2 + $0x3e0] sm:$0xff]
    %v584 = vld [vmem:[#allocation2 + $0x3e8] sm:$0xff]
    %v585 = vld [vmem:[#allocation2 + $0x3f0] sm:$0xff]
    %v586 = vld [vmem:[#allocation2 + $0x3f8] sm:$0xff]
    %v587 = vld [vmem:[#allocation5] sm:$0xf]
    %v589 = vlaneseq
    %v590 = vshrl.u32 %v589, 7
    %v591 = vsub.s32 0, %v590
    %v592 = vrot.slane %v587, %v591
    %v593 = vlaneseq
    %v594 = vshrl.u32 %v593, 7
    %v595 = vsub.s32 1, %v594
    %v596 = vrot.slane %v587, %v595
    %v597 = vlaneseq
    %v598 = vshrl.u32 %v597, 7
    %v599 = vsub.s32 2, %v598
    %v600 = vrot.slane %v587, %v599
    %v601 = vlaneseq
    %v602 = vshrl.u32 %v601, 7
    %v603 = vsub.s32 3, %v602
    %v604 = vrot.slane %v587, %v603
    %609 = vmatprep.subr.mxu0 %v460
    %610 = vmatpush1.msra.mxu0 %v459
    %611 = vmatprep.subr.mxu0 %v464
    %612 = vmatpush1.msra.mxu0 %v463
    %613 = vmatprep.subr.mxu0 %v468
    %614 = vmatpush1.msra.mxu0 %v467
    %615 = vmatprep.subr.mxu0 %v472
    %616 = vmatpush1.msra.mxu0 %v471
    %617 = vmatprep.subr.mxu0 %v476
    %618 = vmatpush1.msra.mxu0 %v475
    %619 = vmatprep.subr.mxu0 %v480
    %620 = vmatpush1.msra.mxu0 %v479
    %621 = vmatprep.subr.mxu0 %v484
    %622 = vmatpush1.msra.mxu0 %v483
    %623 = vmatprep.subr.mxu0 %v488
    %624 = vmatpush1.msra.mxu0 %v487
    %625 = vmatprep.subr.mxu0 %v492
    %626 = vmatpush1.msra.mxu0 %v491
    %627 = vmatprep.subr.mxu0 %v496
    %628 = vmatpush1.msra.mxu0 %v495
    %629 = vmatprep.subr.mxu0 %v500
    %630 = vmatpush1.msra.mxu0 %v499
    %631 = vmatprep.subr.mxu0 %v504
    %632 = vmatpush1.msra.mxu0 %v503
    %633 = vmatprep.subr.mxu0 %v508
    %634 = vmatpush1.msra.mxu0 %v507
    %635 = vmatprep.subr.mxu0 %v512
    %636 = vmatpush1.msra.mxu0 %v511
    %637 = vmatprep.subr.mxu0 %v516
    %638 = vmatpush1.msra.mxu0 %v515
    %639 = vmatprep.subr.mxu0 %v520
    %640 = vmatpush1.msra.mxu0 %v519
    %641 = vmatprep.subr.mxu0 %v524
    %642 = vmatpush1.msra.mxu0 %v523
    %643 = vmatprep.subr.mxu0 %v528
    %644 = vmatpush1.msra.mxu0 %v527
    %645 = vmatprep.subr.mxu0 %v532
    %646 = vmatpush1.msra.mxu0 %v531
    %647 = vmatprep.subr.mxu0 %v536
    %648 = vmatpush1.msra.mxu0 %v535
    %649 = vmatprep.subr.mxu0 %v540
    %650 = vmatpush1.msra.mxu0 %v539
    %651 = vmatprep.subr.mxu0 %v544
    %652 = vmatpush1.msra.mxu0 %v543
    %653 = vmatprep.subr.mxu0 %v548
    %654 = vmatpush1.msra.mxu0 %v547
    %655 = vmatprep.subr.mxu0 %v552
    %656 = vmatpush1.msra.mxu0 %v551
    %657 = vmatprep.subr.mxu0 %v556
    %658 = vmatpush1.msra.mxu0 %v555
    %659 = vmatprep.subr.mxu0 %v560
    %660 = vmatpush1.msra.mxu0 %v559
    %661 = vmatprep.subr.mxu0 %v564
    %662 = vmatpush1.msra.mxu0 %v563
    %663 = vmatprep.subr.mxu0 %v568
    %664 = vmatpush1.msra.mxu0 %v567
    %665 = vmatprep.subr.mxu0 %v572
    %666 = vmatpush1.msra.mxu0 %v571
    %667 = vmatprep.subr.mxu0 %v576
    %668 = vmatpush1.msra.mxu0 %v575
    %669 = vmatprep.subr.mxu0 %v580
    %670 = vmatpush1.msra.mxu0 %v579
    %671 = vmatprep.subr.mxu0 %v584
    %672 = vmatpush1.msra.mxu0 %v583
    %673 = vmatprep.mubr.f32.mxu0 %v455
    %674 = vmatmul.mubr.f32.gmra.mrb[0].mxu0 %v458
    %v675 = vpop.f32.mrb[0].mxu0
    %v676 = vadd.f32 %v592, %v675
    %v677 = vpop.f32.mrb[0].mxu0
    %v678 = vadd.f32 %v596, %v677
    %679 = vdwg.mxu0
    %680 = vmatprep.subr.mxu0 %v462
    %681 = vmatpush1.msra.mxu0 %v461
    %682 = vmatprep.subr.mxu0 %v466
    %683 = vmatpush1.msra.mxu0 %v465
    %684 = vmatprep.subr.mxu0 %v470
    %685 = vmatpush1.msra.mxu0 %v469
    %686 = vmatprep.subr.mxu0 %v474
    %687 = vmatpush1.msra.mxu0 %v473
    %688 = vmatprep.subr.mxu0 %v478
    %689 = vmatpush1.msra.mxu0 %v477
    %690 = vmatprep.subr.mxu0 %v482
    %691 = vmatpush1.msra.mxu0 %v481
    %692 = vmatprep.subr.mxu0 %v486
    %693 = vmatpush1.msra.mxu0 %v485
    %694 = vmatprep.subr.mxu0 %v490
    %695 = vmatpush1.msra.mxu0 %v489
    %696 = vmatprep.subr.mxu0 %v494
    %697 = vmatpush1.msra.mxu0 %v493
    %698 = vmatprep.subr.mxu0 %v498
    %699 = vmatpush1.msra.mxu0 %v497
    %700 = vmatprep.subr.mxu0 %v502
    %701 = vmatpush1.msra.mxu0 %v501
    %702 = vmatprep.subr.mxu0 %v506
    %703 = vmatpush1.msra.mxu0 %v505
    %704 = vmatprep.subr.mxu0 %v510
    %705 = vmatpush1.msra.mxu0 %v509
    %706 = vmatprep.subr.mxu0 %v514
    %707 = vmatpush1.msra.mxu0 %v513
    %708 = vmatprep.subr.mxu0 %v518
    %709 = vmatpush1.msra.mxu0 %v517
    %710 = vmatprep.subr.mxu0 %v522
    %711 = vmatpush1.msra.mxu0 %v521
    %712 = vmatprep.subr.mxu0 %v526
    %713 = vmatpush1.msra.mxu0 %v525
    %714 = vmatprep.subr.mxu0 %v530
    %715 = vmatpush1.msra.mxu0 %v529
    %716 = vmatprep.subr.mxu0 %v534
    %717 = vmatpush1.msra.mxu0 %v533
    %718 = vmatprep.subr.mxu0 %v538
    %719 = vmatpush1.msra.mxu0 %v537
    %720 = vmatprep.subr.mxu0 %v542
    %721 = vmatpush1.msra.mxu0 %v541
    %722 = vmatprep.subr.mxu0 %v546
    %723 = vmatpush1.msra.mxu0 %v545
    %724 = vmatprep.subr.mxu0 %v550
    %725 = vmatpush1.msra.mxu0 %v549
    %726 = vmatprep.subr.mxu0 %v554
    %727 = vmatpush1.msra.mxu0 %v553
    %728 = vmatprep.subr.mxu0 %v558
    %729 = vmatpush1.msra.mxu0 %v557
    %730 = vmatprep.subr.mxu0 %v562
    %731 = vmatpush1.msra.mxu0 %v561
    %732 = vmatprep.subr.mxu0 %v566
    %733 = vmatpush1.msra.mxu0 %v565
    %734 = vmatprep.subr.mxu0 %v570
    %735 = vmatpush1.msra.mxu0 %v569
    %736 = vmatprep.subr.mxu0 %v574
    %737 = vmatpush1.msra.mxu0 %v573
    %738 = vmatprep.subr.mxu0 %v578
    %739 = vmatpush1.msra.mxu0 %v577
    %740 = vmatprep.subr.mxu0 %v582
    %741 = vmatpush1.msra.mxu0 %v581
    %742 = vmatprep.subr.mxu0 %v586
    %743 = vmatpush1.msra.mxu0 %v585
    %744 = vmatprep.mubr.f32.mxu0 %v455
    %745 = vmatmul.mubr.f32.gmra.mrb[0].mxu0 %v458
    %v746 = vpop.f32.mrb[0].mxu0
    %v747 = vadd.f32 %v600, %v746
    %v748 = vpop.f32.mrb[0].mxu0
    %v749 = vadd.f32 %v604, %v748
    %750 = vdwg.mxu0
    %v751 = vmul.f32 %v676, 0.5
    %v752 = vtanh.pop %v751
    %v753 = vmul.f32 %v752, 0.5
    %v754 = vadd.f32 %v753, 0.5
    %v755 = vmul.f32 %v678, 0.5
    %v756 = vtanh.pop %v755
    %v757 = vmul.f32 %v756, 0.5
    %v758 = vadd.f32 %v757, 0.5
    %v759 = vtanh.pop %v747
    %v760 = vmul.f32 %v749, 0.5
    %v761 = vtanh.pop %v760
    %v762 = vmul.f32 %v761, 0.5
    %v763 = vadd.f32 %v762, 0.5
    %v764 = vmul.f32 %v758, %v453
    %v765 = vmul.f32 %v754, %v759
    %v766 = vadd.f32 %v764, %v765
    %v767 = vtanh.pop %v766
    %v768 = vmul.f32 %v763, %v767
    %v769 = vld [vmem:[%s92] sm:$0xff]
    %v770 = vld [vmem:[%s92 + $0x8] sm:$0xff]
    %v771 = vld [vmem:[%s92 + $0x10] sm:$0xff]
    %v772 = vld [vmem:[%s92 + $0x18] sm:$0xff]
    %v773 = vld [vmem:[%s92 + $0x20] sm:$0xff]
    %v774 = vld [vmem:[%s92 + $0x28] sm:$0xff]
    %v775 = vld [vmem:[%s92 + $0x30] sm:$0xff]
    %v776 = vld [vmem:[%s92 + $0x38] sm:$0xff]
    %v777 = vld [vmem:[%s92 + $0x40] sm:$0xff]
    %v778 = vld [vmem:[%s92 + $0x48] sm:$0xff]
    %v779 = vld [vmem:[%s92 + $0x50] sm:$0xff]
    %v780 = vld [vmem:[%s92 + $0x58] sm:$0xff]
    %v781 = vld [vmem:[%s92 + $0x60] sm:$0xff]
    %v782 = vld [vmem:[%s92 + $0x68] sm:$0xff]
    %v783 = vld [vmem:[%s92 + $0x70] sm:$0xff]
    %v784 = vld [vmem:[%s92 + $0x78] sm:$0xff]
    %v785 = vld [vmem:[%s92 + $0x80] sm:$0xff]
    %v786 = vld [vmem:[%s92 + $0x88] sm:$0xff]
    %v787 = vld [vmem:[%s92 + $0x90] sm:$0xff]
    %v788 = vld [vmem:[%s92 + $0x98] sm:$0xff]
    %v789 = vld [vmem:[%s92 + $0xa0] sm:$0xff]
    %v790 = vld [vmem:[%s92 + $0xa8] sm:$0xff]
    %v791 = vld [vmem:[%s92 + $0xb0] sm:$0xff]
    %v792 = vld [vmem:[%s92 + $0xb8] sm:$0xff]
    %v793 = vld [vmem:[%s92 + $0xc0] sm:$0xff]
    %v794 = vld [vmem:[%s92 + $0xc8] sm:$0xff]
    %v795 = vld [vmem:[%s92 + $0xd0] sm:$0xff]
    %v796 = vld [vmem:[%s92 + $0xd8] sm:$0xff]
    %v797 = vld [vmem:[%s92 + $0xe0] sm:$0xff]
    %v798 = vld [vmem:[%s92 + $0xe8] sm:$0xff]
    %v799 = vld [vmem:[%s92 + $0xf0] sm:$0xff]
    %v800 = vld [vmem:[%s92 + $0xf8] sm:$0xff]
    %v801 = vld [vmem:[%s92 + $0x100] sm:$0xff]
    %v802 = vld [vmem:[%s92 + $0x108] sm:$0xff]
    %v803 = vld [vmem:[%s92 + $0x110] sm:$0xff]
    %v804 = vld [vmem:[%s92 + $0x118] sm:$0xff]
    %v805 = vld [vmem:[%s92 + $0x120] sm:$0xff]
    %v806 = vld [vmem:[%s92 + $0x128] sm:$0xff]
    %v807 = vld [vmem:[%s92 + $0x130] sm:$0xff]
    %v808 = vld [vmem:[%s92 + $0x138] sm:$0xff]
    %v809 = vld [vmem:[%s92 + $0x140] sm:$0xff]
    %v810 = vld [vmem:[%s92 + $0x148] sm:$0xff]
    %v811 = vld [vmem:[%s92 + $0x150] sm:$0xff]
    %v812 = vld [vmem:[%s92 + $0x158] sm:$0xff]
    %v813 = vld [vmem:[%s92 + $0x160] sm:$0xff]
    %v814 = vld [vmem:[%s92 + $0x168] sm:$0xff]
    %v815 = vld [vmem:[%s92 + $0x170] sm:$0xff]
    %v816 = vld [vmem:[%s92 + $0x178] sm:$0xff]
    %v817 = vld [vmem:[%s92 + $0x180] sm:$0xff]
    %v818 = vld [vmem:[%s92 + $0x188] sm:$0xff]
    %v819 = vld [vmem:[%s92 + $0x190] sm:$0xff]
    %v820 = vld [vmem:[%s92 + $0x198] sm:$0xff]
    %v821 = vld [vmem:[%s92 + $0x1a0] sm:$0xff]
    %v822 = vld [vmem:[%s92 + $0x1a8] sm:$0xff]
    %v823 = vld [vmem:[%s92 + $0x1b0] sm:$0xff]
    %v824 = vld [vmem:[%s92 + $0x1b8] sm:$0xff]
    %v825 = vld [vmem:[%s92 + $0x1c0] sm:$0xff]
    %v826 = vld [vmem:[%s92 + $0x1c8] sm:$0xff]
    %v827 = vld [vmem:[%s92 + $0x1d0] sm:$0xff]
    %v828 = vld [vmem:[%s92 + $0x1d8] sm:$0xff]
    %v829 = vld [vmem:[%s92 + $0x1e0] sm:$0xff]
    %v830 = vld [vmem:[%s92 + $0x1e8] sm:$0xff]
    %v831 = vld [vmem:[%s92 + $0x1f0] sm:$0xff]
    %v832 = vld [vmem:[%s92 + $0x1f8] sm:$0xff]
    %v833 = vld [vmem:[%s92 + $0x200] sm:$0xff]
    %v834 = vld [vmem:[%s92 + $0x208] sm:$0xff]
    %v835 = vld [vmem:[%s92 + $0x210] sm:$0xff]
    %v836 = vld [vmem:[%s92 + $0x218] sm:$0xff]
    %v837 = vld [vmem:[%s92 + $0x220] sm:$0xff]
    %v838 = vld [vmem:[%s92 + $0x228] sm:$0xff]
    %v839 = vld [vmem:[%s92 + $0x230] sm:$0xff]
    %v840 = vld [vmem:[%s92 + $0x238] sm:$0xff]
    %v841 = vld [vmem:[%s92 + $0x240] sm:$0xff]
    %v842 = vld [vmem:[%s92 + $0x248] sm:$0xff]
    %v843 = vld [vmem:[%s92 + $0x250] sm:$0xff]
    %v844 = vld [vmem:[%s92 + $0x258] sm:$0xff]
    %v845 = vld [vmem:[%s92 + $0x260] sm:$0xff]
    %v846 = vld [vmem:[%s92 + $0x268] sm:$0xff]
    %v847 = vld [vmem:[%s92 + $0x270] sm:$0xff]
    %v848 = vld [vmem:[%s92 + $0x278] sm:$0xff]
    %v849 = vld [vmem:[%s92 + $0x280] sm:$0xff]
    %v850 = vld [vmem:[%s92 + $0x288] sm:$0xff]
    %v851 = vld [vmem:[%s92 + $0x290] sm:$0xff]
    %v852 = vld [vmem:[%s92 + $0x298] sm:$0xff]
    %v853 = vld [vmem:[%s92 + $0x2a0] sm:$0xff]
    %v854 = vld [vmem:[%s92 + $0x2a8] sm:$0xff]
    %v855 = vld [vmem:[%s92 + $0x2b0] sm:$0xff]
    %v856 = vld [vmem:[%s92 + $0x2b8] sm:$0xff]
    %v857 = vld [vmem:[%s92 + $0x2c0] sm:$0xff]
    %v858 = vld [vmem:[%s92 + $0x2c8] sm:$0xff]
    %v859 = vld [vmem:[%s92 + $0x2d0] sm:$0xff]
    %v860 = vld [vmem:[%s92 + $0x2d8] sm:$0xff]
    %v861 = vld [vmem:[%s92 + $0x2e0] sm:$0xff]
    %v862 = vld [vmem:[%s92 + $0x2e8] sm:$0xff]
    %v863 = vld [vmem:[%s92 + $0x2f0] sm:$0xff]
    %v864 = vld [vmem:[%s92 + $0x2f8] sm:$0xff]
    %v865 = vld [vmem:[%s92 + $0x300] sm:$0xff]
    %v866 = vld [vmem:[%s92 + $0x308] sm:$0xff]
    %v867 = vld [vmem:[%s92 + $0x310] sm:$0xff]
    %v868 = vld [vmem:[%s92 + $0x318] sm:$0xff]
    %v869 = vld [vmem:[%s92 + $0x320] sm:$0xff]
    %v870 = vld [vmem:[%s92 + $0x328] sm:$0xff]
    %v871 = vld [vmem:[%s92 + $0x330] sm:$0xff]
    %v872 = vld [vmem:[%s92 + $0x338] sm:$0xff]
    %v873 = vld [vmem:[%s92 + $0x340] sm:$0xff]
    %v874 = vld [vmem:[%s92 + $0x348] sm:$0xff]
    %v875 = vld [vmem:[%s92 + $0x350] sm:$0xff]
    %v876 = vld [vmem:[%s92 + $0x358] sm:$0xff]
    %v877 = vld [vmem:[%s92 + $0x360] sm:$0xff]
    %v878 = vld [vmem:[%s92 + $0x368] sm:$0xff]
    %v879 = vld [vmem:[%s92 + $0x370] sm:$0xff]
    %v880 = vld [vmem:[%s92 + $0x378] sm:$0xff]
    %v881 = vld [vmem:[%s92 + $0x380] sm:$0xff]
    %v882 = vld [vmem:[%s92 + $0x388] sm:$0xff]
    %v883 = vld [vmem:[%s92 + $0x390] sm:$0xff]
    %v884 = vld [vmem:[%s92 + $0x398] sm:$0xff]
    %v885 = vld [vmem:[%s92 + $0x3a0] sm:$0xff]
    %v886 = vld [vmem:[%s92 + $0x3a8] sm:$0xff]
    %v887 = vld [vmem:[%s92 + $0x3b0] sm:$0xff]
    %v888 = vld [vmem:[%s92 + $0x3b8] sm:$0xff]
    %v889 = vld [vmem:[%s92 + $0x3c0] sm:$0xff]
    %v890 = vld [vmem:[%s92 + $0x3c8] sm:$0xff]
    %v891 = vld [vmem:[%s92 + $0x3d0] sm:$0xff]
    %v892 = vld [vmem:[%s92 + $0x3d8] sm:$0xff]
    %v893 = vld [vmem:[%s92 + $0x3e0] sm:$0xff]
    %v894 = vld [vmem:[%s92 + $0x3e8] sm:$0xff]
    %v895 = vld [vmem:[%s92 + $0x3f0] sm:$0xff]
    %v896 = vld [vmem:[%s92 + $0x3f8] sm:$0xff]
    %s897 = scalar_lea.vmem [#allocation5], 4
    %v898 = vld [vmem:[%s897] sm:$0xf]
    %v900 = vlaneseq
    %v901 = vshrl.u32 %v900, 7
    %v902 = vsub.s32 0, %v901
    %v903 = vrot.slane %v898, %v902
    %v904 = vlaneseq
    %v905 = vshrl.u32 %v904, 7
    %v906 = vsub.s32 1, %v905
    %v907 = vrot.slane %v898, %v906
    %v908 = vlaneseq
    %v909 = vshrl.u32 %v908, 7
    %v910 = vsub.s32 2, %v909
    %v911 = vrot.slane %v898, %v910
    %v912 = vlaneseq
    %v913 = vshrl.u32 %v912, 7
    %v914 = vsub.s32 3, %v913
    %v915 = vrot.slane %v898, %v914
    %920 = vmatprep.subr.mxu0 %v770
    %921 = vmatpush1.msra.mxu0 %v769
    %922 = vmatprep.subr.mxu0 %v774
    %923 = vmatpush1.msra.mxu0 %v773
    %924 = vmatprep.subr.mxu0 %v778
    %925 = vmatpush1.msra.mxu0 %v777
    %926 = vmatprep.subr.mxu0 %v782
    %927 = vmatpush1.msra.mxu0 %v781
    %928 = vmatprep.subr.mxu0 %v786
    %929 = vmatpush1.msra.mxu0 %v785
    %930 = vmatprep.subr.mxu0 %v790
    %931 = vmatpush1.msra.mxu0 %v789
    %932 = vmatprep.subr.mxu0 %v794
    %933 = vmatpush1.msra.mxu0 %v793
    %934 = vmatprep.subr.mxu0 %v798
    %935 = vmatpush1.msra.mxu0 %v797
    %936 = vmatprep.subr.mxu0 %v802
    %937 = vmatpush1.msra.mxu0 %v801
    %938 = vmatprep.subr.mxu0 %v806
    %939 = vmatpush1.msra.mxu0 %v805
    %940 = vmatprep.subr.mxu0 %v810
    %941 = vmatpush1.msra.mxu0 %v809
    %942 = vmatprep.subr.mxu0 %v814
    %943 = vmatpush1.msra.mxu0 %v813
    %944 = vmatprep.subr.mxu0 %v818
    %945 = vmatpush1.msra.mxu0 %v817
    %946 = vmatprep.subr.mxu0 %v822
    %947 = vmatpush1.msra.mxu0 %v821
    %948 = vmatprep.subr.mxu0 %v826
    %949 = vmatpush1.msra.mxu0 %v825
    %950 = vmatprep.subr.mxu0 %v830
    %951 = vmatpush1.msra.mxu0 %v829
    %952 = vmatprep.subr.mxu0 %v834
    %953 = vmatpush1.msra.mxu0 %v833
    %954 = vmatprep.subr.mxu0 %v838
    %955 = vmatpush1.msra.mxu0 %v837
    %956 = vmatprep.subr.mxu0 %v842
    %957 = vmatpush1.msra.mxu0 %v841
    %958 = vmatprep.subr.mxu0 %v846
    %959 = vmatpush1.msra.mxu0 %v845
    %960 = vmatprep.subr.mxu0 %v850
    %961 = vmatpush1.msra.mxu0 %v849
    %962 = vmatprep.subr.mxu0 %v854
    %963 = vmatpush1.msra.mxu0 %v853
    %964 = vmatprep.subr.mxu0 %v858
    %965 = vmatpush1.msra.mxu0 %v857
    %966 = vmatprep.subr.mxu0 %v862
    %967 = vmatpush1.msra.mxu0 %v861
    %968 = vmatprep.subr.mxu0 %v866
    %969 = vmatpush1.msra.mxu0 %v865
    %970 = vmatprep.subr.mxu0 %v870
    %971 = vmatpush1.msra.mxu0 %v869
    %972 = vmatprep.subr.mxu0 %v874
    %973 = vmatpush1.msra.mxu0 %v873
    %974 = vmatprep.subr.mxu0 %v878
    %975 = vmatpush1.msra.mxu0 %v877
    %976 = vmatprep.subr.mxu0 %v882
    %977 = vmatpush1.msra.mxu0 %v881
    %978 = vmatprep.subr.mxu0 %v886
    %979 = vmatpush1.msra.mxu0 %v885
    %980 = vmatprep.subr.mxu0 %v890
    %981 = vmatpush1.msra.mxu0 %v889
    %982 = vmatprep.subr.mxu0 %v894
    %983 = vmatpush1.msra.mxu0 %v893
    %984 = vmatprep.mubr.f32.mxu0 %v133
    %985 = vmatmul.mubr.f32.gmra.mrb[0].mxu0 %v455
    %v986 = vpop.f32.mrb[0].mxu0
    %v987 = vadd.f32 %v903, %v986
    %v988 = vpop.f32.mrb[0].mxu0
    %v989 = vadd.f32 %v907, %v988
    %990 = vdwg.mxu0
    %991 = vmatprep.subr.mxu0 %v772
    %992 = vmatpush1.msra.mxu0 %v771
    %993 = vmatprep.subr.mxu0 %v776
    %994 = vmatpush1.msra.mxu0 %v775
    %995 = vmatprep.subr.mxu0 %v780
    %996 = vmatpush1.msra.mxu0 %v779
    %997 = vmatprep.subr.mxu0 %v784
    %998 = vmatpush1.msra.mxu0 %v783
    %999 = vmatprep.subr.mxu0 %v788
    %1000 = vmatpush1.msra.mxu0 %v787
    %1001 = vmatprep.subr.mxu0 %v792
    %1002 = vmatpush1.msra.mxu0 %v791
    %1003 = vmatprep.subr.mxu0 %v796
    %1004 = vmatpush1.msra.mxu0 %v795
    %1005 = vmatprep.subr.mxu0 %v800
    %1006 = vmatpush1.msra.mxu0 %v799
    %1007 = vmatprep.subr.mxu0 %v804
    %1008 = vmatpush1.msra.mxu0 %v803
    %1009 = vmatprep.subr.mxu0 %v808
    %1010 = vmatpush1.msra.mxu0 %v807
    %1011 = vmatprep.subr.mxu0 %v812
    %1012 = vmatpush1.msra.mxu0 %v811
    %1013 = vmatprep.subr.mxu0 %v816
    %1014 = vmatpush1.msra.mxu0 %v815
    %1015 = vmatprep.subr.mxu0 %v820
    %1016 = vmatpush1.msra.mxu0 %v819
    %1017 = vmatprep.subr.mxu0 %v824
    %1018 = vmatpush1.msra.mxu0 %v823
    %1019 = vmatprep.subr.mxu0 %v828
    %1020 = vmatpush1.msra.mxu0 %v827
    %1021 = vmatprep.subr.mxu0 %v832
    %1022 = vmatpush1.msra.mxu0 %v831
    %1023 = vmatprep.subr.mxu0 %v836
    %1024 = vmatpush1.msra.mxu0 %v835
    %1025 = vmatprep.subr.mxu0 %v840
    %1026 = vmatpush1.msra.mxu0 %v839
    %1027 = vmatprep.subr.mxu0 %v844
    %1028 = vmatpush1.msra.mxu0 %v843
    %1029 = vmatprep.subr.mxu0 %v848
    %1030 = vmatpush1.msra.mxu0 %v847
    %1031 = vmatprep.subr.mxu0 %v852
    %1032 = vmatpush1.msra.mxu0 %v851
    %1033 = vmatprep.subr.mxu0 %v856
    %1034 = vmatpush1.msra.mxu0 %v855
    %1035 = vmatprep.subr.mxu0 %v860
    %1036 = vmatpush1.msra.mxu0 %v859
    %1037 = vmatprep.subr.mxu0 %v864
    %1038 = vmatpush1.msra.mxu0 %v863
    %1039 = vmatprep.subr.mxu0 %v868
    %1040 = vmatpush1.msra.mxu0 %v867
    %1041 = vmatprep.subr.mxu0 %v872
    %1042 = vmatpush1.msra.mxu0 %v871
    %1043 = vmatprep.subr.mxu0 %v876
    %1044 = vmatpush1.msra.mxu0 %v875
    %1045 = vmatprep.subr.mxu0 %v880
    %1046 = vmatpush1.msra.mxu0 %v879
    %1047 = vmatprep.subr.mxu0 %v884
    %1048 = vmatpush1.msra.mxu0 %v883
    %1049 = vmatprep.subr.mxu0 %v888
    %1050 = vmatpush1.msra.mxu0 %v887
    %1051 = vmatprep.subr.mxu0 %v892
    %1052 = vmatpush1.msra.mxu0 %v891
    %1053 = vmatprep.subr.mxu0 %v896
    %1054 = vmatpush1.msra.mxu0 %v895
    %1055 = vmatprep.mubr.f32.mxu0 %v133
    %1056 = vmatmul.mubr.f32.gmra.mrb[0].mxu0 %v455
    %v1057 = vpop.f32.mrb[0].mxu0
    %v1058 = vadd.f32 %v911, %v1057
    %v1059 = vpop.f32.mrb[0].mxu0
    %v1060 = vadd.f32 %v915, %v1059
    %1061 = vdwg.mxu0
    %v1062 = vmul.f32 %v987, 0.5
    %v1063 = vtanh.pop %v1062
    %v1064 = vmul.f32 %v1063, 0.5
    %v1065 = vadd.f32 %v1064, 0.5
    %v1066 = vmul.f32 %v989, 0.5
    %v1067 = vtanh.pop %v1066
    %v1068 = vmul.f32 %v1067, 0.5
    %v1069 = vadd.f32 %v1068, 0.5
    %v1070 = vtanh.pop %v1058
    %v1071 = vmul.f32 %v1060, 0.5
    %v1072 = vtanh.pop %v1071
    %v1073 = vmul.f32 %v1072, 0.5
    %v1074 = vadd.f32 %v1073, 0.5
    %v1075 = vmul.f32 %v1069, %v138
    %v1076 = vmul.f32 %v1065, %v1070
    %v1077 = vadd.f32 %v1075, %v1076
    %v1078 = vtanh.pop %v1077
    %v1079 = vmul.f32 %v1074, %v1078
    %s1080 = sshll.u32 %s142, 4
    %1081 = dma.done %s107, %s1080
    %v1082 = vld [vmem:[%s0 + $0x10] sm:$0xff]
    %v1083 = vld [vmem:[#allocation2] sm:$0xff]
    %v1084 = vld [vmem:[#allocation2 + $0x8] sm:$0xff]
    %v1085 = vld [vmem:[#allocation2 + $0x10] sm:$0xff]
    %v1086 = vld [vmem:[#allocation2 + $0x18] sm:$0xff]
    %v1087 = vld [vmem:[#allocation2 + $0x20] sm:$0xff]
    %v1088 = vld [vmem:[#allocation2 + $0x28] sm:$0xff]
    %v1089 = vld [vmem:[#allocation2 + $0x30] sm:$0xff]
    %v1090 = vld [vmem:[#allocation2 + $0x38] sm:$0xff]
    %v1091 = vld [vmem:[#allocation2 + $0x40] sm:$0xff]
    %v1092 = vld [vmem:[#allocation2 + $0x48] sm:$0xff]
    %v1093 = vld [vmem:[#allocation2 + $0x50] sm:$0xff]
    %v1094 = vld [vmem:[#allocation2 + $0x58] sm:$0xff]
    %v1095 = vld [vmem:[#allocation2 + $0x60] sm:$0xff]
    %v1096 = vld [vmem:[#allocation2 + $0x68] sm:$0xff]
    %v1097 = vld [vmem:[#allocation2 + $0x70] sm:$0xff]
    %v1098 = vld [vmem:[#allocation2 + $0x78] sm:$0xff]
    %v1099 = vld [vmem:[#allocation2 + $0x80] sm:$0xff]
    %v1100 = vld [vmem:[#allocation2 + $0x88] sm:$0xff]
    %v1101 = vld [vmem:[#allocation2 + $0x90] sm:$0xff]
    %v1102 = vld [vmem:[#allocation2 + $0x98] sm:$0xff]
    %v1103 = vld [vmem:[#allocation2 + $0xa0] sm:$0xff]
    %v1104 = vld [vmem:[#allocation2 + $0xa8] sm:$0xff]
    %v1105 = vld [vmem:[#allocation2 + $0xb0] sm:$0xff]
    %v1106 = vld [vmem:[#allocation2 + $0xb8] sm:$0xff]
    %v1107 = vld [vmem:[#allocation2 + $0xc0] sm:$0xff]
    %v1108 = vld [vmem:[#allocation2 + $0xc8] sm:$0xff]
    %v1109 = vld [vmem:[#allocation2 + $0xd0] sm:$0xff]
    %v1110 = vld [vmem:[#allocation2 + $0xd8] sm:$0xff]
    %v1111 = vld [vmem:[#allocation2 + $0xe0] sm:$0xff]
    %v1112 = vld [vmem:[#allocation2 + $0xe8] sm:$0xff]
    %v1113 = vld [vmem:[#allocation2 + $0xf0] sm:$0xff]
    %v1114 = vld [vmem:[#allocation2 + $0xf8] sm:$0xff]
    %v1115 = vld [vmem:[#allocation2 + $0x100] sm:$0xff]
    %v1116 = vld [vmem:[#allocation2 + $0x108] sm:$0xff]
    %v1117 = vld [vmem:[#allocation2 + $0x110] sm:$0xff]
    %v1118 = vld [vmem:[#allocation2 + $0x118] sm:$0xff]
    %v1119 = vld [vmem:[#allocation2 + $0x120] sm:$0xff]
    %v1120 = vld [vmem:[#allocation2 + $0x128] sm:$0xff]
    %v1121 = vld [vmem:[#allocation2 + $0x130] sm:$0xff]
    %v1122 = vld [vmem:[#allocation2 + $0x138] sm:$0xff]
    %v1123 = vld [vmem:[#allocation2 + $0x140] sm:$0xff]
    %v1124 = vld [vmem:[#allocation2 + $0x148] sm:$0xff]
    %v1125 = vld [vmem:[#allocation2 + $0x150] sm:$0xff]
    %v1126 = vld [vmem:[#allocation2 + $0x158] sm:$0xff]
    %v1127 = vld [vmem:[#allocation2 + $0x160] sm:$0xff]
    %v1128 = vld [vmem:[#allocation2 + $0x168] sm:$0xff]
    %v1129 = vld [vmem:[#allocation2 + $0x170] sm:$0xff]
    %v1130 = vld [vmem:[#allocation2 + $0x178] sm:$0xff]
    %v1131 = vld [vmem:[#allocation2 + $0x180] sm:$0xff]
    %v1132 = vld [vmem:[#allocation2 + $0x188] sm:$0xff]
    %v1133 = vld [vmem:[#allocation2 + $0x190] sm:$0xff]
    %v1134 = vld [vmem:[#allocation2 + $0x198] sm:$0xff]
    %v1135 = vld [vmem:[#allocation2 + $0x1a0] sm:$0xff]
    %v1136 = vld [vmem:[#allocation2 + $0x1a8] sm:$0xff]
    %v1137 = vld [vmem:[#allocation2 + $0x1b0] sm:$0xff]
    %v1138 = vld [vmem:[#allocation2 + $0x1b8] sm:$0xff]
    %v1139 = vld [vmem:[#allocation2 + $0x1c0] sm:$0xff]
    %v1140 = vld [vmem:[#allocation2 + $0x1c8] sm:$0xff]
    %v1141 = vld [vmem:[#allocation2 + $0x1d0] sm:$0xff]
    %v1142 = vld [vmem:[#allocation2 + $0x1d8] sm:$0xff]
    %v1143 = vld [vmem:[#allocation2 + $0x1e0] sm:$0xff]
    %v1144 = vld [vmem:[#allocation2 + $0x1e8] sm:$0xff]
    %v1145 = vld [vmem:[#allocation2 + $0x1f0] sm:$0xff]
    %v1146 = vld [vmem:[#allocation2 + $0x1f8] sm:$0xff]
    %v1147 = vld [vmem:[#allocation2 + $0x200] sm:$0xff]
    %v1148 = vld [vmem:[#allocation2 + $0x208] sm:$0xff]
    %v1149 = vld [vmem:[#allocation2 + $0x210] sm:$0xff]
    %v1150 = vld [vmem:[#allocation2 + $0x218] sm:$0xff]
    %v1151 = vld [vmem:[#allocation2 + $0x220] sm:$0xff]
    %v1152 = vld [vmem:[#allocation2 + $0x228] sm:$0xff]
    %v1153 = vld [vmem:[#allocation2 + $0x230] sm:$0xff]
    %v1154 = vld [vmem:[#allocation2 + $0x238] sm:$0xff]
    %v1155 = vld [vmem:[#allocation2 + $0x240] sm:$0xff]
    %v1156 = vld [vmem:[#allocation2 + $0x248] sm:$0xff]
    %v1157 = vld [vmem:[#allocation2 + $0x250] sm:$0xff]
    %v1158 = vld [vmem:[#allocation2 + $0x258] sm:$0xff]
    %v1159 = vld [vmem:[#allocation2 + $0x260] sm:$0xff]
    %v1160 = vld [vmem:[#allocation2 + $0x268] sm:$0xff]
    %v1161 = vld [vmem:[#allocation2 + $0x270] sm:$0xff]
    %v1162 = vld [vmem:[#allocation2 + $0x278] sm:$0xff]
    %v1163 = vld [vmem:[#allocation2 + $0x280] sm:$0xff]
    %v1164 = vld [vmem:[#allocation2 + $0x288] sm:$0xff]
    %v1165 = vld [vmem:[#allocation2 + $0x290] sm:$0xff]
    %v1166 = vld [vmem:[#allocation2 + $0x298] sm:$0xff]
    %v1167 = vld [vmem:[#allocation2 + $0x2a0] sm:$0xff]
    %v1168 = vld [vmem:[#allocation2 + $0x2a8] sm:$0xff]
    %v1169 = vld [vmem:[#allocation2 + $0x2b0] sm:$0xff]
    %v1170 = vld [vmem:[#allocation2 + $0x2b8] sm:$0xff]
    %v1171 = vld [vmem:[#allocation2 + $0x2c0] sm:$0xff]
    %v1172 = vld [vmem:[#allocation2 + $0x2c8] sm:$0xff]
    %v1173 = vld [vmem:[#allocation2 + $0x2d0] sm:$0xff]
    %v1174 = vld [vmem:[#allocation2 + $0x2d8] sm:$0xff]
    %v1175 = vld [vmem:[#allocation2 + $0x2e0] sm:$0xff]
    %v1176 = vld [vmem:[#allocation2 + $0x2e8] sm:$0xff]
    %v1177 = vld [vmem:[#allocation2 + $0x2f0] sm:$0xff]
    %v1178 = vld [vmem:[#allocation2 + $0x2f8] sm:$0xff]
    %v1179 = vld [vmem:[#allocation2 + $0x300] sm:$0xff]
    %v1180 = vld [vmem:[#allocation2 + $0x308] sm:$0xff]
    %v1181 = vld [vmem:[#allocation2 + $0x310] sm:$0xff]
    %v1182 = vld [vmem:[#allocation2 + $0x318] sm:$0xff]
    %v1183 = vld [vmem:[#allocation2 + $0x320] sm:$0xff]
    %v1184 = vld [vmem:[#allocation2 + $0x328] sm:$0xff]
    %v1185 = vld [vmem:[#allocation2 + $0x330] sm:$0xff]
    %v1186 = vld [vmem:[#allocation2 + $0x338] sm:$0xff]
    %v1187 = vld [vmem:[#allocation2 + $0x340] sm:$0xff]
    %v1188 = vld [vmem:[#allocation2 + $0x348] sm:$0xff]
    %v1189 = vld [vmem:[#allocation2 + $0x350] sm:$0xff]
    %v1190 = vld [vmem:[#allocation2 + $0x358] sm:$0xff]
    %v1191 = vld [vmem:[#allocation2 + $0x360] sm:$0xff]
    %v1192 = vld [vmem:[#allocation2 + $0x368] sm:$0xff]
    %v1193 = vld [vmem:[#allocation2 + $0x370] sm:$0xff]
    %v1194 = vld [vmem:[#allocation2 + $0x378] sm:$0xff]
    %v1195 = vld [vmem:[#allocation2 + $0x380] sm:$0xff]
    %v1196 = vld [vmem:[#allocation2 + $0x388] sm:$0xff]
    %v1197 = vld [vmem:[#allocation2 + $0x390] sm:$0xff]
    %v1198 = vld [vmem:[#allocation2 + $0x398] sm:$0xff]
    %v1199 = vld [vmem:[#allocation2 + $0x3a0] sm:$0xff]
    %v1200 = vld [vmem:[#allocation2 + $0x3a8] sm:$0xff]
    %v1201 = vld [vmem:[#allocation2 + $0x3b0] sm:$0xff]
    %v1202 = vld [vmem:[#allocation2 + $0x3b8] sm:$0xff]
    %v1203 = vld [vmem:[#allocation2 + $0x3c0] sm:$0xff]
    %v1204 = vld [vmem:[#allocation2 + $0x3c8] sm:$0xff]
    %v1205 = vld [vmem:[#allocation2 + $0x3d0] sm:$0xff]
    %v1206 = vld [vmem:[#allocation2 + $0x3d8] sm:$0xff]
    %v1207 = vld [vmem:[#allocation2 + $0x3e0] sm:$0xff]
    %v1208 = vld [vmem:[#allocation2 + $0x3e8] sm:$0xff]
    %v1209 = vld [vmem:[#allocation2 + $0x3f0] sm:$0xff]
    %v1210 = vld [vmem:[#allocation2 + $0x3f8] sm:$0xff]
    %v1211 = vld [vmem:[#allocation5] sm:$0xf]
    %v1213 = vlaneseq
    %v1214 = vshrl.u32 %v1213, 7
    %v1215 = vsub.s32 0, %v1214
    %v1216 = vrot.slane %v1211, %v1215
    %v1217 = vlaneseq
    %v1218 = vshrl.u32 %v1217, 7
    %v1219 = vsub.s32 1, %v1218
    %v1220 = vrot.slane %v1211, %v1219
    %v1221 = vlaneseq
    %v1222 = vshrl.u32 %v1221, 7
    %v1223 = vsub.s32 2, %v1222
    %v1224 = vrot.slane %v1211, %v1223
    %v1225 = vlaneseq
    %v1226 = vshrl.u32 %v1225, 7
    %v1227 = vsub.s32 3, %v1226
    %v1228 = vrot.slane %v1211, %v1227
    %1233 = vmatprep.subr.mxu0 %v1084
    %1234 = vmatpush1.msra.mxu0 %v1083
    %1235 = vmatprep.subr.mxu0 %v1088
    %1236 = vmatpush1.msra.mxu0 %v1087
    %1237 = vmatprep.subr.mxu0 %v1092
    %1238 = vmatpush1.msra.mxu0 %v1091
    %1239 = vmatprep.subr.mxu0 %v1096
    %1240 = vmatpush1.msra.mxu0 %v1095
    %1241 = vmatprep.subr.mxu0 %v1100
    %1242 = vmatpush1.msra.mxu0 %v1099
    %1243 = vmatprep.subr.mxu0 %v1104
    %1244 = vmatpush1.msra.mxu0 %v1103
    %1245 = vmatprep.subr.mxu0 %v1108
    %1246 = vmatpush1.msra.mxu0 %v1107
    %1247 = vmatprep.subr.mxu0 %v1112
    %1248 = vmatpush1.msra.mxu0 %v1111
    %1249 = vmatprep.subr.mxu0 %v1116
    %1250 = vmatpush1.msra.mxu0 %v1115
    %1251 = vmatprep.subr.mxu0 %v1120
    %1252 = vmatpush1.msra.mxu0 %v1119
    %1253 = vmatprep.subr.mxu0 %v1124
    %1254 = vmatpush1.msra.mxu0 %v1123
    %1255 = vmatprep.subr.mxu0 %v1128
    %1256 = vmatpush1.msra.mxu0 %v1127
    %1257 = vmatprep.subr.mxu0 %v1132
    %1258 = vmatpush1.msra.mxu0 %v1131
    %1259 = vmatprep.subr.mxu0 %v1136
    %1260 = vmatpush1.msra.mxu0 %v1135
    %1261 = vmatprep.subr.mxu0 %v1140
    %1262 = vmatpush1.msra.mxu0 %v1139
    %1263 = vmatprep.subr.mxu0 %v1144
    %1264 = vmatpush1.msra.mxu0 %v1143
    %1265 = vmatprep.subr.mxu0 %v1148
    %1266 = vmatpush1.msra.mxu0 %v1147
    %1267 = vmatprep.subr.mxu0 %v1152
    %1268 = vmatpush1.msra.mxu0 %v1151
    %1269 = vmatprep.subr.mxu0 %v1156
    %1270 = vmatpush1.msra.mxu0 %v1155
    %1271 = vmatprep.subr.mxu0 %v1160
    %1272 = vmatpush1.msra.mxu0 %v1159
    %1273 = vmatprep.subr.mxu0 %v1164
    %1274 = vmatpush1.msra.mxu0 %v1163
    %1275 = vmatprep.subr.mxu0 %v1168
    %1276 = vmatpush1.msra.mxu0 %v1167
    %1277 = vmatprep.subr.mxu0 %v1172
    %1278 = vmatpush1.msra.mxu0 %v1171
    %1279 = vmatprep.subr.mxu0 %v1176
    %1280 = vmatpush1.msra.mxu0 %v1175
    %1281 = vmatprep.subr.mxu0 %v1180
    %1282 = vmatpush1.msra.mxu0 %v1179
    %1283 = vmatprep.subr.mxu0 %v1184
    %1284 = vmatpush1.msra.mxu0 %v1183
    %1285 = vmatprep.subr.mxu0 %v1188
    %1286 = vmatpush1.msra.mxu0 %v1187
    %1287 = vmatprep.subr.mxu0 %v1192
    %1288 = vmatpush1.msra.mxu0 %v1191
    %1289 = vmatprep.subr.mxu0 %v1196
    %1290 = vmatpush1.msra.mxu0 %v1195
    %1291 = vmatprep.subr.mxu0 %v1200
    %1292 = vmatpush1.msra.mxu0 %v1199
    %1293 = vmatprep.subr.mxu0 %v1204
    %1294 = vmatpush1.msra.mxu0 %v1203
    %1295 = vmatprep.subr.mxu0 %v1208
    %1296 = vmatpush1.msra.mxu0 %v1207
    %1297 = vmatprep.mubr.f32.mxu0 %v768
    %1298 = vmatmul.mubr.f32.gmra.mrb[0].mxu0 %v1082
    %v1299 = vpop.f32.mrb[0].mxu0
    %v1300 = vadd.f32 %v1216, %v1299
    %v1301 = vpop.f32.mrb[0].mxu0
    %v1302 = vadd.f32 %v1220, %v1301
    %1303 = vdwg.mxu0
    %1304 = vmatprep.subr.mxu0 %v1086
    %1305 = vmatpush1.msra.mxu0 %v1085
    %1306 = vmatprep.subr.mxu0 %v1090
    %1307 = vmatpush1.msra.mxu0 %v1089
    %1308 = vmatprep.subr.mxu0 %v1094
    %1309 = vmatpush1.msra.mxu0 %v1093
    %1310 = vmatprep.subr.mxu0 %v1098
    %1311 = vmatpush1.msra.mxu0 %v1097
    %1312 = vmatprep.subr.mxu0 %v1102
    %1313 = vmatpush1.msra.mxu0 %v1101
    %1314 = vmatprep.subr.mxu0 %v1106
    %1315 = vmatpush1.msra.mxu0 %v1105
    %1316 = vmatprep.subr.mxu0 %v1110
    %1317 = vmatpush1.msra.mxu0 %v1109
    %1318 = vmatprep.subr.mxu0 %v1114
    %1319 = vmatpush1.msra.mxu0 %v1113
    %1320 = vmatprep.subr.mxu0 %v1118
    %1321 = vmatpush1.msra.mxu0 %v1117
    %1322 = vmatprep.subr.mxu0 %v1122
    %1323 = vmatpush1.msra.mxu0 %v1121
    %1324 = vmatprep.subr.mxu0 %v1126
    %1325 = vmatpush1.msra.mxu0 %v1125
    %1326 = vmatprep.subr.mxu0 %v1130
    %1327 = vmatpush1.msra.mxu0 %v1129
    %1328 = vmatprep.subr.mxu0 %v1134
    %1329 = vmatpush1.msra.mxu0 %v1133
    %1330 = vmatprep.subr.mxu0 %v1138
    %1331 = vmatpush1.msra.mxu0 %v1137
    %1332 = vmatprep.subr.mxu0 %v1142
    %1333 = vmatpush1.msra.mxu0 %v1141
    %1334 = vmatprep.subr.mxu0 %v1146
    %1335 = vmatpush1.msra.mxu0 %v1145
    %1336 = vmatprep.subr.mxu0 %v1150
    %1337 = vmatpush1.msra.mxu0 %v1149
    %1338 = vmatprep.subr.mxu0 %v1154
    %1339 = vmatpush1.msra.mxu0 %v1153
    %1340 = vmatprep.subr.mxu0 %v1158
    %1341 = vmatpush1.msra.mxu0 %v1157
    %1342 = vmatprep.subr.mxu0 %v1162
    %1343 = vmatpush1.msra.mxu0 %v1161
    %1344 = vmatprep.subr.mxu0 %v1166
    %1345 = vmatpush1.msra.mxu0 %v1165
    %1346 = vmatprep.subr.mxu0 %v1170
    %1347 = vmatpush1.msra.mxu0 %v1169
    %1348 = vmatprep.subr.mxu0 %v1174
    %1349 = vmatpush1.msra.mxu0 %v1173
    %1350 = vmatprep.subr.mxu0 %v1178
    %1351 = vmatpush1.msra.mxu0 %v1177
    %1352 = vmatprep.subr.mxu0 %v1182
    %1353 = vmatpush1.msra.mxu0 %v1181
    %1354 = vmatprep.subr.mxu0 %v1186
    %1355 = vmatpush1.msra.mxu0 %v1185
    %1356 = vmatprep.subr.mxu0 %v1190
    %1357 = vmatpush1.msra.mxu0 %v1189
    %1358 = vmatprep.subr.mxu0 %v1194
    %1359 = vmatpush1.msra.mxu0 %v1193
    %1360 = vmatprep.subr.mxu0 %v1198
    %1361 = vmatpush1.msra.mxu0 %v1197
    %1362 = vmatprep.subr.mxu0 %v1202
    %1363 = vmatpush1.msra.mxu0 %v1201
    %1364 = vmatprep.subr.mxu0 %v1206
    %1365 = vmatpush1.msra.mxu0 %v1205
    %1366 = vmatprep.subr.mxu0 %v1210
    %1367 = vmatpush1.msra.mxu0 %v1209
    %1368 = vmatprep.mubr.f32.mxu0 %v768
    %1369 = vmatmul.mubr.f32.gmra.mrb[0].mxu0 %v1082
    %v1370 = vpop.f32.mrb[0].mxu0
    %v1371 = vadd.f32 %v1224, %v1370
    %v1372 = vpop.f32.mrb[0].mxu0
    %v1373 = vadd.f32 %v1228, %v1372
    %1374 = vdwg.mxu0
    %v1375 = vmul.f32 %v1300, 0.5
    %v1376 = vtanh.pop %v1375
    %v1377 = vmul.f32 %v1376, 0.5
    %v1378 = vadd.f32 %v1377, 0.5
    %v1379 = vmul.f32 %v1302, 0.5
    %v1380 = vtanh.pop %v1379
    %v1381 = vmul.f32 %v1380, 0.5
    %v1382 = vadd.f32 %v1381, 0.5
    %v1383 = vtanh.pop %v1371
    %v1384 = vmul.f32 %v1373, 0.5
    %v1385 = vtanh.pop %v1384
    %v1386 = vmul.f32 %v1385, 0.5
    %v1387 = vadd.f32 %v1386, 0.5
    %v1388 = vmul.f32 %v1382, %v766
    %v1389 = vmul.f32 %v1378, %v1383
    %v1390 = vadd.f32 %v1388, %v1389
    %v1391 = vtanh.pop %v1390
    %v1392 = vmul.f32 %v1387, %v1391
    %v1393 = vld [vmem:[%s92] sm:$0xff]
    %v1394 = vld [vmem:[%s92 + $0x8] sm:$0xff]
    %v1395 = vld [vmem:[%s92 + $0x10] sm:$0xff]
    %v1396 = vld [vmem:[%s92 + $0x18] sm:$0xff]
    %v1397 = vld [vmem:[%s92 + $0x20] sm:$0xff]
    %v1398 = vld [vmem:[%s92 + $0x28] sm:$0xff]
    %v1399 = vld [vmem:[%s92 + $0x30] sm:$0xff]
    %v1400 = vld [vmem:[%s92 + $0x38] sm:$0xff]
    %v1401 = vld [vmem:[%s92 + $0x40] sm:$0xff]
    %v1402 = vld [vmem:[%s92 + $0x48] sm:$0xff]
    %v1403 = vld [vmem:[%s92 + $0x50] sm:$0xff]
    %v1404 = vld [vmem:[%s92 + $0x58] sm:$0xff]
    %v1405 = vld [vmem:[%s92 + $0x60] sm:$0xff]
    %v1406 = vld [vmem:[%s92 + $0x68] sm:$0xff]
    %v1407 = vld [vmem:[%s92 + $0x70] sm:$0xff]
    %v1408 = vld [vmem:[%s92 + $0x78] sm:$0xff]
    %v1409 = vld [vmem:[%s92 + $0x80] sm:$0xff]
    %v1410 = vld [vmem:[%s92 + $0x88] sm:$0xff]
    %v1411 = vld [vmem:[%s92 + $0x90] sm:$0xff]
    %v1412 = vld [vmem:[%s92 + $0x98] sm:$0xff]
    %v1413 = vld [vmem:[%s92 + $0xa0] sm:$0xff]
    %v1414 = vld [vmem:[%s92 + $0xa8] sm:$0xff]
    %v1415 = vld [vmem:[%s92 + $0xb0] sm:$0xff]
    %v1416 = vld [vmem:[%s92 + $0xb8] sm:$0xff]
    %v1417 = vld [vmem:[%s92 + $0xc0] sm:$0xff]
    %v1418 = vld [vmem:[%s92 + $0xc8] sm:$0xff]
    %v1419 = vld [vmem:[%s92 + $0xd0] sm:$0xff]
    %v1420 = vld [vmem:[%s92 + $0xd8] sm:$0xff]
    %v1421 = vld [vmem:[%s92 + $0xe0] sm:$0xff]
    %v1422 = vld [vmem:[%s92 + $0xe8] sm:$0xff]
    %v1423 = vld [vmem:[%s92 + $0xf0] sm:$0xff]
    %v1424 = vld [vmem:[%s92 + $0xf8] sm:$0xff]
    %v1425 = vld [vmem:[%s92 + $0x100] sm:$0xff]
    %v1426 = vld [vmem:[%s92 + $0x108] sm:$0xff]
    %v1427 = vld [vmem:[%s92 + $0x110] sm:$0xff]
    %v1428 = vld [vmem:[%s92 + $0x118] sm:$0xff]
    %v1429 = vld [vmem:[%s92 + $0x120] sm:$0xff]
    %v1430 = vld [vmem:[%s92 + $0x128] sm:$0xff]
    %v1431 = vld [vmem:[%s92 + $0x130] sm:$0xff]
    %v1432 = vld [vmem:[%s92 + $0x138] sm:$0xff]
    %v1433 = vld [vmem:[%s92 + $0x140] sm:$0xff]
    %v1434 = vld [vmem:[%s92 + $0x148] sm:$0xff]
    %v1435 = vld [vmem:[%s92 + $0x150] sm:$0xff]
    %v1436 = vld [vmem:[%s92 + $0x158] sm:$0xff]
    %v1437 = vld [vmem:[%s92 + $0x160] sm:$0xff]
    %v1438 = vld [vmem:[%s92 + $0x168] sm:$0xff]
    %v1439 = vld [vmem:[%s92 + $0x170] sm:$0xff]
    %v1440 = vld [vmem:[%s92 + $0x178] sm:$0xff]
    %v1441 = vld [vmem:[%s92 + $0x180] sm:$0xff]
    %v1442 = vld [vmem:[%s92 + $0x188] sm:$0xff]
    %v1443 = vld [vmem:[%s92 + $0x190] sm:$0xff]
    %v1444 = vld [vmem:[%s92 + $0x198] sm:$0xff]
    %v1445 = vld [vmem:[%s92 + $0x1a0] sm:$0xff]
    %v1446 = vld [vmem:[%s92 + $0x1a8] sm:$0xff]
    %v1447 = vld [vmem:[%s92 + $0x1b0] sm:$0xff]
    %v1448 = vld [vmem:[%s92 + $0x1b8] sm:$0xff]
    %v1449 = vld [vmem:[%s92 + $0x1c0] sm:$0xff]
    %v1450 = vld [vmem:[%s92 + $0x1c8] sm:$0xff]
    %v1451 = vld [vmem:[%s92 + $0x1d0] sm:$0xff]
    %v1452 = vld [vmem:[%s92 + $0x1d8] sm:$0xff]
    %v1453 = vld [vmem:[%s92 + $0x1e0] sm:$0xff]
    %v1454 = vld [vmem:[%s92 + $0x1e8] sm:$0xff]
    %v1455 = vld [vmem:[%s92 + $0x1f0] sm:$0xff]
    %v1456 = vld [vmem:[%s92 + $0x1f8] sm:$0xff]
    %v1457 = vld [vmem:[%s92 + $0x200] sm:$0xff]
    %v1458 = vld [vmem:[%s92 + $0x208] sm:$0xff]
    %v1459 = vld [vmem:[%s92 + $0x210] sm:$0xff]
    %v1460 = vld [vmem:[%s92 + $0x218] sm:$0xff]
    %v1461 = vld [vmem:[%s92 + $0x220] sm:$0xff]
    %v1462 = vld [vmem:[%s92 + $0x228] sm:$0xff]
    %v1463 = vld [vmem:[%s92 + $0x230] sm:$0xff]
    %v1464 = vld [vmem:[%s92 + $0x238] sm:$0xff]
    %v1465 = vld [vmem:[%s92 + $0x240] sm:$0xff]
    %v1466 = vld [vmem:[%s92 + $0x248] sm:$0xff]
    %v1467 = vld [vmem:[%s92 + $0x250] sm:$0xff]
    %v1468 = vld [vmem:[%s92 + $0x258] sm:$0xff]
    %v1469 = vld [vmem:[%s92 + $0x260] sm:$0xff]
    %v1470 = vld [vmem:[%s92 + $0x268] sm:$0xff]
    %v1471 = vld [vmem:[%s92 + $0x270] sm:$0xff]
    %v1472 = vld [vmem:[%s92 + $0x278] sm:$0xff]
    %v1473 = vld [vmem:[%s92 + $0x280] sm:$0xff]
    %v1474 = vld [vmem:[%s92 + $0x288] sm:$0xff]
    %v1475 = vld [vmem:[%s92 + $0x290] sm:$0xff]
    %v1476 = vld [vmem:[%s92 + $0x298] sm:$0xff]
    %v1477 = vld [vmem:[%s92 + $0x2a0] sm:$0xff]
    %v1478 = vld [vmem:[%s92 + $0x2a8] sm:$0xff]
    %v1479 = vld [vmem:[%s92 + $0x2b0] sm:$0xff]
    %v1480 = vld [vmem:[%s92 + $0x2b8] sm:$0xff]
    %v1481 = vld [vmem:[%s92 + $0x2c0] sm:$0xff]
    %v1482 = vld [vmem:[%s92 + $0x2c8] sm:$0xff]
    %v1483 = vld [vmem:[%s92 + $0x2d0] sm:$0xff]
    %v1484 = vld [vmem:[%s92 + $0x2d8] sm:$0xff]
    %v1485 = vld [vmem:[%s92 + $0x2e0] sm:$0xff]
    %v1486 = vld [vmem:[%s92 + $0x2e8] sm:$0xff]
    %v1487 = vld [vmem:[%s92 + $0x2f0] sm:$0xff]
    %v1488 = vld [vmem:[%s92 + $0x2f8] sm:$0xff]
    %v1489 = vld [vmem:[%s92 + $0x300] sm:$0xff]
    %v1490 = vld [vmem:[%s92 + $0x308] sm:$0xff]
    %v1491 = vld [vmem:[%s92 + $0x310] sm:$0xff]
    %v1492 = vld [vmem:[%s92 + $0x318] sm:$0xff]
    %v1493 = vld [vmem:[%s92 + $0x320] sm:$0xff]
    %v1494 = vld [vmem:[%s92 + $0x328] sm:$0xff]
    %v1495 = vld [vmem:[%s92 + $0x330] sm:$0xff]
    %v1496 = vld [vmem:[%s92 + $0x338] sm:$0xff]
    %v1497 = vld [vmem:[%s92 + $0x340] sm:$0xff]
    %v1498 = vld [vmem:[%s92 + $0x348] sm:$0xff]
    %v1499 = vld [vmem:[%s92 + $0x350] sm:$0xff]
    %v1500 = vld [vmem:[%s92 + $0x358] sm:$0xff]
    %v1501 = vld [vmem:[%s92 + $0x360] sm:$0xff]
    %v1502 = vld [vmem:[%s92 + $0x368] sm:$0xff]
    %v1503 = vld [vmem:[%s92 + $0x370] sm:$0xff]
    %v1504 = vld [vmem:[%s92 + $0x378] sm:$0xff]
    %v1505 = vld [vmem:[%s92 + $0x380] sm:$0xff]
    %v1506 = vld [vmem:[%s92 + $0x388] sm:$0xff]
    %v1507 = vld [vmem:[%s92 + $0x390] sm:$0xff]
    %v1508 = vld [vmem:[%s92 + $0x398] sm:$0xff]
    %v1509 = vld [vmem:[%s92 + $0x3a0] sm:$0xff]
    %v1510 = vld [vmem:[%s92 + $0x3a8] sm:$0xff]
    %v1511 = vld [vmem:[%s92 + $0x3b0] sm:$0xff]
    %v1512 = vld [vmem:[%s92 + $0x3b8] sm:$0xff]
    %v1513 = vld [vmem:[%s92 + $0x3c0] sm:$0xff]
    %v1514 = vld [vmem:[%s92 + $0x3c8] sm:$0xff]
    %v1515 = vld [vmem:[%s92 + $0x3d0] sm:$0xff]
    %v1516 = vld [vmem:[%s92 + $0x3d8] sm:$0xff]
    %v1517 = vld [vmem:[%s92 + $0x3e0] sm:$0xff]
    %v1518 = vld [vmem:[%s92 + $0x3e8] sm:$0xff]
    %v1519 = vld [vmem:[%s92 + $0x3f0] sm:$0xff]
    %v1520 = vld [vmem:[%s92 + $0x3f8] sm:$0xff]
    %v1521 = vld [vmem:[%s897] sm:$0xf]
    %v1523 = vlaneseq
    %v1524 = vshrl.u32 %v1523, 7
    %v1525 = vsub.s32 0, %v1524
    %v1526 = vrot.slane %v1521, %v1525
    %v1527 = vlaneseq
    %v1528 = vshrl.u32 %v1527, 7
    %v1529 = vsub.s32 1, %v1528
    %v1530 = vrot.slane %v1521, %v1529
    %v1531 = vlaneseq
    %v1532 = vshrl.u32 %v1531, 7
    %v1533 = vsub.s32 2, %v1532
    %v1534 = vrot.slane %v1521, %v1533
    %v1535 = vlaneseq
    %v1536 = vshrl.u32 %v1535, 7
    %v1537 = vsub.s32 3, %v1536
    %v1538 = vrot.slane %v1521, %v1537
    %1543 = vmatprep.subr.mxu0 %v1394
    %1544 = vmatpush1.msra.mxu0 %v1393
    %1545 = vmatprep.subr.mxu0 %v1398
    %1546 = vmatpush1.msra.mxu0 %v1397
    %1547 = vmatprep.subr.mxu0 %v1402
    %1548 = vmatpush1.msra.mxu0 %v1401
    %1549 = vmatprep.subr.mxu0 %v1406
    %1550 = vmatpush1.msra.mxu0 %v1405
    %1551 = vmatprep.subr.mxu0 %v1410
    %1552 = vmatpush1.msra.mxu0 %v1409
    %1553 = vmatprep.subr.mxu0 %v1414
    %1554 = vmatpush1.msra.mxu0 %v1413
    %1555 = vmatprep.subr.mxu0 %v1418
    %1556 = vmatpush1.msra.mxu0 %v1417
    %1557 = vmatprep.subr.mxu0 %v1422
    %1558 = vmatpush1.msra.mxu0 %v1421
    %1559 = vmatprep.subr.mxu0 %v1426
    %1560 = vmatpush1.msra.mxu0 %v1425
    %1561 = vmatprep.subr.mxu0 %v1430
    %1562 = vmatpush1.msra.mxu0 %v1429
    %1563 = vmatprep.subr.mxu0 %v1434
    %1564 = vmatpush1.msra.mxu0 %v1433
    %1565 = vmatprep.subr.mxu0 %v1438
    %1566 = vmatpush1.msra.mxu0 %v1437
    %1567 = vmatprep.subr.mxu0 %v1442
    %1568 = vmatpush1.msra.mxu0 %v1441
    %1569 = vmatprep.subr.mxu0 %v1446
    %1570 = vmatpush1.msra.mxu0 %v1445
    %1571 = vmatprep.subr.mxu0 %v1450
    %1572 = vmatpush1.msra.mxu0 %v1449
    %1573 = vmatprep.subr.mxu0 %v1454
    %1574 = vmatpush1.msra.mxu0 %v1453
    %1575 = vmatprep.subr.mxu0 %v1458
    %1576 = vmatpush1.msra.mxu0 %v1457
    %1577 = vmatprep.subr.mxu0 %v1462
    %1578 = vmatpush1.msra.mxu0 %v1461
    %1579 = vmatprep.subr.mxu0 %v1466
    %1580 = vmatpush1.msra.mxu0 %v1465
    %1581 = vmatprep.subr.mxu0 %v1470
    %1582 = vmatpush1.msra.mxu0 %v1469
    %1583 = vmatprep.subr.mxu0 %v1474
    %1584 = vmatpush1.msra.mxu0 %v1473
    %1585 = vmatprep.subr.mxu0 %v1478
    %1586 = vmatpush1.msra.mxu0 %v1477
    %1587 = vmatprep.subr.mxu0 %v1482
    %1588 = vmatpush1.msra.mxu0 %v1481
    %1589 = vmatprep.subr.mxu0 %v1486
    %1590 = vmatpush1.msra.mxu0 %v1485
    %1591 = vmatprep.subr.mxu0 %v1490
    %1592 = vmatpush1.msra.mxu0 %v1489
    %1593 = vmatprep.subr.mxu0 %v1494
    %1594 = vmatpush1.msra.mxu0 %v1493
    %1595 = vmatprep.subr.mxu0 %v1498
    %1596 = vmatpush1.msra.mxu0 %v1497
    %1597 = vmatprep.subr.mxu0 %v1502
    %1598 = vmatpush1.msra.mxu0 %v1501
    %1599 = vmatprep.subr.mxu0 %v1506
    %1600 = vmatpush1.msra.mxu0 %v1505
    %1601 = vmatprep.subr.mxu0 %v1510
    %1602 = vmatpush1.msra.mxu0 %v1509
    %1603 = vmatprep.subr.mxu0 %v1514
    %1604 = vmatpush1.msra.mxu0 %v1513
    %1605 = vmatprep.subr.mxu0 %v1518
    %1606 = vmatpush1.msra.mxu0 %v1517
    %1607 = vmatprep.mubr.f32.mxu0 %v1079
    %1608 = vmatmul.mubr.f32.gmra.mrb[0].mxu0 %v768
    %v1609 = vpop.f32.mrb[0].mxu0
    %v1610 = vadd.f32 %v1526, %v1609
    %v1611 = vpop.f32.mrb[0].mxu0
    %v1612 = vadd.f32 %v1530, %v1611
    %1613 = vdwg.mxu0
    %1614 = vmatprep.subr.mxu0 %v1396
    %1615 = vmatpush1.msra.mxu0 %v1395
    %1616 = vmatprep.subr.mxu0 %v1400
    %1617 = vmatpush1.msra.mxu0 %v1399
    %1618 = vmatprep.subr.mxu0 %v1404
    %1619 = vmatpush1.msra.mxu0 %v1403
    %1620 = vmatprep.subr.mxu0 %v1408
    %1621 = vmatpush1.msra.mxu0 %v1407
    %1622 = vmatprep.subr.mxu0 %v1412
    %1623 = vmatpush1.msra.mxu0 %v1411
    %1624 = vmatprep.subr.mxu0 %v1416
    %1625 = vmatpush1.msra.mxu0 %v1415
    %1626 = vmatprep.subr.mxu0 %v1420
    %1627 = vmatpush1.msra.mxu0 %v1419
    %1628 = vmatprep.subr.mxu0 %v1424
    %1629 = vmatpush1.msra.mxu0 %v1423
    %1630 = vmatprep.subr.mxu0 %v1428
    %1631 = vmatpush1.msra.mxu0 %v1427
    %1632 = vmatprep.subr.mxu0 %v1432
    %1633 = vmatpush1.msra.mxu0 %v1431
    %1634 = vmatprep.subr.mxu0 %v1436
    %1635 = vmatpush1.msra.mxu0 %v1435
    %1636 = vmatprep.subr.mxu0 %v1440
    %1637 = vmatpush1.msra.mxu0 %v1439
    %1638 = vmatprep.subr.mxu0 %v1444
    %1639 = vmatpush1.msra.mxu0 %v1443
    %1640 = vmatprep.subr.mxu0 %v1448
    %1641 = vmatpush1.msra.mxu0 %v1447
    %1642 = vmatprep.subr.mxu0 %v1452
    %1643 = vmatpush1.msra.mxu0 %v1451
    %1644 = vmatprep.subr.mxu0 %v1456
    %1645 = vmatpush1.msra.mxu0 %v1455
    %1646 = vmatprep.subr.mxu0 %v1460
    %1647 = vmatpush1.msra.mxu0 %v1459
    %1648 = vmatprep.subr.mxu0 %v1464
    %1649 = vmatpush1.msra.mxu0 %v1463
    %1650 = vmatprep.subr.mxu0 %v1468
    %1651 = vmatpush1.msra.mxu0 %v1467
    %1652 = vmatprep.subr.mxu0 %v1472
    %1653 = vmatpush1.msra.mxu0 %v1471
    %1654 = vmatprep.subr.mxu0 %v1476
    %1655 = vmatpush1.msra.mxu0 %v1475
    %1656 = vmatprep.subr.mxu0 %v1480
    %1657 = vmatpush1.msra.mxu0 %v1479
    %1658 = vmatprep.subr.mxu0 %v1484
    %1659 = vmatpush1.msra.mxu0 %v1483
    %1660 = vmatprep.subr.mxu0 %v1488
    %1661 = vmatpush1.msra.mxu0 %v1487
    %1662 = vmatprep.subr.mxu0 %v1492
    %1663 = vmatpush1.msra.mxu0 %v1491
    %1664 = vmatprep.subr.mxu0 %v1496
    %1665 = vmatpush1.msra.mxu0 %v1495
    %1666 = vmatprep.subr.mxu0 %v1500
    %1667 = vmatpush1.msra.mxu0 %v1499
    %1668 = vmatprep.subr.mxu0 %v1504
    %1669 = vmatpush1.msra.mxu0 %v1503
    %1670 = vmatprep.subr.mxu0 %v1508
    %1671 = vmatpush1.msra.mxu0 %v1507
    %1672 = vmatprep.subr.mxu0 %v1512
    %1673 = vmatpush1.msra.mxu0 %v1511
    %1674 = vmatprep.subr.mxu0 %v1516
    %1675 = vmatpush1.msra.mxu0 %v1515
    %1676 = vmatprep.subr.mxu0 %v1520
    %1677 = vmatpush1.msra.mxu0 %v1519
    %1678 = vmatprep.mubr.f32.mxu0 %v1079
    %1679 = vmatmul.mubr.f32.gmra.mrb[0].mxu0 %v768
    %v1680 = vpop.f32.mrb[0].mxu0
    %v1681 = vadd.f32 %v1534, %v1680
    %v1682 = vpop.f32.mrb[0].mxu0
    %v1683 = vadd.f32 %v1538, %v1682
    %1684 = vdwg.mxu0
    %v1685 = vmul.f32 %v1610, 0.5
    %v1686 = vtanh.pop %v1685
    %v1687 = vmul.f32 %v1686, 0.5
    %v1688 = vadd.f32 %v1687, 0.5
    %v1689 = vmul.f32 %v1612, 0.5
    %v1690 = vtanh.pop %v1689
    %v1691 = vmul.f32 %v1690, 0.5
    %v1692 = vadd.f32 %v1691, 0.5
    %v1693 = vtanh.pop %v1681
    %v1694 = vmul.f32 %v1683, 0.5
    %v1695 = vtanh.pop %v1694
    %v1696 = vmul.f32 %v1695, 0.5
    %v1697 = vadd.f32 %v1696, 0.5
    %v1698 = vmul.f32 %v1692, %v1077
    %v1699 = vmul.f32 %v1688, %v1693
    %v1700 = vadd.f32 %v1698, %v1699
    %v1701 = vtanh.pop %v1700
    %v1702 = vmul.f32 %v1697, %v1701
    %v1703 = vld [vmem:[%s106] sm:$0xff]
    %v1704 = vld [vmem:[%s106 + $0x8] sm:$0xff]
    %v1705 = vld [vmem:[%s106 + $0x10] sm:$0xff]
    %v1706 = vld [vmem:[%s106 + $0x18] sm:$0xff]
    %v1707 = vld [vmem:[%s106 + $0x20] sm:$0xff]
    %v1708 = vld [vmem:[%s106 + $0x28] sm:$0xff]
    %v1709 = vld [vmem:[%s106 + $0x30] sm:$0xff]
    %v1710 = vld [vmem:[%s106 + $0x38] sm:$0xff]
    %v1711 = vld [vmem:[%s106 + $0x40] sm:$0xff]
    %v1712 = vld [vmem:[%s106 + $0x48] sm:$0xff]
    %v1713 = vld [vmem:[%s106 + $0x50] sm:$0xff]
    %v1714 = vld [vmem:[%s106 + $0x58] sm:$0xff]
    %v1715 = vld [vmem:[%s106 + $0x60] sm:$0xff]
    %v1716 = vld [vmem:[%s106 + $0x68] sm:$0xff]
    %v1717 = vld [vmem:[%s106 + $0x70] sm:$0xff]
    %v1718 = vld [vmem:[%s106 + $0x78] sm:$0xff]
    %v1719 = vld [vmem:[%s106 + $0x80] sm:$0xff]
    %v1720 = vld [vmem:[%s106 + $0x88] sm:$0xff]
    %v1721 = vld [vmem:[%s106 + $0x90] sm:$0xff]
    %v1722 = vld [vmem:[%s106 + $0x98] sm:$0xff]
    %v1723 = vld [vmem:[%s106 + $0xa0] sm:$0xff]
    %v1724 = vld [vmem:[%s106 + $0xa8] sm:$0xff]
    %v1725 = vld [vmem:[%s106 + $0xb0] sm:$0xff]
    %v1726 = vld [vmem:[%s106 + $0xb8] sm:$0xff]
    %v1727 = vld [vmem:[%s106 + $0xc0] sm:$0xff]
    %v1728 = vld [vmem:[%s106 + $0xc8] sm:$0xff]
    %v1729 = vld [vmem:[%s106 + $0xd0] sm:$0xff]
    %v1730 = vld [vmem:[%s106 + $0xd8] sm:$0xff]
    %v1731 = vld [vmem:[%s106 + $0xe0] sm:$0xff]
    %v1732 = vld [vmem:[%s106 + $0xe8] sm:$0xff]
    %v1733 = vld [vmem:[%s106 + $0xf0] sm:$0xff]
    %v1734 = vld [vmem:[%s106 + $0xf8] sm:$0xff]
    %v1735 = vld [vmem:[%s106 + $0x100] sm:$0xff]
    %v1736 = vld [vmem:[%s106 + $0x108] sm:$0xff]
    %v1737 = vld [vmem:[%s106 + $0x110] sm:$0xff]
    %v1738 = vld [vmem:[%s106 + $0x118] sm:$0xff]
    %v1739 = vld [vmem:[%s106 + $0x120] sm:$0xff]
    %v1740 = vld [vmem:[%s106 + $0x128] sm:$0xff]
    %v1741 = vld [vmem:[%s106 + $0x130] sm:$0xff]
    %v1742 = vld [vmem:[%s106 + $0x138] sm:$0xff]
    %v1743 = vld [vmem:[%s106 + $0x140] sm:$0xff]
    %v1744 = vld [vmem:[%s106 + $0x148] sm:$0xff]
    %v1745 = vld [vmem:[%s106 + $0x150] sm:$0xff]
    %v1746 = vld [vmem:[%s106 + $0x158] sm:$0xff]
    %v1747 = vld [vmem:[%s106 + $0x160] sm:$0xff]
    %v1748 = vld [vmem:[%s106 + $0x168] sm:$0xff]
    %v1749 = vld [vmem:[%s106 + $0x170] sm:$0xff]
    %v1750 = vld [vmem:[%s106 + $0x178] sm:$0xff]
    %v1751 = vld [vmem:[%s106 + $0x180] sm:$0xff]
    %v1752 = vld [vmem:[%s106 + $0x188] sm:$0xff]
    %v1753 = vld [vmem:[%s106 + $0x190] sm:$0xff]
    %v1754 = vld [vmem:[%s106 + $0x198] sm:$0xff]
    %v1755 = vld [vmem:[%s106 + $0x1a0] sm:$0xff]
    %v1756 = vld [vmem:[%s106 + $0x1a8] sm:$0xff]
    %v1757 = vld [vmem:[%s106 + $0x1b0] sm:$0xff]
    %v1758 = vld [vmem:[%s106 + $0x1b8] sm:$0xff]
    %v1759 = vld [vmem:[%s106 + $0x1c0] sm:$0xff]
    %v1760 = vld [vmem:[%s106 + $0x1c8] sm:$0xff]
    %v1761 = vld [vmem:[%s106 + $0x1d0] sm:$0xff]
    %v1762 = vld [vmem:[%s106 + $0x1d8] sm:$0xff]
    %v1763 = vld [vmem:[%s106 + $0x1e0] sm:$0xff]
    %v1764 = vld [vmem:[%s106 + $0x1e8] sm:$0xff]
    %v1765 = vld [vmem:[%s106 + $0x1f0] sm:$0xff]
    %v1766 = vld [vmem:[%s106 + $0x1f8] sm:$0xff]
    %v1767 = vld [vmem:[%s106 + $0x200] sm:$0xff]
    %v1768 = vld [vmem:[%s106 + $0x208] sm:$0xff]
    %v1769 = vld [vmem:[%s106 + $0x210] sm:$0xff]
    %v1770 = vld [vmem:[%s106 + $0x218] sm:$0xff]
    %v1771 = vld [vmem:[%s106 + $0x220] sm:$0xff]
    %v1772 = vld [vmem:[%s106 + $0x228] sm:$0xff]
    %v1773 = vld [vmem:[%s106 + $0x230] sm:$0xff]
    %v1774 = vld [vmem:[%s106 + $0x238] sm:$0xff]
    %v1775 = vld [vmem:[%s106 + $0x240] sm:$0xff]
    %v1776 = vld [vmem:[%s106 + $0x248] sm:$0xff]
    %v1777 = vld [vmem:[%s106 + $0x250] sm:$0xff]
    %v1778 = vld [vmem:[%s106 + $0x258] sm:$0xff]
    %v1779 = vld [vmem:[%s106 + $0x260] sm:$0xff]
    %v1780 = vld [vmem:[%s106 + $0x268] sm:$0xff]
    %v1781 = vld [vmem:[%s106 + $0x270] sm:$0xff]
    %v1782 = vld [vmem:[%s106 + $0x278] sm:$0xff]
    %v1783 = vld [vmem:[%s106 + $0x280] sm:$0xff]
    %v1784 = vld [vmem:[%s106 + $0x288] sm:$0xff]
    %v1785 = vld [vmem:[%s106 + $0x290] sm:$0xff]
    %v1786 = vld [vmem:[%s106 + $0x298] sm:$0xff]
    %v1787 = vld [vmem:[%s106 + $0x2a0] sm:$0xff]
    %v1788 = vld [vmem:[%s106 + $0x2a8] sm:$0xff]
    %v1789 = vld [vmem:[%s106 + $0x2b0] sm:$0xff]
    %v1790 = vld [vmem:[%s106 + $0x2b8] sm:$0xff]
    %v1791 = vld [vmem:[%s106 + $0x2c0] sm:$0xff]
    %v1792 = vld [vmem:[%s106 + $0x2c8] sm:$0xff]
    %v1793 = vld [vmem:[%s106 + $0x2d0] sm:$0xff]
    %v1794 = vld [vmem:[%s106 + $0x2d8] sm:$0xff]
    %v1795 = vld [vmem:[%s106 + $0x2e0] sm:$0xff]
    %v1796 = vld [vmem:[%s106 + $0x2e8] sm:$0xff]
    %v1797 = vld [vmem:[%s106 + $0x2f0] sm:$0xff]
    %v1798 = vld [vmem:[%s106 + $0x2f8] sm:$0xff]
    %v1799 = vld [vmem:[%s106 + $0x300] sm:$0xff]
    %v1800 = vld [vmem:[%s106 + $0x308] sm:$0xff]
    %v1801 = vld [vmem:[%s106 + $0x310] sm:$0xff]
    %v1802 = vld [vmem:[%s106 + $0x318] sm:$0xff]
    %v1803 = vld [vmem:[%s106 + $0x320] sm:$0xff]
    %v1804 = vld [vmem:[%s106 + $0x328] sm:$0xff]
    %v1805 = vld [vmem:[%s106 + $0x330] sm:$0xff]
    %v1806 = vld [vmem:[%s106 + $0x338] sm:$0xff]
    %v1807 = vld [vmem:[%s106 + $0x340] sm:$0xff]
    %v1808 = vld [vmem:[%s106 + $0x348] sm:$0xff]
    %v1809 = vld [vmem:[%s106 + $0x350] sm:$0xff]
    %v1810 = vld [vmem:[%s106 + $0x358] sm:$0xff]
    %v1811 = vld [vmem:[%s106 + $0x360] sm:$0xff]
    %v1812 = vld [vmem:[%s106 + $0x368] sm:$0xff]
    %v1813 = vld [vmem:[%s106 + $0x370] sm:$0xff]
    %v1814 = vld [vmem:[%s106 + $0x378] sm:$0xff]
    %v1815 = vld [vmem:[%s106 + $0x380] sm:$0xff]
    %v1816 = vld [vmem:[%s106 + $0x388] sm:$0xff]
    %v1817 = vld [vmem:[%s106 + $0x390] sm:$0xff]
    %v1818 = vld [vmem:[%s106 + $0x398] sm:$0xff]
    %v1819 = vld [vmem:[%s106 + $0x3a0] sm:$0xff]
    %v1820 = vld [vmem:[%s106 + $0x3a8] sm:$0xff]
    %v1821 = vld [vmem:[%s106 + $0x3b0] sm:$0xff]
    %v1822 = vld [vmem:[%s106 + $0x3b8] sm:$0xff]
    %v1823 = vld [vmem:[%s106 + $0x3c0] sm:$0xff]
    %v1824 = vld [vmem:[%s106 + $0x3c8] sm:$0xff]
    %v1825 = vld [vmem:[%s106 + $0x3d0] sm:$0xff]
    %v1826 = vld [vmem:[%s106 + $0x3d8] sm:$0xff]
    %v1827 = vld [vmem:[%s106 + $0x3e0] sm:$0xff]
    %v1828 = vld [vmem:[%s106 + $0x3e8] sm:$0xff]
    %v1829 = vld [vmem:[%s106 + $0x3f0] sm:$0xff]
    %v1830 = vld [vmem:[%s106 + $0x3f8] sm:$0xff]
    %s1831 = scalar_lea.vmem [#allocation5], 8
    %v1832 = vld [vmem:[%s1831] sm:$0xf]
    %v1834 = vlaneseq
    %v1835 = vshrl.u32 %v1834, 7
    %v1836 = vsub.s32 0, %v1835
    %v1837 = vrot.slane %v1832, %v1836
    %v1838 = vlaneseq
    %v1839 = vshrl.u32 %v1838, 7
    %v1840 = vsub.s32 1, %v1839
    %v1841 = vrot.slane %v1832, %v1840
    %v1842 = vlaneseq
    %v1843 = vshrl.u32 %v1842, 7
    %v1844 = vsub.s32 2, %v1843
    %v1845 = vrot.slane %v1832, %v1844
    %v1846 = vlaneseq
    %v1847 = vshrl.u32 %v1846, 7
    %v1848 = vsub.s32 3, %v1847
    %v1849 = vrot.slane %v1832, %v1848
    %1854 = vmatprep.subr.mxu0 %v1704
    %1855 = vmatpush1.msra.mxu0 %v1703
    %1856 = vmatprep.subr.mxu0 %v1708
    %1857 = vmatpush1.msra.mxu0 %v1707
    %1858 = vmatprep.subr.mxu0 %v1712
    %1859 = vmatpush1.msra.mxu0 %v1711
    %1860 = vmatprep.subr.mxu0 %v1716
    %1861 = vmatpush1.msra.mxu0 %v1715
    %1862 = vmatprep.subr.mxu0 %v1720
    %1863 = vmatpush1.msra.mxu0 %v1719
    %1864 = vmatprep.subr.mxu0 %v1724
    %1865 = vmatpush1.msra.mxu0 %v1723
    %1866 = vmatprep.subr.mxu0 %v1728
    %1867 = vmatpush1.msra.mxu0 %v1727
    %1868 = vmatprep.subr.mxu0 %v1732
    %1869 = vmatpush1.msra.mxu0 %v1731
    %1870 = vmatprep.subr.mxu0 %v1736
    %1871 = vmatpush1.msra.mxu0 %v1735
    %1872 = vmatprep.subr.mxu0 %v1740
    %1873 = vmatpush1.msra.mxu0 %v1739
    %1874 = vmatprep.subr.mxu0 %v1744
    %1875 = vmatpush1.msra.mxu0 %v1743
    %1876 = vmatprep.subr.mxu0 %v1748
    %1877 = vmatpush1.msra.mxu0 %v1747
    %1878 = vmatprep.subr.mxu0 %v1752
    %1879 = vmatpush1.msra.mxu0 %v1751
    %1880 = vmatprep.subr.mxu0 %v1756
    %1881 = vmatpush1.msra.mxu0 %v1755
    %1882 = vmatprep.subr.mxu0 %v1760
    %1883 = vmatpush1.msra.mxu0 %v1759
    %1884 = vmatprep.subr.mxu0 %v1764
    %1885 = vmatpush1.msra.mxu0 %v1763
    %1886 = vmatprep.subr.mxu0 %v1768
    %1887 = vmatpush1.msra.mxu0 %v1767
    %1888 = vmatprep.subr.mxu0 %v1772
    %1889 = vmatpush1.msra.mxu0 %v1771
    %1890 = vmatprep.subr.mxu0 %v1776
    %1891 = vmatpush1.msra.mxu0 %v1775
    %1892 = vmatprep.subr.mxu0 %v1780
    %1893 = vmatpush1.msra.mxu0 %v1779
    %1894 = vmatprep.subr.mxu0 %v1784
    %1895 = vmatpush1.msra.mxu0 %v1783
    %1896 = vmatprep.subr.mxu0 %v1788
    %1897 = vmatpush1.msra.mxu0 %v1787
    %1898 = vmatprep.subr.mxu0 %v1792
    %1899 = vmatpush1.msra.mxu0 %v1791
    %1900 = vmatprep.subr.mxu0 %v1796
    %1901 = vmatpush1.msra.mxu0 %v1795
    %1902 = vmatprep.subr.mxu0 %v1800
    %1903 = vmatpush1.msra.mxu0 %v1799
    %1904 = vmatprep.subr.mxu0 %v1804
    %1905 = vmatpush1.msra.mxu0 %v1803
    %1906 = vmatprep.subr.mxu0 %v1808
    %1907 = vmatpush1.msra.mxu0 %v1807
    %1908 = vmatprep.subr.mxu0 %v1812
    %1909 = vmatpush1.msra.mxu0 %v1811
    %1910 = vmatprep.subr.mxu0 %v1816
    %1911 = vmatpush1.msra.mxu0 %v1815
    %1912 = vmatprep.subr.mxu0 %v1820
    %1913 = vmatpush1.msra.mxu0 %v1819
    %1914 = vmatprep.subr.mxu0 %v1824
    %1915 = vmatpush1.msra.mxu0 %v1823
    %1916 = vmatprep.subr.mxu0 %v1828
    %1917 = vmatpush1.msra.mxu0 %v1827
    %1918 = vmatprep.mubr.f32.mxu0 %v135
    %1919 = vmatmul.mubr.f32.gmra.mrb[0].mxu0 %v1079
    %v1920 = vpop.f32.mrb[0].mxu0
    %v1921 = vadd.f32 %v1837, %v1920
    %v1922 = vpop.f32.mrb[0].mxu0
    %v1923 = vadd.f32 %v1841, %v1922
    %1924 = vdwg.mxu0
    %1925 = vmatprep.subr.mxu0 %v1706
    %1926 = vmatpush1.msra.mxu0 %v1705
    %1927 = vmatprep.subr.mxu0 %v1710
    %1928 = vmatpush1.msra.mxu0 %v1709
    %1929 = vmatprep.subr.mxu0 %v1714
    %1930 = vmatpush1.msra.mxu0 %v1713
    %1931 = vmatprep.subr.mxu0 %v1718
    %1932 = vmatpush1.msra.mxu0 %v1717
    %1933 = vmatprep.subr.mxu0 %v1722
    %1934 = vmatpush1.msra.mxu0 %v1721
    %1935 = vmatprep.subr.mxu0 %v1726
    %1936 = vmatpush1.msra.mxu0 %v1725
    %1937 = vmatprep.subr.mxu0 %v1730
    %1938 = vmatpush1.msra.mxu0 %v1729
    %1939 = vmatprep.subr.mxu0 %v1734
    %1940 = vmatpush1.msra.mxu0 %v1733
    %1941 = vmatprep.subr.mxu0 %v1738
    %1942 = vmatpush1.msra.mxu0 %v1737
    %1943 = vmatprep.subr.mxu0 %v1742
    %1944 = vmatpush1.msra.mxu0 %v1741
    %1945 = vmatprep.subr.mxu0 %v1746
    %1946 = vmatpush1.msra.mxu0 %v1745
    %1947 = vmatprep.subr.mxu0 %v1750
    %1948 = vmatpush1.msra.mxu0 %v1749
    %1949 = vmatprep.subr.mxu0 %v1754
    %1950 = vmatpush1.msra.mxu0 %v1753
    %1951 = vmatprep.subr.mxu0 %v1758
    %1952 = vmatpush1.msra.mxu0 %v1757
    %1953 = vmatprep.subr.mxu0 %v1762
    %1954 = vmatpush1.msra.mxu0 %v1761
    %1955 = vmatprep.subr.mxu0 %v1766
    %1956 = vmatpush1.msra.mxu0 %v1765
    %1957 = vmatprep.subr.mxu0 %v1770
    %1958 = vmatpush1.msra.mxu0 %v1769
    %1959 = vmatprep.subr.mxu0 %v1774
    %1960 = vmatpush1.msra.mxu0 %v1773
    %1961 = vmatprep.subr.mxu0 %v1778
    %1962 = vmatpush1.msra.mxu0 %v1777
    %1963 = vmatprep.subr.mxu0 %v1782
    %1964 = vmatpush1.msra.mxu0 %v1781
    %1965 = vmatprep.subr.mxu0 %v1786
    %1966 = vmatpush1.msra.mxu0 %v1785
    %1967 = vmatprep.subr.mxu0 %v1790
    %1968 = vmatpush1.msra.mxu0 %v1789
    %1969 = vmatprep.subr.mxu0 %v1794
    %1970 = vmatpush1.msra.mxu0 %v1793
    %1971 = vmatprep.subr.mxu0 %v1798
    %1972 = vmatpush1.msra.mxu0 %v1797
    %1973 = vmatprep.subr.mxu0 %v1802
    %1974 = vmatpush1.msra.mxu0 %v1801
    %1975 = vmatprep.subr.mxu0 %v1806
    %1976 = vmatpush1.msra.mxu0 %v1805
    %1977 = vmatprep.subr.mxu0 %v1810
    %1978 = vmatpush1.msra.mxu0 %v1809
    %1979 = vmatprep.subr.mxu0 %v1814
    %1980 = vmatpush1.msra.mxu0 %v1813
    %1981 = vmatprep.subr.mxu0 %v1818
    %1982 = vmatpush1.msra.mxu0 %v1817
    %1983 = vmatprep.subr.mxu0 %v1822
    %1984 = vmatpush1.msra.mxu0 %v1821
    %1985 = vmatprep.subr.mxu0 %v1826
    %1986 = vmatpush1.msra.mxu0 %v1825
    %1987 = vmatprep.subr.mxu0 %v1830
    %1988 = vmatpush1.msra.mxu0 %v1829
    %1989 = vmatprep.mubr.f32.mxu0 %v135
    %1990 = vmatmul.mubr.f32.gmra.mrb[0].mxu0 %v1079
    %v1991 = vpop.f32.mrb[0].mxu0
    %v1992 = vadd.f32 %v1845, %v1991
    %v1993 = vpop.f32.mrb[0].mxu0
    %v1994 = vadd.f32 %v1849, %v1993
    %1995 = vdwg.mxu0
    %v1996 = vmul.f32 %v1921, 0.5
    %v1997 = vtanh.pop %v1996
    %v1998 = vmul.f32 %v1997, 0.5
    %v1999 = vadd.f32 %v1998, 0.5
    %v2000 = vmul.f32 %v1923, 0.5
    %v2001 = vtanh.pop %v2000
    %v2002 = vmul.f32 %v2001, 0.5
    %v2003 = vadd.f32 %v2002, 0.5
    %v2004 = vtanh.pop %v1992
    %v2005 = vmul.f32 %v1994, 0.5
    %v2006 = vtanh.pop %v2005
    %v2007 = vmul.f32 %v2006, 0.5
    %v2008 = vadd.f32 %v2007, 0.5
    %v2009 = vmul.f32 %v2003, %v140
    %v2010 = vmul.f32 %v1999, %v2004
    %v2011 = vadd.f32 %v2009, %v2010
    %v2012 = vtanh.pop %v2011
    %v2013 = vmul.f32 %v2008, %v2012
    %v2014 = vld [vmem:[%s0 + $0x18] sm:$0xff]
    %2015 = vmatprep.subr.mxu0 %v1084
    %2016 = vmatpush1.msra.mxu0 %v1083
    %2017 = vmatprep.subr.mxu0 %v1088
    %2018 = vmatpush1.msra.mxu0 %v1087
    %2019 = vmatprep.subr.mxu0 %v1092
    %2020 = vmatpush1.msra.mxu0 %v1091
    %2021 = vmatprep.subr.mxu0 %v1096
    %2022 = vmatpush1.msra.mxu0 %v1095
    %2023 = vmatprep.subr.mxu0 %v1100
    %2024 = vmatpush1.msra.mxu0 %v1099
    %2025 = vmatprep.subr.mxu0 %v1104
    %2026 = vmatpush1.msra.mxu0 %v1103
    %2027 = vmatprep.subr.mxu0 %v1108
    %2028 = vmatpush1.msra.mxu0 %v1107
    %2029 = vmatprep.subr.mxu0 %v1112
    %2030 = vmatpush1.msra.mxu0 %v1111
    %2031 = vmatprep.subr.mxu0 %v1116
    %2032 = vmatpush1.msra.mxu0 %v1115
    %2033 = vmatprep.subr.mxu0 %v1120
    %2034 = vmatpush1.msra.mxu0 %v1119
    %2035 = vmatprep.subr.mxu0 %v1124
    %2036 = vmatpush1.msra.mxu0 %v1123
    %2037 = vmatprep.subr.mxu0 %v1128
    %2038 = vmatpush1.msra.mxu0 %v1127
    %2039 = vmatprep.subr.mxu0 %v1132
    %2040 = vmatpush1.msra.mxu0 %v1131
    %2041 = vmatprep.subr.mxu0 %v1136
    %2042 = vmatpush1.msra.mxu0 %v1135
    %2043 = vmatprep.subr.mxu0 %v1140
    %2044 = vmatpush1.msra.mxu0 %v1139
    %2045 = vmatprep.subr.mxu0 %v1144
    %2046 = vmatpush1.msra.mxu0 %v1143
    %2047 = vmatprep.subr.mxu0 %v1148
    %2048 = vmatpush1.msra.mxu0 %v1147
    %2049 = vmatprep.subr.mxu0 %v1152
    %2050 = vmatpush1.msra.mxu0 %v1151
    %2051 = vmatprep.subr.mxu0 %v1156
    %2052 = vmatpush1.msra.mxu0 %v1155
    %2053 = vmatprep.subr.mxu0 %v1160
    %2054 = vmatpush1.msra.mxu0 %v1159
    %2055 = vmatprep.subr.mxu0 %v1164
    %2056 = vmatpush1.msra.mxu0 %v1163
    %2057 = vmatprep.subr.mxu0 %v1168
    %2058 = vmatpush1.msra.mxu0 %v1167
    %2059 = vmatprep.subr.mxu0 %v1172
    %2060 = vmatpush1.msra.mxu0 %v1171
    %2061 = vmatprep.subr.mxu0 %v1176
    %2062 = vmatpush1.msra.mxu0 %v1175
    %2063 = vmatprep.subr.mxu0 %v1180
    %2064 = vmatpush1.msra.mxu0 %v1179
    %2065 = vmatprep.subr.mxu0 %v1184
    %2066 = vmatpush1.msra.mxu0 %v1183
    %2067 = vmatprep.subr.mxu0 %v1188
    %2068 = vmatpush1.msra.mxu0 %v1187
    %2069 = vmatprep.subr.mxu0 %v1192
    %2070 = vmatpush1.msra.mxu0 %v1191
    %2071 = vmatprep.subr.mxu0 %v1196
    %2072 = vmatpush1.msra.mxu0 %v1195
    %2073 = vmatprep.subr.mxu0 %v1200
    %2074 = vmatpush1.msra.mxu0 %v1199
    %2075 = vmatprep.subr.mxu0 %v1204
    %2076 = vmatpush1.msra.mxu0 %v1203
    %2077 = vmatprep.subr.mxu0 %v1208
    %2078 = vmatpush1.msra.mxu0 %v1207
    %2079 = vmatprep.mubr.f32.mxu0 %v1392
    %2080 = vmatmul.mubr.f32.gmra.mrb[0].mxu0 %v2014
    %v2081 = vpop.f32.mrb[0].mxu0
    %v2082 = vadd.f32 %v1216, %v2081
    %v2083 = vpop.f32.mrb[0].mxu0
    %v2084 = vadd.f32 %v1220, %v2083
    %2085 = vdwg.mxu0
    %2086 = vmatprep.subr.mxu0 %v1086
    %2087 = vmatpush1.msra.mxu0 %v1085
    %2088 = vmatprep.subr.mxu0 %v1090
    %2089 = vmatpush1.msra.mxu0 %v1089
    %2090 = vmatprep.subr.mxu0 %v1094
    %2091 = vmatpush1.msra.mxu0 %v1093
    %2092 = vmatprep.subr.mxu0 %v1098
    %2093 = vmatpush1.msra.mxu0 %v1097
    %2094 = vmatprep.subr.mxu0 %v1102
    %2095 = vmatpush1.msra.mxu0 %v1101
    %2096 = vmatprep.subr.mxu0 %v1106
    %2097 = vmatpush1.msra.mxu0 %v1105
    %2098 = vmatprep.subr.mxu0 %v1110
    %2099 = vmatpush1.msra.mxu0 %v1109
    %2100 = vmatprep.subr.mxu0 %v1114
    %2101 = vmatpush1.msra.mxu0 %v1113
    %2102 = vmatprep.subr.mxu0 %v1118
    %2103 = vmatpush1.msra.mxu0 %v1117
    %2104 = vmatprep.subr.mxu0 %v1122
    %2105 = vmatpush1.msra.mxu0 %v1121
    %2106 = vmatprep.subr.mxu0 %v1126
    %2107 = vmatpush1.msra.mxu0 %v1125
    %2108 = vmatprep.subr.mxu0 %v1130
    %2109 = vmatpush1.msra.mxu0 %v1129
    %2110 = vmatprep.subr.mxu0 %v1134
    %2111 = vmatpush1.msra.mxu0 %v1133
    %2112 = vmatprep.subr.mxu0 %v1138
    %2113 = vmatpush1.msra.mxu0 %v1137
    %2114 = vmatprep.subr.mxu0 %v1142
    %2115 = vmatpush1.msra.mxu0 %v1141
    %2116 = vmatprep.subr.mxu0 %v1146
    %2117 = vmatpush1.msra.mxu0 %v1145
    %2118 = vmatprep.subr.mxu0 %v1150
    %2119 = vmatpush1.msra.mxu0 %v1149
    %2120 = vmatprep.subr.mxu0 %v1154
    %2121 = vmatpush1.msra.mxu0 %v1153
    %2122 = vmatprep.subr.mxu0 %v1158
    %2123 = vmatpush1.msra.mxu0 %v1157
    %2124 = vmatprep.subr.mxu0 %v1162
    %2125 = vmatpush1.msra.mxu0 %v1161
    %2126 = vmatprep.subr.mxu0 %v1166
    %2127 = vmatpush1.msra.mxu0 %v1165
    %2128 = vmatprep.subr.mxu0 %v1170
    %2129 = vmatpush1.msra.mxu0 %v1169
    %2130 = vmatprep.subr.mxu0 %v1174
    %2131 = vmatpush1.msra.mxu0 %v1173
    %2132 = vmatprep.subr.mxu0 %v1178
    %2133 = vmatpush1.msra.mxu0 %v1177
    %2134 = vmatprep.subr.mxu0 %v1182
    %2135 = vmatpush1.msra.mxu0 %v1181
    %2136 = vmatprep.subr.mxu0 %v1186
    %2137 = vmatpush1.msra.mxu0 %v1185
    %2138 = vmatprep.subr.mxu0 %v1190
    %2139 = vmatpush1.msra.mxu0 %v1189
    %2140 = vmatprep.subr.mxu0 %v1194
    %2141 = vmatpush1.msra.mxu0 %v1193
    %2142 = vmatprep.subr.mxu0 %v1198
    %2143 = vmatpush1.msra.mxu0 %v1197
    %2144 = vmatprep.subr.mxu0 %v1202
    %2145 = vmatpush1.msra.mxu0 %v1201
    %2146 = vmatprep.subr.mxu0 %v1206
    %2147 = vmatpush1.msra.mxu0 %v1205
    %2148 = vmatprep.subr.mxu0 %v1210
    %2149 = vmatpush1.msra.mxu0 %v1209
    %2150 = vmatprep.mubr.f32.mxu0 %v1392
    %2151 = vmatmul.mubr.f32.gmra.mrb[0].mxu0 %v2014
    %v2152 = vpop.f32.mrb[0].mxu0
    %v2153 = vadd.f32 %v1224, %v2152
    %v2154 = vpop.f32.mrb[0].mxu0
    %v2155 = vadd.f32 %v1228, %v2154
    %2156 = vdwg.mxu0
    %v2157 = vmul.f32 %v2082, 0.5
    %v2158 = vtanh.pop %v2157
    %v2159 = vmul.f32 %v2158, 0.5
    %v2160 = vadd.f32 %v2159, 0.5
    %v2161 = vmul.f32 %v2084, 0.5
    %v2162 = vtanh.pop %v2161
    %v2163 = vmul.f32 %v2162, 0.5
    %v2164 = vadd.f32 %v2163, 0.5
    %v2165 = vtanh.pop %v2153
    %v2166 = vmul.f32 %v2155, 0.5
    %v2167 = vtanh.pop %v2166
    %v2168 = vmul.f32 %v2167, 0.5
    %v2169 = vadd.f32 %v2168, 0.5
    %v2170 = vmul.f32 %v2164, %v1390
    %v2171 = vmul.f32 %v2160, %v2165
    %v2172 = vadd.f32 %v2170, %v2171
    %v2173 = vtanh.pop %v2172
    %v2174 = vmul.f32 %v2169, %v2173
    %2175 = vmatprep.subr.mxu0 %v1394
    %2176 = vmatpush1.msra.mxu0 %v1393
    %2177 = vmatprep.subr.mxu0 %v1398
    %2178 = vmatpush1.msra.mxu0 %v1397
    %2179 = vmatprep.subr.mxu0 %v1402
    %2180 = vmatpush1.msra.mxu0 %v1401
    %2181 = vmatprep.subr.mxu0 %v1406
    %2182 = vmatpush1.msra.mxu0 %v1405
    %2183 = vmatprep.subr.mxu0 %v1410
    %2184 = vmatpush1.msra.mxu0 %v1409
    %2185 = vmatprep.subr.mxu0 %v1414
    %2186 = vmatpush1.msra.mxu0 %v1413
    %2187 = vmatprep.subr.mxu0 %v1418
    %2188 = vmatpush1.msra.mxu0 %v1417
    %2189 = vmatprep.subr.mxu0 %v1422
    %2190 = vmatpush1.msra.mxu0 %v1421
    %2191 = vmatprep.subr.mxu0 %v1426
    %2192 = vmatpush1.msra.mxu0 %v1425
    %2193 = vmatprep.subr.mxu0 %v1430
    %2194 = vmatpush1.msra.mxu0 %v1429
    %2195 = vmatprep.subr.mxu0 %v1434
    %2196 = vmatpush1.msra.mxu0 %v1433
    %2197 = vmatprep.subr.mxu0 %v1438
    %2198 = vmatpush1.msra.mxu0 %v1437
    %2199 = vmatprep.subr.mxu0 %v1442
    %2200 = vmatpush1.msra.mxu0 %v1441
    %2201 = vmatprep.subr.mxu0 %v1446
    %2202 = vmatpush1.msra.mxu0 %v1445
    %2203 = vmatprep.subr.mxu0 %v1450
    %2204 = vmatpush1.msra.mxu0 %v1449
    %2205 = vmatprep.subr.mxu0 %v1454
    %2206 = vmatpush1.msra.mxu0 %v1453
    %2207 = vmatprep.subr.mxu0 %v1458
    %2208 = vmatpush1.msra.mxu0 %v1457
    %2209 = vmatprep.subr.mxu0 %v1462
    %2210 = vmatpush1.msra.mxu0 %v1461
    %2211 = vmatprep.subr.mxu0 %v1466
    %2212 = vmatpush1.msra.mxu0 %v1465
    %2213 = vmatprep.subr.mxu0 %v1470
    %2214 = vmatpush1.msra.mxu0 %v1469
    %2215 = vmatprep.subr.mxu0 %v1474
    %2216 = vmatpush1.msra.mxu0 %v1473
    %2217 = vmatprep.subr.mxu0 %v1478
    %2218 = vmatpush1.msra.mxu0 %v1477
    %2219 = vmatprep.subr.mxu0 %v1482
    %2220 = vmatpush1.msra.mxu0 %v1481
    %2221 = vmatprep.subr.mxu0 %v1486
    %2222 = vmatpush1.msra.mxu0 %v1485
    %2223 = vmatprep.subr.mxu0 %v1490
    %2224 = vmatpush1.msra.mxu0 %v1489
    %2225 = vmatprep.subr.mxu0 %v1494
    %2226 = vmatpush1.msra.mxu0 %v1493
    %2227 = vmatprep.subr.mxu0 %v1498
    %2228 = vmatpush1.msra.mxu0 %v1497
    %2229 = vmatprep.subr.mxu0 %v1502
    %2230 = vmatpush1.msra.mxu0 %v1501
    %2231 = vmatprep.subr.mxu0 %v1506
    %2232 = vmatpush1.msra.mxu0 %v1505
    %2233 = vmatprep.subr.mxu0 %v1510
    %2234 = vmatpush1.msra.mxu0 %v1509
    %2235 = vmatprep.subr.mxu0 %v1514
    %2236 = vmatpush1.msra.mxu0 %v1513
    %2237 = vmatprep.subr.mxu0 %v1518
    %2238 = vmatpush1.msra.mxu0 %v1517
    %2239 = vmatprep.mubr.f32.mxu0 %v1702
    %2240 = vmatmul.mubr.f32.gmra.mrb[0].mxu0 %v1392
    %v2241 = vpop.f32.mrb[0].mxu0
    %v2242 = vadd.f32 %v1526, %v2241
    %v2243 = vpop.f32.mrb[0].mxu0
    %v2244 = vadd.f32 %v1530, %v2243
    %2245 = vdwg.mxu0
    %2246 = vmatprep.subr.mxu0 %v1396
    %2247 = vmatpush1.msra.mxu0 %v1395
    %2248 = vmatprep.subr.mxu0 %v1400
    %2249 = vmatpush1.msra.mxu0 %v1399
    %2250 = vmatprep.subr.mxu0 %v1404
    %2251 = vmatpush1.msra.mxu0 %v1403
    %2252 = vmatprep.subr.mxu0 %v1408
    %2253 = vmatpush1.msra.mxu0 %v1407
    %2254 = vmatprep.subr.mxu0 %v1412
    %2255 = vmatpush1.msra.mxu0 %v1411
    %2256 = vmatprep.subr.mxu0 %v1416
    %2257 = vmatpush1.msra.mxu0 %v1415
    %2258 = vmatprep.subr.mxu0 %v1420
    %2259 = vmatpush1.msra.mxu0 %v1419
    %2260 = vmatprep.subr.mxu0 %v1424
    %2261 = vmatpush1.msra.mxu0 %v1423
    %2262 = vmatprep.subr.mxu0 %v1428
    %2263 = vmatpush1.msra.mxu0 %v1427
    %2264 = vmatprep.subr.mxu0 %v1432
    %2265 = vmatpush1.msra.mxu0 %v1431
    %2266 = vmatprep.subr.mxu0 %v1436
    %2267 = vmatpush1.msra.mxu0 %v1435
    %2268 = vmatprep.subr.mxu0 %v1440
    %2269 = vmatpush1.msra.mxu0 %v1439
    %2270 = vmatprep.subr.mxu0 %v1444
    %2271 = vmatpush1.msra.mxu0 %v1443
    %2272 = vmatprep.subr.mxu0 %v1448
    %2273 = vmatpush1.msra.mxu0 %v1447
    %2274 = vmatprep.subr.mxu0 %v1452
    %2275 = vmatpush1.msra.mxu0 %v1451
    %2276 = vmatprep.subr.mxu0 %v1456
    %2277 = vmatpush1.msra.mxu0 %v1455
    %2278 = vmatprep.subr.mxu0 %v1460
    %2279 = vmatpush1.msra.mxu0 %v1459
    %2280 = vmatprep.subr.mxu0 %v1464
    %2281 = vmatpush1.msra.mxu0 %v1463
    %2282 = vmatprep.subr.mxu0 %v1468
    %2283 = vmatpush1.msra.mxu0 %v1467
    %2284 = vmatprep.subr.mxu0 %v1472
    %2285 = vmatpush1.msra.mxu0 %v1471
    %2286 = vmatprep.subr.mxu0 %v1476
    %2287 = vmatpush1.msra.mxu0 %v1475
    %2288 = vmatprep.subr.mxu0 %v1480
    %2289 = vmatpush1.msra.mxu0 %v1479
    %2290 = vmatprep.subr.mxu0 %v1484
    %2291 = vmatpush1.msra.mxu0 %v1483
    %2292 = vmatprep.subr.mxu0 %v1488
    %2293 = vmatpush1.msra.mxu0 %v1487
    %2294 = vmatprep.subr.mxu0 %v1492
    %2295 = vmatpush1.msra.mxu0 %v1491
    %2296 = vmatprep.subr.mxu0 %v1496
    %2297 = vmatpush1.msra.mxu0 %v1495
    %2298 = vmatprep.subr.mxu0 %v1500
    %2299 = vmatpush1.msra.mxu0 %v1499
    %2300 = vmatprep.subr.mxu0 %v1504
    %2301 = vmatpush1.msra.mxu0 %v1503
    %2302 = vmatprep.subr.mxu0 %v1508
    %2303 = vmatpush1.msra.mxu0 %v1507
    %2304 = vmatprep.subr.mxu0 %v1512
    %2305 = vmatpush1.msra.mxu0 %v1511
    %2306 = vmatprep.subr.mxu0 %v1516
    %2307 = vmatpush1.msra.mxu0 %v1515
    %2308 = vmatprep.subr.mxu0 %v1520
    %2309 = vmatpush1.msra.mxu0 %v1519
    %2310 = vmatprep.mubr.f32.mxu0 %v1702
    %2311 = vmatmul.mubr.f32.gmra.mrb[0].mxu0 %v1392
    %v2312 = vpop.f32.mrb[0].mxu0
    %v2313 = vadd.f32 %v1534, %v2312
    %v2314 = vpop.f32.mrb[0].mxu0
    %v2315 = vadd.f32 %v1538, %v2314
    %2316 = vdwg.mxu0
    %v2317 = vmul.f32 %v2242, 0.5
    %v2318 = vtanh.pop %v2317
    %v2319 = vmul.f32 %v2318, 0.5
    %v2320 = vadd.f32 %v2319, 0.5
    %v2321 = vmul.f32 %v2244, 0.5
    %v2322 = vtanh.pop %v2321
    %v2323 = vmul.f32 %v2322, 0.5
    %v2324 = vadd.f32 %v2323, 0.5
    %v2325 = vtanh.pop %v2313
    %v2326 = vmul.f32 %v2315, 0.5
    %v2327 = vtanh.pop %v2326
    %v2328 = vmul.f32 %v2327, 0.5
    %v2329 = vadd.f32 %v2328, 0.5
    %v2330 = vmul.f32 %v2324, %v1700
    %v2331 = vmul.f32 %v2320, %v2325
    %v2332 = vadd.f32 %v2330, %v2331
    %v2333 = vtanh.pop %v2332
    %v2334 = vmul.f32 %v2329, %v2333
    %2335 = vmatprep.subr.mxu0 %v1704
    %2336 = vmatpush1.msra.mxu0 %v1703
    %2337 = vmatprep.subr.mxu0 %v1708
    %2338 = vmatpush1.msra.mxu0 %v1707
    %2339 = vmatprep.subr.mxu0 %v1712
    %2340 = vmatpush1.msra.mxu0 %v1711
    %2341 = vmatprep.subr.mxu0 %v1716
    %2342 = vmatpush1.msra.mxu0 %v1715
    %2343 = vmatprep.subr.mxu0 %v1720
    %2344 = vmatpush1.msra.mxu0 %v1719
    %2345 = vmatprep.subr.mxu0 %v1724
    %2346 = vmatpush1.msra.mxu0 %v1723
    %2347 = vmatprep.subr.mxu0 %v1728
    %2348 = vmatpush1.msra.mxu0 %v1727
    %2349 = vmatprep.subr.mxu0 %v1732
    %2350 = vmatpush1.msra.mxu0 %v1731
    %2351 = vmatprep.subr.mxu0 %v1736
    %2352 = vmatpush1.msra.mxu0 %v1735
    %2353 = vmatprep.subr.mxu0 %v1740
    %2354 = vmatpush1.msra.mxu0 %v1739
    %2355 = vmatprep.subr.mxu0 %v1744
    %2356 = vmatpush1.msra.mxu0 %v1743
    %2357 = vmatprep.subr.mxu0 %v1748
    %2358 = vmatpush1.msra.mxu0 %v1747
    %2359 = vmatprep.subr.mxu0 %v1752
    %2360 = vmatpush1.msra.mxu0 %v1751
    %2361 = vmatprep.subr.mxu0 %v1756
    %2362 = vmatpush1.msra.mxu0 %v1755
    %2363 = vmatprep.subr.mxu0 %v1760
    %2364 = vmatpush1.msra.mxu0 %v1759
    %2365 = vmatprep.subr.mxu0 %v1764
    %2366 = vmatpush1.msra.mxu0 %v1763
    %2367 = vmatprep.subr.mxu0 %v1768
    %2368 = vmatpush1.msra.mxu0 %v1767
    %2369 = vmatprep.subr.mxu0 %v1772
    %2370 = vmatpush1.msra.mxu0 %v1771
    %2371 = vmatprep.subr.mxu0 %v1776
    %2372 = vmatpush1.msra.mxu0 %v1775
    %2373 = vmatprep.subr.mxu0 %v1780
    %2374 = vmatpush1.msra.mxu0 %v1779
    %2375 = vmatprep.subr.mxu0 %v1784
    %2376 = vmatpush1.msra.mxu0 %v1783
    %2377 = vmatprep.subr.mxu0 %v1788
    %2378 = vmatpush1.msra.mxu0 %v1787
    %2379 = vmatprep.subr.mxu0 %v1792
    %2380 = vmatpush1.msra.mxu0 %v1791
    %2381 = vmatprep.subr.mxu0 %v1796
    %2382 = vmatpush1.msra.mxu0 %v1795
    %2383 = vmatprep.subr.mxu0 %v1800
    %2384 = vmatpush1.msra.mxu0 %v1799
    %2385 = vmatprep.subr.mxu0 %v1804
    %2386 = vmatpush1.msra.mxu0 %v1803
    %2387 = vmatprep.subr.mxu0 %v1808
    %2388 = vmatpush1.msra.mxu0 %v1807
    %2389 = vmatprep.subr.mxu0 %v1812
    %2390 = vmatpush1.msra.mxu0 %v1811
    %2391 = vmatprep.subr.mxu0 %v1816
    %2392 = vmatpush1.msra.mxu0 %v1815
    %2393 = vmatprep.subr.mxu0 %v1820
    %2394 = vmatpush1.msra.mxu0 %v1819
    %2395 = vmatprep.subr.mxu0 %v1824
    %2396 = vmatpush1.msra.mxu0 %v1823
    %2397 = vmatprep.subr.mxu0 %v1828
    %2398 = vmatpush1.msra.mxu0 %v1827
    %2399 = vmatprep.mubr.f32.mxu0 %v2013
    %2400 = vmatmul.mubr.f32.gmra.mrb[0].mxu0 %v1702
    %v2401 = vpop.f32.mrb[0].mxu0
    %v2402 = vadd.f32 %v1837, %v2401
    %v2403 = vpop.f32.mrb[0].mxu0
    %v2404 = vadd.f32 %v1841, %v2403
    %2405 = vdwg.mxu0
    %2406 = vmatprep.subr.mxu0 %v1706
    %2407 = vmatpush1.msra.mxu0 %v1705
    %2408 = vmatprep.subr.mxu0 %v1710
    %2409 = vmatpush1.msra.mxu0 %v1709
    %2410 = vmatprep.subr.mxu0 %v1714
    %2411 = vmatpush1.msra.mxu0 %v1713
    %2412 = vmatprep.subr.mxu0 %v1718
    %2413 = vmatpush1.msra.mxu0 %v1717
    %2414 = vmatprep.subr.mxu0 %v1722
    %2415 = vmatpush1.msra.mxu0 %v1721
    %2416 = vmatprep.subr.mxu0 %v1726
    %2417 = vmatpush1.msra.mxu0 %v1725
    %2418 = vmatprep.subr.mxu0 %v1730
    %2419 = vmatpush1.msra.mxu0 %v1729
    %2420 = vmatprep.subr.mxu0 %v1734
    %2421 = vmatpush1.msra.mxu0 %v1733
    %2422 = vmatprep.subr.mxu0 %v1738
    %2423 = vmatpush1.msra.mxu0 %v1737
    %2424 = vmatprep.subr.mxu0 %v1742
    %2425 = vmatpush1.msra.mxu0 %v1741
    %2426 = vmatprep.subr.mxu0 %v1746
    %2427 = vmatpush1.msra.mxu0 %v1745
    %2428 = vmatprep.subr.mxu0 %v1750
    %2429 = vmatpush1.msra.mxu0 %v1749
    %2430 = vmatprep.subr.mxu0 %v1754
    %2431 = vmatpush1.msra.mxu0 %v1753
    %2432 = vmatprep.subr.mxu0 %v1758
    %2433 = vmatpush1.msra.mxu0 %v1757
    %2434 = vmatprep.subr.mxu0 %v1762
    %2435 = vmatpush1.msra.mxu0 %v1761
    %2436 = vmatprep.subr.mxu0 %v1766
    %2437 = vmatpush1.msra.mxu0 %v1765
    %2438 = vmatprep.subr.mxu0 %v1770
    %2439 = vmatpush1.msra.mxu0 %v1769
    %2440 = vmatprep.subr.mxu0 %v1774
    %2441 = vmatpush1.msra.mxu0 %v1773
    %2442 = vmatprep.subr.mxu0 %v1778
    %2443 = vmatpush1.msra.mxu0 %v1777
    %2444 = vmatprep.subr.mxu0 %v1782
    %2445 = vmatpush1.msra.mxu0 %v1781
    %2446 = vmatprep.subr.mxu0 %v1786
    %2447 = vmatpush1.msra.mxu0 %v1785
    %2448 = vmatprep.subr.mxu0 %v1790
    %2449 = vmatpush1.msra.mxu0 %v1789
    %2450 = vmatprep.subr.mxu0 %v1794
    %2451 = vmatpush1.msra.mxu0 %v1793
    %2452 = vmatprep.subr.mxu0 %v1798
    %2453 = vmatpush1.msra.mxu0 %v1797
    %2454 = vmatprep.subr.mxu0 %v1802
    %2455 = vmatpush1.msra.mxu0 %v1801
    %2456 = vmatprep.subr.mxu0 %v1806
    %2457 = vmatpush1.msra.mxu0 %v1805
    %2458 = vmatprep.subr.mxu0 %v1810
    %2459 = vmatpush1.msra.mxu0 %v1809
    %2460 = vmatprep.subr.mxu0 %v1814
    %2461 = vmatpush1.msra.mxu0 %v1813
    %2462 = vmatprep.subr.mxu0 %v1818
    %2463 = vmatpush1.msra.mxu0 %v1817
    %2464 = vmatprep.subr.mxu0 %v1822
    %2465 = vmatpush1.msra.mxu0 %v1821
    %2466 = vmatprep.subr.mxu0 %v1826
    %2467 = vmatpush1.msra.mxu0 %v1825
    %2468 = vmatprep.subr.mxu0 %v1830
    %2469 = vmatpush1.msra.mxu0 %v1829
    %2470 = vmatprep.mubr.f32.mxu0 %v2013
    %2471 = vmatmul.mubr.f32.gmra.mrb[0].mxu0 %v1702
    %v2472 = vpop.f32.mrb[0].mxu0
    %v2473 = vadd.f32 %v1845, %v2472
    %v2474 = vpop.f32.mrb[0].mxu0
    %v2475 = vadd.f32 %v1849, %v2474
    %2476 = vdwg.mxu0
    %v2477 = vmul.f32 %v2402, 0.5
    %v2478 = vtanh.pop %v2477
    %v2479 = vmul.f32 %v2478, 0.5
    %v2480 = vadd.f32 %v2479, 0.5
    %v2481 = vmul.f32 %v2404, 0.5
    %v2482 = vtanh.pop %v2481
    %v2483 = vmul.f32 %v2482, 0.5
    %v2484 = vadd.f32 %v2483, 0.5
    %v2485 = vtanh.pop %v2473
    %v2486 = vmul.f32 %v2475, 0.5
    %v2487 = vtanh.pop %v2486
    %v2488 = vmul.f32 %v2487, 0.5
    %v2489 = vadd.f32 %v2488, 0.5
    %v2490 = vmul.f32 %v2484, %v2011
    %v2491 = vmul.f32 %v2480, %v2485
    %v2492 = vadd.f32 %v2490, %v2491
    %v2493 = vtanh.pop %v2492
    %v2494 = vmul.f32 %v2489, %v2493
    %v2495 = vld [vmem:[%s0 + $0x20] sm:$0xff]
    %2496 = vmatprep.subr.mxu0 %v1084
    %2497 = vmatpush1.msra.mxu0 %v1083
    %2498 = vmatprep.subr.mxu0 %v1088
    %2499 = vmatpush1.msra.mxu0 %v1087
    %2500 = vmatprep.subr.mxu0 %v1092
    %2501 = vmatpush1.msra.mxu0 %v1091
    %2502 = vmatprep.subr.mxu0 %v1096
    %2503 = vmatpush1.msra.mxu0 %v1095
    %2504 = vmatprep.subr.mxu0 %v1100
    %2505 = vmatpush1.msra.mxu0 %v1099
    %2506 = vmatprep.subr.mxu0 %v1104
    %2507 = vmatpush1.msra.mxu0 %v1103
    %2508 = vmatprep.subr.mxu0 %v1108
    %2509 = vmatpush1.msra.mxu0 %v1107
    %2510 = vmatprep.subr.mxu0 %v1112
    %2511 = vmatpush1.msra.mxu0 %v1111
    %2512 = vmatprep.subr.mxu0 %v1116
    %2513 = vmatpush1.msra.mxu0 %v1115
    %2514 = vmatprep.subr.mxu0 %v1120
    %2515 = vmatpush1.msra.mxu0 %v1119
    %2516 = vmatprep.subr.mxu0 %v1124
    %2517 = vmatpush1.msra.mxu0 %v1123
    %2518 = vmatprep.subr.mxu0 %v1128
    %2519 = vmatpush1.msra.mxu0 %v1127
    %2520 = vmatprep.subr.mxu0 %v1132
    %2521 = vmatpush1.msra.mxu0 %v1131
    %2522 = vmatprep.subr.mxu0 %v1136
    %2523 = vmatpush1.msra.mxu0 %v1135
    %2524 = vmatprep.subr.mxu0 %v1140
    %2525 = vmatpush1.msra.mxu0 %v1139
    %2526 = vmatprep.subr.mxu0 %v1144
    %2527 = vmatpush1.msra.mxu0 %v1143
    %2528 = vmatprep.subr.mxu0 %v1148
    %2529 = vmatpush1.msra.mxu0 %v1147
    %2530 = vmatprep.subr.mxu0 %v1152
    %2531 = vmatpush1.msra.mxu0 %v1151
    %2532 = vmatprep.subr.mxu0 %v1156
    %2533 = vmatpush1.msra.mxu0 %v1155
    %2534 = vmatprep.subr.mxu0 %v1160
    %2535 = vmatpush1.msra.mxu0 %v1159
    %2536 = vmatprep.subr.mxu0 %v1164
    %2537 = vmatpush1.msra.mxu0 %v1163
    %2538 = vmatprep.subr.mxu0 %v1168
    %2539 = vmatpush1.msra.mxu0 %v1167
    %2540 = vmatprep.subr.mxu0 %v1172
    %2541 = vmatpush1.msra.mxu0 %v1171
    %2542 = vmatprep.subr.mxu0 %v1176
    %2543 = vmatpush1.msra.mxu0 %v1175
    %2544 = vmatprep.subr.mxu0 %v1180
    %2545 = vmatpush1.msra.mxu0 %v1179
    %2546 = vmatprep.subr.mxu0 %v1184
    %2547 = vmatpush1.msra.mxu0 %v1183
    %2548 = vmatprep.subr.mxu0 %v1188
    %2549 = vmatpush1.msra.mxu0 %v1187
    %2550 = vmatprep.subr.mxu0 %v1192
    %2551 = vmatpush1.msra.mxu0 %v1191
    %2552 = vmatprep.subr.mxu0 %v1196
    %2553 = vmatpush1.msra.mxu0 %v1195
    %2554 = vmatprep.subr.mxu0 %v1200
    %2555 = vmatpush1.msra.mxu0 %v1199
    %2556 = vmatprep.subr.mxu0 %v1204
    %2557 = vmatpush1.msra.mxu0 %v1203
    %2558 = vmatprep.subr.mxu0 %v1208
    %2559 = vmatpush1.msra.mxu0 %v1207
    %2560 = vmatprep.mubr.f32.mxu0 %v2174
    %2561 = vmatmul.mubr.f32.gmra.mrb[0].mxu0 %v2495
    %v2562 = vpop.f32.mrb[0].mxu0
    %v2563 = vadd.f32 %v1216, %v2562
    %v2564 = vpop.f32.mrb[0].mxu0
    %v2565 = vadd.f32 %v1220, %v2564
    %2566 = vdwg.mxu0
    %2567 = vmatprep.subr.mxu0 %v1086
    %2568 = vmatpush1.msra.mxu0 %v1085
    %2569 = vmatprep.subr.mxu0 %v1090
    %2570 = vmatpush1.msra.mxu0 %v1089
    %2571 = vmatprep.subr.mxu0 %v1094
    %2572 = vmatpush1.msra.mxu0 %v1093
    %2573 = vmatprep.subr.mxu0 %v1098
    %2574 = vmatpush1.msra.mxu0 %v1097
    %2575 = vmatprep.subr.mxu0 %v1102
    %2576 = vmatpush1.msra.mxu0 %v1101
    %2577 = vmatprep.subr.mxu0 %v1106
    %2578 = vmatpush1.msra.mxu0 %v1105
    %2579 = vmatprep.subr.mxu0 %v1110
    %2580 = vmatpush1.msra.mxu0 %v1109
    %2581 = vmatprep.subr.mxu0 %v1114
    %2582 = vmatpush1.msra.mxu0 %v1113
    %2583 = vmatprep.subr.mxu0 %v1118
    %2584 = vmatpush1.msra.mxu0 %v1117
    %2585 = vmatprep.subr.mxu0 %v1122
    %2586 = vmatpush1.msra.mxu0 %v1121
    %2587 = vmatprep.subr.mxu0 %v1126
    %2588 = vmatpush1.msra.mxu0 %v1125
    %2589 = vmatprep.subr.mxu0 %v1130
    %2590 = vmatpush1.msra.mxu0 %v1129
    %2591 = vmatprep.subr.mxu0 %v1134
    %2592 = vmatpush1.msra.mxu0 %v1133
    %2593 = vmatprep.subr.mxu0 %v1138
    %2594 = vmatpush1.msra.mxu0 %v1137
    %2595 = vmatprep.subr.mxu0 %v1142
    %2596 = vmatpush1.msra.mxu0 %v1141
    %2597 = vmatprep.subr.mxu0 %v1146
    %2598 = vmatpush1.msra.mxu0 %v1145
    %2599 = vmatprep.subr.mxu0 %v1150
    %2600 = vmatpush1.msra.mxu0 %v1149
    %2601 = vmatprep.subr.mxu0 %v1154
    %2602 = vmatpush1.msra.mxu0 %v1153
    %2603 = vmatprep.subr.mxu0 %v1158
    %2604 = vmatpush1.msra.mxu0 %v1157
    %2605 = vmatprep.subr.mxu0 %v1162
    %2606 = vmatpush1.msra.mxu0 %v1161
    %2607 = vmatprep.subr.mxu0 %v1166
    %2608 = vmatpush1.msra.mxu0 %v1165
    %2609 = vmatprep.subr.mxu0 %v1170
    %2610 = vmatpush1.msra.mxu0 %v1169
    %2611 = vmatprep.subr.mxu0 %v1174
    %2612 = vmatpush1.msra.mxu0 %v1173
    %2613 = vmatprep.subr.mxu0 %v1178
    %2614 = vmatpush1.msra.mxu0 %v1177
    %2615 = vmatprep.subr.mxu0 %v1182
    %2616 = vmatpush1.msra.mxu0 %v1181
    %2617 = vmatprep.subr.mxu0 %v1186
    %2618 = vmatpush1.msra.mxu0 %v1185
    %2619 = vmatprep.subr.mxu0 %v1190
    %2620 = vmatpush1.msra.mxu0 %v1189
    %2621 = vmatprep.subr.mxu0 %v1194
    %2622 = vmatpush1.msra.mxu0 %v1193
    %2623 = vmatprep.subr.mxu0 %v1198
    %2624 = vmatpush1.msra.mxu0 %v1197
    %2625 = vmatprep.subr.mxu0 %v1202
    %2626 = vmatpush1.msra.mxu0 %v1201
    %2627 = vmatprep.subr.mxu0 %v1206
    %2628 = vmatpush1.msra.mxu0 %v1205
    %2629 = vmatprep.subr.mxu0 %v1210
    %2630 = vmatpush1.msra.mxu0 %v1209
    %2631 = vmatprep.mubr.f32.mxu0 %v2174
    %2632 = vmatmul.mubr.f32.gmra.mrb[0].mxu0 %v2495
    %v2633 = vpop.f32.mrb[0].mxu0
    %v2634 = vadd.f32 %v1224, %v2633
    %v2635 = vpop.f32.mrb[0].mxu0
    %v2636 = vadd.f32 %v1228, %v2635
    %2637 = vdwg.mxu0
    %v2638 = vmul.f32 %v2563, 0.5
    %v2639 = vtanh.pop %v2638
    %v2640 = vmul.f32 %v2639, 0.5
    %v2641 = vadd.f32 %v2640, 0.5
    %v2642 = vmul.f32 %v2565, 0.5
    %v2643 = vtanh.pop %v2642
    %v2644 = vmul.f32 %v2643, 0.5
    %v2645 = vadd.f32 %v2644, 0.5
    %v2646 = vtanh.pop %v2634
    %v2647 = vmul.f32 %v2636, 0.5
    %v2648 = vtanh.pop %v2647
    %v2649 = vmul.f32 %v2648, 0.5
    %v2650 = vadd.f32 %v2649, 0.5
    %v2651 = vmul.f32 %v2645, %v2172
    %v2652 = vmul.f32 %v2641, %v2646
    %v2653 = vadd.f32 %v2651, %v2652
    %v2654 = vtanh.pop %v2653
    %v2655 = vmul.f32 %v2650, %v2654
    %2656 = vmatprep.subr.mxu0 %v1394
    %2657 = vmatpush1.msra.mxu0 %v1393
    %2658 = vmatprep.subr.mxu0 %v1398
    %2659 = vmatpush1.msra.mxu0 %v1397
    %2660 = vmatprep.subr.mxu0 %v1402
    %2661 = vmatpush1.msra.mxu0 %v1401
    %2662 = vmatprep.subr.mxu0 %v1406
    %2663 = vmatpush1.msra.mxu0 %v1405
    %2664 = vmatprep.subr.mxu0 %v1410
    %2665 = vmatpush1.msra.mxu0 %v1409
    %2666 = vmatprep.subr.mxu0 %v1414
    %2667 = vmatpush1.msra.mxu0 %v1413
    %2668 = vmatprep.subr.mxu0 %v1418
    %2669 = vmatpush1.msra.mxu0 %v1417
    %2670 = vmatprep.subr.mxu0 %v1422
    %2671 = vmatpush1.msra.mxu0 %v1421
    %2672 = vmatprep.subr.mxu0 %v1426
    %2673 = vmatpush1.msra.mxu0 %v1425
    %2674 = vmatprep.subr.mxu0 %v1430
    %2675 = vmatpush1.msra.mxu0 %v1429
    %2676 = vmatprep.subr.mxu0 %v1434
    %2677 = vmatpush1.msra.mxu0 %v1433
    %2678 = vmatprep.subr.mxu0 %v1438
    %2679 = vmatpush1.msra.mxu0 %v1437
    %2680 = vmatprep.subr.mxu0 %v1442
    %2681 = vmatpush1.msra.mxu0 %v1441
    %2682 = vmatprep.subr.mxu0 %v1446
    %2683 = vmatpush1.msra.mxu0 %v1445
    %2684 = vmatprep.subr.mxu0 %v1450
    %2685 = vmatpush1.msra.mxu0 %v1449
    %2686 = vmatprep.subr.mxu0 %v1454
    %2687 = vmatpush1.msra.mxu0 %v1453
    %2688 = vmatprep.subr.mxu0 %v1458
    %2689 = vmatpush1.msra.mxu0 %v1457
    %2690 = vmatprep.subr.mxu0 %v1462
    %2691 = vmatpush1.msra.mxu0 %v1461
    %2692 = vmatprep.subr.mxu0 %v1466
    %2693 = vmatpush1.msra.mxu0 %v1465
    %2694 = vmatprep.subr.mxu0 %v1470
    %2695 = vmatpush1.msra.mxu0 %v1469
    %2696 = vmatprep.subr.mxu0 %v1474
    %2697 = vmatpush1.msra.mxu0 %v1473
    %2698 = vmatprep.subr.mxu0 %v1478
    %2699 = vmatpush1.msra.mxu0 %v1477
    %2700 = vmatprep.subr.mxu0 %v1482
    %2701 = vmatpush1.msra.mxu0 %v1481
    %2702 = vmatprep.subr.mxu0 %v1486
    %2703 = vmatpush1.msra.mxu0 %v1485
    %2704 = vmatprep.subr.mxu0 %v1490
    %2705 = vmatpush1.msra.mxu0 %v1489
    %2706 = vmatprep.subr.mxu0 %v1494
    %2707 = vmatpush1.msra.mxu0 %v1493
    %2708 = vmatprep.subr.mxu0 %v1498
    %2709 = vmatpush1.msra.mxu0 %v1497
    %2710 = vmatprep.subr.mxu0 %v1502
    %2711 = vmatpush1.msra.mxu0 %v1501
    %2712 = vmatprep.subr.mxu0 %v1506
    %2713 = vmatpush1.msra.mxu0 %v1505
    %2714 = vmatprep.subr.mxu0 %v1510
    %2715 = vmatpush1.msra.mxu0 %v1509
    %2716 = vmatprep.subr.mxu0 %v1514
    %2717 = vmatpush1.msra.mxu0 %v1513
    %2718 = vmatprep.subr.mxu0 %v1518
    %2719 = vmatpush1.msra.mxu0 %v1517
    %2720 = vmatprep.mubr.f32.mxu0 %v2334
    %2721 = vmatmul.mubr.f32.gmra.mrb[0].mxu0 %v2174
    %v2722 = vpop.f32.mrb[0].mxu0
    %v2723 = vadd.f32 %v1526, %v2722
    %v2724 = vpop.f32.mrb[0].mxu0
    %v2725 = vadd.f32 %v1530, %v2724
    %2726 = vdwg.mxu0
    %2727 = vmatprep.subr.mxu0 %v1396
    %2728 = vmatpush1.msra.mxu0 %v1395
    %2729 = vmatprep.subr.mxu0 %v1400
    %2730 = vmatpush1.msra.mxu0 %v1399
    %2731 = vmatprep.subr.mxu0 %v1404
    %2732 = vmatpush1.msra.mxu0 %v1403
    %2733 = vmatprep.subr.mxu0 %v1408
    %2734 = vmatpush1.msra.mxu0 %v1407
    %2735 = vmatprep.subr.mxu0 %v1412
    %2736 = vmatpush1.msra.mxu0 %v1411
    %2737 = vmatprep.subr.mxu0 %v1416
    %2738 = vmatpush1.msra.mxu0 %v1415
    %2739 = vmatprep.subr.mxu0 %v1420
    %2740 = vmatpush1.msra.mxu0 %v1419
    %2741 = vmatprep.subr.mxu0 %v1424
    %2742 = vmatpush1.msra.mxu0 %v1423
    %2743 = vmatprep.subr.mxu0 %v1428
    %2744 = vmatpush1.msra.mxu0 %v1427
    %2745 = vmatprep.subr.mxu0 %v1432
    %2746 = vmatpush1.msra.mxu0 %v1431
    %2747 = vmatprep.subr.mxu0 %v1436
    %2748 = vmatpush1.msra.mxu0 %v1435
    %2749 = vmatprep.subr.mxu0 %v1440
    %2750 = vmatpush1.msra.mxu0 %v1439
    %2751 = vmatprep.subr.mxu0 %v1444
    %2752 = vmatpush1.msra.mxu0 %v1443
    %2753 = vmatprep.subr.mxu0 %v1448
    %2754 = vmatpush1.msra.mxu0 %v1447
    %2755 = vmatprep.subr.mxu0 %v1452
    %2756 = vmatpush1.msra.mxu0 %v1451
    %2757 = vmatprep.subr.mxu0 %v1456
    %2758 = vmatpush1.msra.mxu0 %v1455
    %2759 = vmatprep.subr.mxu0 %v1460
    %2760 = vmatpush1.msra.mxu0 %v1459
    %2761 = vmatprep.subr.mxu0 %v1464
    %2762 = vmatpush1.msra.mxu0 %v1463
    %2763 = vmatprep.subr.mxu0 %v1468
    %2764 = vmatpush1.msra.mxu0 %v1467
    %2765 = vmatprep.subr.mxu0 %v1472
    %2766 = vmatpush1.msra.mxu0 %v1471
    %2767 = vmatprep.subr.mxu0 %v1476
    %2768 = vmatpush1.msra.mxu0 %v1475
    %2769 = vmatprep.subr.mxu0 %v1480
    %2770 = vmatpush1.msra.mxu0 %v1479
    %2771 = vmatprep.subr.mxu0 %v1484
    %2772 = vmatpush1.msra.mxu0 %v1483
    %2773 = vmatprep.subr.mxu0 %v1488
    %2774 = vmatpush1.msra.mxu0 %v1487
    %2775 = vmatprep.subr.mxu0 %v1492
    %2776 = vmatpush1.msra.mxu0 %v1491
    %2777 = vmatprep.subr.mxu0 %v1496
    %2778 = vmatpush1.msra.mxu0 %v1495
    %2779 = vmatprep.subr.mxu0 %v1500
    %2780 = vmatpush1.msra.mxu0 %v1499
    %2781 = vmatprep.subr.mxu0 %v1504
    %2782 = vmatpush1.msra.mxu0 %v1503
    %2783 = vmatprep.subr.mxu0 %v1508
    %2784 = vmatpush1.msra.mxu0 %v1507
    %2785 = vmatprep.subr.mxu0 %v1512
    %2786 = vmatpush1.msra.mxu0 %v1511
    %2787 = vmatprep.subr.mxu0 %v1516
    %2788 = vmatpush1.msra.mxu0 %v1515
    %2789 = vmatprep.subr.mxu0 %v1520
    %2790 = vmatpush1.msra.mxu0 %v1519
    %2791 = vmatprep.mubr.f32.mxu0 %v2334
    %2792 = vmatmul.mubr.f32.gmra.mrb[0].mxu0 %v2174
    %v2793 = vpop.f32.mrb[0].mxu0
    %v2794 = vadd.f32 %v1534, %v2793
    %v2795 = vpop.f32.mrb[0].mxu0
    %v2796 = vadd.f32 %v1538, %v2795
    %2797 = vdwg.mxu0
    %v2798 = vmul.f32 %v2723, 0.5
    %v2799 = vtanh.pop %v2798
    %v2800 = vmul.f32 %v2799, 0.5
    %v2801 = vadd.f32 %v2800, 0.5
    %v2802 = vmul.f32 %v2725, 0.5
    %v2803 = vtanh.pop %v2802
    %v2804 = vmul.f32 %v2803, 0.5
    %v2805 = vadd.f32 %v2804, 0.5
    %v2806 = vtanh.pop %v2794
    %v2807 = vmul.f32 %v2796, 0.5
    %v2808 = vtanh.pop %v2807
    %v2809 = vmul.f32 %v2808, 0.5
    %v2810 = vadd.f32 %v2809, 0.5
    %v2811 = vmul.f32 %v2805, %v2332
    %v2812 = vmul.f32 %v2801, %v2806
    %v2813 = vadd.f32 %v2811, %v2812
    %v2814 = vtanh.pop %v2813
    %v2815 = vmul.f32 %v2810, %v2814
    %2816 = vmatprep.subr.mxu0 %v1704
    %2817 = vmatpush1.msra.mxu0 %v1703
    %2818 = vmatprep.subr.mxu0 %v1708
    %2819 = vmatpush1.msra.mxu0 %v1707
    %2820 = vmatprep.subr.mxu0 %v1712
    %2821 = vmatpush1.msra.mxu0 %v1711
    %2822 = vmatprep.subr.mxu0 %v1716
    %2823 = vmatpush1.msra.mxu0 %v1715
    %2824 = vmatprep.subr.mxu0 %v1720
    %2825 = vmatpush1.msra.mxu0 %v1719
    %2826 = vmatprep.subr.mxu0 %v1724
    %2827 = vmatpush1.msra.mxu0 %v1723
    %2828 = vmatprep.subr.mxu0 %v1728
    %2829 = vmatpush1.msra.mxu0 %v1727
    %2830 = vmatprep.subr.mxu0 %v1732
    %2831 = vmatpush1.msra.mxu0 %v1731
    %2832 = vmatprep.subr.mxu0 %v1736
    %2833 = vmatpush1.msra.mxu0 %v1735
    %2834 = vmatprep.subr.mxu0 %v1740
    %2835 = vmatpush1.msra.mxu0 %v1739
    %2836 = vmatprep.subr.mxu0 %v1744
    %2837 = vmatpush1.msra.mxu0 %v1743
    %2838 = vmatprep.subr.mxu0 %v1748
    %2839 = vmatpush1.msra.mxu0 %v1747
    %2840 = vmatprep.subr.mxu0 %v1752
    %2841 = vmatpush1.msra.mxu0 %v1751
    %2842 = vmatprep.subr.mxu0 %v1756
    %2843 = vmatpush1.msra.mxu0 %v1755
    %2844 = vmatprep.subr.mxu0 %v1760
    %2845 = vmatpush1.msra.mxu0 %v1759
    %2846 = vmatprep.subr.mxu0 %v1764
    %2847 = vmatpush1.msra.mxu0 %v1763
    %2848 = vmatprep.subr.mxu0 %v1768
    %2849 = vmatpush1.msra.mxu0 %v1767
    %2850 = vmatprep.subr.mxu0 %v1772
    %2851 = vmatpush1.msra.mxu0 %v1771
    %2852 = vmatprep.subr.mxu0 %v1776
    %2853 = vmatpush1.msra.mxu0 %v1775
    %2854 = vmatprep.subr.mxu0 %v1780
    %2855 = vmatpush1.msra.mxu0 %v1779
    %2856 = vmatprep.subr.mxu0 %v1784
    %2857 = vmatpush1.msra.mxu0 %v1783
    %2858 = vmatprep.subr.mxu0 %v1788
    %2859 = vmatpush1.msra.mxu0 %v1787
    %2860 = vmatprep.subr.mxu0 %v1792
    %2861 = vmatpush1.msra.mxu0 %v1791
    %2862 = vmatprep.subr.mxu0 %v1796
    %2863 = vmatpush1.msra.mxu0 %v1795
    %2864 = vmatprep.subr.mxu0 %v1800
    %2865 = vmatpush1.msra.mxu0 %v1799
    %2866 = vmatprep.subr.mxu0 %v1804
    %2867 = vmatpush1.msra.mxu0 %v1803
    %2868 = vmatprep.subr.mxu0 %v1808
    %2869 = vmatpush1.msra.mxu0 %v1807
    %2870 = vmatprep.subr.mxu0 %v1812
    %2871 = vmatpush1.msra.mxu0 %v1811
    %2872 = vmatprep.subr.mxu0 %v1816
    %2873 = vmatpush1.msra.mxu0 %v1815
    %2874 = vmatprep.subr.mxu0 %v1820
    %2875 = vmatpush1.msra.mxu0 %v1819
    %2876 = vmatprep.subr.mxu0 %v1824
    %2877 = vmatpush1.msra.mxu0 %v1823
    %2878 = vmatprep.subr.mxu0 %v1828
    %2879 = vmatpush1.msra.mxu0 %v1827
    %2880 = vmatprep.mubr.f32.mxu0 %v2494
    %2881 = vmatmul.mubr.f32.gmra.mrb[0].mxu0 %v2334
    %v2882 = vpop.f32.mrb[0].mxu0
    %v2883 = vadd.f32 %v1837, %v2882
    %v2884 = vpop.f32.mrb[0].mxu0
    %v2885 = vadd.f32 %v1841, %v2884
    %2886 = vdwg.mxu0
    %2887 = vmatprep.subr.mxu0 %v1706
    %2888 = vmatpush1.msra.mxu0 %v1705
    %2889 = vmatprep.subr.mxu0 %v1710
    %2890 = vmatpush1.msra.mxu0 %v1709
    %2891 = vmatprep.subr.mxu0 %v1714
    %2892 = vmatpush1.msra.mxu0 %v1713
    %2893 = vmatprep.subr.mxu0 %v1718
    %2894 = vmatpush1.msra.mxu0 %v1717
    %2895 = vmatprep.subr.mxu0 %v1722
    %2896 = vmatpush1.msra.mxu0 %v1721
    %2897 = vmatprep.subr.mxu0 %v1726
    %2898 = vmatpush1.msra.mxu0 %v1725
    %2899 = vmatprep.subr.mxu0 %v1730
    %2900 = vmatpush1.msra.mxu0 %v1729
    %2901 = vmatprep.subr.mxu0 %v1734
    %2902 = vmatpush1.msra.mxu0 %v1733
    %2903 = vmatprep.subr.mxu0 %v1738
    %2904 = vmatpush1.msra.mxu0 %v1737
    %2905 = vmatprep.subr.mxu0 %v1742
    %2906 = vmatpush1.msra.mxu0 %v1741
    %2907 = vmatprep.subr.mxu0 %v1746
    %2908 = vmatpush1.msra.mxu0 %v1745
    %2909 = vmatprep.subr.mxu0 %v1750
    %2910 = vmatpush1.msra.mxu0 %v1749
    %2911 = vmatprep.subr.mxu0 %v1754
    %2912 = vmatpush1.msra.mxu0 %v1753
    %2913 = vmatprep.subr.mxu0 %v1758
    %2914 = vmatpush1.msra.mxu0 %v1757
    %2915 = vmatprep.subr.mxu0 %v1762
    %2916 = vmatpush1.msra.mxu0 %v1761
    %2917 = vmatprep.subr.mxu0 %v1766
    %2918 = vmatpush1.msra.mxu0 %v1765
    %2919 = vmatprep.subr.mxu0 %v1770
    %2920 = vmatpush1.msra.mxu0 %v1769
    %2921 = vmatprep.subr.mxu0 %v1774
    %2922 = vmatpush1.msra.mxu0 %v1773
    %2923 = vmatprep.subr.mxu0 %v1778
    %2924 = vmatpush1.msra.mxu0 %v1777
    %2925 = vmatprep.subr.mxu0 %v1782
    %2926 = vmatpush1.msra.mxu0 %v1781
    %2927 = vmatprep.subr.mxu0 %v1786
    %2928 = vmatpush1.msra.mxu0 %v1785
    %2929 = vmatprep.subr.mxu0 %v1790
    %2930 = vmatpush1.msra.mxu0 %v1789
    %2931 = vmatprep.subr.mxu0 %v1794
    %2932 = vmatpush1.msra.mxu0 %v1793
    %2933 = vmatprep.subr.mxu0 %v1798
    %2934 = vmatpush1.msra.mxu0 %v1797
    %2935 = vmatprep.subr.mxu0 %v1802
    %2936 = vmatpush1.msra.mxu0 %v1801
    %2937 = vmatprep.subr.mxu0 %v1806
    %2938 = vmatpush1.msra.mxu0 %v1805
    %2939 = vmatprep.subr.mxu0 %v1810
    %2940 = vmatpush1.msra.mxu0 %v1809
    %2941 = vmatprep.subr.mxu0 %v1814
    %2942 = vmatpush1.msra.mxu0 %v1813
    %2943 = vmatprep.subr.mxu0 %v1818
    %2944 = vmatpush1.msra.mxu0 %v1817
    %2945 = vmatprep.subr.mxu0 %v1822
    %2946 = vmatpush1.msra.mxu0 %v1821
    %2947 = vmatprep.subr.mxu0 %v1826
    %2948 = vmatpush1.msra.mxu0 %v1825
    %2949 = vmatprep.subr.mxu0 %v1830
    %2950 = vmatpush1.msra.mxu0 %v1829
    %2951 = vmatprep.mubr.f32.mxu0 %v2494
    %2952 = vmatmul.mubr.f32.gmra.mrb[0].mxu0 %v2334
    %v2953 = vpop.f32.mrb[0].mxu0
    %v2954 = vadd.f32 %v1845, %v2953
    %v2955 = vpop.f32.mrb[0].mxu0
    %v2956 = vadd.f32 %v1849, %v2955
    %2957 = vdwg.mxu0
    %v2958 = vmul.f32 %v2883, 0.5
    %v2959 = vtanh.pop %v2958
    %v2960 = vmul.f32 %v2959, 0.5
    %v2961 = vadd.f32 %v2960, 0.5
    %v2962 = vmul.f32 %v2885, 0.5
    %v2963 = vtanh.pop %v2962
    %v2964 = vmul.f32 %v2963, 0.5
    %v2965 = vadd.f32 %v2964, 0.5
    %v2966 = vtanh.pop %v2954
    %v2967 = vmul.f32 %v2956, 0.5
    %v2968 = vtanh.pop %v2967
    %v2969 = vmul.f32 %v2968, 0.5
    %v2970 = vadd.f32 %v2969, 0.5
    %v2971 = vmul.f32 %v2965, %v2492
    %v2972 = vmul.f32 %v2961, %v2966
    %v2973 = vadd.f32 %v2971, %v2972
    %v2974 = vtanh.pop %v2973
    %v2975 = vmul.f32 %v2970, %v2974
    %v2976 = vld [vmem:[%s0 + $0x28] sm:$0xff]
    %2977 = vmatprep.subr.mxu0 %v1084
    %2978 = vmatpush1.msra.mxu0 %v1083
    %2979 = vmatprep.subr.mxu0 %v1088
    %2980 = vmatpush1.msra.mxu0 %v1087
    %2981 = vmatprep.subr.mxu0 %v1092
    %2982 = vmatpush1.msra.mxu0 %v1091
    %2983 = vmatprep.subr.mxu0 %v1096
    %2984 = vmatpush1.msra.mxu0 %v1095
    %2985 = vmatprep.subr.mxu0 %v1100
    %2986 = vmatpush1.msra.mxu0 %v1099
    %2987 = vmatprep.subr.mxu0 %v1104
    %2988 = vmatpush1.msra.mxu0 %v1103
    %2989 = vmatprep.subr.mxu0 %v1108
    %2990 = vmatpush1.msra.mxu0 %v1107
    %2991 = vmatprep.subr.mxu0 %v1112
    %2992 = vmatpush1.msra.mxu0 %v1111
    %2993 = vmatprep.subr.mxu0 %v1116
    %2994 = vmatpush1.msra.mxu0 %v1115
    %2995 = vmatprep.subr.mxu0 %v1120
    %2996 = vmatpush1.msra.mxu0 %v1119
    %2997 = vmatprep.subr.mxu0 %v1124
    %2998 = vmatpush1.msra.mxu0 %v1123
    %2999 = vmatprep.subr.mxu0 %v1128
    %3000 = vmatpush1.msra.mxu0 %v1127
    %3001 = vmatprep.subr.mxu0 %v1132
    %3002 = vmatpush1.msra.mxu0 %v1131
    %3003 = vmatprep.subr.mxu0 %v1136
    %3004 = vmatpush1.msra.mxu0 %v1135
    %3005 = vmatprep.subr.mxu0 %v1140
    %3006 = vmatpush1.msra.mxu0 %v1139
    %3007 = vmatprep.subr.mxu0 %v1144
    %3008 = vmatpush1.msra.mxu0 %v1143
    %3009 = vmatprep.subr.mxu0 %v1148
    %3010 = vmatpush1.msra.mxu0 %v1147
    %3011 = vmatprep.subr.mxu0 %v1152
    %3012 = vmatpush1.msra.mxu0 %v1151
    %3013 = vmatprep.subr.mxu0 %v1156
    %3014 = vmatpush1.msra.mxu0 %v1155
    %3015 = vmatprep.subr.mxu0 %v1160
    %3016 = vmatpush1.msra.mxu0 %v1159
    %3017 = vmatprep.subr.mxu0 %v1164
    %3018 = vmatpush1.msra.mxu0 %v1163
    %3019 = vmatprep.subr.mxu0 %v1168
    %3020 = vmatpush1.msra.mxu0 %v1167
    %3021 = vmatprep.subr.mxu0 %v1172
    %3022 = vmatpush1.msra.mxu0 %v1171
    %3023 = vmatprep.subr.mxu0 %v1176
    %3024 = vmatpush1.msra.mxu0 %v1175
    %3025 = vmatprep.subr.mxu0 %v1180
    %3026 = vmatpush1.msra.mxu0 %v1179
    %3027 = vmatprep.subr.mxu0 %v1184
    %3028 = vmatpush1.msra.mxu0 %v1183
    %3029 = vmatprep.subr.mxu0 %v1188
    %3030 = vmatpush1.msra.mxu0 %v1187
    %3031 = vmatprep.subr.mxu0 %v1192
    %3032 = vmatpush1.msra.mxu0 %v1191
    %3033 = vmatprep.subr.mxu0 %v1196
    %3034 = vmatpush1.msra.mxu0 %v1195
    %3035 = vmatprep.subr.mxu0 %v1200
    %3036 = vmatpush1.msra.mxu0 %v1199
    %3037 = vmatprep.subr.mxu0 %v1204
    %3038 = vmatpush1.msra.mxu0 %v1203
    %3039 = vmatprep.subr.mxu0 %v1208
    %3040 = vmatpush1.msra.mxu0 %v1207
    %3041 = vmatprep.mubr.f32.mxu0 %v2655
    %3042 = vmatmul.mubr.f32.gmra.mrb[0].mxu0 %v2976
    %v3043 = vpop.f32.mrb[0].mxu0
    %v3044 = vadd.f32 %v1216, %v3043
    %v3045 = vpop.f32.mrb[0].mxu0
    %v3046 = vadd.f32 %v1220, %v3045
    %3047 = vdwg.mxu0
    %3048 = vmatprep.subr.mxu0 %v1086
    %3049 = vmatpush1.msra.mxu0 %v1085
    %3050 = vmatprep.subr.mxu0 %v1090
    %3051 = vmatpush1.msra.mxu0 %v1089
    %3052 = vmatprep.subr.mxu0 %v1094
    %3053 = vmatpush1.msra.mxu0 %v1093
    %3054 = vmatprep.subr.mxu0 %v1098
    %3055 = vmatpush1.msra.mxu0 %v1097
    %3056 = vmatprep.subr.mxu0 %v1102
    %3057 = vmatpush1.msra.mxu0 %v1101
    %3058 = vmatprep.subr.mxu0 %v1106
    %3059 = vmatpush1.msra.mxu0 %v1105
    %3060 = vmatprep.subr.mxu0 %v1110
    %3061 = vmatpush1.msra.mxu0 %v1109
    %3062 = vmatprep.subr.mxu0 %v1114
    %3063 = vmatpush1.msra.mxu0 %v1113
    %3064 = vmatprep.subr.mxu0 %v1118
    %3065 = vmatpush1.msra.mxu0 %v1117
    %3066 = vmatprep.subr.mxu0 %v1122
    %3067 = vmatpush1.msra.mxu0 %v1121
    %3068 = vmatprep.subr.mxu0 %v1126
    %3069 = vmatpush1.msra.mxu0 %v1125
    %3070 = vmatprep.subr.mxu0 %v1130
    %3071 = vmatpush1.msra.mxu0 %v1129
    %3072 = vmatprep.subr.mxu0 %v1134
    %3073 = vmatpush1.msra.mxu0 %v1133
    %3074 = vmatprep.subr.mxu0 %v1138
    %3075 = vmatpush1.msra.mxu0 %v1137
    %3076 = vmatprep.subr.mxu0 %v1142
    %3077 = vmatpush1.msra.mxu0 %v1141
    %3078 = vmatprep.subr.mxu0 %v1146
    %3079 = vmatpush1.msra.mxu0 %v1145
    %3080 = vmatprep.subr.mxu0 %v1150
    %3081 = vmatpush1.msra.mxu0 %v1149
    %3082 = vmatprep.subr.mxu0 %v1154
    %3083 = vmatpush1.msra.mxu0 %v1153
    %3084 = vmatprep.subr.mxu0 %v1158
    %3085 = vmatpush1.msra.mxu0 %v1157
    %3086 = vmatprep.subr.mxu0 %v1162
    %3087 = vmatpush1.msra.mxu0 %v1161
    %3088 = vmatprep.subr.mxu0 %v1166
    %3089 = vmatpush1.msra.mxu0 %v1165
    %3090 = vmatprep.subr.mxu0 %v1170
    %3091 = vmatpush1.msra.mxu0 %v1169
    %3092 = vmatprep.subr.mxu0 %v1174
    %3093 = vmatpush1.msra.mxu0 %v1173
    %3094 = vmatprep.subr.mxu0 %v1178
    %3095 = vmatpush1.msra.mxu0 %v1177
    %3096 = vmatprep.subr.mxu0 %v1182
    %3097 = vmatpush1.msra.mxu0 %v1181
    %3098 = vmatprep.subr.mxu0 %v1186
    %3099 = vmatpush1.msra.mxu0 %v1185
    %3100 = vmatprep.subr.mxu0 %v1190
    %3101 = vmatpush1.msra.mxu0 %v1189
    %3102 = vmatprep.subr.mxu0 %v1194
    %3103 = vmatpush1.msra.mxu0 %v1193
    %3104 = vmatprep.subr.mxu0 %v1198
    %3105 = vmatpush1.msra.mxu0 %v1197
    %3106 = vmatprep.subr.mxu0 %v1202
    %3107 = vmatpush1.msra.mxu0 %v1201
    %3108 = vmatprep.subr.mxu0 %v1206
    %3109 = vmatpush1.msra.mxu0 %v1205
    %3110 = vmatprep.subr.mxu0 %v1210
    %3111 = vmatpush1.msra.mxu0 %v1209
    %3112 = vmatprep.mubr.f32.mxu0 %v2655
    %3113 = vmatmul.mubr.f32.gmra.mrb[0].mxu0 %v2976
    %v3114 = vpop.f32.mrb[0].mxu0
    %v3115 = vadd.f32 %v1224, %v3114
    %v3116 = vpop.f32.mrb[0].mxu0
    %v3117 = vadd.f32 %v1228, %v3116
    %3118 = vdwg.mxu0
    %v3119 = vmul.f32 %v3044, 0.5
    %v3120 = vtanh.pop %v3119
    %v3121 = vmul.f32 %v3120, 0.5
    %v3122 = vadd.f32 %v3121, 0.5
    %v3123 = vmul.f32 %v3046, 0.5
    %v3124 = vtanh.pop %v3123
    %v3125 = vmul.f32 %v3124, 0.5
    %v3126 = vadd.f32 %v3125, 0.5
    %v3127 = vtanh.pop %v3115
    %v3128 = vmul.f32 %v3117, 0.5
    %v3129 = vtanh.pop %v3128
    %v3130 = vmul.f32 %v3129, 0.5
    %v3131 = vadd.f32 %v3130, 0.5
    %v3132 = vmul.f32 %v3126, %v2653
    %v3133 = vmul.f32 %v3122, %v3127
    %v3134 = vadd.f32 %v3132, %v3133
    %v3135 = vtanh.pop %v3134
    %v3136 = vmul.f32 %v3131, %v3135
    %3137 = vmatprep.subr.mxu0 %v1394
    %3138 = vmatpush1.msra.mxu0 %v1393
    %3139 = vmatprep.subr.mxu0 %v1398
    %3140 = vmatpush1.msra.mxu0 %v1397
    %3141 = vmatprep.subr.mxu0 %v1402
    %3142 = vmatpush1.msra.mxu0 %v1401
    %3143 = vmatprep.subr.mxu0 %v1406
    %3144 = vmatpush1.msra.mxu0 %v1405
    %3145 = vmatprep.subr.mxu0 %v1410
    %3146 = vmatpush1.msra.mxu0 %v1409
    %3147 = vmatprep.subr.mxu0 %v1414
    %3148 = vmatpush1.msra.mxu0 %v1413
    %3149 = vmatprep.subr.mxu0 %v1418
    %3150 = vmatpush1.msra.mxu0 %v1417
    %3151 = vmatprep.subr.mxu0 %v1422
    %3152 = vmatpush1.msra.mxu0 %v1421
    %3153 = vmatprep.subr.mxu0 %v1426
    %3154 = vmatpush1.msra.mxu0 %v1425
    %3155 = vmatprep.subr.mxu0 %v1430
    %3156 = vmatpush1.msra.mxu0 %v1429
    %3157 = vmatprep.subr.mxu0 %v1434
    %3158 = vmatpush1.msra.mxu0 %v1433
    %3159 = vmatprep.subr.mxu0 %v1438
    %3160 = vmatpush1.msra.mxu0 %v1437
    %3161 = vmatprep.subr.mxu0 %v1442
    %3162 = vmatpush1.msra.mxu0 %v1441
    %3163 = vmatprep.subr.mxu0 %v1446
    %3164 = vmatpush1.msra.mxu0 %v1445
    %3165 = vmatprep.subr.mxu0 %v1450
    %3166 = vmatpush1.msra.mxu0 %v1449
    %3167 = vmatprep.subr.mxu0 %v1454
    %3168 = vmatpush1.msra.mxu0 %v1453
    %3169 = vmatprep.subr.mxu0 %v1458
    %3170 = vmatpush1.msra.mxu0 %v1457
    %3171 = vmatprep.subr.mxu0 %v1462
    %3172 = vmatpush1.msra.mxu0 %v1461
    %3173 = vmatprep.subr.mxu0 %v1466
    %3174 = vmatpush1.msra.mxu0 %v1465
    %3175 = vmatprep.subr.mxu0 %v1470
    %3176 = vmatpush1.msra.mxu0 %v1469
    %3177 = vmatprep.subr.mxu0 %v1474
    %3178 = vmatpush1.msra.mxu0 %v1473
    %3179 = vmatprep.subr.mxu0 %v1478
    %3180 = vmatpush1.msra.mxu0 %v1477
    %3181 = vmatprep.subr.mxu0 %v1482
    %3182 = vmatpush1.msra.mxu0 %v1481
    %3183 = vmatprep.subr.mxu0 %v1486
    %3184 = vmatpush1.msra.mxu0 %v1485
    %3185 = vmatprep.subr.mxu0 %v1490
    %3186 = vmatpush1.msra.mxu0 %v1489
    %3187 = vmatprep.subr.mxu0 %v1494
    %3188 = vmatpush1.msra.mxu0 %v1493
    %3189 = vmatprep.subr.mxu0 %v1498
    %3190 = vmatpush1.msra.mxu0 %v1497
    %3191 = vmatprep.subr.mxu0 %v1502
    %3192 = vmatpush1.msra.mxu0 %v1501
    %3193 = vmatprep.subr.mxu0 %v1506
    %3194 = vmatpush1.msra.mxu0 %v1505
    %3195 = vmatprep.subr.mxu0 %v1510
    %3196 = vmatpush1.msra.mxu0 %v1509
    %3197 = vmatprep.subr.mxu0 %v1514
    %3198 = vmatpush1.msra.mxu0 %v1513
    %3199 = vmatprep.subr.mxu0 %v1518
    %3200 = vmatpush1.msra.mxu0 %v1517
    %3201 = vmatprep.mubr.f32.mxu0 %v2815
    %3202 = vmatmul.mubr.f32.gmra.mrb[0].mxu0 %v2655
    %v3203 = vpop.f32.mrb[0].mxu0
    %v3204 = vadd.f32 %v1526, %v3203
    %v3205 = vpop.f32.mrb[0].mxu0
    %v3206 = vadd.f32 %v1530, %v3205
    %3207 = vdwg.mxu0
    %3208 = vmatprep.subr.mxu0 %v1396
    %3209 = vmatpush1.msra.mxu0 %v1395
    %3210 = vmatprep.subr.mxu0 %v1400
    %3211 = vmatpush1.msra.mxu0 %v1399
    %3212 = vmatprep.subr.mxu0 %v1404
    %3213 = vmatpush1.msra.mxu0 %v1403
    %3214 = vmatprep.subr.mxu0 %v1408
    %3215 = vmatpush1.msra.mxu0 %v1407
    %3216 = vmatprep.subr.mxu0 %v1412
    %3217 = vmatpush1.msra.mxu0 %v1411
    %3218 = vmatprep.subr.mxu0 %v1416
    %3219 = vmatpush1.msra.mxu0 %v1415
    %3220 = vmatprep.subr.mxu0 %v1420
    %3221 = vmatpush1.msra.mxu0 %v1419
    %3222 = vmatprep.subr.mxu0 %v1424
    %3223 = vmatpush1.msra.mxu0 %v1423
    %3224 = vmatprep.subr.mxu0 %v1428
    %3225 = vmatpush1.msra.mxu0 %v1427
    %3226 = vmatprep.subr.mxu0 %v1432
    %3227 = vmatpush1.msra.mxu0 %v1431
    %3228 = vmatprep.subr.mxu0 %v1436
    %3229 = vmatpush1.msra.mxu0 %v1435
    %3230 = vmatprep.subr.mxu0 %v1440
    %3231 = vmatpush1.msra.mxu0 %v1439
    %3232 = vmatprep.subr.mxu0 %v1444
    %3233 = vmatpush1.msra.mxu0 %v1443
    %3234 = vmatprep.subr.mxu0 %v1448
    %3235 = vmatpush1.msra.mxu0 %v1447
    %3236 = vmatprep.subr.mxu0 %v1452
    %3237 = vmatpush1.msra.mxu0 %v1451
    %3238 = vmatprep.subr.mxu0 %v1456
    %3239 = vmatpush1.msra.mxu0 %v1455
    %3240 = vmatprep.subr.mxu0 %v1460
    %3241 = vmatpush1.msra.mxu0 %v1459
    %3242 = vmatprep.subr.mxu0 %v1464
    %3243 = vmatpush1.msra.mxu0 %v1463
    %3244 = vmatprep.subr.mxu0 %v1468
    %3245 = vmatpush1.msra.mxu0 %v1467
    %3246 = vmatprep.subr.mxu0 %v1472
    %3247 = vmatpush1.msra.mxu0 %v1471
    %3248 = vmatprep.subr.mxu0 %v1476
    %3249 = vmatpush1.msra.mxu0 %v1475
    %3250 = vmatprep.subr.mxu0 %v1480
    %3251 = vmatpush1.msra.mxu0 %v1479
    %3252 = vmatprep.subr.mxu0 %v1484
    %3253 = vmatpush1.msra.mxu0 %v1483
    %3254 = vmatprep.subr.mxu0 %v1488
    %3255 = vmatpush1.msra.mxu0 %v1487
    %3256 = vmatprep.subr.mxu0 %v1492
    %3257 = vmatpush1.msra.mxu0 %v1491
    %3258 = vmatprep.subr.mxu0 %v1496
    %3259 = vmatpush1.msra.mxu0 %v1495
    %3260 = vmatprep.subr.mxu0 %v1500
    %3261 = vmatpush1.msra.mxu0 %v1499
    %3262 = vmatprep.subr.mxu0 %v1504
    %3263 = vmatpush1.msra.mxu0 %v1503
    %3264 = vmatprep.subr.mxu0 %v1508
    %3265 = vmatpush1.msra.mxu0 %v1507
    %3266 = vmatprep.subr.mxu0 %v1512
    %3267 = vmatpush1.msra.mxu0 %v1511
    %3268 = vmatprep.subr.mxu0 %v1516
    %3269 = vmatpush1.msra.mxu0 %v1515
    %3270 = vmatprep.subr.mxu0 %v1520
    %3271 = vmatpush1.msra.mxu0 %v1519
    %3272 = vmatprep.mubr.f32.mxu0 %v2815
    %3273 = vmatmul.mubr.f32.gmra.mrb[0].mxu0 %v2655
    %v3274 = vpop.f32.mrb[0].mxu0
    %v3275 = vadd.f32 %v1534, %v3274
    %v3276 = vpop.f32.mrb[0].mxu0
    %v3277 = vadd.f32 %v1538, %v3276
    %3278 = vdwg.mxu0
    %v3279 = vmul.f32 %v3204, 0.5
    %v3280 = vtanh.pop %v3279
    %v3281 = vmul.f32 %v3280, 0.5
    %v3282 = vadd.f32 %v3281, 0.5
    %v3283 = vmul.f32 %v3206, 0.5
    %v3284 = vtanh.pop %v3283
    %v3285 = vmul.f32 %v3284, 0.5
    %v3286 = vadd.f32 %v3285, 0.5
    %v3287 = vtanh.pop %v3275
    %v3288 = vmul.f32 %v3277, 0.5
    %v3289 = vtanh.pop %v3288
    %v3290 = vmul.f32 %v3289, 0.5
    %v3291 = vadd.f32 %v3290, 0.5
    %v3292 = vmul.f32 %v3286, %v2813
    %v3293 = vmul.f32 %v3282, %v3287
    %v3294 = vadd.f32 %v3292, %v3293
    %v3295 = vtanh.pop %v3294
    %v3296 = vmul.f32 %v3291, %v3295
    %3297 = vmatprep.subr.mxu0 %v1704
    %3298 = vmatpush1.msra.mxu0 %v1703
    %3299 = vmatprep.subr.mxu0 %v1708
    %3300 = vmatpush1.msra.mxu0 %v1707
    %3301 = vmatprep.subr.mxu0 %v1712
    %3302 = vmatpush1.msra.mxu0 %v1711
    %3303 = vmatprep.subr.mxu0 %v1716
    %3304 = vmatpush1.msra.mxu0 %v1715
    %3305 = vmatprep.subr.mxu0 %v1720
    %3306 = vmatpush1.msra.mxu0 %v1719
    %3307 = vmatprep.subr.mxu0 %v1724
    %3308 = vmatpush1.msra.mxu0 %v1723
    %3309 = vmatprep.subr.mxu0 %v1728
    %3310 = vmatpush1.msra.mxu0 %v1727
    %3311 = vmatprep.subr.mxu0 %v1732
    %3312 = vmatpush1.msra.mxu0 %v1731
    %3313 = vmatprep.subr.mxu0 %v1736
    %3314 = vmatpush1.msra.mxu0 %v1735
    %3315 = vmatprep.subr.mxu0 %v1740
    %3316 = vmatpush1.msra.mxu0 %v1739
    %3317 = vmatprep.subr.mxu0 %v1744
    %3318 = vmatpush1.msra.mxu0 %v1743
    %3319 = vmatprep.subr.mxu0 %v1748
    %3320 = vmatpush1.msra.mxu0 %v1747
    %3321 = vmatprep.subr.mxu0 %v1752
    %3322 = vmatpush1.msra.mxu0 %v1751
    %3323 = vmatprep.subr.mxu0 %v1756
    %3324 = vmatpush1.msra.mxu0 %v1755
    %3325 = vmatprep.subr.mxu0 %v1760
    %3326 = vmatpush1.msra.mxu0 %v1759
    %3327 = vmatprep.subr.mxu0 %v1764
    %3328 = vmatpush1.msra.mxu0 %v1763
    %3329 = vmatprep.subr.mxu0 %v1768
    %3330 = vmatpush1.msra.mxu0 %v1767
    %3331 = vmatprep.subr.mxu0 %v1772
    %3332 = vmatpush1.msra.mxu0 %v1771
    %3333 = vmatprep.subr.mxu0 %v1776
    %3334 = vmatpush1.msra.mxu0 %v1775
    %3335 = vmatprep.subr.mxu0 %v1780
    %3336 = vmatpush1.msra.mxu0 %v1779
    %3337 = vmatprep.subr.mxu0 %v1784
    %3338 = vmatpush1.msra.mxu0 %v1783
    %3339 = vmatprep.subr.mxu0 %v1788
    %3340 = vmatpush1.msra.mxu0 %v1787
    %3341 = vmatprep.subr.mxu0 %v1792
    %3342 = vmatpush1.msra.mxu0 %v1791
    %3343 = vmatprep.subr.mxu0 %v1796
    %3344 = vmatpush1.msra.mxu0 %v1795
    %3345 = vmatprep.subr.mxu0 %v1800
    %3346 = vmatpush1.msra.mxu0 %v1799
    %3347 = vmatprep.subr.mxu0 %v1804
    %3348 = vmatpush1.msra.mxu0 %v1803
    %3349 = vmatprep.subr.mxu0 %v1808
    %3350 = vmatpush1.msra.mxu0 %v1807
    %3351 = vmatprep.subr.mxu0 %v1812
    %3352 = vmatpush1.msra.mxu0 %v1811
    %3353 = vmatprep.subr.mxu0 %v1816
    %3354 = vmatpush1.msra.mxu0 %v1815
    %3355 = vmatprep.subr.mxu0 %v1820
    %3356 = vmatpush1.msra.mxu0 %v1819
    %3357 = vmatprep.subr.mxu0 %v1824
    %3358 = vmatpush1.msra.mxu0 %v1823
    %3359 = vmatprep.subr.mxu0 %v1828
    %3360 = vmatpush1.msra.mxu0 %v1827
    %3361 = vmatprep.mubr.f32.mxu0 %v2975
    %3362 = vmatmul.mubr.f32.gmra.mrb[0].mxu0 %v2815
    %v3363 = vpop.f32.mrb[0].mxu0
    %v3364 = vadd.f32 %v1837, %v3363
    %v3365 = vpop.f32.mrb[0].mxu0
    %v3366 = vadd.f32 %v1841, %v3365
    %3367 = vdwg.mxu0
    %3368 = vmatprep.subr.mxu0 %v1706
    %3369 = vmatpush1.msra.mxu0 %v1705
    %3370 = vmatprep.subr.mxu0 %v1710
    %3371 = vmatpush1.msra.mxu0 %v1709
    %3372 = vmatprep.subr.mxu0 %v1714
    %3373 = vmatpush1.msra.mxu0 %v1713
    %3374 = vmatprep.subr.mxu0 %v1718
    %3375 = vmatpush1.msra.mxu0 %v1717
    %3376 = vmatprep.subr.mxu0 %v1722
    %3377 = vmatpush1.msra.mxu0 %v1721
    %3378 = vmatprep.subr.mxu0 %v1726
    %3379 = vmatpush1.msra.mxu0 %v1725
    %3380 = vmatprep.subr.mxu0 %v1730
    %3381 = vmatpush1.msra.mxu0 %v1729
    %3382 = vmatprep.subr.mxu0 %v1734
    %3383 = vmatpush1.msra.mxu0 %v1733
    %3384 = vmatprep.subr.mxu0 %v1738
    %3385 = vmatpush1.msra.mxu0 %v1737
    %3386 = vmatprep.subr.mxu0 %v1742
    %3387 = vmatpush1.msra.mxu0 %v1741
    %3388 = vmatprep.subr.mxu0 %v1746
    %3389 = vmatpush1.msra.mxu0 %v1745
    %3390 = vmatprep.subr.mxu0 %v1750
    %3391 = vmatpush1.msra.mxu0 %v1749
    %3392 = vmatprep.subr.mxu0 %v1754
    %3393 = vmatpush1.msra.mxu0 %v1753
    %3394 = vmatprep.subr.mxu0 %v1758
    %3395 = vmatpush1.msra.mxu0 %v1757
    %3396 = vmatprep.subr.mxu0 %v1762
    %3397 = vmatpush1.msra.mxu0 %v1761
    %3398 = vmatprep.subr.mxu0 %v1766
    %3399 = vmatpush1.msra.mxu0 %v1765
    %3400 = vmatprep.subr.mxu0 %v1770
    %3401 = vmatpush1.msra.mxu0 %v1769
    %3402 = vmatprep.subr.mxu0 %v1774
    %3403 = vmatpush1.msra.mxu0 %v1773
    %3404 = vmatprep.subr.mxu0 %v1778
    %3405 = vmatpush1.msra.mxu0 %v1777
    %3406 = vmatprep.subr.mxu0 %v1782
    %3407 = vmatpush1.msra.mxu0 %v1781
    %3408 = vmatprep.subr.mxu0 %v1786
    %3409 = vmatpush1.msra.mxu0 %v1785
    %3410 = vmatprep.subr.mxu0 %v1790
    %3411 = vmatpush1.msra.mxu0 %v1789
    %3412 = vmatprep.subr.mxu0 %v1794
    %3413 = vmatpush1.msra.mxu0 %v1793
    %3414 = vmatprep.subr.mxu0 %v1798
    %3415 = vmatpush1.msra.mxu0 %v1797
    %3416 = vmatprep.subr.mxu0 %v1802
    %3417 = vmatpush1.msra.mxu0 %v1801
    %3418 = vmatprep.subr.mxu0 %v1806
    %3419 = vmatpush1.msra.mxu0 %v1805
    %3420 = vmatprep.subr.mxu0 %v1810
    %3421 = vmatpush1.msra.mxu0 %v1809
    %3422 = vmatprep.subr.mxu0 %v1814
    %3423 = vmatpush1.msra.mxu0 %v1813
    %3424 = vmatprep.subr.mxu0 %v1818
    %3425 = vmatpush1.msra.mxu0 %v1817
    %3426 = vmatprep.subr.mxu0 %v1822
    %3427 = vmatpush1.msra.mxu0 %v1821
    %3428 = vmatprep.subr.mxu0 %v1826
    %3429 = vmatpush1.msra.mxu0 %v1825
    %3430 = vmatprep.subr.mxu0 %v1830
    %3431 = vmatpush1.msra.mxu0 %v1829
    %3432 = vmatprep.mubr.f32.mxu0 %v2975
    %3433 = vmatmul.mubr.f32.gmra.mrb[0].mxu0 %v2815
    %v3434 = vpop.f32.mrb[0].mxu0
    %v3435 = vadd.f32 %v1845, %v3434
    %v3436 = vpop.f32.mrb[0].mxu0
    %v3437 = vadd.f32 %v1849, %v3436
    %3438 = vdwg.mxu0
    %v3439 = vmul.f32 %v3364, 0.5
    %v3440 = vtanh.pop %v3439
    %v3441 = vmul.f32 %v3440, 0.5
    %v3442 = vadd.f32 %v3441, 0.5
    %v3443 = vmul.f32 %v3366, 0.5
    %v3444 = vtanh.pop %v3443
    %v3445 = vmul.f32 %v3444, 0.5
    %v3446 = vadd.f32 %v3445, 0.5
    %v3447 = vtanh.pop %v3435
    %v3448 = vmul.f32 %v3437, 0.5
    %v3449 = vtanh.pop %v3448
    %v3450 = vmul.f32 %v3449, 0.5
    %v3451 = vadd.f32 %v3450, 0.5
    %v3452 = vmul.f32 %v3446, %v2973
    %v3453 = vmul.f32 %v3442, %v3447
    %v3454 = vadd.f32 %v3452, %v3453
    %v3455 = vtanh.pop %v3454
    %v3456 = vmul.f32 %v3451, %v3455
    %v3457 = vld [vmem:[%s0 + $0x30] sm:$0xff]
    %3458 = vmatprep.subr.mxu0 %v1084
    %3459 = vmatpush1.msra.mxu0 %v1083
    %3460 = vmatprep.subr.mxu0 %v1088
    %3461 = vmatpush1.msra.mxu0 %v1087
    %3462 = vmatprep.subr.mxu0 %v1092
    %3463 = vmatpush1.msra.mxu0 %v1091
    %3464 = vmatprep.subr.mxu0 %v1096
    %3465 = vmatpush1.msra.mxu0 %v1095
    %3466 = vmatprep.subr.mxu0 %v1100
    %3467 = vmatpush1.msra.mxu0 %v1099
    %3468 = vmatprep.subr.mxu0 %v1104
    %3469 = vmatpush1.msra.mxu0 %v1103
    %3470 = vmatprep.subr.mxu0 %v1108
    %3471 = vmatpush1.msra.mxu0 %v1107
    %3472 = vmatprep.subr.mxu0 %v1112
    %3473 = vmatpush1.msra.mxu0 %v1111
    %3474 = vmatprep.subr.mxu0 %v1116
    %3475 = vmatpush1.msra.mxu0 %v1115
    %3476 = vmatprep.subr.mxu0 %v1120
    %3477 = vmatpush1.msra.mxu0 %v1119
    %3478 = vmatprep.subr.mxu0 %v1124
    %3479 = vmatpush1.msra.mxu0 %v1123
    %3480 = vmatprep.subr.mxu0 %v1128
    %3481 = vmatpush1.msra.mxu0 %v1127
    %3482 = vmatprep.subr.mxu0 %v1132
    %3483 = vmatpush1.msra.mxu0 %v1131
    %3484 = vmatprep.subr.mxu0 %v1136
    %3485 = vmatpush1.msra.mxu0 %v1135
    %3486 = vmatprep.subr.mxu0 %v1140
    %3487 = vmatpush1.msra.mxu0 %v1139
    %3488 = vmatprep.subr.mxu0 %v1144
    %3489 = vmatpush1.msra.mxu0 %v1143
    %3490 = vmatprep.subr.mxu0 %v1148
    %3491 = vmatpush1.msra.mxu0 %v1147
    %3492 = vmatprep.subr.mxu0 %v1152
    %3493 = vmatpush1.msra.mxu0 %v1151
    %3494 = vmatprep.subr.mxu0 %v1156
    %3495 = vmatpush1.msra.mxu0 %v1155
    %3496 = vmatprep.subr.mxu0 %v1160
    %3497 = vmatpush1.msra.mxu0 %v1159
    %3498 = vmatprep.subr.mxu0 %v1164
    %3499 = vmatpush1.msra.mxu0 %v1163
    %3500 = vmatprep.subr.mxu0 %v1168
    %3501 = vmatpush1.msra.mxu0 %v1167
    %3502 = vmatprep.subr.mxu0 %v1172
    %3503 = vmatpush1.msra.mxu0 %v1171
    %3504 = vmatprep.subr.mxu0 %v1176
    %3505 = vmatpush1.msra.mxu0 %v1175
    %3506 = vmatprep.subr.mxu0 %v1180
    %3507 = vmatpush1.msra.mxu0 %v1179
    %3508 = vmatprep.subr.mxu0 %v1184
    %3509 = vmatpush1.msra.mxu0 %v1183
    %3510 = vmatprep.subr.mxu0 %v1188
    %3511 = vmatpush1.msra.mxu0 %v1187
    %3512 = vmatprep.subr.mxu0 %v1192
    %3513 = vmatpush1.msra.mxu0 %v1191
    %3514 = vmatprep.subr.mxu0 %v1196
    %3515 = vmatpush1.msra.mxu0 %v1195
    %3516 = vmatprep.subr.mxu0 %v1200
    %3517 = vmatpush1.msra.mxu0 %v1199
    %3518 = vmatprep.subr.mxu0 %v1204
    %3519 = vmatpush1.msra.mxu0 %v1203
    %3520 = vmatprep.subr.mxu0 %v1208
    %3521 = vmatpush1.msra.mxu0 %v1207
    %3522 = vmatprep.mubr.f32.mxu0 %v3136
    %3523 = vmatmul.mubr.f32.gmra.mrb[0].mxu0 %v3457
    %v3524 = vpop.f32.mrb[0].mxu0
    %v3525 = vadd.f32 %v1216, %v3524
    %v3526 = vpop.f32.mrb[0].mxu0
    %v3527 = vadd.f32 %v1220, %v3526
    %3528 = vdwg.mxu0
    %3529 = vmatprep.subr.mxu0 %v1086
    %3530 = vmatpush1.msra.mxu0 %v1085
    %3531 = vmatprep.subr.mxu0 %v1090
    %3532 = vmatpush1.msra.mxu0 %v1089
    %3533 = vmatprep.subr.mxu0 %v1094
    %3534 = vmatpush1.msra.mxu0 %v1093
    %3535 = vmatprep.subr.mxu0 %v1098
    %3536 = vmatpush1.msra.mxu0 %v1097
    %3537 = vmatprep.subr.mxu0 %v1102
    %3538 = vmatpush1.msra.mxu0 %v1101
    %3539 = vmatprep.subr.mxu0 %v1106
    %3540 = vmatpush1.msra.mxu0 %v1105
    %3541 = vmatprep.subr.mxu0 %v1110
    %3542 = vmatpush1.msra.mxu0 %v1109
    %3543 = vmatprep.subr.mxu0 %v1114
    %3544 = vmatpush1.msra.mxu0 %v1113
    %3545 = vmatprep.subr.mxu0 %v1118
    %3546 = vmatpush1.msra.mxu0 %v1117
    %3547 = vmatprep.subr.mxu0 %v1122
    %3548 = vmatpush1.msra.mxu0 %v1121
    %3549 = vmatprep.subr.mxu0 %v1126
    %3550 = vmatpush1.msra.mxu0 %v1125
    %3551 = vmatprep.subr.mxu0 %v1130
    %3552 = vmatpush1.msra.mxu0 %v1129
    %3553 = vmatprep.subr.mxu0 %v1134
    %3554 = vmatpush1.msra.mxu0 %v1133
    %3555 = vmatprep.subr.mxu0 %v1138
    %3556 = vmatpush1.msra.mxu0 %v1137
    %3557 = vmatprep.subr.mxu0 %v1142
    %3558 = vmatpush1.msra.mxu0 %v1141
    %3559 = vmatprep.subr.mxu0 %v1146
    %3560 = vmatpush1.msra.mxu0 %v1145
    %3561 = vmatprep.subr.mxu0 %v1150
    %3562 = vmatpush1.msra.mxu0 %v1149
    %3563 = vmatprep.subr.mxu0 %v1154
    %3564 = vmatpush1.msra.mxu0 %v1153
    %3565 = vmatprep.subr.mxu0 %v1158
    %3566 = vmatpush1.msra.mxu0 %v1157
    %3567 = vmatprep.subr.mxu0 %v1162
    %3568 = vmatpush1.msra.mxu0 %v1161
    %3569 = vmatprep.subr.mxu0 %v1166
    %3570 = vmatpush1.msra.mxu0 %v1165
    %3571 = vmatprep.subr.mxu0 %v1170
    %3572 = vmatpush1.msra.mxu0 %v1169
    %3573 = vmatprep.subr.mxu0 %v1174
    %3574 = vmatpush1.msra.mxu0 %v1173
    %3575 = vmatprep.subr.mxu0 %v1178
    %3576 = vmatpush1.msra.mxu0 %v1177
    %3577 = vmatprep.subr.mxu0 %v1182
    %3578 = vmatpush1.msra.mxu0 %v1181
    %3579 = vmatprep.subr.mxu0 %v1186
    %3580 = vmatpush1.msra.mxu0 %v1185
    %3581 = vmatprep.subr.mxu0 %v1190
    %3582 = vmatpush1.msra.mxu0 %v1189
    %3583 = vmatprep.subr.mxu0 %v1194
    %3584 = vmatpush1.msra.mxu0 %v1193
    %3585 = vmatprep.subr.mxu0 %v1198
    %3586 = vmatpush1.msra.mxu0 %v1197
    %3587 = vmatprep.subr.mxu0 %v1202
    %3588 = vmatpush1.msra.mxu0 %v1201
    %3589 = vmatprep.subr.mxu0 %v1206
    %3590 = vmatpush1.msra.mxu0 %v1205
    %3591 = vmatprep.subr.mxu0 %v1210
    %3592 = vmatpush1.msra.mxu0 %v1209
    %3593 = vmatprep.mubr.f32.mxu0 %v3136
    %3594 = vmatmul.mubr.f32.gmra.mrb[0].mxu0 %v3457
    %v3595 = vpop.f32.mrb[0].mxu0
    %v3596 = vadd.f32 %v1224, %v3595
    %v3597 = vpop.f32.mrb[0].mxu0
    %v3598 = vadd.f32 %v1228, %v3597
    %3599 = vdwg.mxu0
    %v3600 = vmul.f32 %v3525, 0.5
    %v3601 = vtanh.pop %v3600
    %v3602 = vmul.f32 %v3601, 0.5
    %v3603 = vadd.f32 %v3602, 0.5
    %v3604 = vmul.f32 %v3527, 0.5
    %v3605 = vtanh.pop %v3604
    %v3606 = vmul.f32 %v3605, 0.5
    %v3607 = vadd.f32 %v3606, 0.5
    %v3608 = vtanh.pop %v3596
    %v3609 = vmul.f32 %v3598, 0.5
    %v3610 = vtanh.pop %v3609
    %v3611 = vmul.f32 %v3610, 0.5
    %v3612 = vadd.f32 %v3611, 0.5
    %v3613 = vmul.f32 %v3607, %v3134
    %v3614 = vmul.f32 %v3603, %v3608
    %v3615 = vadd.f32 %v3613, %v3614
    %v3616 = vtanh.pop %v3615
    %v3617 = vmul.f32 %v3612, %v3616
    %3618 = vmatprep.subr.mxu0 %v1394
    %3619 = vmatpush1.msra.mxu0 %v1393
    %3620 = vmatprep.subr.mxu0 %v1398
    %3621 = vmatpush1.msra.mxu0 %v1397
    %3622 = vmatprep.subr.mxu0 %v1402
    %3623 = vmatpush1.msra.mxu0 %v1401
    %3624 = vmatprep.subr.mxu0 %v1406
    %3625 = vmatpush1.msra.mxu0 %v1405
    %3626 = vmatprep.subr.mxu0 %v1410
    %3627 = vmatpush1.msra.mxu0 %v1409
    %3628 = vmatprep.subr.mxu0 %v1414
    %3629 = vmatpush1.msra.mxu0 %v1413
    %3630 = vmatprep.subr.mxu0 %v1418
    %3631 = vmatpush1.msra.mxu0 %v1417
    %3632 = vmatprep.subr.mxu0 %v1422
    %3633 = vmatpush1.msra.mxu0 %v1421
    %3634 = vmatprep.subr.mxu0 %v1426
    %3635 = vmatpush1.msra.mxu0 %v1425
    %3636 = vmatprep.subr.mxu0 %v1430
    %3637 = vmatpush1.msra.mxu0 %v1429
    %3638 = vmatprep.subr.mxu0 %v1434
    %3639 = vmatpush1.msra.mxu0 %v1433
    %3640 = vmatprep.subr.mxu0 %v1438
    %3641 = vmatpush1.msra.mxu0 %v1437
    %3642 = vmatprep.subr.mxu0 %v1442
    %3643 = vmatpush1.msra.mxu0 %v1441
    %3644 = vmatprep.subr.mxu0 %v1446
    %3645 = vmatpush1.msra.mxu0 %v1445
    %3646 = vmatprep.subr.mxu0 %v1450
    %3647 = vmatpush1.msra.mxu0 %v1449
    %3648 = vmatprep.subr.mxu0 %v1454
    %3649 = vmatpush1.msra.mxu0 %v1453
    %3650 = vmatprep.subr.mxu0 %v1458
    %3651 = vmatpush1.msra.mxu0 %v1457
    %3652 = vmatprep.subr.mxu0 %v1462
    %3653 = vmatpush1.msra.mxu0 %v1461
    %3654 = vmatprep.subr.mxu0 %v1466
    %3655 = vmatpush1.msra.mxu0 %v1465
    %3656 = vmatprep.subr.mxu0 %v1470
    %3657 = vmatpush1.msra.mxu0 %v1469
    %3658 = vmatprep.subr.mxu0 %v1474
    %3659 = vmatpush1.msra.mxu0 %v1473
    %3660 = vmatprep.subr.mxu0 %v1478
    %3661 = vmatpush1.msra.mxu0 %v1477
    %3662 = vmatprep.subr.mxu0 %v1482
    %3663 = vmatpush1.msra.mxu0 %v1481
    %3664 = vmatprep.subr.mxu0 %v1486
    %3665 = vmatpush1.msra.mxu0 %v1485
    %3666 = vmatprep.subr.mxu0 %v1490
    %3667 = vmatpush1.msra.mxu0 %v1489
    %3668 = vmatprep.subr.mxu0 %v1494
    %3669 = vmatpush1.msra.mxu0 %v1493
    %3670 = vmatprep.subr.mxu0 %v1498
    %3671 = vmatpush1.msra.mxu0 %v1497
    %3672 = vmatprep.subr.mxu0 %v1502
    %3673 = vmatpush1.msra.mxu0 %v1501
    %3674 = vmatprep.subr.mxu0 %v1506
    %3675 = vmatpush1.msra.mxu0 %v1505
    %3676 = vmatprep.subr.mxu0 %v1510
    %3677 = vmatpush1.msra.mxu0 %v1509
    %3678 = vmatprep.subr.mxu0 %v1514
    %3679 = vmatpush1.msra.mxu0 %v1513
    %3680 = vmatprep.subr.mxu0 %v1518
    %3681 = vmatpush1.msra.mxu0 %v1517
    %3682 = vmatprep.mubr.f32.mxu0 %v3296
    %3683 = vmatmul.mubr.f32.gmra.mrb[0].mxu0 %v3136
    %v3684 = vpop.f32.mrb[0].mxu0
    %v3685 = vadd.f32 %v1526, %v3684
    %v3686 = vpop.f32.mrb[0].mxu0
    %v3687 = vadd.f32 %v1530, %v3686
    %3688 = vdwg.mxu0
    %3689 = vmatprep.subr.mxu0 %v1396
    %3690 = vmatpush1.msra.mxu0 %v1395
    %3691 = vmatprep.subr.mxu0 %v1400
    %3692 = vmatpush1.msra.mxu0 %v1399
    %3693 = vmatprep.subr.mxu0 %v1404
    %3694 = vmatpush1.msra.mxu0 %v1403
    %3695 = vmatprep.subr.mxu0 %v1408
    %3696 = vmatpush1.msra.mxu0 %v1407
    %3697 = vmatprep.subr.mxu0 %v1412
    %3698 = vmatpush1.msra.mxu0 %v1411
    %3699 = vmatprep.subr.mxu0 %v1416
    %3700 = vmatpush1.msra.mxu0 %v1415
    %3701 = vmatprep.subr.mxu0 %v1420
    %3702 = vmatpush1.msra.mxu0 %v1419
    %3703 = vmatprep.subr.mxu0 %v1424
    %3704 = vmatpush1.msra.mxu0 %v1423
    %3705 = vmatprep.subr.mxu0 %v1428
    %3706 = vmatpush1.msra.mxu0 %v1427
    %3707 = vmatprep.subr.mxu0 %v1432
    %3708 = vmatpush1.msra.mxu0 %v1431
    %3709 = vmatprep.subr.mxu0 %v1436
    %3710 = vmatpush1.msra.mxu0 %v1435
    %3711 = vmatprep.subr.mxu0 %v1440
    %3712 = vmatpush1.msra.mxu0 %v1439
    %3713 = vmatprep.subr.mxu0 %v1444
    %3714 = vmatpush1.msra.mxu0 %v1443
    %3715 = vmatprep.subr.mxu0 %v1448
    %3716 = vmatpush1.msra.mxu0 %v1447
    %3717 = vmatprep.subr.mxu0 %v1452
    %3718 = vmatpush1.msra.mxu0 %v1451
    %3719 = vmatprep.subr.mxu0 %v1456
    %3720 = vmatpush1.msra.mxu0 %v1455
    %3721 = vmatprep.subr.mxu0 %v1460
    %3722 = vmatpush1.msra.mxu0 %v1459
    %3723 = vmatprep.subr.mxu0 %v1464
    %3724 = vmatpush1.msra.mxu0 %v1463
    %3725 = vmatprep.subr.mxu0 %v1468
    %3726 = vmatpush1.msra.mxu0 %v1467
    %3727 = vmatprep.subr.mxu0 %v1472
    %3728 = vmatpush1.msra.mxu0 %v1471
    %3729 = vmatprep.subr.mxu0 %v1476
    %3730 = vmatpush1.msra.mxu0 %v1475
    %3731 = vmatprep.subr.mxu0 %v1480
    %3732 = vmatpush1.msra.mxu0 %v1479
    %3733 = vmatprep.subr.mxu0 %v1484
    %3734 = vmatpush1.msra.mxu0 %v1483
    %3735 = vmatprep.subr.mxu0 %v1488
    %3736 = vmatpush1.msra.mxu0 %v1487
    %3737 = vmatprep.subr.mxu0 %v1492
    %3738 = vmatpush1.msra.mxu0 %v1491
    %3739 = vmatprep.subr.mxu0 %v1496
    %3740 = vmatpush1.msra.mxu0 %v1495
    %3741 = vmatprep.subr.mxu0 %v1500
    %3742 = vmatpush1.msra.mxu0 %v1499
    %3743 = vmatprep.subr.mxu0 %v1504
    %3744 = vmatpush1.msra.mxu0 %v1503
    %3745 = vmatprep.subr.mxu0 %v1508
    %3746 = vmatpush1.msra.mxu0 %v1507
    %3747 = vmatprep.subr.mxu0 %v1512
    %3748 = vmatpush1.msra.mxu0 %v1511
    %3749 = vmatprep.subr.mxu0 %v1516
    %3750 = vmatpush1.msra.mxu0 %v1515
    %3751 = vmatprep.subr.mxu0 %v1520
    %3752 = vmatpush1.msra.mxu0 %v1519
    %3753 = vmatprep.mubr.f32.mxu0 %v3296
    %3754 = vmatmul.mubr.f32.gmra.mrb[0].mxu0 %v3136
    %v3755 = vpop.f32.mrb[0].mxu0
    %v3756 = vadd.f32 %v1534, %v3755
    %v3757 = vpop.f32.mrb[0].mxu0
    %v3758 = vadd.f32 %v1538, %v3757
    %3759 = vdwg.mxu0
    %v3760 = vmul.f32 %v3685, 0.5
    %v3761 = vtanh.pop %v3760
    %v3762 = vmul.f32 %v3761, 0.5
    %v3763 = vadd.f32 %v3762, 0.5
    %v3764 = vmul.f32 %v3687, 0.5
    %v3765 = vtanh.pop %v3764
    %v3766 = vmul.f32 %v3765, 0.5
    %v3767 = vadd.f32 %v3766, 0.5
    %v3768 = vtanh.pop %v3756
    %v3769 = vmul.f32 %v3758, 0.5
    %v3770 = vtanh.pop %v3769
    %v3771 = vmul.f32 %v3770, 0.5
    %v3772 = vadd.f32 %v3771, 0.5
    %v3773 = vmul.f32 %v3767, %v3294
    %v3774 = vmul.f32 %v3763, %v3768
    %v3775 = vadd.f32 %v3773, %v3774
    %v3776 = vtanh.pop %v3775
    %v3777 = vmul.f32 %v3772, %v3776
    %3778 = vmatprep.subr.mxu0 %v1704
    %3779 = vmatpush1.msra.mxu0 %v1703
    %3780 = vmatprep.subr.mxu0 %v1708
    %3781 = vmatpush1.msra.mxu0 %v1707
    %3782 = vmatprep.subr.mxu0 %v1712
    %3783 = vmatpush1.msra.mxu0 %v1711
    %3784 = vmatprep.subr.mxu0 %v1716
    %3785 = vmatpush1.msra.mxu0 %v1715
    %3786 = vmatprep.subr.mxu0 %v1720
    %3787 = vmatpush1.msra.mxu0 %v1719
    %3788 = vmatprep.subr.mxu0 %v1724
    %3789 = vmatpush1.msra.mxu0 %v1723
    %3790 = vmatprep.subr.mxu0 %v1728
    %3791 = vmatpush1.msra.mxu0 %v1727
    %3792 = vmatprep.subr.mxu0 %v1732
    %3793 = vmatpush1.msra.mxu0 %v1731
    %3794 = vmatprep.subr.mxu0 %v1736
    %3795 = vmatpush1.msra.mxu0 %v1735
    %3796 = vmatprep.subr.mxu0 %v1740
    %3797 = vmatpush1.msra.mxu0 %v1739
    %3798 = vmatprep.subr.mxu0 %v1744
    %3799 = vmatpush1.msra.mxu0 %v1743
    %3800 = vmatprep.subr.mxu0 %v1748
    %3801 = vmatpush1.msra.mxu0 %v1747
    %3802 = vmatprep.subr.mxu0 %v1752
    %3803 = vmatpush1.msra.mxu0 %v1751
    %3804 = vmatprep.subr.mxu0 %v1756
    %3805 = vmatpush1.msra.mxu0 %v1755
    %3806 = vmatprep.subr.mxu0 %v1760
    %3807 = vmatpush1.msra.mxu0 %v1759
    %3808 = vmatprep.subr.mxu0 %v1764
    %3809 = vmatpush1.msra.mxu0 %v1763
    %3810 = vmatprep.subr.mxu0 %v1768
    %3811 = vmatpush1.msra.mxu0 %v1767
    %3812 = vmatprep.subr.mxu0 %v1772
    %3813 = vmatpush1.msra.mxu0 %v1771
    %3814 = vmatprep.subr.mxu0 %v1776
    %3815 = vmatpush1.msra.mxu0 %v1775
    %3816 = vmatprep.subr.mxu0 %v1780
    %3817 = vmatpush1.msra.mxu0 %v1779
    %3818 = vmatprep.subr.mxu0 %v1784
    %3819 = vmatpush1.msra.mxu0 %v1783
    %3820 = vmatprep.subr.mxu0 %v1788
    %3821 = vmatpush1.msra.mxu0 %v1787
    %3822 = vmatprep.subr.mxu0 %v1792
    %3823 = vmatpush1.msra.mxu0 %v1791
    %3824 = vmatprep.subr.mxu0 %v1796
    %3825 = vmatpush1.msra.mxu0 %v1795
    %3826 = vmatprep.subr.mxu0 %v1800
    %3827 = vmatpush1.msra.mxu0 %v1799
    %3828 = vmatprep.subr.mxu0 %v1804
    %3829 = vmatpush1.msra.mxu0 %v1803
    %3830 = vmatprep.subr.mxu0 %v1808
    %3831 = vmatpush1.msra.mxu0 %v1807
    %3832 = vmatprep.subr.mxu0 %v1812
    %3833 = vmatpush1.msra.mxu0 %v1811
    %3834 = vmatprep.subr.mxu0 %v1816
    %3835 = vmatpush1.msra.mxu0 %v1815
    %3836 = vmatprep.subr.mxu0 %v1820
    %3837 = vmatpush1.msra.mxu0 %v1819
    %3838 = vmatprep.subr.mxu0 %v1824
    %3839 = vmatpush1.msra.mxu0 %v1823
    %3840 = vmatprep.subr.mxu0 %v1828
    %3841 = vmatpush1.msra.mxu0 %v1827
    %3842 = vmatprep.mubr.f32.mxu0 %v3456
    %3843 = vmatmul.mubr.f32.gmra.mrb[0].mxu0 %v3296
    %v3844 = vpop.f32.mrb[0].mxu0
    %v3845 = vadd.f32 %v1837, %v3844
    %v3846 = vpop.f32.mrb[0].mxu0
    %v3847 = vadd.f32 %v1841, %v3846
    %3848 = vdwg.mxu0
    %3849 = vmatprep.subr.mxu0 %v1706
    %3850 = vmatpush1.msra.mxu0 %v1705
    %3851 = vmatprep.subr.mxu0 %v1710
    %3852 = vmatpush1.msra.mxu0 %v1709
    %3853 = vmatprep.subr.mxu0 %v1714
    %3854 = vmatpush1.msra.mxu0 %v1713
    %3855 = vmatprep.subr.mxu0 %v1718
    %3856 = vmatpush1.msra.mxu0 %v1717
    %3857 = vmatprep.subr.mxu0 %v1722
    %3858 = vmatpush1.msra.mxu0 %v1721
    %3859 = vmatprep.subr.mxu0 %v1726
    %3860 = vmatpush1.msra.mxu0 %v1725
    %3861 = vmatprep.subr.mxu0 %v1730
    %3862 = vmatpush1.msra.mxu0 %v1729
    %3863 = vmatprep.subr.mxu0 %v1734
    %3864 = vmatpush1.msra.mxu0 %v1733
    %3865 = vmatprep.subr.mxu0 %v1738
    %3866 = vmatpush1.msra.mxu0 %v1737
    %3867 = vmatprep.subr.mxu0 %v1742
    %3868 = vmatpush1.msra.mxu0 %v1741
    %3869 = vmatprep.subr.mxu0 %v1746
    %3870 = vmatpush1.msra.mxu0 %v1745
    %3871 = vmatprep.subr.mxu0 %v1750
    %3872 = vmatpush1.msra.mxu0 %v1749
    %3873 = vmatprep.subr.mxu0 %v1754
    %3874 = vmatpush1.msra.mxu0 %v1753
    %3875 = vmatprep.subr.mxu0 %v1758
    %3876 = vmatpush1.msra.mxu0 %v1757
    %3877 = vmatprep.subr.mxu0 %v1762
    %3878 = vmatpush1.msra.mxu0 %v1761
    %3879 = vmatprep.subr.mxu0 %v1766
    %3880 = vmatpush1.msra.mxu0 %v1765
    %3881 = vmatprep.subr.mxu0 %v1770
    %3882 = vmatpush1.msra.mxu0 %v1769
    %3883 = vmatprep.subr.mxu0 %v1774
    %3884 = vmatpush1.msra.mxu0 %v1773
    %3885 = vmatprep.subr.mxu0 %v1778
    %3886 = vmatpush1.msra.mxu0 %v1777
    %3887 = vmatprep.subr.mxu0 %v1782
    %3888 = vmatpush1.msra.mxu0 %v1781
    %3889 = vmatprep.subr.mxu0 %v1786
    %3890 = vmatpush1.msra.mxu0 %v1785
    %3891 = vmatprep.subr.mxu0 %v1790
    %3892 = vmatpush1.msra.mxu0 %v1789
    %3893 = vmatprep.subr.mxu0 %v1794
    %3894 = vmatpush1.msra.mxu0 %v1793
    %3895 = vmatprep.subr.mxu0 %v1798
    %3896 = vmatpush1.msra.mxu0 %v1797
    %3897 = vmatprep.subr.mxu0 %v1802
    %3898 = vmatpush1.msra.mxu0 %v1801
    %3899 = vmatprep.subr.mxu0 %v1806
    %3900 = vmatpush1.msra.mxu0 %v1805
    %3901 = vmatprep.subr.mxu0 %v1810
    %3902 = vmatpush1.msra.mxu0 %v1809
    %3903 = vmatprep.subr.mxu0 %v1814
    %3904 = vmatpush1.msra.mxu0 %v1813
    %3905 = vmatprep.subr.mxu0 %v1818
    %3906 = vmatpush1.msra.mxu0 %v1817
    %3907 = vmatprep.subr.mxu0 %v1822
    %3908 = vmatpush1.msra.mxu0 %v1821
    %3909 = vmatprep.subr.mxu0 %v1826
    %3910 = vmatpush1.msra.mxu0 %v1825
    %3911 = vmatprep.subr.mxu0 %v1830
    %3912 = vmatpush1.msra.mxu0 %v1829
    %3913 = vmatprep.mubr.f32.mxu0 %v3456
    %3914 = vmatmul.mubr.f32.gmra.mrb[0].mxu0 %v3296
    %v3915 = vpop.f32.mrb[0].mxu0
    %v3916 = vadd.f32 %v1845, %v3915
    %v3917 = vpop.f32.mrb[0].mxu0
    %v3918 = vadd.f32 %v1849, %v3917
    %3919 = vdwg.mxu0
    %v3920 = vmul.f32 %v3845, 0.5
    %v3921 = vtanh.pop %v3920
    %v3922 = vmul.f32 %v3921, 0.5
    %v3923 = vadd.f32 %v3922, 0.5
    %v3924 = vmul.f32 %v3847, 0.5
    %v3925 = vtanh.pop %v3924
    %v3926 = vmul.f32 %v3925, 0.5
    %v3927 = vadd.f32 %v3926, 0.5
    %v3928 = vtanh.pop %v3916
    %v3929 = vmul.f32 %v3918, 0.5
    %v3930 = vtanh.pop %v3929
    %v3931 = vmul.f32 %v3930, 0.5
    %v3932 = vadd.f32 %v3931, 0.5
    %v3933 = vmul.f32 %v3927, %v3454
    %v3934 = vmul.f32 %v3923, %v3928
    %v3935 = vadd.f32 %v3933, %v3934
    %v3936 = vtanh.pop %v3935
    %v3937 = vmul.f32 %v3932, %v3936
    %v3938 = vld [vmem:[%s0 + $0x38] sm:$0xff]
    %3939 = vmatprep.subr.mxu0 %v1084
    %3940 = vmatpush1.msra.mxu0 %v1083
    %3941 = vmatprep.subr.mxu0 %v1088
    %3942 = vmatpush1.msra.mxu0 %v1087
    %3943 = vmatprep.subr.mxu0 %v1092
    %3944 = vmatpush1.msra.mxu0 %v1091
    %3945 = vmatprep.subr.mxu0 %v1096
    %3946 = vmatpush1.msra.mxu0 %v1095
    %3947 = vmatprep.subr.mxu0 %v1100
    %3948 = vmatpush1.msra.mxu0 %v1099
    %3949 = vmatprep.subr.mxu0 %v1104
    %3950 = vmatpush1.msra.mxu0 %v1103
    %3951 = vmatprep.subr.mxu0 %v1108
    %3952 = vmatpush1.msra.mxu0 %v1107
    %3953 = vmatprep.subr.mxu0 %v1112
    %3954 = vmatpush1.msra.mxu0 %v1111
    %3955 = vmatprep.subr.mxu0 %v1116
    %3956 = vmatpush1.msra.mxu0 %v1115
    %3957 = vmatprep.subr.mxu0 %v1120
    %3958 = vmatpush1.msra.mxu0 %v1119
    %3959 = vmatprep.subr.mxu0 %v1124
    %3960 = vmatpush1.msra.mxu0 %v1123
    %3961 = vmatprep.subr.mxu0 %v1128
    %3962 = vmatpush1.msra.mxu0 %v1127
    %3963 = vmatprep.subr.mxu0 %v1132
    %3964 = vmatpush1.msra.mxu0 %v1131
    %3965 = vmatprep.subr.mxu0 %v1136
    %3966 = vmatpush1.msra.mxu0 %v1135
    %3967 = vmatprep.subr.mxu0 %v1140
    %3968 = vmatpush1.msra.mxu0 %v1139
    %3969 = vmatprep.subr.mxu0 %v1144
    %3970 = vmatpush1.msra.mxu0 %v1143
    %3971 = vmatprep.subr.mxu0 %v1148
    %3972 = vmatpush1.msra.mxu0 %v1147
    %3973 = vmatprep.subr.mxu0 %v1152
    %3974 = vmatpush1.msra.mxu0 %v1151
    %3975 = vmatprep.subr.mxu0 %v1156
    %3976 = vmatpush1.msra.mxu0 %v1155
    %3977 = vmatprep.subr.mxu0 %v1160
    %3978 = vmatpush1.msra.mxu0 %v1159
    %3979 = vmatprep.subr.mxu0 %v1164
    %3980 = vmatpush1.msra.mxu0 %v1163
    %3981 = vmatprep.subr.mxu0 %v1168
    %3982 = vmatpush1.msra.mxu0 %v1167
    %3983 = vmatprep.subr.mxu0 %v1172
    %3984 = vmatpush1.msra.mxu0 %v1171
    %3985 = vmatprep.subr.mxu0 %v1176
    %3986 = vmatpush1.msra.mxu0 %v1175
    %3987 = vmatprep.subr.mxu0 %v1180
    %3988 = vmatpush1.msra.mxu0 %v1179
    %3989 = vmatprep.subr.mxu0 %v1184
    %3990 = vmatpush1.msra.mxu0 %v1183
    %3991 = vmatprep.subr.mxu0 %v1188
    %3992 = vmatpush1.msra.mxu0 %v1187
    %3993 = vmatprep.subr.mxu0 %v1192
    %3994 = vmatpush1.msra.mxu0 %v1191
    %3995 = vmatprep.subr.mxu0 %v1196
    %3996 = vmatpush1.msra.mxu0 %v1195
    %3997 = vmatprep.subr.mxu0 %v1200
    %3998 = vmatpush1.msra.mxu0 %v1199
    %3999 = vmatprep.subr.mxu0 %v1204
    %4000 = vmatpush1.msra.mxu0 %v1203
    %4001 = vmatprep.subr.mxu0 %v1208
    %4002 = vmatpush1.msra.mxu0 %v1207
    %4003 = vmatprep.mubr.f32.mxu0 %v3617
    %4004 = vmatmul.mubr.f32.gmra.mrb[0].mxu0 %v3938
    %v4005 = vpop.f32.mrb[0].mxu0
    %v4006 = vadd.f32 %v1216, %v4005
    %v4007 = vpop.f32.mrb[0].mxu0
    %v4008 = vadd.f32 %v1220, %v4007
    %4009 = vdwg.mxu0
    %4010 = vmatprep.subr.mxu0 %v1086
    %4011 = vmatpush1.msra.mxu0 %v1085
    %4012 = vmatprep.subr.mxu0 %v1090
    %4013 = vmatpush1.msra.mxu0 %v1089
    %4014 = vmatprep.subr.mxu0 %v1094
    %4015 = vmatpush1.msra.mxu0 %v1093
    %4016 = vmatprep.subr.mxu0 %v1098
    %4017 = vmatpush1.msra.mxu0 %v1097
    %4018 = vmatprep.subr.mxu0 %v1102
    %4019 = vmatpush1.msra.mxu0 %v1101
    %4020 = vmatprep.subr.mxu0 %v1106
    %4021 = vmatpush1.msra.mxu0 %v1105
    %4022 = vmatprep.subr.mxu0 %v1110
    %4023 = vmatpush1.msra.mxu0 %v1109
    %4024 = vmatprep.subr.mxu0 %v1114
    %4025 = vmatpush1.msra.mxu0 %v1113
    %4026 = vmatprep.subr.mxu0 %v1118
    %4027 = vmatpush1.msra.mxu0 %v1117
    %4028 = vmatprep.subr.mxu0 %v1122
    %4029 = vmatpush1.msra.mxu0 %v1121
    %4030 = vmatprep.subr.mxu0 %v1126
    %4031 = vmatpush1.msra.mxu0 %v1125
    %4032 = vmatprep.subr.mxu0 %v1130
    %4033 = vmatpush1.msra.mxu0 %v1129
    %4034 = vmatprep.subr.mxu0 %v1134
    %4035 = vmatpush1.msra.mxu0 %v1133
    %4036 = vmatprep.subr.mxu0 %v1138
    %4037 = vmatpush1.msra.mxu0 %v1137
    %4038 = vmatprep.subr.mxu0 %v1142
    %4039 = vmatpush1.msra.mxu0 %v1141
    %4040 = vmatprep.subr.mxu0 %v1146
    %4041 = vmatpush1.msra.mxu0 %v1145
    %4042 = vmatprep.subr.mxu0 %v1150
    %4043 = vmatpush1.msra.mxu0 %v1149
    %4044 = vmatprep.subr.mxu0 %v1154
    %4045 = vmatpush1.msra.mxu0 %v1153
    %4046 = vmatprep.subr.mxu0 %v1158
    %4047 = vmatpush1.msra.mxu0 %v1157
    %4048 = vmatprep.subr.mxu0 %v1162
    %4049 = vmatpush1.msra.mxu0 %v1161
    %4050 = vmatprep.subr.mxu0 %v1166
    %4051 = vmatpush1.msra.mxu0 %v1165
    %4052 = vmatprep.subr.mxu0 %v1170
    %4053 = vmatpush1.msra.mxu0 %v1169
    %4054 = vmatprep.subr.mxu0 %v1174
    %4055 = vmatpush1.msra.mxu0 %v1173
    %4056 = vmatprep.subr.mxu0 %v1178
    %4057 = vmatpush1.msra.mxu0 %v1177
    %4058 = vmatprep.subr.mxu0 %v1182
    %4059 = vmatpush1.msra.mxu0 %v1181
    %4060 = vmatprep.subr.mxu0 %v1186
    %4061 = vmatpush1.msra.mxu0 %v1185
    %4062 = vmatprep.subr.mxu0 %v1190
    %4063 = vmatpush1.msra.mxu0 %v1189
    %4064 = vmatprep.subr.mxu0 %v1194
    %4065 = vmatpush1.msra.mxu0 %v1193
    %4066 = vmatprep.subr.mxu0 %v1198
    %4067 = vmatpush1.msra.mxu0 %v1197
    %4068 = vmatprep.subr.mxu0 %v1202
    %4069 = vmatpush1.msra.mxu0 %v1201
    %4070 = vmatprep.subr.mxu0 %v1206
    %4071 = vmatpush1.msra.mxu0 %v1205
    %4072 = vmatprep.subr.mxu0 %v1210
    %4073 = vmatpush1.msra.mxu0 %v1209
    %4074 = vmatprep.mubr.f32.mxu0 %v3617
    %4075 = vmatmul.mubr.f32.gmra.mrb[0].mxu0 %v3938
    %v4076 = vpop.f32.mrb[0].mxu0
    %v4077 = vadd.f32 %v1224, %v4076
    %v4078 = vpop.f32.mrb[0].mxu0
    %v4079 = vadd.f32 %v1228, %v4078
    %4080 = vdwg.mxu0
    %v4081 = vmul.f32 %v4006, 0.5
    %v4082 = vtanh.pop %v4081
    %v4083 = vmul.f32 %v4082, 0.5
    %v4084 = vadd.f32 %v4083, 0.5
    %v4085 = vmul.f32 %v4008, 0.5
    %v4086 = vtanh.pop %v4085
    %v4087 = vmul.f32 %v4086, 0.5
    %v4088 = vadd.f32 %v4087, 0.5
    %v4089 = vtanh.pop %v4077
    %v4090 = vmul.f32 %v4079, 0.5
    %v4091 = vtanh.pop %v4090
    %v4092 = vmul.f32 %v4091, 0.5
    %v4093 = vadd.f32 %v4092, 0.5
    %v4094 = vmul.f32 %v4088, %v3615
    %v4095 = vmul.f32 %v4084, %v4089
    %v4096 = vadd.f32 %v4094, %v4095
    %v4097 = vtanh.pop %v4096
    %v4098 = vmul.f32 %v4093, %v4097
    %4099 = vmatprep.subr.mxu0 %v1394
    %4100 = vmatpush1.msra.mxu0 %v1393
    %4101 = vmatprep.subr.mxu0 %v1398
    %4102 = vmatpush1.msra.mxu0 %v1397
    %4103 = vmatprep.subr.mxu0 %v1402
    %4104 = vmatpush1.msra.mxu0 %v1401
    %4105 = vmatprep.subr.mxu0 %v1406
    %4106 = vmatpush1.msra.mxu0 %v1405
    %4107 = vmatprep.subr.mxu0 %v1410
    %4108 = vmatpush1.msra.mxu0 %v1409
    %4109 = vmatprep.subr.mxu0 %v1414
    %4110 = vmatpush1.msra.mxu0 %v1413
    %4111 = vmatprep.subr.mxu0 %v1418
    %4112 = vmatpush1.msra.mxu0 %v1417
    %4113 = vmatprep.subr.mxu0 %v1422
    %4114 = vmatpush1.msra.mxu0 %v1421
    %4115 = vmatprep.subr.mxu0 %v1426
    %4116 = vmatpush1.msra.mxu0 %v1425
    %4117 = vmatprep.subr.mxu0 %v1430
    %4118 = vmatpush1.msra.mxu0 %v1429
    %4119 = vmatprep.subr.mxu0 %v1434
    %4120 = vmatpush1.msra.mxu0 %v1433
    %4121 = vmatprep.subr.mxu0 %v1438
    %4122 = vmatpush1.msra.mxu0 %v1437
    %4123 = vmatprep.subr.mxu0 %v1442
    %4124 = vmatpush1.msra.mxu0 %v1441
    %4125 = vmatprep.subr.mxu0 %v1446
    %4126 = vmatpush1.msra.mxu0 %v1445
    %4127 = vmatprep.subr.mxu0 %v1450
    %4128 = vmatpush1.msra.mxu0 %v1449
    %4129 = vmatprep.subr.mxu0 %v1454
    %4130 = vmatpush1.msra.mxu0 %v1453
    %4131 = vmatprep.subr.mxu0 %v1458
    %4132 = vmatpush1.msra.mxu0 %v1457
    %4133 = vmatprep.subr.mxu0 %v1462
    %4134 = vmatpush1.msra.mxu0 %v1461
    %4135 = vmatprep.subr.mxu0 %v1466
    %4136 = vmatpush1.msra.mxu0 %v1465
    %4137 = vmatprep.subr.mxu0 %v1470
    %4138 = vmatpush1.msra.mxu0 %v1469
    %4139 = vmatprep.subr.mxu0 %v1474
    %4140 = vmatpush1.msra.mxu0 %v1473
    %4141 = vmatprep.subr.mxu0 %v1478
    %4142 = vmatpush1.msra.mxu0 %v1477
    %4143 = vmatprep.subr.mxu0 %v1482
    %4144 = vmatpush1.msra.mxu0 %v1481
    %4145 = vmatprep.subr.mxu0 %v1486
    %4146 = vmatpush1.msra.mxu0 %v1485
    %4147 = vmatprep.subr.mxu0 %v1490
    %4148 = vmatpush1.msra.mxu0 %v1489
    %4149 = vmatprep.subr.mxu0 %v1494
    %4150 = vmatpush1.msra.mxu0 %v1493
    %4151 = vmatprep.subr.mxu0 %v1498
    %4152 = vmatpush1.msra.mxu0 %v1497
    %4153 = vmatprep.subr.mxu0 %v1502
    %4154 = vmatpush1.msra.mxu0 %v1501
    %4155 = vmatprep.subr.mxu0 %v1506
    %4156 = vmatpush1.msra.mxu0 %v1505
    %4157 = vmatprep.subr.mxu0 %v1510
    %4158 = vmatpush1.msra.mxu0 %v1509
    %4159 = vmatprep.subr.mxu0 %v1514
    %4160 = vmatpush1.msra.mxu0 %v1513
    %4161 = vmatprep.subr.mxu0 %v1518
    %4162 = vmatpush1.msra.mxu0 %v1517
    %4163 = vmatprep.mubr.f32.mxu0 %v3777
    %4164 = vmatmul.mubr.f32.gmra.mrb[0].mxu0 %v3617
    %v4165 = vpop.f32.mrb[0].mxu0
    %v4166 = vadd.f32 %v1526, %v4165
    %v4167 = vpop.f32.mrb[0].mxu0
    %v4168 = vadd.f32 %v1530, %v4167
    %4169 = vdwg.mxu0
    %4170 = vmatprep.subr.mxu0 %v1396
    %4171 = vmatpush1.msra.mxu0 %v1395
    %4172 = vmatprep.subr.mxu0 %v1400
    %4173 = vmatpush1.msra.mxu0 %v1399
    %4174 = vmatprep.subr.mxu0 %v1404
    %4175 = vmatpush1.msra.mxu0 %v1403
    %4176 = vmatprep.subr.mxu0 %v1408
    %4177 = vmatpush1.msra.mxu0 %v1407
    %4178 = vmatprep.subr.mxu0 %v1412
    %4179 = vmatpush1.msra.mxu0 %v1411
    %4180 = vmatprep.subr.mxu0 %v1416
    %4181 = vmatpush1.msra.mxu0 %v1415
    %4182 = vmatprep.subr.mxu0 %v1420
    %4183 = vmatpush1.msra.mxu0 %v1419
    %4184 = vmatprep.subr.mxu0 %v1424
    %4185 = vmatpush1.msra.mxu0 %v1423
    %4186 = vmatprep.subr.mxu0 %v1428
    %4187 = vmatpush1.msra.mxu0 %v1427
    %4188 = vmatprep.subr.mxu0 %v1432
    %4189 = vmatpush1.msra.mxu0 %v1431
    %4190 = vmatprep.subr.mxu0 %v1436
    %4191 = vmatpush1.msra.mxu0 %v1435
    %4192 = vmatprep.subr.mxu0 %v1440
    %4193 = vmatpush1.msra.mxu0 %v1439
    %4194 = vmatprep.subr.mxu0 %v1444
    %4195 = vmatpush1.msra.mxu0 %v1443
    %4196 = vmatprep.subr.mxu0 %v1448
    %4197 = vmatpush1.msra.mxu0 %v1447
    %4198 = vmatprep.subr.mxu0 %v1452
    %4199 = vmatpush1.msra.mxu0 %v1451
    %4200 = vmatprep.subr.mxu0 %v1456
    %4201 = vmatpush1.msra.mxu0 %v1455
    %4202 = vmatprep.subr.mxu0 %v1460
    %4203 = vmatpush1.msra.mxu0 %v1459
    %4204 = vmatprep.subr.mxu0 %v1464
    %4205 = vmatpush1.msra.mxu0 %v1463
    %4206 = vmatprep.subr.mxu0 %v1468
    %4207 = vmatpush1.msra.mxu0 %v1467
    %4208 = vmatprep.subr.mxu0 %v1472
    %4209 = vmatpush1.msra.mxu0 %v1471
    %4210 = vmatprep.subr.mxu0 %v1476
    %4211 = vmatpush1.msra.mxu0 %v1475
    %4212 = vmatprep.subr.mxu0 %v1480
    %4213 = vmatpush1.msra.mxu0 %v1479
    %4214 = vmatprep.subr.mxu0 %v1484
    %4215 = vmatpush1.msra.mxu0 %v1483
    %4216 = vmatprep.subr.mxu0 %v1488
    %4217 = vmatpush1.msra.mxu0 %v1487
    %4218 = vmatprep.subr.mxu0 %v1492
    %4219 = vmatpush1.msra.mxu0 %v1491
    %4220 = vmatprep.subr.mxu0 %v1496
    %4221 = vmatpush1.msra.mxu0 %v1495
    %4222 = vmatprep.subr.mxu0 %v1500
    %4223 = vmatpush1.msra.mxu0 %v1499
    %4224 = vmatprep.subr.mxu0 %v1504
    %4225 = vmatpush1.msra.mxu0 %v1503
    %4226 = vmatprep.subr.mxu0 %v1508
    %4227 = vmatpush1.msra.mxu0 %v1507
    %4228 = vmatprep.subr.mxu0 %v1512
    %4229 = vmatpush1.msra.mxu0 %v1511
    %4230 = vmatprep.subr.mxu0 %v1516
    %4231 = vmatpush1.msra.mxu0 %v1515
    %4232 = vmatprep.subr.mxu0 %v1520
    %4233 = vmatpush1.msra.mxu0 %v1519
    %4234 = vmatprep.mubr.f32.mxu0 %v3777
    %4235 = vmatmul.mubr.f32.gmra.mrb[0].mxu0 %v3617
    %v4236 = vpop.f32.mrb[0].mxu0
    %v4237 = vadd.f32 %v1534, %v4236
    %v4238 = vpop.f32.mrb[0].mxu0
    %v4239 = vadd.f32 %v1538, %v4238
    %4240 = vdwg.mxu0
    %v4241 = vmul.f32 %v4166, 0.5
    %v4242 = vtanh.pop %v4241
    %v4243 = vmul.f32 %v4242, 0.5
    %v4244 = vadd.f32 %v4243, 0.5
    %v4245 = vmul.f32 %v4168, 0.5
    %v4246 = vtanh.pop %v4245
    %v4247 = vmul.f32 %v4246, 0.5
    %v4248 = vadd.f32 %v4247, 0.5
    %v4249 = vtanh.pop %v4237
    %v4250 = vmul.f32 %v4239, 0.5
    %v4251 = vtanh.pop %v4250
    %v4252 = vmul.f32 %v4251, 0.5
    %v4253 = vadd.f32 %v4252, 0.5
    %v4254 = vmul.f32 %v4248, %v3775
    %v4255 = vmul.f32 %v4244, %v4249
    %v4256 = vadd.f32 %v4254, %v4255
    %v4257 = vtanh.pop %v4256
    %v4258 = vmul.f32 %v4253, %v4257
    %4259 = vmatprep.subr.mxu0 %v1704
    %4260 = vmatpush1.msra.mxu0 %v1703
    %4261 = vmatprep.subr.mxu0 %v1708
    %4262 = vmatpush1.msra.mxu0 %v1707
    %4263 = vmatprep.subr.mxu0 %v1712
    %4264 = vmatpush1.msra.mxu0 %v1711
    %4265 = vmatprep.subr.mxu0 %v1716
    %4266 = vmatpush1.msra.mxu0 %v1715
    %4267 = vmatprep.subr.mxu0 %v1720
    %4268 = vmatpush1.msra.mxu0 %v1719
    %4269 = vmatprep.subr.mxu0 %v1724
    %4270 = vmatpush1.msra.mxu0 %v1723
    %4271 = vmatprep.subr.mxu0 %v1728
    %4272 = vmatpush1.msra.mxu0 %v1727
    %4273 = vmatprep.subr.mxu0 %v1732
    %4274 = vmatpush1.msra.mxu0 %v1731
    %4275 = vmatprep.subr.mxu0 %v1736
    %4276 = vmatpush1.msra.mxu0 %v1735
    %4277 = vmatprep.subr.mxu0 %v1740
    %4278 = vmatpush1.msra.mxu0 %v1739
    %4279 = vmatprep.subr.mxu0 %v1744
    %4280 = vmatpush1.msra.mxu0 %v1743
    %4281 = vmatprep.subr.mxu0 %v1748
    %4282 = vmatpush1.msra.mxu0 %v1747
    %4283 = vmatprep.subr.mxu0 %v1752
    %4284 = vmatpush1.msra.mxu0 %v1751
    %4285 = vmatprep.subr.mxu0 %v1756
    %4286 = vmatpush1.msra.mxu0 %v1755
    %4287 = vmatprep.subr.mxu0 %v1760
    %4288 = vmatpush1.msra.mxu0 %v1759
    %4289 = vmatprep.subr.mxu0 %v1764
    %4290 = vmatpush1.msra.mxu0 %v1763
    %4291 = vmatprep.subr.mxu0 %v1768
    %4292 = vmatpush1.msra.mxu0 %v1767
    %4293 = vmatprep.subr.mxu0 %v1772
    %4294 = vmatpush1.msra.mxu0 %v1771
    %4295 = vmatprep.subr.mxu0 %v1776
    %4296 = vmatpush1.msra.mxu0 %v1775
    %4297 = vmatprep.subr.mxu0 %v1780
    %4298 = vmatpush1.msra.mxu0 %v1779
    %4299 = vmatprep.subr.mxu0 %v1784
    %4300 = vmatpush1.msra.mxu0 %v1783
    %4301 = vmatprep.subr.mxu0 %v1788
    %4302 = vmatpush1.msra.mxu0 %v1787
    %4303 = vmatprep.subr.mxu0 %v1792
    %4304 = vmatpush1.msra.mxu0 %v1791
    %4305 = vmatprep.subr.mxu0 %v1796
    %4306 = vmatpush1.msra.mxu0 %v1795
    %4307 = vmatprep.subr.mxu0 %v1800
    %4308 = vmatpush1.msra.mxu0 %v1799
    %4309 = vmatprep.subr.mxu0 %v1804
    %4310 = vmatpush1.msra.mxu0 %v1803
    %4311 = vmatprep.subr.mxu0 %v1808
    %4312 = vmatpush1.msra.mxu0 %v1807
    %4313 = vmatprep.subr.mxu0 %v1812
    %4314 = vmatpush1.msra.mxu0 %v1811
    %4315 = vmatprep.subr.mxu0 %v1816
    %4316 = vmatpush1.msra.mxu0 %v1815
    %4317 = vmatprep.subr.mxu0 %v1820
    %4318 = vmatpush1.msra.mxu0 %v1819
    %4319 = vmatprep.subr.mxu0 %v1824
    %4320 = vmatpush1.msra.mxu0 %v1823
    %4321 = vmatprep.subr.mxu0 %v1828
    %4322 = vmatpush1.msra.mxu0 %v1827
    %4323 = vmatprep.mubr.f32.mxu0 %v3937
    %4324 = vmatmul.mubr.f32.gmra.mrb[0].mxu0 %v3777
    %v4325 = vpop.f32.mrb[0].mxu0
    %v4326 = vadd.f32 %v1837, %v4325
    %v4327 = vpop.f32.mrb[0].mxu0
    %v4328 = vadd.f32 %v1841, %v4327
    %4329 = vdwg.mxu0
    %4330 = vmatprep.subr.mxu0 %v1706
    %4331 = vmatpush1.msra.mxu0 %v1705
    %4332 = vmatprep.subr.mxu0 %v1710
    %4333 = vmatpush1.msra.mxu0 %v1709
    %4334 = vmatprep.subr.mxu0 %v1714
    %4335 = vmatpush1.msra.mxu0 %v1713
    %4336 = vmatprep.subr.mxu0 %v1718
    %4337 = vmatpush1.msra.mxu0 %v1717
    %4338 = vmatprep.subr.mxu0 %v1722
    %4339 = vmatpush1.msra.mxu0 %v1721
    %4340 = vmatprep.subr.mxu0 %v1726
    %4341 = vmatpush1.msra.mxu0 %v1725
    %4342 = vmatprep.subr.mxu0 %v1730
    %4343 = vmatpush1.msra.mxu0 %v1729
    %4344 = vmatprep.subr.mxu0 %v1734
    %4345 = vmatpush1.msra.mxu0 %v1733
    %4346 = vmatprep.subr.mxu0 %v1738
    %4347 = vmatpush1.msra.mxu0 %v1737
    %4348 = vmatprep.subr.mxu0 %v1742
    %4349 = vmatpush1.msra.mxu0 %v1741
    %4350 = vmatprep.subr.mxu0 %v1746
    %4351 = vmatpush1.msra.mxu0 %v1745
    %4352 = vmatprep.subr.mxu0 %v1750
    %4353 = vmatpush1.msra.mxu0 %v1749
    %4354 = vmatprep.subr.mxu0 %v1754
    %4355 = vmatpush1.msra.mxu0 %v1753
    %4356 = vmatprep.subr.mxu0 %v1758
    %4357 = vmatpush1.msra.mxu0 %v1757
    %4358 = vmatprep.subr.mxu0 %v1762
    %4359 = vmatpush1.msra.mxu0 %v1761
    %4360 = vmatprep.subr.mxu0 %v1766
    %4361 = vmatpush1.msra.mxu0 %v1765
    %4362 = vmatprep.subr.mxu0 %v1770
    %4363 = vmatpush1.msra.mxu0 %v1769
    %4364 = vmatprep.subr.mxu0 %v1774
    %4365 = vmatpush1.msra.mxu0 %v1773
    %4366 = vmatprep.subr.mxu0 %v1778
    %4367 = vmatpush1.msra.mxu0 %v1777
    %4368 = vmatprep.subr.mxu0 %v1782
    %4369 = vmatpush1.msra.mxu0 %v1781
    %4370 = vmatprep.subr.mxu0 %v1786
    %4371 = vmatpush1.msra.mxu0 %v1785
    %4372 = vmatprep.subr.mxu0 %v1790
    %4373 = vmatpush1.msra.mxu0 %v1789
    %4374 = vmatprep.subr.mxu0 %v1794
    %4375 = vmatpush1.msra.mxu0 %v1793
    %4376 = vmatprep.subr.mxu0 %v1798
    %4377 = vmatpush1.msra.mxu0 %v1797
    %4378 = vmatprep.subr.mxu0 %v1802
    %4379 = vmatpush1.msra.mxu0 %v1801
    %4380 = vmatprep.subr.mxu0 %v1806
    %4381 = vmatpush1.msra.mxu0 %v1805
    %4382 = vmatprep.subr.mxu0 %v1810
    %4383 = vmatpush1.msra.mxu0 %v1809
    %4384 = vmatprep.subr.mxu0 %v1814
    %4385 = vmatpush1.msra.mxu0 %v1813
    %4386 = vmatprep.subr.mxu0 %v1818
    %4387 = vmatpush1.msra.mxu0 %v1817
    %4388 = vmatprep.subr.mxu0 %v1822
    %4389 = vmatpush1.msra.mxu0 %v1821
    %4390 = vmatprep.subr.mxu0 %v1826
    %4391 = vmatpush1.msra.mxu0 %v1825
    %4392 = vmatprep.subr.mxu0 %v1830
    %4393 = vmatpush1.msra.mxu0 %v1829
    %4394 = vmatprep.mubr.f32.mxu0 %v3937
    %4395 = vmatmul.mubr.f32.gmra.mrb[0].mxu0 %v3777
    %v4396 = vpop.f32.mrb[0].mxu0
    %v4397 = vadd.f32 %v1845, %v4396
    %v4398 = vpop.f32.mrb[0].mxu0
    %v4399 = vadd.f32 %v1849, %v4398
    %4400 = vdwg.mxu0
    %v4401 = vmul.f32 %v4326, 0.5
    %v4402 = vtanh.pop %v4401
    %v4403 = vmul.f32 %v4402, 0.5
    %v4404 = vadd.f32 %v4403, 0.5
    %v4405 = vmul.f32 %v4328, 0.5
    %v4406 = vtanh.pop %v4405
    %v4407 = vmul.f32 %v4406, 0.5
    %v4408 = vadd.f32 %v4407, 0.5
    %v4409 = vtanh.pop %v4397
    %v4410 = vmul.f32 %v4399, 0.5
    %v4411 = vtanh.pop %v4410
    %v4412 = vmul.f32 %v4411, 0.5
    %v4413 = vadd.f32 %v4412, 0.5
    %v4414 = vmul.f32 %v4408, %v3935
    %v4415 = vmul.f32 %v4404, %v4409
    %v4416 = vadd.f32 %v4414, %v4415
    %v4417 = vtanh.pop %v4416
    %v4418 = vmul.f32 %v4413, %v4417
    %4419 = vmatprep.subr.mxu0 %v1394
    %4420 = vmatpush1.msra.mxu0 %v1393
    %4421 = vmatprep.subr.mxu0 %v1398
    %4422 = vmatpush1.msra.mxu0 %v1397
    %4423 = vmatprep.subr.mxu0 %v1402
    %4424 = vmatpush1.msra.mxu0 %v1401
    %4425 = vmatprep.subr.mxu0 %v1406
    %4426 = vmatpush1.msra.mxu0 %v1405
    %4427 = vmatprep.subr.mxu0 %v1410
    %4428 = vmatpush1.msra.mxu0 %v1409
    %4429 = vmatprep.subr.mxu0 %v1414
    %4430 = vmatpush1.msra.mxu0 %v1413
    %4431 = vmatprep.subr.mxu0 %v1418
    %4432 = vmatpush1.msra.mxu0 %v1417
    %4433 = vmatprep.subr.mxu0 %v1422
    %4434 = vmatpush1.msra.mxu0 %v1421
    %4435 = vmatprep.subr.mxu0 %v1426
    %4436 = vmatpush1.msra.mxu0 %v1425
    %4437 = vmatprep.subr.mxu0 %v1430
    %4438 = vmatpush1.msra.mxu0 %v1429
    %4439 = vmatprep.subr.mxu0 %v1434
    %4440 = vmatpush1.msra.mxu0 %v1433
    %4441 = vmatprep.subr.mxu0 %v1438
    %4442 = vmatpush1.msra.mxu0 %v1437
    %4443 = vmatprep.subr.mxu0 %v1442
    %4444 = vmatpush1.msra.mxu0 %v1441
    %4445 = vmatprep.subr.mxu0 %v1446
    %4446 = vmatpush1.msra.mxu0 %v1445
    %4447 = vmatprep.subr.mxu0 %v1450
    %4448 = vmatpush1.msra.mxu0 %v1449
    %4449 = vmatprep.subr.mxu0 %v1454
    %4450 = vmatpush1.msra.mxu0 %v1453
    %4451 = vmatprep.subr.mxu0 %v1458
    %4452 = vmatpush1.msra.mxu0 %v1457
    %4453 = vmatprep.subr.mxu0 %v1462
    %4454 = vmatpush1.msra.mxu0 %v1461
    %4455 = vmatprep.subr.mxu0 %v1466
    %4456 = vmatpush1.msra.mxu0 %v1465
    %4457 = vmatprep.subr.mxu0 %v1470
    %4458 = vmatpush1.msra.mxu0 %v1469
    %4459 = vmatprep.subr.mxu0 %v1474
    %4460 = vmatpush1.msra.mxu0 %v1473
    %4461 = vmatprep.subr.mxu0 %v1478
    %4462 = vmatpush1.msra.mxu0 %v1477
    %4463 = vmatprep.subr.mxu0 %v1482
    %4464 = vmatpush1.msra.mxu0 %v1481
    %4465 = vmatprep.subr.mxu0 %v1486
    %4466 = vmatpush1.msra.mxu0 %v1485
    %4467 = vmatprep.subr.mxu0 %v1490
    %4468 = vmatpush1.msra.mxu0 %v1489
    %4469 = vmatprep.subr.mxu0 %v1494
    %4470 = vmatpush1.msra.mxu0 %v1493
    %4471 = vmatprep.subr.mxu0 %v1498
    %4472 = vmatpush1.msra.mxu0 %v1497
    %4473 = vmatprep.subr.mxu0 %v1502
    %4474 = vmatpush1.msra.mxu0 %v1501
    %4475 = vmatprep.subr.mxu0 %v1506
    %4476 = vmatpush1.msra.mxu0 %v1505
    %4477 = vmatprep.subr.mxu0 %v1510
    %4478 = vmatpush1.msra.mxu0 %v1509
    %4479 = vmatprep.subr.mxu0 %v1514
    %4480 = vmatpush1.msra.mxu0 %v1513
    %4481 = vmatprep.subr.mxu0 %v1518
    %4482 = vmatpush1.msra.mxu0 %v1517
    %4483 = vmatprep.mubr.f32.mxu0 %v4258
    %4484 = vmatmul.mubr.f32.gmra.mrb[0].mxu0 %v4098
    %v4485 = vpop.f32.mrb[0].mxu0
    %v4486 = vadd.f32 %v1526, %v4485
    %v4487 = vpop.f32.mrb[0].mxu0
    %v4488 = vadd.f32 %v1530, %v4487
    %4489 = vdwg.mxu0
    %4490 = vmatprep.subr.mxu0 %v1396
    %4491 = vmatpush1.msra.mxu0 %v1395
    %4492 = vmatprep.subr.mxu0 %v1400
    %4493 = vmatpush1.msra.mxu0 %v1399
    %4494 = vmatprep.subr.mxu0 %v1404
    %4495 = vmatpush1.msra.mxu0 %v1403
    %4496 = vmatprep.subr.mxu0 %v1408
    %4497 = vmatpush1.msra.mxu0 %v1407
    %4498 = vmatprep.subr.mxu0 %v1412
    %4499 = vmatpush1.msra.mxu0 %v1411
    %4500 = vmatprep.subr.mxu0 %v1416
    %4501 = vmatpush1.msra.mxu0 %v1415
    %4502 = vmatprep.subr.mxu0 %v1420
    %4503 = vmatpush1.msra.mxu0 %v1419
    %4504 = vmatprep.subr.mxu0 %v1424
    %4505 = vmatpush1.msra.mxu0 %v1423
    %4506 = vmatprep.subr.mxu0 %v1428
    %4507 = vmatpush1.msra.mxu0 %v1427
    %4508 = vmatprep.subr.mxu0 %v1432
    %4509 = vmatpush1.msra.mxu0 %v1431
    %4510 = vmatprep.subr.mxu0 %v1436
    %4511 = vmatpush1.msra.mxu0 %v1435
    %4512 = vmatprep.subr.mxu0 %v1440
    %4513 = vmatpush1.msra.mxu0 %v1439
    %4514 = vmatprep.subr.mxu0 %v1444
    %4515 = vmatpush1.msra.mxu0 %v1443
    %4516 = vmatprep.subr.mxu0 %v1448
    %4517 = vmatpush1.msra.mxu0 %v1447
    %4518 = vmatprep.subr.mxu0 %v1452
    %4519 = vmatpush1.msra.mxu0 %v1451
    %4520 = vmatprep.subr.mxu0 %v1456
    %4521 = vmatpush1.msra.mxu0 %v1455
    %4522 = vmatprep.subr.mxu0 %v1460
    %4523 = vmatpush1.msra.mxu0 %v1459
    %4524 = vmatprep.subr.mxu0 %v1464
    %4525 = vmatpush1.msra.mxu0 %v1463
    %4526 = vmatprep.subr.mxu0 %v1468
    %4527 = vmatpush1.msra.mxu0 %v1467
    %4528 = vmatprep.subr.mxu0 %v1472
    %4529 = vmatpush1.msra.mxu0 %v1471
    %4530 = vmatprep.subr.mxu0 %v1476
    %4531 = vmatpush1.msra.mxu0 %v1475
    %4532 = vmatprep.subr.mxu0 %v1480
    %4533 = vmatpush1.msra.mxu0 %v1479
    %4534 = vmatprep.subr.mxu0 %v1484
    %4535 = vmatpush1.msra.mxu0 %v1483
    %4536 = vmatprep.subr.mxu0 %v1488
    %4537 = vmatpush1.msra.mxu0 %v1487
    %4538 = vmatprep.subr.mxu0 %v1492
    %4539 = vmatpush1.msra.mxu0 %v1491
    %4540 = vmatprep.subr.mxu0 %v1496
    %4541 = vmatpush1.msra.mxu0 %v1495
    %4542 = vmatprep.subr.mxu0 %v1500
    %4543 = vmatpush1.msra.mxu0 %v1499
    %4544 = vmatprep.subr.mxu0 %v1504
    %4545 = vmatpush1.msra.mxu0 %v1503
    %4546 = vmatprep.subr.mxu0 %v1508
    %4547 = vmatpush1.msra.mxu0 %v1507
    %4548 = vmatprep.subr.mxu0 %v1512
    %4549 = vmatpush1.msra.mxu0 %v1511
    %4550 = vmatprep.subr.mxu0 %v1516
    %4551 = vmatpush1.msra.mxu0 %v1515
    %4552 = vmatprep.subr.mxu0 %v1520
    %4553 = vmatpush1.msra.mxu0 %v1519
    %4554 = vmatprep.mubr.f32.mxu0 %v4258
    %4555 = vmatmul.mubr.f32.gmra.mrb[0].mxu0 %v4098
    %v4556 = vpop.f32.mrb[0].mxu0
    %v4557 = vadd.f32 %v1534, %v4556
    %v4558 = vpop.f32.mrb[0].mxu0
    %v4559 = vadd.f32 %v1538, %v4558
    %4560 = vdwg.mxu0
    %v4561 = vmul.f32 %v4486, 0.5
    %v4562 = vtanh.pop %v4561
    %v4563 = vmul.f32 %v4562, 0.5
    %v4564 = vadd.f32 %v4563, 0.5
    %v4565 = vmul.f32 %v4488, 0.5
    %v4566 = vtanh.pop %v4565
    %v4567 = vmul.f32 %v4566, 0.5
    %v4568 = vadd.f32 %v4567, 0.5
    %v4569 = vtanh.pop %v4557
    %v4570 = vmul.f32 %v4559, 0.5
    %v4571 = vtanh.pop %v4570
    %v4572 = vmul.f32 %v4571, 0.5
    %v4573 = vadd.f32 %v4572, 0.5
    %v4574 = vmul.f32 %v4568, %v4256
    %v4575 = vmul.f32 %v4564, %v4569
    %v4576 = vadd.f32 %v4574, %v4575
    %v4577 = vtanh.pop %v4576
    %v4578 = vmul.f32 %v4573, %v4577
    %4579 = vmatprep.subr.mxu0 %v1704
    %4580 = vmatpush1.msra.mxu0 %v1703
    %4581 = vmatprep.subr.mxu0 %v1708
    %4582 = vmatpush1.msra.mxu0 %v1707
    %4583 = vmatprep.subr.mxu0 %v1712
    %4584 = vmatpush1.msra.mxu0 %v1711
    %4585 = vmatprep.subr.mxu0 %v1716
    %4586 = vmatpush1.msra.mxu0 %v1715
    %4587 = vmatprep.subr.mxu0 %v1720
    %4588 = vmatpush1.msra.mxu0 %v1719
    %4589 = vmatprep.subr.mxu0 %v1724
    %4590 = vmatpush1.msra.mxu0 %v1723
    %4591 = vmatprep.subr.mxu0 %v1728
    %4592 = vmatpush1.msra.mxu0 %v1727
    %4593 = vmatprep.subr.mxu0 %v1732
    %4594 = vmatpush1.msra.mxu0 %v1731
    %4595 = vmatprep.subr.mxu0 %v1736
    %4596 = vmatpush1.msra.mxu0 %v1735
    %4597 = vmatprep.subr.mxu0 %v1740
    %4598 = vmatpush1.msra.mxu0 %v1739
    %4599 = vmatprep.subr.mxu0 %v1744
    %4600 = vmatpush1.msra.mxu0 %v1743
    %4601 = vmatprep.subr.mxu0 %v1748
    %4602 = vmatpush1.msra.mxu0 %v1747
    %4603 = vmatprep.subr.mxu0 %v1752
    %4604 = vmatpush1.msra.mxu0 %v1751
    %4605 = vmatprep.subr.mxu0 %v1756
    %4606 = vmatpush1.msra.mxu0 %v1755
    %4607 = vmatprep.subr.mxu0 %v1760
    %4608 = vmatpush1.msra.mxu0 %v1759
    %4609 = vmatprep.subr.mxu0 %v1764
    %4610 = vmatpush1.msra.mxu0 %v1763
    %4611 = vmatprep.subr.mxu0 %v1768
    %4612 = vmatpush1.msra.mxu0 %v1767
    %4613 = vmatprep.subr.mxu0 %v1772
    %4614 = vmatpush1.msra.mxu0 %v1771
    %4615 = vmatprep.subr.mxu0 %v1776
    %4616 = vmatpush1.msra.mxu0 %v1775
    %4617 = vmatprep.subr.mxu0 %v1780
    %4618 = vmatpush1.msra.mxu0 %v1779
    %4619 = vmatprep.subr.mxu0 %v1784
    %4620 = vmatpush1.msra.mxu0 %v1783
    %4621 = vmatprep.subr.mxu0 %v1788
    %4622 = vmatpush1.msra.mxu0 %v1787
    %4623 = vmatprep.subr.mxu0 %v1792
    %4624 = vmatpush1.msra.mxu0 %v1791
    %4625 = vmatprep.subr.mxu0 %v1796
    %4626 = vmatpush1.msra.mxu0 %v1795
    %4627 = vmatprep.subr.mxu0 %v1800
    %4628 = vmatpush1.msra.mxu0 %v1799
    %4629 = vmatprep.subr.mxu0 %v1804
    %4630 = vmatpush1.msra.mxu0 %v1803
    %4631 = vmatprep.subr.mxu0 %v1808
    %4632 = vmatpush1.msra.mxu0 %v1807
    %4633 = vmatprep.subr.mxu0 %v1812
    %4634 = vmatpush1.msra.mxu0 %v1811
    %4635 = vmatprep.subr.mxu0 %v1816
    %4636 = vmatpush1.msra.mxu0 %v1815
    %4637 = vmatprep.subr.mxu0 %v1820
    %4638 = vmatpush1.msra.mxu0 %v1819
    %4639 = vmatprep.subr.mxu0 %v1824
    %4640 = vmatpush1.msra.mxu0 %v1823
    %4641 = vmatprep.subr.mxu0 %v1828
    %4642 = vmatpush1.msra.mxu0 %v1827
    %4643 = vmatprep.mubr.f32.mxu0 %v4418
    %4644 = vmatmul.mubr.f32.gmra.mrb[0].mxu0 %v4258
    %v4645 = vpop.f32.mrb[0].mxu0
    %v4646 = vadd.f32 %v1837, %v4645
    %v4647 = vpop.f32.mrb[0].mxu0
    %v4648 = vadd.f32 %v1841, %v4647
    %4649 = vdwg.mxu0
    %4650 = vmatprep.subr.mxu0 %v1706
    %4651 = vmatpush1.msra.mxu0 %v1705
    %4652 = vmatprep.subr.mxu0 %v1710
    %4653 = vmatpush1.msra.mxu0 %v1709
    %4654 = vmatprep.subr.mxu0 %v1714
    %4655 = vmatpush1.msra.mxu0 %v1713
    %4656 = vmatprep.subr.mxu0 %v1718
    %4657 = vmatpush1.msra.mxu0 %v1717
    %4658 = vmatprep.subr.mxu0 %v1722
    %4659 = vmatpush1.msra.mxu0 %v1721
    %4660 = vmatprep.subr.mxu0 %v1726
    %4661 = vmatpush1.msra.mxu0 %v1725
    %4662 = vmatprep.subr.mxu0 %v1730
    %4663 = vmatpush1.msra.mxu0 %v1729
    %4664 = vmatprep.subr.mxu0 %v1734
    %4665 = vmatpush1.msra.mxu0 %v1733
    %4666 = vmatprep.subr.mxu0 %v1738
    %4667 = vmatpush1.msra.mxu0 %v1737
    %4668 = vmatprep.subr.mxu0 %v1742
    %4669 = vmatpush1.msra.mxu0 %v1741
    %4670 = vmatprep.subr.mxu0 %v1746
    %4671 = vmatpush1.msra.mxu0 %v1745
    %4672 = vmatprep.subr.mxu0 %v1750
    %4673 = vmatpush1.msra.mxu0 %v1749
    %4674 = vmatprep.subr.mxu0 %v1754
    %4675 = vmatpush1.msra.mxu0 %v1753
    %4676 = vmatprep.subr.mxu0 %v1758
    %4677 = vmatpush1.msra.mxu0 %v1757
    %4678 = vmatprep.subr.mxu0 %v1762
    %4679 = vmatpush1.msra.mxu0 %v1761
    %4680 = vmatprep.subr.mxu0 %v1766
    %4681 = vmatpush1.msra.mxu0 %v1765
    %4682 = vmatprep.subr.mxu0 %v1770
    %4683 = vmatpush1.msra.mxu0 %v1769
    %4684 = vmatprep.subr.mxu0 %v1774
    %4685 = vmatpush1.msra.mxu0 %v1773
    %4686 = vmatprep.subr.mxu0 %v1778
    %4687 = vmatpush1.msra.mxu0 %v1777
    %4688 = vmatprep.subr.mxu0 %v1782
    %4689 = vmatpush1.msra.mxu0 %v1781
    %4690 = vmatprep.subr.mxu0 %v1786
    %4691 = vmatpush1.msra.mxu0 %v1785
    %4692 = vmatprep.subr.mxu0 %v1790
    %4693 = vmatpush1.msra.mxu0 %v1789
    %4694 = vmatprep.subr.mxu0 %v1794
    %4695 = vmatpush1.msra.mxu0 %v1793
    %4696 = vmatprep.subr.mxu0 %v1798
    %4697 = vmatpush1.msra.mxu0 %v1797
    %4698 = vmatprep.subr.mxu0 %v1802
    %4699 = vmatpush1.msra.mxu0 %v1801
    %4700 = vmatprep.subr.mxu0 %v1806
    %4701 = vmatpush1.msra.mxu0 %v1805
    %4702 = vmatprep.subr.mxu0 %v1810
    %4703 = vmatpush1.msra.mxu0 %v1809
    %4704 = vmatprep.subr.mxu0 %v1814
    %4705 = vmatpush1.msra.mxu0 %v1813
    %4706 = vmatprep.subr.mxu0 %v1818
    %4707 = vmatpush1.msra.mxu0 %v1817
    %4708 = vmatprep.subr.mxu0 %v1822
    %4709 = vmatpush1.msra.mxu0 %v1821
    %4710 = vmatprep.subr.mxu0 %v1826
    %4711 = vmatpush1.msra.mxu0 %v1825
    %4712 = vmatprep.subr.mxu0 %v1830
    %4713 = vmatpush1.msra.mxu0 %v1829
    %4714 = vmatprep.mubr.f32.mxu0 %v4418
    %4715 = vmatmul.mubr.f32.gmra.mrb[0].mxu0 %v4258
    %v4716 = vpop.f32.mrb[0].mxu0
    %v4717 = vadd.f32 %v1845, %v4716
    %v4718 = vpop.f32.mrb[0].mxu0
    %v4719 = vadd.f32 %v1849, %v4718
    %4720 = vdwg.mxu0
    %v4721 = vmul.f32 %v4646, 0.5
    %v4722 = vtanh.pop %v4721
    %v4723 = vmul.f32 %v4722, 0.5
    %v4724 = vadd.f32 %v4723, 0.5
    %v4725 = vmul.f32 %v4648, 0.5
    %v4726 = vtanh.pop %v4725
    %v4727 = vmul.f32 %v4726, 0.5
    %v4728 = vadd.f32 %v4727, 0.5
    %v4729 = vtanh.pop %v4717
    %v4730 = vmul.f32 %v4719, 0.5
    %v4731 = vtanh.pop %v4730
    %v4732 = vmul.f32 %v4731, 0.5
    %v4733 = vadd.f32 %v4732, 0.5
    %v4734 = vmul.f32 %v4728, %v4416
    %v4735 = vmul.f32 %v4724, %v4729
    %v4736 = vadd.f32 %v4734, %v4735
    %v4737 = vtanh.pop %v4736
    %v4738 = vmul.f32 %v4733, %v4737
    %4739 = vmatprep.subr.mxu0 %v1704
    %4740 = vmatpush1.msra.mxu0 %v1703
    %4741 = vmatprep.subr.mxu0 %v1708
    %4742 = vmatpush1.msra.mxu0 %v1707
    %4743 = vmatprep.subr.mxu0 %v1712
    %4744 = vmatpush1.msra.mxu0 %v1711
    %4745 = vmatprep.subr.mxu0 %v1716
    %4746 = vmatpush1.msra.mxu0 %v1715
    %4747 = vmatprep.subr.mxu0 %v1720
    %4748 = vmatpush1.msra.mxu0 %v1719
    %4749 = vmatprep.subr.mxu0 %v1724
    %4750 = vmatpush1.msra.mxu0 %v1723
    %4751 = vmatprep.subr.mxu0 %v1728
    %4752 = vmatpush1.msra.mxu0 %v1727
    %4753 = vmatprep.subr.mxu0 %v1732
    %4754 = vmatpush1.msra.mxu0 %v1731
    %4755 = vmatprep.subr.mxu0 %v1736
    %4756 = vmatpush1.msra.mxu0 %v1735
    %4757 = vmatprep.subr.mxu0 %v1740
    %4758 = vmatpush1.msra.mxu0 %v1739
    %4759 = vmatprep.subr.mxu0 %v1744
    %4760 = vmatpush1.msra.mxu0 %v1743
    %4761 = vmatprep.subr.mxu0 %v1748
    %4762 = vmatpush1.msra.mxu0 %v1747
    %4763 = vmatprep.subr.mxu0 %v1752
    %4764 = vmatpush1.msra.mxu0 %v1751
    %4765 = vmatprep.subr.mxu0 %v1756
    %4766 = vmatpush1.msra.mxu0 %v1755
    %4767 = vmatprep.subr.mxu0 %v1760
    %4768 = vmatpush1.msra.mxu0 %v1759
    %4769 = vmatprep.subr.mxu0 %v1764
    %4770 = vmatpush1.msra.mxu0 %v1763
    %4771 = vmatprep.subr.mxu0 %v1768
    %4772 = vmatpush1.msra.mxu0 %v1767
    %4773 = vmatprep.subr.mxu0 %v1772
    %4774 = vmatpush1.msra.mxu0 %v1771
    %4775 = vmatprep.subr.mxu0 %v1776
    %4776 = vmatpush1.msra.mxu0 %v1775
    %4777 = vmatprep.subr.mxu0 %v1780
    %4778 = vmatpush1.msra.mxu0 %v1779
    %4779 = vmatprep.subr.mxu0 %v1784
    %4780 = vmatpush1.msra.mxu0 %v1783
    %4781 = vmatprep.subr.mxu0 %v1788
    %4782 = vmatpush1.msra.mxu0 %v1787
    %4783 = vmatprep.subr.mxu0 %v1792
    %4784 = vmatpush1.msra.mxu0 %v1791
    %4785 = vmatprep.subr.mxu0 %v1796
    %4786 = vmatpush1.msra.mxu0 %v1795
    %4787 = vmatprep.subr.mxu0 %v1800
    %4788 = vmatpush1.msra.mxu0 %v1799
    %4789 = vmatprep.subr.mxu0 %v1804
    %4790 = vmatpush1.msra.mxu0 %v1803
    %4791 = vmatprep.subr.mxu0 %v1808
    %4792 = vmatpush1.msra.mxu0 %v1807
    %4793 = vmatprep.subr.mxu0 %v1812
    %4794 = vmatpush1.msra.mxu0 %v1811
    %4795 = vmatprep.subr.mxu0 %v1816
    %4796 = vmatpush1.msra.mxu0 %v1815
    %4797 = vmatprep.subr.mxu0 %v1820
    %4798 = vmatpush1.msra.mxu0 %v1819
    %4799 = vmatprep.subr.mxu0 %v1824
    %4800 = vmatpush1.msra.mxu0 %v1823
    %4801 = vmatprep.subr.mxu0 %v1828
    %4802 = vmatpush1.msra.mxu0 %v1827
    %4803 = vmatprep.mubr.f32.mxu0 %v4738
    %4804 = vmatmul.mubr.f32.gmra.mrb[0].mxu0 %v4578
    %v4805 = vpop.f32.mrb[0].mxu0
    %v4806 = vadd.f32 %v1837, %v4805
    %v4807 = vpop.f32.mrb[0].mxu0
    %v4808 = vadd.f32 %v1841, %v4807
    %4809 = vdwg.mxu0
    %4810 = vmatprep.subr.mxu0 %v1706
    %4811 = vmatpush1.msra.mxu0 %v1705
    %4812 = vmatprep.subr.mxu0 %v1710
    %4813 = vmatpush1.msra.mxu0 %v1709
    %4814 = vmatprep.subr.mxu0 %v1714
    %4815 = vmatpush1.msra.mxu0 %v1713
    %4816 = vmatprep.subr.mxu0 %v1718
    %4817 = vmatpush1.msra.mxu0 %v1717
    %4818 = vmatprep.subr.mxu0 %v1722
    %4819 = vmatpush1.msra.mxu0 %v1721
    %4820 = vmatprep.subr.mxu0 %v1726
    %4821 = vmatpush1.msra.mxu0 %v1725
    %4822 = vmatprep.subr.mxu0 %v1730
    %4823 = vmatpush1.msra.mxu0 %v1729
    %4824 = vmatprep.subr.mxu0 %v1734
    %4825 = vmatpush1.msra.mxu0 %v1733
    %4826 = vmatprep.subr.mxu0 %v1738
    %4827 = vmatpush1.msra.mxu0 %v1737
    %4828 = vmatprep.subr.mxu0 %v1742
    %4829 = vmatpush1.msra.mxu0 %v1741
    %4830 = vmatprep.subr.mxu0 %v1746
    %4831 = vmatpush1.msra.mxu0 %v1745
    %4832 = vmatprep.subr.mxu0 %v1750
    %4833 = vmatpush1.msra.mxu0 %v1749
    %4834 = vmatprep.subr.mxu0 %v1754
    %4835 = vmatpush1.msra.mxu0 %v1753
    %4836 = vmatprep.subr.mxu0 %v1758
    %4837 = vmatpush1.msra.mxu0 %v1757
    %4838 = vmatprep.subr.mxu0 %v1762
    %4839 = vmatpush1.msra.mxu0 %v1761
    %4840 = vmatprep.subr.mxu0 %v1766
    %4841 = vmatpush1.msra.mxu0 %v1765
    %4842 = vmatprep.subr.mxu0 %v1770
    %4843 = vmatpush1.msra.mxu0 %v1769
    %4844 = vmatprep.subr.mxu0 %v1774
    %4845 = vmatpush1.msra.mxu0 %v1773
    %4846 = vmatprep.subr.mxu0 %v1778
    %4847 = vmatpush1.msra.mxu0 %v1777
    %4848 = vmatprep.subr.mxu0 %v1782
    %4849 = vmatpush1.msra.mxu0 %v1781
    %4850 = vmatprep.subr.mxu0 %v1786
    %4851 = vmatpush1.msra.mxu0 %v1785
    %4852 = vmatprep.subr.mxu0 %v1790
    %4853 = vmatpush1.msra.mxu0 %v1789
    %4854 = vmatprep.subr.mxu0 %v1794
    %4855 = vmatpush1.msra.mxu0 %v1793
    %4856 = vmatprep.subr.mxu0 %v1798
    %4857 = vmatpush1.msra.mxu0 %v1797
    %4858 = vmatprep.subr.mxu0 %v1802
    %4859 = vmatpush1.msra.mxu0 %v1801
    %4860 = vmatprep.subr.mxu0 %v1806
    %4861 = vmatpush1.msra.mxu0 %v1805
    %4862 = vmatprep.subr.mxu0 %v1810
    %4863 = vmatpush1.msra.mxu0 %v1809
    %4864 = vmatprep.subr.mxu0 %v1814
    %4865 = vmatpush1.msra.mxu0 %v1813
    %4866 = vmatprep.subr.mxu0 %v1818
    %4867 = vmatpush1.msra.mxu0 %v1817
    %4868 = vmatprep.subr.mxu0 %v1822
    %4869 = vmatpush1.msra.mxu0 %v1821
    %4870 = vmatprep.subr.mxu0 %v1826
    %4871 = vmatpush1.msra.mxu0 %v1825
    %4872 = vmatprep.subr.mxu0 %v1830
    %4873 = vmatpush1.msra.mxu0 %v1829
    %4874 = vmatprep.mubr.f32.mxu0 %v4738
    %4875 = vmatmul.mubr.f32.gmra.mrb[0].mxu0 %v4578
    %v4876 = vpop.f32.mrb[0].mxu0
    %v4877 = vadd.f32 %v1845, %v4876
    %v4878 = vpop.f32.mrb[0].mxu0
    %v4879 = vadd.f32 %v1849, %v4878
    %4880 = vdwg.mxu0
    %v4881 = vmul.f32 %v4806, 0.5
    %v4882 = vtanh.pop %v4881
    %v4883 = vmul.f32 %v4882, 0.5
    %v4884 = vadd.f32 %v4883, 0.5
    %v4885 = vmul.f32 %v4808, 0.5
    %v4886 = vtanh.pop %v4885
    %v4887 = vmul.f32 %v4886, 0.5
    %v4888 = vadd.f32 %v4887, 0.5
    %v4889 = vtanh.pop %v4877
    %v4890 = vmul.f32 %v4879, 0.5
    %v4891 = vtanh.pop %v4890
    %v4892 = vmul.f32 %v4891, 0.5
    %v4893 = vadd.f32 %v4892, 0.5
    %v4894 = vmul.f32 %v4888, %v4736
    %v4895 = vmul.f32 %v4884, %v4889
    %v4896 = vadd.f32 %v4894, %v4895
    %v4897 = vtanh.pop %v4896
    %v4898 = vmul.f32 %v4893, %v4897
    %4899 = vst [vmem:[#allocation14] sm:$0xff] %v4098
    %4900 = vst [vmem:[#allocation16] sm:$0xff] %v4096
    %s4901 = scalar_lea.vmem [#allocation14], 8
    %4902 = vst [vmem:[%s4901] sm:$0xff] %v4578
    %s4903 = scalar_lea.vmem [#allocation16], 8
    %4904 = vst [vmem:[%s4903] sm:$0xff] %v4576
    %s4905 = scalar_lea.vmem [#allocation14], 16
    %4906 = vst [vmem:[%s4905] sm:$0xff] %v4898
    %s4907 = scalar_lea.vmem [#allocation16], 16
    %4908 = vst [vmem:[%s4907] sm:$0xff] %v4896
    %s4909 = smul.u32 8, 16
    %s4910 = smul.u32 %s4909, 2
    %s4911 = sshll.u32 %s4910, 4
    %4912 = dma.done %s119, %s4911
    %v4913 = vld [vmem:[#allocation3] sm:$0xff]
    %v4914 = vld [vmem:[#allocation3 + $0x8] sm:$0xff]
    %v4915 = vld [vmem:[#allocation3 + $0x10] sm:$0xff]
    %v4916 = vld [vmem:[#allocation3 + $0x18] sm:$0xff]
    %v4917 = vld [vmem:[#allocation3 + $0x20] sm:$0xff]
    %v4918 = vld [vmem:[#allocation3 + $0x28] sm:$0xff]
    %v4919 = vld [vmem:[#allocation3 + $0x30] sm:$0xff]
    %v4920 = vld [vmem:[#allocation3 + $0x38] sm:$0xff]
    %v4921 = vld [vmem:[#allocation3 + $0x40] sm:$0xff]
    %v4922 = vld [vmem:[#allocation3 + $0x48] sm:$0xff]
    %v4923 = vld [vmem:[#allocation3 + $0x50] sm:$0xff]
    %v4924 = vld [vmem:[#allocation3 + $0x58] sm:$0xff]
    %v4925 = vld [vmem:[#allocation3 + $0x60] sm:$0xff]
    %v4926 = vld [vmem:[#allocation3 + $0x68] sm:$0xff]
    %v4927 = vld [vmem:[#allocation3 + $0x70] sm:$0xff]
    %v4928 = vld [vmem:[#allocation3 + $0x78] sm:$0xff]
    %v4929 = vld [vmem:[#allocation3 + $0x80] sm:$0xff]
    %v4930 = vld [vmem:[#allocation3 + $0x88] sm:$0xff]
    %v4931 = vld [vmem:[#allocation3 + $0x90] sm:$0xff]
    %v4932 = vld [vmem:[#allocation3 + $0x98] sm:$0xff]
    %v4933 = vld [vmem:[#allocation3 + $0xa0] sm:$0xff]
    %v4934 = vld [vmem:[#allocation3 + $0xa8] sm:$0xff]
    %v4935 = vld [vmem:[#allocation3 + $0xb0] sm:$0xff]
    %v4936 = vld [vmem:[#allocation3 + $0xb8] sm:$0xff]
    %v4937 = vld [vmem:[#allocation3 + $0xc0] sm:$0xff]
    %v4938 = vld [vmem:[#allocation3 + $0xc8] sm:$0xff]
    %v4939 = vld [vmem:[#allocation3 + $0xd0] sm:$0xff]
    %v4940 = vld [vmem:[#allocation3 + $0xd8] sm:$0xff]
    %v4941 = vld [vmem:[#allocation3 + $0xe0] sm:$0xff]
    %v4942 = vld [vmem:[#allocation3 + $0xe8] sm:$0xff]
    %v4943 = vld [vmem:[#allocation3 + $0xf0] sm:$0xff]
    %v4944 = vld [vmem:[#allocation3 + $0xf8] sm:$0xff]
    %v4945 = vld [vmem:[#allocation11] sm:$0x3]
    %v4947 = vlaneseq
    %v4948 = vshrl.u32 %v4947, 7
    %v4949 = vsub.s32 0, %v4948
    %v4950 = vrot.slane %v4945, %v4949
    %v4951 = vlaneseq
    %v4952 = vshrl.u32 %v4951, 7
    %v4953 = vsub.s32 1, %v4952
    %v4954 = vrot.slane %v4945, %v4953
    %4957 = vmatprep.subr.mxu0 %v4914
    %4958 = vmatpush1.msra.mxu0 %v4913
    %4959 = vmatprep.subr.mxu0 %v4916
    %4960 = vmatpush1.msra.mxu0 %v4915
    %4961 = vmatprep.subr.mxu0 %v4918
    %4962 = vmatpush1.msra.mxu0 %v4917
    %4963 = vmatprep.subr.mxu0 %v4920
    %4964 = vmatpush1.msra.mxu0 %v4919
    %4965 = vmatprep.subr.mxu0 %v4922
    %4966 = vmatpush1.msra.mxu0 %v4921
    %4967 = vmatprep.subr.mxu0 %v4924
    %4968 = vmatpush1.msra.mxu0 %v4923
    %4969 = vmatprep.subr.mxu0 %v4926
    %4970 = vmatpush1.msra.mxu0 %v4925
    %4971 = vmatprep.subr.mxu0 %v4928
    %4972 = vmatpush1.msra.mxu0 %v4927
    %4973 = vmatprep.subr.mxu0 %v4930
    %4974 = vmatpush1.msra.mxu0 %v4929
    %4975 = vmatprep.subr.mxu0 %v4932
    %4976 = vmatpush1.msra.mxu0 %v4931
    %4977 = vmatprep.subr.mxu0 %v4934
    %4978 = vmatpush1.msra.mxu0 %v4933
    %4979 = vmatprep.subr.mxu0 %v4936
    %4980 = vmatpush1.msra.mxu0 %v4935
    %4981 = vmatprep.subr.mxu0 %v4938
    %4982 = vmatpush1.msra.mxu0 %v4937
    %4983 = vmatprep.subr.mxu0 %v4940
    %4984 = vmatpush1.msra.mxu0 %v4939
    %4985 = vmatprep.subr.mxu0 %v4942
    %4986 = vmatpush1.msra.mxu0 %v4941
    %4987 = vmatprep.subr.mxu0 %v4944
    %4988 = vmatpush1.msra.mxu0 %v4943
    %4989 = vmatprep.subr.mxu0 0.0
    %4990 = vmatpush1.msra.mxu0 0.0
    %4991 = vmatprep.subr.mxu0 0.0
    %4992 = vmatpush1.msra.mxu0 0.0
    %4993 = vmatprep.subr.mxu0 0.0
    %4994 = vmatpush1.msra.mxu0 0.0
    %4995 = vmatprep.subr.mxu0 0.0
    %4996 = vmatpush1.msra.mxu0 0.0
    %4997 = vmatprep.subr.mxu0 0.0
    %4998 = vmatpush1.msra.mxu0 0.0
    %4999 = vmatprep.subr.mxu0 0.0
    %5000 = vmatpush1.msra.mxu0 0.0
    %5001 = vmatprep.subr.mxu0 0.0
    %5002 = vmatpush1.msra.mxu0 0.0
    %5003 = vmatprep.subr.mxu0 0.0
    %5004 = vmatpush1.msra.mxu0 0.0
    %5005 = vmatprep.subr.mxu0 0.0
    %5006 = vmatpush1.msra.mxu0 0.0
    %5007 = vmatprep.subr.mxu0 0.0
    %5008 = vmatpush1.msra.mxu0 0.0
    %5009 = vmatprep.subr.mxu0 0.0
    %5010 = vmatpush1.msra.mxu0 0.0
    %5011 = vmatprep.subr.mxu0 0.0
    %5012 = vmatpush1.msra.mxu0 0.0
    %5013 = vmatprep.subr.mxu0 0.0
    %5014 = vmatpush1.msra.mxu0 0.0
    %5015 = vmatprep.subr.mxu0 0.0
    %5016 = vmatpush1.msra.mxu0 0.0
    %5017 = vmatprep.subr.mxu0 0.0
    %5018 = vmatpush1.msra.mxu0 0.0
    %5019 = vmatprep.subr.mxu0 0.0
    %5020 = vmatpush1.msra.mxu0 0.0
    %5021 = vmatprep.mubr.f32.mxu0 0.0
    %5022 = vmatmul.mubr.f32.gmra.mrb[0].mxu0 %v2013
    %v5023 = vpop.f32.mrb[0].mxu0
    %v5024 = vadd.f32 %v4950, %v5023
    %v5025 = vpop.f32.mrb[0].mxu0
    %v5026 = vadd.f32 %v4954, %v5025
    %5027 = vmatprep.mubr.f32.mxu0 0.0
    %5028 = vmatmul.mubr.f32.gmra.mrb[0].mxu0 %v2494
    %v5029 = vpop.f32.mrb[0].mxu0
    %v5030 = vadd.f32 %v4950, %v5029
    %v5031 = vpop.f32.mrb[0].mxu0
    %v5032 = vadd.f32 %v4954, %v5031
    %5033 = vmatprep.mubr.f32.mxu0 0.0
    %5034 = vmatmul.mubr.f32.gmra.mrb[0].mxu0 %v2975
    %v5035 = vpop.f32.mrb[0].mxu0
    %v5036 = vadd.f32 %v4950, %v5035
    %v5037 = vpop.f32.mrb[0].mxu0
    %v5038 = vadd.f32 %v4954, %v5037
    %5039 = vmatprep.mubr.f32.mxu0 0.0
    %5040 = vmatmul.mubr.f32.gmra.mrb[0].mxu0 %v3456
    %v5041 = vpop.f32.mrb[0].mxu0
    %v5042 = vadd.f32 %v4950, %v5041
    %v5043 = vpop.f32.mrb[0].mxu0
    %v5044 = vadd.f32 %v4954, %v5043
    %5045 = vmatprep.mubr.f32.mxu0 0.0
    %5046 = vmatmul.mubr.f32.gmra.mrb[0].mxu0 %v3937
    %v5047 = vpop.f32.mrb[0].mxu0
    %v5048 = vadd.f32 %v4950, %v5047
    %v5049 = vpop.f32.mrb[0].mxu0
    %v5050 = vadd.f32 %v4954, %v5049
    %5051 = vmatprep.mubr.f32.mxu0 0.0
    %5052 = vmatmul.mubr.f32.gmra.mrb[0].mxu0 %v4418
    %v5053 = vpop.f32.mrb[0].mxu0
    %v5054 = vadd.f32 %v4950, %v5053
    %v5055 = vpop.f32.mrb[0].mxu0
    %v5056 = vadd.f32 %v4954, %v5055
    %5057 = vmatprep.mubr.f32.mxu0 0.0
    %5058 = vmatmul.mubr.f32.gmra.mrb[0].mxu0 %v4738
    %v5059 = vpop.f32.mrb[0].mxu0
    %v5060 = vadd.f32 %v4950, %v5059
    %v5061 = vpop.f32.mrb[0].mxu0
    %v5062 = vadd.f32 %v4954, %v5061
    %5063 = vmatprep.mubr.f32.mxu0 0.0
    %5064 = vmatmul.mubr.f32.gmra.mrb[0].mxu0 %v4898
    %v5065 = vpop.f32.mrb[0].mxu0
    %v5066 = vadd.f32 %v4950, %v5065
    %v5067 = vpop.f32.mrb[0].mxu0
    %v5068 = vadd.f32 %v4954, %v5067
    %5069 = vdwg.mxu0
    %5070 = vst [vmem:[#allocation13] sm:$0xff] %v5024
    %5071 = vst [vmem:[#allocation13 + $0x8] sm:$0xff] %v5026
    %5072 = vst [vmem:[#allocation13 + $0x10] sm:$0xff] %v5030
    %5073 = vst [vmem:[#allocation13 + $0x18] sm:$0xff] %v5032
    %5074 = vst [vmem:[#allocation13 + $0x20] sm:$0xff] %v5036
    %5075 = vst [vmem:[#allocation13 + $0x28] sm:$0xff] %v5038
    %5076 = vst [vmem:[#allocation13 + $0x30] sm:$0xff] %v5042
    %5077 = vst [vmem:[#allocation13 + $0x38] sm:$0xff] %v5044
    %5078 = vst [vmem:[#allocation13 + $0x40] sm:$0xff] %v5048
    %5079 = vst [vmem:[#allocation13 + $0x48] sm:$0xff] %v5050
    %5080 = vst [vmem:[#allocation13 + $0x50] sm:$0xff] %v5054
    %5081 = vst [vmem:[#allocation13 + $0x58] sm:$0xff] %v5056
    %5082 = vst [vmem:[#allocation13 + $0x60] sm:$0xff] %v5060
    %5083 = vst [vmem:[#allocation13 + $0x68] sm:$0xff] %v5062
    %5084 = vst [vmem:[#allocation13 + $0x70] sm:$0xff] %v5066
    %5085 = vst [vmem:[#allocation13 + $0x78] sm:$0xff] %v5068
    // Predicated region
    $region54: #{model_forward.1} parent=1 // pred_check
      _
    $region55: #{model_forward.1} parent=1 // pred_check_branch
      %5087 = sbr.rel (0) target = $region57
    $region56: #{model_forward.1} parent=1 // pred_region
      %s5089 = ssub.s32 2048, 2048
      %5090 = vsyncadd [#allocation7], %s5089
      %s5091 = sshll.u32 [#allocation13], 4
      %s5092 = int_to_ptr.vmem [resolvable:$true] %s5091
      %5097 = dma.vmem_to_hbm [thread:$0]  %s5092, 2048, %s7, [#allocation7], 256, 256, 16
    $region57: #{model_forward.1} parent=1 // pred_fallthru
      _
    // Predicated region
    $region58: #{model_forward.1} parent=1 // pred_check
      _
    $region59: #{model_forward.1} parent=1 // pred_check_branch
      %5099 = sbr.rel (0) target = $region61
    $region60: #{model_forward.1} parent=1 // pred_region
      %s5101 = ssub.s32 384, 384
      %5102 = vsyncadd [#allocation15], %s5101
      %s5103 = sshll.u32 [#allocation14], 4
      %s5104 = int_to_ptr.vmem [resolvable:$true] %s5103
      %5109 = dma.vmem_to_hbm [thread:$0]  %s5104, 384, %s8, [#allocation15], 128, 128, 8
    $region61: #{model_forward.1} parent=1 // pred_fallthru
      _
    // Predicated region
    $region62: #{model_forward.1} parent=1 // pred_check
      _
    $region63: #{model_forward.1} parent=1 // pred_check_branch
      %5111 = sbr.rel (0) target = $region65
    $region64: #{model_forward.1} parent=1 // pred_region
      %s5113 = ssub.s32 384, 384
      %5114 = vsyncadd [#allocation15], %s5113
      %s5115 = sshll.u32 [#allocation16], 4
      %s5116 = int_to_ptr.vmem [resolvable:$true] %s5115
      %5121 = dma.vmem_to_hbm [thread:$0]  %s5116, 384, %s9, [#allocation15], 128, 128, 8
    $region65: #{model_forward.1} parent=1 // pred_fallthru
      _
    // Predicated region
    $region66: #{model_forward.1} parent=1 // pred_check
      _
    $region67: #{model_forward.1} parent=1 // pred_check_branch
      %5123 = sbr.rel (0) target = $region69
    $region68: #{model_forward.1} parent=1 // pred_region
      %5124 = dma.done [#allocation7], 2048
    $region69: #{model_forward.1} parent=1 // pred_fallthru
      _
    // Predicated region
    $region70: #{model_forward.1} parent=1 // pred_check
      _
    $region71: #{model_forward.1} parent=1 // pred_check_branch
      %5126 = sbr.rel (0) target = $region73
    $region72: #{model_forward.1} parent=1 // pred_region
      %5127 = dma.done [#allocation15], 384
    $region73: #{model_forward.1} parent=1 // pred_fallthru
      _
    // Predicated region
    $region74: #{model_forward.1} parent=1 // pred_check
      _
    $region75: #{model_forward.1} parent=1 // pred_check_branch
      %5129 = sbr.rel (0) target = $region77
    $region76: #{model_forward.1} parent=1 // pred_region
      %5130 = dma.done [#allocation15], 384
    $region77: #{model_forward.1} parent=1 // pred_fallthru
      _
    %5131 = vsyncpa [#allocation6], 1
    %5132 = vsyncpa [#allocation9], 1
    %5133 = vsyncpa [#allocation12], 1
    %5134 = vsyncpa [#allocation7], 1
    %5135 = vsyncpa [#allocation15], 1
  %5136 = vsyncmov [#allocation4]
  %s5137 = vpop.sfrf %5136
  %p5138 = scmp.eq.s32.totalorder %s5137, 0
  %p5139 = pneg %p5138
  %5141 = shalt.err (%p5139)
  %s5142 = scalar_lea.sflag [#allocation4], 1
  %5143 = vsyncmov %s5142
  %s5144 = vpop.sfrf %5143
  %p5145 = scmp.eq.s32.totalorder %s5144, 0
  %p5146 = pneg %p5145
  %5148 = shalt.err (%p5146)
  %s5149 = scalar_lea.sflag [#allocation4], 2
  %5150 = vsyncmov %s5149
  %s5151 = vpop.sfrf %5150
  %p5152 = scmp.eq.s32.totalorder %s5151, 0
  %p5153 = pneg %p5152
  %5155 = shalt.err (%p5153)
  %s5156 = scalar_lea.sflag [#allocation4], 3
  %5157 = vsyncmov %s5156
  %s5158 = vpop.sfrf %5157
  %p5159 = scmp.eq.s32.totalorder %s5158, 0
  %p5160 = pneg %p5159
  %5162 = shalt.err (%p5160)

</llo_original>
